<compile_context>
chip_gen: v7x
topology: tpu7x:2x2x1
jax: 0.10.0
libtpu: 0.0.40
codegen_flags: <defaults>
</compile_context>

<pallas_src>
import functools
import math

import jax
import jax.numpy as jnp
from jax.experimental import pallas as pl
from jax.experimental.pallas import tpu as pltpu


# ----------------------------------------------------------------------------- #
# In-kernel helpers
# ----------------------------------------------------------------------------- #
def _layernorm(x, gamma, beta, eps=1e-5):
    mu = jnp.mean(x, axis=-1, keepdims=True)
    var = jnp.mean((x - mu) ** 2, axis=-1, keepdims=True)
    return (x - mu) * jax.lax.rsqrt(var + eps) * gamma + beta


# ----------------------------------------------------------------------------- #
# Pallas kernel: whole forward pass for one batch element
# ----------------------------------------------------------------------------- #
def graph_transformer_kernel(
    # batched per-element inputs
    x_ref, mask_row_ref, key_bias_ref, out_mask_ref,
    # shared tables / parameters
    pe_ref,
    w_pe_ref, b_pe_ref,
    w_qkv_ref, b_qkv_ref, wo_ref, bo_ref,
    ln1_g_ref, ln1_b_ref, ln2_g_ref, ln2_b_ref,
    w1_ref, b1_ref, w2_ref, b2_ref,
    nrm_g_ref, nrm_b_ref,
    w_lin_ref, b_lin_ref,
    # output
    o_ref,
    *, num_layers, nhead, target_len,
):
    S = x_ref.shape[1]
    H = w_pe_ref.shape[1]
    bf16 = jnp.bfloat16
    f32 = jnp.float32

    x = x_ref[0]                         # (S, F) f32
    mask_row = mask_row_ref[0]           # (S, 1) f32
    key_bias = key_bias_ref[...]         # (1, 1, S) f32 additive key-padding bias

    # --- PatchEmbedding (patch_size=1 -> per-step Linear) + PositionalEncoding ---
    h = jnp.dot(x.astype(bf16), w_pe_ref[...],
                preferred_element_type=f32) + b_pe_ref[...]
    h = h + pe_ref[...]                  # (S, H) f32

    for l in range(num_layers):
        # ---- fused, head-major QKV projection (one batched contraction) --------
        hb = jnp.broadcast_to(h.astype(bf16)[None], (3 * nhead, S, H))
        qkv = jnp.einsum("nsk,nkd->nsd", hb, w_qkv_ref[l],
                         preferred_element_type=f32) + b_qkv_ref[l]  # (3N, S, hd)
        q = qkv[:nhead]                   # (N, S, hd)  (1/sqrt(hd) folded into Wq/bq)
        k = qkv[nhead:2 * nhead]          # (N, S, hd)
        v = qkv[2 * nhead:]               # (N, S, hd)

        # ---- all heads at once: no per-head loop, no scratch, no masked stores --
        scores = jnp.einsum("nqd,nkd->nqk", q.astype(bf16), k.astype(bf16),
                            preferred_element_type=f32)              # (N, S, S)
        scores = scores + key_bias
        m = jnp.max(scores, axis=-1, keepdims=True)
        e = jnp.exp(scores - m)
        p = e * pl.reciprocal(jnp.sum(e, axis=-1, keepdims=True), approx=True)
        ctx = jnp.einsum("nqk,nkd->nqd", p.astype(bf16), v.astype(bf16),
                         preferred_element_type=f32)                  # (N, S, hd)
        attn = jnp.einsum("nqd,ndh->nqh", ctx.astype(bf16), wo_ref[l],
                          preferred_element_type=f32)                 # (N, S, H)
        attn = jnp.sum(attn, axis=0) + bo_ref[l]                      # (S, H)

        # ---- post-norm encoder layer: Add&Norm, ReLU FFN, Add&Norm --------------
        h1 = _layernorm(h + attn, ln1_g_ref[l], ln1_b_ref[l])
        ff = jnp.maximum(
            jnp.dot(h1.astype(bf16), w1_ref[l], preferred_element_type=f32)
            + b1_ref[l], 0.0)
        ff = jnp.dot(ff.astype(bf16), w2_ref[l],
                     preferred_element_type=f32) + b2_ref[l]
        layer_out = _layernorm(h1 + ff, ln2_g_ref[l], ln2_b_ref[l])

        # ---- baseline wrapper: mask, residual, outer LayerNorm ------------------
        layer_out = layer_out * mask_row
        h = _layernorm(layer_out + h, nrm_g_ref[l], nrm_b_ref[l])

    # ------------------- final Linear on the target rows only --------------------
    h_t = h[:target_len]                                              # (T, H)
    out = jnp.dot(h_t.astype(bf16), w_lin_ref[...],
                  preferred_element_type=f32) + b_lin_ref[...]
    o_ref[0] = out * out_mask_ref[0]


# ----------------------------------------------------------------------------- #
# JAX-side glue
# ----------------------------------------------------------------------------- #
def sinusoidal_pe(seq_len, d_model):
    pos = jnp.arange(seq_len, dtype=jnp.float32)[:, None]
    i = jnp.arange(0, d_model, 2, dtype=jnp.float32)[None, :]
    div = jnp.exp(-jnp.log(jnp.float32(10000.0)) * i / d_model)
    pe = jnp.zeros((seq_len, d_model), jnp.float32)
    pe = pe.at[:, 0::2].set(jnp.sin(pos * div))
    pe = pe.at[:, 1::2].set(jnp.cos(pos * div))
    return pe


def init_params(key, feature_dim, hidden_dim, num_layers, ffn_dim):
    ks = jax.random.split(key, 8)
    n = lambda k, shp: (0.02 * jax.random.normal(k, shp)).astype(jnp.float32)
    L, F, H, FF = num_layers, feature_dim, hidden_dim, ffn_dim
    return dict(
        w_pe=n(ks[0], (F, H)), b_pe=jnp.zeros((1, H), jnp.float32),
        wq=n(ks[1], (L, H, H)), bq=jnp.zeros((L, 1, H), jnp.float32),
        wk=n(ks[2], (L, H, H)), bk=jnp.zeros((L, 1, H), jnp.float32),
        wv=n(ks[3], (L, H, H)), bv=jnp.zeros((L, 1, H), jnp.float32),
        wo=n(ks[4], (L, H, H)), bo=jnp.zeros((L, 1, H), jnp.float32),
        ln1_g=jnp.ones((L, 1, H), jnp.float32), ln1_b=jnp.zeros((L, 1, H), jnp.float32),
        ln2_g=jnp.ones((L, 1, H), jnp.float32), ln2_b=jnp.zeros((L, 1, H), jnp.float32),
        w1=n(ks[5], (L, H, FF)), b1=jnp.zeros((L, 1, FF), jnp.float32),
        w2=n(ks[6], (L, FF, H)), b2=jnp.zeros((L, 1, H), jnp.float32),
        nrm_g=jnp.ones((L, 1, H), jnp.float32), nrm_b=jnp.zeros((L, 1, H), jnp.float32),
        w_lin=n(ks[7], (H, F)), b_lin=jnp.zeros((1, F), jnp.float32),
    )


def _pack_params(params, nhead):
    """One-time wrapper-side repack: fused head-major QKV (scale folded into Wq/bq),
    head-major Wo, bf16 matmul weights; biases / LN params stay f32."""
    L, H, _ = params["wq"].shape
    hd = H // nhead
    scale = 1.0 / math.sqrt(hd)

    def heads_rhs(w):                    # (L, H, H) -> (L, nhead, H, hd)
        return w.reshape(L, H, nhead, hd).transpose(0, 2, 1, 3)

    def heads_bias(b):                   # (L, 1, H) -> (L, nhead, 1, hd)
        return b.reshape(L, 1, nhead, hd).transpose(0, 2, 1, 3)

    w_qkv = jnp.concatenate(
        [heads_rhs(params["wq"]) * scale,
         heads_rhs(params["wk"]),
         heads_rhs(params["wv"])], axis=1).astype(jnp.bfloat16)   # (L, 3N, H, hd)
    b_qkv = jnp.concatenate(
        [heads_bias(params["bq"]) * scale,
         heads_bias(params["bk"]),
         heads_bias(params["bv"])], axis=1).astype(jnp.float32)   # (L, 3N, 1, hd)

    wo = params["wo"].reshape(L, nhead, hd, H).astype(jnp.bfloat16)  # head-major rows

    return dict(
        w_pe=params["w_pe"].astype(jnp.bfloat16), b_pe=params["b_pe"],
        w_qkv=w_qkv, b_qkv=b_qkv,
        wo=wo, bo=params["bo"],
        ln1_g=params["ln1_g"], ln1_b=params["ln1_b"],
        ln2_g=params["ln2_g"], ln2_b=params["ln2_b"],
        w1=params["w1"].astype(jnp.bfloat16), b1=params["b1"],
        w2=params["w2"].astype(jnp.bfloat16), b2=params["b2"],
        nrm_g=params["nrm_g"], nrm_b=params["nrm_b"],
        w_lin=params["w_lin"].astype(jnp.bfloat16), b_lin=params["b_lin"],
    )


def graph_transformer_forward(x, input_mask, output_mask, params, *, nhead=8):
    B, S, F = x.shape
    T = output_mask.shape[1]
    H = params["w_pe"].shape[1]
    L = params["wq"].shape[0]

    packed = _pack_params(params, nhead)
    pe = sinusoidal_pe(S, H)

    mask_row = input_mask.reshape(B, S, 1).astype(jnp.float32)
    # Additive key-padding bias, precomputed once (0 for valid keys, -1e9 for padded).
    key_bias = jnp.where(input_mask.reshape(B, 1, S) > 0.0, 0.0, -1e9).astype(jnp.float32)
    out_mask = output_mask.reshape(B, T, 1).astype(jnp.float32)

    def spec_batched(arr):
        nd = arr.ndim
        return pl.BlockSpec((1,) + arr.shape[1:],
                            lambda b, _nd=nd: (b,) + (0,) * (_nd - 1))

    def spec_full(arr):
        nd = arr.ndim
        return pl.BlockSpec(arr.shape, lambda b, _nd=nd: (0,) * _nd)

    param_order = [
        "w_pe", "b_pe",
        "w_qkv", "b_qkv", "wo", "bo",
        "ln1_g", "ln1_b", "ln2_g", "ln2_b",
        "w1", "b1", "w2", "b2",
        "nrm_g", "nrm_b",
        "w_lin", "b_lin",
    ]
    batched_inputs = [x.astype(jnp.float32), mask_row, key_bias, out_mask]
    shared_inputs = [pe] + [packed[name] for name in param_order]

    in_specs = ([spec_batched(a) for a in batched_inputs]
                + [spec_full(a) for a in shared_inputs])

    kernel = functools.partial(
        graph_transformer_kernel, num_layers=L, nhead=nhead, target_len=T)

    out = pl.pallas_call(
        kernel,
        out_shape=jax.ShapeDtypeStruct((B, T, F), jnp.float32),
        grid_spec=pltpu.PrefetchScalarGridSpec(
            num_scalar_prefetch=0,
            grid=(B,),
            in_specs=in_specs,
            out_specs=pl.BlockSpec((1, T, F), lambda b: (b, 0, 0)),
        ),
        compiler_params=pltpu.CompilerParams(
            dimension_semantics=("parallel",),
            vmem_limit_bytes=64 * 1024 * 1024),
    )(*batched_inputs, *shared_inputs)
    return out


# ----------------------------------------------------------------------------- #
# Main
# ----------------------------------------------------------------------------- #
if __name__ == "__main__":
    # Small, forward-consistent shapes.
    B, S, F, H = 2, 8, 4, 32          # batch, seq_len, feature_dim, hidden_dim
    T = 4                             # target_len (<= seq_len)
    L = 2                             # num_layers
    NHEAD = 8
    FFN = 4 * H

    key = jax.random.PRNGKey(0)
    k_x, k_p = jax.random.split(key)

    x = jax.random.normal(k_x, (B, S, F), dtype=jnp.float32)
    input_mask = jnp.ones((B, S), dtype=jnp.float32)
    input_mask = input_mask.at[1, -2:].set(0.0)      # exercise key-padding path
    output_mask = jnp.ones((B, T), dtype=jnp.float32)

    params = init_params(k_p, F, H, L, FFN)

    out = graph_transformer_forward(x, input_mask, output_mask, params, nhead=NHEAD)
    out = jax.block_until_ready(out)

    assert out.shape == (B, T, F)
    assert bool(jnp.all(jnp.isfinite(out)))
    print("KERNEL_OK")
</pallas_src>

<mosaic_0001>
module attributes {stable_mosaic.version = 11 : i64} {
  func.func @graph_transformer_kernel(%arg0: i32, %arg1: memref<1x8x4xf32, #tpu.memory_space<vmem>>, %arg2: memref<1x8x1xf32, #tpu.memory_space<vmem>>, %arg3: memref<1x1x8xf32, #tpu.memory_space<vmem>>, %arg4: memref<1x4x1xf32, #tpu.memory_space<vmem>>, %arg5: memref<8x32xf32, #tpu.memory_space<vmem>>, %arg6: memref<4x32xbf16, #tpu.memory_space<vmem>>, %arg7: memref<1x32xf32, #tpu.memory_space<vmem>>, %arg8: memref<2x24x32x4xbf16, #tpu.memory_space<vmem>>, %arg9: memref<2x24x1x4xf32, #tpu.memory_space<vmem>>, %arg10: memref<2x8x4x32xbf16, #tpu.memory_space<vmem>>, %arg11: memref<2x1x32xf32, #tpu.memory_space<vmem>>, %arg12: memref<2x1x32xf32, #tpu.memory_space<vmem>>, %arg13: memref<2x1x32xf32, #tpu.memory_space<vmem>>, %arg14: memref<2x1x32xf32, #tpu.memory_space<vmem>>, %arg15: memref<2x1x32xf32, #tpu.memory_space<vmem>>, %arg16: memref<2x32x128xbf16, #tpu.memory_space<vmem>>, %arg17: memref<2x1x128xf32, #tpu.memory_space<vmem>>, %arg18: memref<2x128x32xbf16, #tpu.memory_space<vmem>>, %arg19: memref<2x1x32xf32, #tpu.memory_space<vmem>>, %arg20: memref<2x1x32xf32, #tpu.memory_space<vmem>>, %arg21: memref<2x1x32xf32, #tpu.memory_space<vmem>>, %arg22: memref<32x4xbf16, #tpu.memory_space<vmem>>, %arg23: memref<1x4xf32, #tpu.memory_space<vmem>>, %arg24: memref<1x4x4xf32, #tpu.memory_space<vmem>>) attributes {dimension_semantics = [#tpu.dimension_semantics<parallel>], iteration_bounds = array<i64: 2>, scalar_prefetch = 0 : i64, scratch_operands = 0 : i64, tpu.core_type = #tpu.core_type<tc>, window_params = [{transform_indices = @transform_0, window_bounds = array<i64: 1, 8, 4>}, {transform_indices = @transform_1, window_bounds = array<i64: 1, 8, 1>}, {transform_indices = @transform_2, window_bounds = array<i64: 1, 1, 8>}, {transform_indices = @transform_3, window_bounds = array<i64: 1, 4, 1>}, {pipeline_mode = #tpu.pipeline_mode<synchronous>, transform_indices = @transform_4, window_bounds = array<i64: 8, 32>}, {pipeline_mode = #tpu.pipeline_mode<synchronous>, transform_indices = @transform_5, window_bounds = array<i64: 4, 32>}, {pipeline_mode = #tpu.pipeline_mode<synchronous>, transform_indices = @transform_6, window_bounds = array<i64: 1, 32>}, {pipeline_mode = #tpu.pipeline_mode<synchronous>, transform_indices = @transform_7, window_bounds = array<i64: 2, 24, 32, 4>}, {pipeline_mode = #tpu.pipeline_mode<synchronous>, transform_indices = @transform_8, window_bounds = array<i64: 2, 24, 1, 4>}, {pipeline_mode = #tpu.pipeline_mode<synchronous>, transform_indices = @transform_9, window_bounds = array<i64: 2, 8, 4, 32>}, {pipeline_mode = #tpu.pipeline_mode<synchronous>, transform_indices = @transform_10, window_bounds = array<i64: 2, 1, 32>}, {pipeline_mode = #tpu.pipeline_mode<synchronous>, transform_indices = @transform_11, window_bounds = array<i64: 2, 1, 32>}, {pipeline_mode = #tpu.pipeline_mode<synchronous>, transform_indices = @transform_12, window_bounds = array<i64: 2, 1, 32>}, {pipeline_mode = #tpu.pipeline_mode<synchronous>, transform_indices = @transform_13, window_bounds = array<i64: 2, 1, 32>}, {pipeline_mode = #tpu.pipeline_mode<synchronous>, transform_indices = @transform_14, window_bounds = array<i64: 2, 1, 32>}, {pipeline_mode = #tpu.pipeline_mode<synchronous>, transform_indices = @transform_15, window_bounds = array<i64: 2, 32, 128>}, {pipeline_mode = #tpu.pipeline_mode<synchronous>, transform_indices = @transform_16, window_bounds = array<i64: 2, 1, 128>}, {pipeline_mode = #tpu.pipeline_mode<synchronous>, transform_indices = @transform_17, window_bounds = array<i64: 2, 128, 32>}, {pipeline_mode = #tpu.pipeline_mode<synchronous>, transform_indices = @transform_18, window_bounds = array<i64: 2, 1, 32>}, {pipeline_mode = #tpu.pipeline_mode<synchronous>, transform_indices = @transform_19, window_bounds = array<i64: 2, 1, 32>}, {pipeline_mode = #tpu.pipeline_mode<synchronous>, transform_indices = @transform_20, window_bounds = array<i64: 2, 1, 32>}, {pipeline_mode = #tpu.pipeline_mode<synchronous>, transform_indices = @transform_21, window_bounds = array<i64: 32, 4>}, {pipeline_mode = #tpu.pipeline_mode<synchronous>, transform_indices = @transform_22, window_bounds = array<i64: 1, 4>}, {transform_indices = @transform_23, window_bounds = array<i64: 1, 4, 4>}]} {
    %c0 = arith.constant 0 : index
    %c0_0 = arith.constant 0 : index
    %c0_1 = arith.constant 0 : index
    %0 = vector.load %arg1[%c0, %c0_0, %c0_1] : memref<1x8x4xf32, #tpu.memory_space<vmem>>, vector<1x8x4xf32>
    %1 = vector.shape_cast %0 : vector<1x8x4xf32> to vector<8x4xf32>
    %c0_2 = arith.constant 0 : index
    %c0_3 = arith.constant 0 : index
    %c0_4 = arith.constant 0 : index
    %2 = vector.load %arg2[%c0_2, %c0_3, %c0_4] : memref<1x8x1xf32, #tpu.memory_space<vmem>>, vector<1x8x1xf32>
    %3 = vector.shape_cast %2 : vector<1x8x1xf32> to vector<8x1xf32>
    %c0_5 = arith.constant 0 : index
    %c0_6 = arith.constant 0 : index
    %c0_7 = arith.constant 0 : index
    %4 = vector.load %arg3[%c0_5, %c0_6, %c0_7] : memref<1x1x8xf32, #tpu.memory_space<vmem>>, vector<1x1x8xf32>
    %5 = arith.truncf %1 : vector<8x4xf32> to vector<8x4xbf16>
    %c0_8 = arith.constant 0 : index
    %c0_9 = arith.constant 0 : index
    %6 = vector.load %arg6[%c0_8, %c0_9] : memref<4x32xbf16, #tpu.memory_space<vmem>>, vector<4x32xbf16>
    %cst = arith.constant dense<0.000000e+00> : vector<8x32xf32>
    %7 = tpu.matmul %5, %6, %cst {dimension_numbers = #tpu.dot_dimension_numbers<[1], [0], [0], [1], [0, 0, 1, 1], [], []>} : vector<8x4xbf16>, vector<4x32xbf16>, vector<8x32xf32> -> vector<8x32xf32>
    %c0_10 = arith.constant 0 : index
    %c0_11 = arith.constant 0 : index
    %8 = vector.load %arg7[%c0_10, %c0_11] : memref<1x32xf32, #tpu.memory_space<vmem>>, vector<1x32xf32>
    %9 = vector.broadcast %8 : vector<1x32xf32> to vector<8x32xf32>
    %10 = arith.addf %7, %9 : vector<8x32xf32>
    %c0_12 = arith.constant 0 : index
    %c0_13 = arith.constant 0 : index
    %11 = vector.load %arg5[%c0_12, %c0_13] : memref<8x32xf32, #tpu.memory_space<vmem>>, vector<8x32xf32>
    %12 = arith.addf %10, %11 : vector<8x32xf32>
    %13 = arith.truncf %12 : vector<8x32xf32> to vector<8x32xbf16>
    %14 = vector.shape_cast %13 : vector<8x32xbf16> to vector<1x8x32xbf16>
    %15 = vector.shape_cast %14 : vector<1x8x32xbf16> to vector<1x8x32xbf16>
    %16 = vector.broadcast %15 : vector<1x8x32xbf16> to vector<24x8x32xbf16>
    %c0_14 = arith.constant 0 : index
    %c0_15 = arith.constant 0 : index
    %c0_16 = arith.constant 0 : index
    %c0_17 = arith.constant 0 : index
    %17 = vector.load %arg8[%c0_14, %c0_15, %c0_16, %c0_17] : memref<2x24x32x4xbf16, #tpu.memory_space<vmem>>, vector<1x24x32x4xbf16>
    %18 = vector.shape_cast %17 : vector<1x24x32x4xbf16> to vector<24x32x4xbf16>
    "tpu.trace_start"() <{level = 10 : i32, message = "nsk,nkd->nsd"}> : () -> ()
    %cst_18 = arith.constant dense<0.000000e+00> : vector<24x8x4xf32>
    %19 = tpu.matmul %16, %18, %cst_18 {dimension_numbers = #tpu.dot_dimension_numbers<[2], [1], [1], [2], [0, 0, 0, 1, 1, 2], [0], [0]>} : vector<24x8x32xbf16>, vector<24x32x4xbf16>, vector<24x8x4xf32> -> vector<24x8x4xf32>
    "tpu.trace_stop"() : () -> ()
    %c0_19 = arith.constant 0 : index
    %c0_20 = arith.constant 0 : index
    %c0_21 = arith.constant 0 : index
    %c0_22 = arith.constant 0 : index
    %20 = vector.load %arg9[%c0_19, %c0_20, %c0_21, %c0_22] : memref<2x24x1x4xf32, #tpu.memory_space<vmem>>, vector<1x24x1x4xf32>
    %21 = vector.shape_cast %20 : vector<1x24x1x4xf32> to vector<24x1x4xf32>
    %22 = vector.broadcast %21 : vector<24x1x4xf32> to vector<24x8x4xf32>
    %23 = arith.addf %19, %22 : vector<24x8x4xf32>
    %24 = vector.extract_strided_slice %23 {offsets = [0, 0, 0], sizes = [8, 8, 4], strides = [1, 1, 1]} : vector<24x8x4xf32> to vector<8x8x4xf32>
    %25 = vector.extract_strided_slice %23 {offsets = [8, 0, 0], sizes = [8, 8, 4], strides = [1, 1, 1]} : vector<24x8x4xf32> to vector<8x8x4xf32>
    %26 = vector.extract_strided_slice %23 {offsets = [16, 0, 0], sizes = [8, 8, 4], strides = [1, 1, 1]} : vector<24x8x4xf32> to vector<8x8x4xf32>
    %27 = arith.truncf %24 : vector<8x8x4xf32> to vector<8x8x4xbf16>
    %28 = arith.truncf %25 : vector<8x8x4xf32> to vector<8x8x4xbf16>
    "tpu.trace_start"() <{level = 10 : i32, message = "nqd,nkd->nqk"}> : () -> ()
    %cst_23 = arith.constant dense<0.000000e+00> : vector<8x8x8xf32>
    %29 = tpu.matmul %27, %28, %cst_23 {dimension_numbers = #tpu.dot_dimension_numbers<[2], [2], [1], [1], [0, 0, 0, 1, 1, 1], [0], [0]>} : vector<8x8x4xbf16>, vector<8x8x4xbf16>, vector<8x8x8xf32> -> vector<8x8x8xf32>
    "tpu.trace_stop"() : () -> ()
    %30 = vector.broadcast %4 : vector<1x1x8xf32> to vector<8x8x8xf32>
    %31 = arith.addf %29, %30 : vector<8x8x8xf32>
    %cst_24 = arith.constant dense<0xFF800000> : vector<8x8xf32>
    %32 = vector.multi_reduction <maximumf>, %31, %cst_24 [2] : vector<8x8x8xf32> to vector<8x8xf32>
    %33 = vector.shape_cast %32 : vector<8x8xf32> to vector<8x8x1xf32>
    %34 = vector.broadcast %33 : vector<8x8x1xf32> to vector<8x8x8xf32>
    %35 = arith.subf %31, %34 : vector<8x8x8xf32>
    %36 = math.exp %35 : vector<8x8x8xf32>
    %cst_25 = arith.constant dense<0.000000e+00> : vector<8x8xf32>
    %37 = vector.multi_reduction <add>, %36, %cst_25 [2] : vector<8x8x8xf32> to vector<8x8xf32>
    %38 = vector.shape_cast %37 : vector<8x8xf32> to vector<8x8x1xf32>
    %39 = tpu.reciprocal %38 {approx = true} : vector<8x8x1xf32> -> vector<8x8x1xf32>
    %40 = vector.broadcast %39 : vector<8x8x1xf32> to vector<8x8x8xf32>
    %41 = arith.mulf %36, %40 : vector<8x8x8xf32>
    %42 = arith.truncf %41 : vector<8x8x8xf32> to vector<8x8x8xbf16>
    %43 = arith.truncf %26 : vector<8x8x4xf32> to vector<8x8x4xbf16>
    "tpu.trace_start"() <{level = 10 : i32, message = "nqk,nkd->nqd"}> : () -> ()
    %cst_26 = arith.constant dense<0.000000e+00> : vector<8x8x4xf32>
    %44 = tpu.matmul %42, %43, %cst_26 {dimension_numbers = #tpu.dot_dimension_numbers<[2], [1], [1], [2], [0, 0, 0, 1, 1, 2], [0], [0]>} : vector<8x8x8xbf16>, vector<8x8x4xbf16>, vector<8x8x4xf32> -> vector<8x8x4xf32>
    "tpu.trace_stop"() : () -> ()
    %45 = arith.truncf %44 : vector<8x8x4xf32> to vector<8x8x4xbf16>
    %c0_27 = arith.constant 0 : index
    %c0_28 = arith.constant 0 : index
    %c0_29 = arith.constant 0 : index
    %c0_30 = arith.constant 0 : index
    %46 = vector.load %arg10[%c0_27, %c0_28, %c0_29, %c0_30] : memref<2x8x4x32xbf16, #tpu.memory_space<vmem>>, vector<1x8x4x32xbf16>
    %47 = vector.shape_cast %46 : vector<1x8x4x32xbf16> to vector<8x4x32xbf16>
    "tpu.trace_start"() <{level = 10 : i32, message = "nqd,ndh->nqh"}> : () -> ()
    %cst_31 = arith.constant dense<0.000000e+00> : vector<8x8x32xf32>
    %48 = tpu.matmul %45, %47, %cst_31 {dimension_numbers = #tpu.dot_dimension_numbers<[2], [1], [1], [2], [0, 0, 0, 1, 1, 2], [0], [0]>} : vector<8x8x4xbf16>, vector<8x4x32xbf16>, vector<8x8x32xf32> -> vector<8x8x32xf32>
    "tpu.trace_stop"() : () -> ()
    %cst_32 = arith.constant dense<0.000000e+00> : vector<8x32xf32>
    %49 = vector.multi_reduction <add>, %48, %cst_32 [0] : vector<8x8x32xf32> to vector<8x32xf32>
    %c0_33 = arith.constant 0 : index
    %c0_34 = arith.constant 0 : index
    %c0_35 = arith.constant 0 : index
    %50 = vector.load %arg11[%c0_33, %c0_34, %c0_35] : memref<2x1x32xf32, #tpu.memory_space<vmem>>, vector<1x1x32xf32>
    %51 = vector.shape_cast %50 : vector<1x1x32xf32> to vector<1x32xf32>
    %52 = vector.broadcast %51 : vector<1x32xf32> to vector<8x32xf32>
    %53 = arith.addf %49, %52 : vector<8x32xf32>
    %54 = arith.addf %12, %53 : vector<8x32xf32>
    %c0_36 = arith.constant 0 : index
    %c0_37 = arith.constant 0 : index
    %c0_38 = arith.constant 0 : index
    %55 = vector.load %arg12[%c0_36, %c0_37, %c0_38] : memref<2x1x32xf32, #tpu.memory_space<vmem>>, vector<1x1x32xf32>
    %56 = vector.shape_cast %55 : vector<1x1x32xf32> to vector<1x32xf32>
    %c0_39 = arith.constant 0 : index
    %c0_40 = arith.constant 0 : index
    %c0_41 = arith.constant 0 : index
    %57 = vector.load %arg13[%c0_39, %c0_40, %c0_41] : memref<2x1x32xf32, #tpu.memory_space<vmem>>, vector<1x1x32xf32>
    %58 = vector.shape_cast %57 : vector<1x1x32xf32> to vector<1x32xf32>
    %cst_42 = arith.constant dense<0.000000e+00> : vector<8xf32>
    %59 = vector.multi_reduction <add>, %54, %cst_42 [1] : vector<8x32xf32> to vector<8xf32>
    %60 = vector.shape_cast %59 : vector<8xf32> to vector<8x1xf32>
    %cst_43 = arith.constant 3.200000e+01 : f32
    %61 = vector.broadcast %cst_43 : f32 to vector<8x1xf32>
    %62 = arith.divf %60, %61 : vector<8x1xf32>
    %63 = vector.broadcast %62 : vector<8x1xf32> to vector<8x32xf32>
    %64 = arith.subf %54, %63 : vector<8x32xf32>
    %65 = arith.mulf %64, %64 : vector<8x32xf32>
    %cst_44 = arith.constant dense<0.000000e+00> : vector<8xf32>
    %66 = vector.multi_reduction <add>, %65, %cst_44 [1] : vector<8x32xf32> to vector<8xf32>
    %67 = vector.shape_cast %66 : vector<8xf32> to vector<8x1xf32>
    %cst_45 = arith.constant 3.200000e+01 : f32
    %68 = vector.broadcast %cst_45 : f32 to vector<8x1xf32>
    %69 = arith.divf %67, %68 : vector<8x1xf32>
    %70 = vector.broadcast %62 : vector<8x1xf32> to vector<8x32xf32>
    %71 = arith.subf %54, %70 : vector<8x32xf32>
    %cst_46 = arith.constant 9.99999974E-6 : f32
    %72 = vector.broadcast %cst_46 : f32 to vector<8x1xf32>
    %73 = arith.addf %69, %72 : vector<8x1xf32>
    %74 = math.rsqrt %73 : vector<8x1xf32>
    %75 = vector.broadcast %74 : vector<8x1xf32> to vector<8x32xf32>
    %76 = arith.mulf %71, %75 : vector<8x32xf32>
    %77 = vector.broadcast %56 : vector<1x32xf32> to vector<8x32xf32>
    %78 = arith.mulf %76, %77 : vector<8x32xf32>
    %79 = vector.broadcast %58 : vector<1x32xf32> to vector<8x32xf32>
    %80 = arith.addf %78, %79 : vector<8x32xf32>
    %81 = arith.truncf %80 : vector<8x32xf32> to vector<8x32xbf16>
    %c0_47 = arith.constant 0 : index
    %c0_48 = arith.constant 0 : index
    %c0_49 = arith.constant 0 : index
    %82 = vector.load %arg16[%c0_47, %c0_48, %c0_49] : memref<2x32x128xbf16, #tpu.memory_space<vmem>>, vector<1x32x128xbf16>
    %83 = vector.shape_cast %82 : vector<1x32x128xbf16> to vector<32x128xbf16>
    %cst_50 = arith.constant dense<0.000000e+00> : vector<8x128xf32>
    %84 = tpu.matmul %81, %83, %cst_50 {dimension_numbers = #tpu.dot_dimension_numbers<[1], [0], [0], [1], [0, 0, 1, 1], [], []>} : vector<8x32xbf16>, vector<32x128xbf16>, vector<8x128xf32> -> vector<8x128xf32>
    %c0_51 = arith.constant 0 : index
    %c0_52 = arith.constant 0 : index
    %c0_53 = arith.constant 0 : index
    %85 = vector.load %arg17[%c0_51, %c0_52, %c0_53] : memref<2x1x128xf32, #tpu.memory_space<vmem>>, vector<1x1x128xf32>
    %86 = vector.shape_cast %85 : vector<1x1x128xf32> to vector<1x128xf32>
    %87 = vector.broadcast %86 : vector<1x128xf32> to vector<8x128xf32>
    %88 = arith.addf %84, %87 : vector<8x128xf32>
    %cst_54 = arith.constant 0.000000e+00 : f32
    %89 = vector.broadcast %cst_54 : f32 to vector<8x128xf32>
    %90 = arith.maximumf %88, %89 : vector<8x128xf32>
    %91 = arith.truncf %90 : vector<8x128xf32> to vector<8x128xbf16>
    %c0_55 = arith.constant 0 : index
    %c0_56 = arith.constant 0 : index
    %c0_57 = arith.constant 0 : index
    %92 = vector.load %arg18[%c0_55, %c0_56, %c0_57] : memref<2x128x32xbf16, #tpu.memory_space<vmem>>, vector<1x128x32xbf16>
    %93 = vector.shape_cast %92 : vector<1x128x32xbf16> to vector<128x32xbf16>
    %cst_58 = arith.constant dense<0.000000e+00> : vector<8x32xf32>
    %94 = tpu.matmul %91, %93, %cst_58 {dimension_numbers = #tpu.dot_dimension_numbers<[1], [0], [0], [1], [0, 0, 1, 1], [], []>} : vector<8x128xbf16>, vector<128x32xbf16>, vector<8x32xf32> -> vector<8x32xf32>
    %c0_59 = arith.constant 0 : index
    %c0_60 = arith.constant 0 : index
    %c0_61 = arith.constant 0 : index
    %95 = vector.load %arg19[%c0_59, %c0_60, %c0_61] : memref<2x1x32xf32, #tpu.memory_space<vmem>>, vector<1x1x32xf32>
    %96 = vector.shape_cast %95 : vector<1x1x32xf32> to vector<1x32xf32>
    %97 = vector.broadcast %96 : vector<1x32xf32> to vector<8x32xf32>
    %98 = arith.addf %94, %97 : vector<8x32xf32>
    %99 = arith.addf %80, %98 : vector<8x32xf32>
    %c0_62 = arith.constant 0 : index
    %c0_63 = arith.constant 0 : index
    %c0_64 = arith.constant 0 : index
    %100 = vector.load %arg14[%c0_62, %c0_63, %c0_64] : memref<2x1x32xf32, #tpu.memory_space<vmem>>, vector<1x1x32xf32>
    %101 = vector.shape_cast %100 : vector<1x1x32xf32> to vector<1x32xf32>
    %c0_65 = arith.constant 0 : index
    %c0_66 = arith.constant 0 : index
    %c0_67 = arith.constant 0 : index
    %102 = vector.load %arg15[%c0_65, %c0_66, %c0_67] : memref<2x1x32xf32, #tpu.memory_space<vmem>>, vector<1x1x32xf32>
    %103 = vector.shape_cast %102 : vector<1x1x32xf32> to vector<1x32xf32>
    %cst_68 = arith.constant dense<0.000000e+00> : vector<8xf32>
    %104 = vector.multi_reduction <add>, %99, %cst_68 [1] : vector<8x32xf32> to vector<8xf32>
    %105 = vector.shape_cast %104 : vector<8xf32> to vector<8x1xf32>
    %cst_69 = arith.constant 3.200000e+01 : f32
    %106 = vector.broadcast %cst_69 : f32 to vector<8x1xf32>
    %107 = arith.divf %105, %106 : vector<8x1xf32>
    %108 = vector.broadcast %107 : vector<8x1xf32> to vector<8x32xf32>
    %109 = arith.subf %99, %108 : vector<8x32xf32>
    %110 = arith.mulf %109, %109 : vector<8x32xf32>
    %cst_70 = arith.constant dense<0.000000e+00> : vector<8xf32>
    %111 = vector.multi_reduction <add>, %110, %cst_70 [1] : vector<8x32xf32> to vector<8xf32>
    %112 = vector.shape_cast %111 : vector<8xf32> to vector<8x1xf32>
    %cst_71 = arith.constant 3.200000e+01 : f32
    %113 = vector.broadcast %cst_71 : f32 to vector<8x1xf32>
    %114 = arith.divf %112, %113 : vector<8x1xf32>
    %115 = vector.broadcast %107 : vector<8x1xf32> to vector<8x32xf32>
    %116 = arith.subf %99, %115 : vector<8x32xf32>
    %cst_72 = arith.constant 9.99999974E-6 : f32
    %117 = vector.broadcast %cst_72 : f32 to vector<8x1xf32>
    %118 = arith.addf %114, %117 : vector<8x1xf32>
    %119 = math.rsqrt %118 : vector<8x1xf32>
    %120 = vector.broadcast %119 : vector<8x1xf32> to vector<8x32xf32>
    %121 = arith.mulf %116, %120 : vector<8x32xf32>
    %122 = vector.broadcast %101 : vector<1x32xf32> to vector<8x32xf32>
    %123 = arith.mulf %121, %122 : vector<8x32xf32>
    %124 = vector.broadcast %103 : vector<1x32xf32> to vector<8x32xf32>
    %125 = arith.addf %123, %124 : vector<8x32xf32>
    %126 = vector.broadcast %3 : vector<8x1xf32> to vector<8x32xf32>
    %127 = arith.mulf %125, %126 : vector<8x32xf32>
    %128 = arith.addf %127, %12 : vector<8x32xf32>
    %c0_73 = arith.constant 0 : index
    %c0_74 = arith.constant 0 : index
    %c0_75 = arith.constant 0 : index
    %129 = vector.load %arg20[%c0_73, %c0_74, %c0_75] : memref<2x1x32xf32, #tpu.memory_space<vmem>>, vector<1x1x32xf32>
    %130 = vector.shape_cast %129 : vector<1x1x32xf32> to vector<1x32xf32>
    %c0_76 = arith.constant 0 : index
    %c0_77 = arith.constant 0 : index
    %c0_78 = arith.constant 0 : index
    %131 = vector.load %arg21[%c0_76, %c0_77, %c0_78] : memref<2x1x32xf32, #tpu.memory_space<vmem>>, vector<1x1x32xf32>
    %132 = vector.shape_cast %131 : vector<1x1x32xf32> to vector<1x32xf32>
    %cst_79 = arith.constant dense<0.000000e+00> : vector<8xf32>
    %133 = vector.multi_reduction <add>, %128, %cst_79 [1] : vector<8x32xf32> to vector<8xf32>
    %134 = vector.shape_cast %133 : vector<8xf32> to vector<8x1xf32>
    %cst_80 = arith.constant 3.200000e+01 : f32
    %135 = vector.broadcast %cst_80 : f32 to vector<8x1xf32>
    %136 = arith.divf %134, %135 : vector<8x1xf32>
    %137 = vector.broadcast %136 : vector<8x1xf32> to vector<8x32xf32>
    %138 = arith.subf %128, %137 : vector<8x32xf32>
    %139 = arith.mulf %138, %138 : vector<8x32xf32>
    %cst_81 = arith.constant dense<0.000000e+00> : vector<8xf32>
    %140 = vector.multi_reduction <add>, %139, %cst_81 [1] : vector<8x32xf32> to vector<8xf32>
    %141 = vector.shape_cast %140 : vector<8xf32> to vector<8x1xf32>
    %cst_82 = arith.constant 3.200000e+01 : f32
    %142 = vector.broadcast %cst_82 : f32 to vector<8x1xf32>
    %143 = arith.divf %141, %142 : vector<8x1xf32>
    %144 = vector.broadcast %136 : vector<8x1xf32> to vector<8x32xf32>
    %145 = arith.subf %128, %144 : vector<8x32xf32>
    %cst_83 = arith.constant 9.99999974E-6 : f32
    %146 = vector.broadcast %cst_83 : f32 to vector<8x1xf32>
    %147 = arith.addf %143, %146 : vector<8x1xf32>
    %148 = math.rsqrt %147 : vector<8x1xf32>
    %149 = vector.broadcast %148 : vector<8x1xf32> to vector<8x32xf32>
    %150 = arith.mulf %145, %149 : vector<8x32xf32>
    %151 = vector.broadcast %130 : vector<1x32xf32> to vector<8x32xf32>
    %152 = arith.mulf %150, %151 : vector<8x32xf32>
    %153 = vector.broadcast %132 : vector<1x32xf32> to vector<8x32xf32>
    %154 = arith.addf %152, %153 : vector<8x32xf32>
    %155 = arith.truncf %154 : vector<8x32xf32> to vector<8x32xbf16>
    %156 = vector.shape_cast %155 : vector<8x32xbf16> to vector<1x8x32xbf16>
    %157 = vector.shape_cast %156 : vector<1x8x32xbf16> to vector<1x8x32xbf16>
    %158 = vector.broadcast %157 : vector<1x8x32xbf16> to vector<24x8x32xbf16>
    %c1 = arith.constant 1 : index
    %c0_84 = arith.constant 0 : index
    %c0_85 = arith.constant 0 : index
    %c0_86 = arith.constant 0 : index
    %159 = vector.load %arg8[%c1, %c0_84, %c0_85, %c0_86] : memref<2x24x32x4xbf16, #tpu.memory_space<vmem>>, vector<1x24x32x4xbf16>
    %160 = vector.shape_cast %159 : vector<1x24x32x4xbf16> to vector<24x32x4xbf16>
    "tpu.trace_start"() <{level = 10 : i32, message = "nsk,nkd->nsd"}> : () -> ()
    %cst_87 = arith.constant dense<0.000000e+00> : vector<24x8x4xf32>
    %161 = tpu.matmul %158, %160, %cst_87 {dimension_numbers = #tpu.dot_dimension_numbers<[2], [1], [1], [2], [0, 0, 0, 1, 1, 2], [0], [0]>} : vector<24x8x32xbf16>, vector<24x32x4xbf16>, vector<24x8x4xf32> -> vector<24x8x4xf32>
    "tpu.trace_stop"() : () -> ()
    %c1_88 = arith.constant 1 : index
    %c0_89 = arith.constant 0 : index
    %c0_90 = arith.constant 0 : index
    %c0_91 = arith.constant 0 : index
    %162 = vector.load %arg9[%c1_88, %c0_89, %c0_90, %c0_91] : memref<2x24x1x4xf32, #tpu.memory_space<vmem>>, vector<1x24x1x4xf32>
    %163 = vector.shape_cast %162 : vector<1x24x1x4xf32> to vector<24x1x4xf32>
    %164 = vector.broadcast %163 : vector<24x1x4xf32> to vector<24x8x4xf32>
    %165 = arith.addf %161, %164 : vector<24x8x4xf32>
    %166 = vector.extract_strided_slice %165 {offsets = [0, 0, 0], sizes = [8, 8, 4], strides = [1, 1, 1]} : vector<24x8x4xf32> to vector<8x8x4xf32>
    %167 = vector.extract_strided_slice %165 {offsets = [8, 0, 0], sizes = [8, 8, 4], strides = [1, 1, 1]} : vector<24x8x4xf32> to vector<8x8x4xf32>
    %168 = vector.extract_strided_slice %165 {offsets = [16, 0, 0], sizes = [8, 8, 4], strides = [1, 1, 1]} : vector<24x8x4xf32> to vector<8x8x4xf32>
    %169 = arith.truncf %166 : vector<8x8x4xf32> to vector<8x8x4xbf16>
    %170 = arith.truncf %167 : vector<8x8x4xf32> to vector<8x8x4xbf16>
    "tpu.trace_start"() <{level = 10 : i32, message = "nqd,nkd->nqk"}> : () -> ()
    %cst_92 = arith.constant dense<0.000000e+00> : vector<8x8x8xf32>
    %171 = tpu.matmul %169, %170, %cst_92 {dimension_numbers = #tpu.dot_dimension_numbers<[2], [2], [1], [1], [0, 0, 0, 1, 1, 1], [0], [0]>} : vector<8x8x4xbf16>, vector<8x8x4xbf16>, vector<8x8x8xf32> -> vector<8x8x8xf32>
    "tpu.trace_stop"() : () -> ()
    %172 = vector.broadcast %4 : vector<1x1x8xf32> to vector<8x8x8xf32>
    %173 = arith.addf %171, %172 : vector<8x8x8xf32>
    %cst_93 = arith.constant dense<0xFF800000> : vector<8x8xf32>
    %174 = vector.multi_reduction <maximumf>, %173, %cst_93 [2] : vector<8x8x8xf32> to vector<8x8xf32>
    %175 = vector.shape_cast %174 : vector<8x8xf32> to vector<8x8x1xf32>
    %176 = vector.broadcast %175 : vector<8x8x1xf32> to vector<8x8x8xf32>
    %177 = arith.subf %173, %176 : vector<8x8x8xf32>
    %178 = math.exp %177 : vector<8x8x8xf32>
    %cst_94 = arith.constant dense<0.000000e+00> : vector<8x8xf32>
    %179 = vector.multi_reduction <add>, %178, %cst_94 [2] : vector<8x8x8xf32> to vector<8x8xf32>
    %180 = vector.shape_cast %179 : vector<8x8xf32> to vector<8x8x1xf32>
    %181 = tpu.reciprocal %180 {approx = true} : vector<8x8x1xf32> -> vector<8x8x1xf32>
    %182 = vector.broadcast %181 : vector<8x8x1xf32> to vector<8x8x8xf32>
    %183 = arith.mulf %178, %182 : vector<8x8x8xf32>
    %184 = arith.truncf %183 : vector<8x8x8xf32> to vector<8x8x8xbf16>
    %185 = arith.truncf %168 : vector<8x8x4xf32> to vector<8x8x4xbf16>
    "tpu.trace_start"() <{level = 10 : i32, message = "nqk,nkd->nqd"}> : () -> ()
    %cst_95 = arith.constant dense<0.000000e+00> : vector<8x8x4xf32>
    %186 = tpu.matmul %184, %185, %cst_95 {dimension_numbers = #tpu.dot_dimension_numbers<[2], [1], [1], [2], [0, 0, 0, 1, 1, 2], [0], [0]>} : vector<8x8x8xbf16>, vector<8x8x4xbf16>, vector<8x8x4xf32> -> vector<8x8x4xf32>
    "tpu.trace_stop"() : () -> ()
    %187 = arith.truncf %186 : vector<8x8x4xf32> to vector<8x8x4xbf16>
    %c1_96 = arith.constant 1 : index
    %c0_97 = arith.constant 0 : index
    %c0_98 = arith.constant 0 : index
    %c0_99 = arith.constant 0 : index
    %188 = vector.load %arg10[%c1_96, %c0_97, %c0_98, %c0_99] : memref<2x8x4x32xbf16, #tpu.memory_space<vmem>>, vector<1x8x4x32xbf16>
    %189 = vector.shape_cast %188 : vector<1x8x4x32xbf16> to vector<8x4x32xbf16>
    "tpu.trace_start"() <{level = 10 : i32, message = "nqd,ndh->nqh"}> : () -> ()
    %cst_100 = arith.constant dense<0.000000e+00> : vector<8x8x32xf32>
    %190 = tpu.matmul %187, %189, %cst_100 {dimension_numbers = #tpu.dot_dimension_numbers<[2], [1], [1], [2], [0, 0, 0, 1, 1, 2], [0], [0]>} : vector<8x8x4xbf16>, vector<8x4x32xbf16>, vector<8x8x32xf32> -> vector<8x8x32xf32>
    "tpu.trace_stop"() : () -> ()
    %cst_101 = arith.constant dense<0.000000e+00> : vector<8x32xf32>
    %191 = vector.multi_reduction <add>, %190, %cst_101 [0] : vector<8x8x32xf32> to vector<8x32xf32>
    %c1_102 = arith.constant 1 : index
    %c0_103 = arith.constant 0 : index
    %c0_104 = arith.constant 0 : index
    %192 = vector.load %arg11[%c1_102, %c0_103, %c0_104] : memref<2x1x32xf32, #tpu.memory_space<vmem>>, vector<1x1x32xf32>
    %193 = vector.shape_cast %192 : vector<1x1x32xf32> to vector<1x32xf32>
    %194 = vector.broadcast %193 : vector<1x32xf32> to vector<8x32xf32>
    %195 = arith.addf %191, %194 : vector<8x32xf32>
    %196 = arith.addf %154, %195 : vector<8x32xf32>
    %c1_105 = arith.constant 1 : index
    %c0_106 = arith.constant 0 : index
    %c0_107 = arith.constant 0 : index
    %197 = vector.load %arg12[%c1_105, %c0_106, %c0_107] : memref<2x1x32xf32, #tpu.memory_space<vmem>>, vector<1x1x32xf32>
    %198 = vector.shape_cast %197 : vector<1x1x32xf32> to vector<1x32xf32>
    %c1_108 = arith.constant 1 : index
    %c0_109 = arith.constant 0 : index
    %c0_110 = arith.constant 0 : index
    %199 = vector.load %arg13[%c1_108, %c0_109, %c0_110] : memref<2x1x32xf32, #tpu.memory_space<vmem>>, vector<1x1x32xf32>
    %200 = vector.shape_cast %199 : vector<1x1x32xf32> to vector<1x32xf32>
    %cst_111 = arith.constant dense<0.000000e+00> : vector<8xf32>
    %201 = vector.multi_reduction <add>, %196, %cst_111 [1] : vector<8x32xf32> to vector<8xf32>
    %202 = vector.shape_cast %201 : vector<8xf32> to vector<8x1xf32>
    %cst_112 = arith.constant 3.200000e+01 : f32
    %203 = vector.broadcast %cst_112 : f32 to vector<8x1xf32>
    %204 = arith.divf %202, %203 : vector<8x1xf32>
    %205 = vector.broadcast %204 : vector<8x1xf32> to vector<8x32xf32>
    %206 = arith.subf %196, %205 : vector<8x32xf32>
    %207 = arith.mulf %206, %206 : vector<8x32xf32>
    %cst_113 = arith.constant dense<0.000000e+00> : vector<8xf32>
    %208 = vector.multi_reduction <add>, %207, %cst_113 [1] : vector<8x32xf32> to vector<8xf32>
    %209 = vector.shape_cast %208 : vector<8xf32> to vector<8x1xf32>
    %cst_114 = arith.constant 3.200000e+01 : f32
    %210 = vector.broadcast %cst_114 : f32 to vector<8x1xf32>
    %211 = arith.divf %209, %210 : vector<8x1xf32>
    %212 = vector.broadcast %204 : vector<8x1xf32> to vector<8x32xf32>
    %213 = arith.subf %196, %212 : vector<8x32xf32>
    %cst_115 = arith.constant 9.99999974E-6 : f32
    %214 = vector.broadcast %cst_115 : f32 to vector<8x1xf32>
    %215 = arith.addf %211, %214 : vector<8x1xf32>
    %216 = math.rsqrt %215 : vector<8x1xf32>
    %217 = vector.broadcast %216 : vector<8x1xf32> to vector<8x32xf32>
    %218 = arith.mulf %213, %217 : vector<8x32xf32>
    %219 = vector.broadcast %198 : vector<1x32xf32> to vector<8x32xf32>
    %220 = arith.mulf %218, %219 : vector<8x32xf32>
    %221 = vector.broadcast %200 : vector<1x32xf32> to vector<8x32xf32>
    %222 = arith.addf %220, %221 : vector<8x32xf32>
    %223 = arith.truncf %222 : vector<8x32xf32> to vector<8x32xbf16>
    %c1_116 = arith.constant 1 : index
    %c0_117 = arith.constant 0 : index
    %c0_118 = arith.constant 0 : index
    %224 = vector.load %arg16[%c1_116, %c0_117, %c0_118] : memref<2x32x128xbf16, #tpu.memory_space<vmem>>, vector<1x32x128xbf16>
    %225 = vector.shape_cast %224 : vector<1x32x128xbf16> to vector<32x128xbf16>
    %cst_119 = arith.constant dense<0.000000e+00> : vector<8x128xf32>
    %226 = tpu.matmul %223, %225, %cst_119 {dimension_numbers = #tpu.dot_dimension_numbers<[1], [0], [0], [1], [0, 0, 1, 1], [], []>} : vector<8x32xbf16>, vector<32x128xbf16>, vector<8x128xf32> -> vector<8x128xf32>
    %c1_120 = arith.constant 1 : index
    %c0_121 = arith.constant 0 : index
    %c0_122 = arith.constant 0 : index
    %227 = vector.load %arg17[%c1_120, %c0_121, %c0_122] : memref<2x1x128xf32, #tpu.memory_space<vmem>>, vector<1x1x128xf32>
    %228 = vector.shape_cast %227 : vector<1x1x128xf32> to vector<1x128xf32>
    %229 = vector.broadcast %228 : vector<1x128xf32> to vector<8x128xf32>
    %230 = arith.addf %226, %229 : vector<8x128xf32>
    %cst_123 = arith.constant 0.000000e+00 : f32
    %231 = vector.broadcast %cst_123 : f32 to vector<8x128xf32>
    %232 = arith.maximumf %230, %231 : vector<8x128xf32>
    %233 = arith.truncf %232 : vector<8x128xf32> to vector<8x128xbf16>
    %c1_124 = arith.constant 1 : index
    %c0_125 = arith.constant 0 : index
    %c0_126 = arith.constant 0 : index
    %234 = vector.load %arg18[%c1_124, %c0_125, %c0_126] : memref<2x128x32xbf16, #tpu.memory_space<vmem>>, vector<1x128x32xbf16>
    %235 = vector.shape_cast %234 : vector<1x128x32xbf16> to vector<128x32xbf16>
    %cst_127 = arith.constant dense<0.000000e+00> : vector<8x32xf32>
    %236 = tpu.matmul %233, %235, %cst_127 {dimension_numbers = #tpu.dot_dimension_numbers<[1], [0], [0], [1], [0, 0, 1, 1], [], []>} : vector<8x128xbf16>, vector<128x32xbf16>, vector<8x32xf32> -> vector<8x32xf32>
    %c1_128 = arith.constant 1 : index
    %c0_129 = arith.constant 0 : index
    %c0_130 = arith.constant 0 : index
    %237 = vector.load %arg19[%c1_128, %c0_129, %c0_130] : memref<2x1x32xf32, #tpu.memory_space<vmem>>, vector<1x1x32xf32>
    %238 = vector.shape_cast %237 : vector<1x1x32xf32> to vector<1x32xf32>
    %239 = vector.broadcast %238 : vector<1x32xf32> to vector<8x32xf32>
    %240 = arith.addf %236, %239 : vector<8x32xf32>
    %241 = arith.addf %222, %240 : vector<8x32xf32>
    %c1_131 = arith.constant 1 : index
    %c0_132 = arith.constant 0 : index
    %c0_133 = arith.constant 0 : index
    %242 = vector.load %arg14[%c1_131, %c0_132, %c0_133] : memref<2x1x32xf32, #tpu.memory_space<vmem>>, vector<1x1x32xf32>
    %243 = vector.shape_cast %242 : vector<1x1x32xf32> to vector<1x32xf32>
    %c1_134 = arith.constant 1 : index
    %c0_135 = arith.constant 0 : index
    %c0_136 = arith.constant 0 : index
    %244 = vector.load %arg15[%c1_134, %c0_135, %c0_136] : memref<2x1x32xf32, #tpu.memory_space<vmem>>, vector<1x1x32xf32>
    %245 = vector.shape_cast %244 : vector<1x1x32xf32> to vector<1x32xf32>
    %cst_137 = arith.constant dense<0.000000e+00> : vector<8xf32>
    %246 = vector.multi_reduction <add>, %241, %cst_137 [1] : vector<8x32xf32> to vector<8xf32>
    %247 = vector.shape_cast %246 : vector<8xf32> to vector<8x1xf32>
    %cst_138 = arith.constant 3.200000e+01 : f32
    %248 = vector.broadcast %cst_138 : f32 to vector<8x1xf32>
    %249 = arith.divf %247, %248 : vector<8x1xf32>
    %250 = vector.broadcast %249 : vector<8x1xf32> to vector<8x32xf32>
    %251 = arith.subf %241, %250 : vector<8x32xf32>
    %252 = arith.mulf %251, %251 : vector<8x32xf32>
    %cst_139 = arith.constant dense<0.000000e+00> : vector<8xf32>
    %253 = vector.multi_reduction <add>, %252, %cst_139 [1] : vector<8x32xf32> to vector<8xf32>
    %254 = vector.shape_cast %253 : vector<8xf32> to vector<8x1xf32>
    %cst_140 = arith.constant 3.200000e+01 : f32
    %255 = vector.broadcast %cst_140 : f32 to vector<8x1xf32>
    %256 = arith.divf %254, %255 : vector<8x1xf32>
    %257 = vector.broadcast %249 : vector<8x1xf32> to vector<8x32xf32>
    %258 = arith.subf %241, %257 : vector<8x32xf32>
    %cst_141 = arith.constant 9.99999974E-6 : f32
    %259 = vector.broadcast %cst_141 : f32 to vector<8x1xf32>
    %260 = arith.addf %256, %259 : vector<8x1xf32>
    %261 = math.rsqrt %260 : vector<8x1xf32>
    %262 = vector.broadcast %261 : vector<8x1xf32> to vector<8x32xf32>
    %263 = arith.mulf %258, %262 : vector<8x32xf32>
    %264 = vector.broadcast %243 : vector<1x32xf32> to vector<8x32xf32>
    %265 = arith.mulf %263, %264 : vector<8x32xf32>
    %266 = vector.broadcast %245 : vector<1x32xf32> to vector<8x32xf32>
    %267 = arith.addf %265, %266 : vector<8x32xf32>
    %268 = vector.broadcast %3 : vector<8x1xf32> to vector<8x32xf32>
    %269 = arith.mulf %267, %268 : vector<8x32xf32>
    %270 = arith.addf %269, %154 : vector<8x32xf32>
    %c1_142 = arith.constant 1 : index
    %c0_143 = arith.constant 0 : index
    %c0_144 = arith.constant 0 : index
    %271 = vector.load %arg20[%c1_142, %c0_143, %c0_144] : memref<2x1x32xf32, #tpu.memory_space<vmem>>, vector<1x1x32xf32>
    %272 = vector.shape_cast %271 : vector<1x1x32xf32> to vector<1x32xf32>
    %c1_145 = arith.constant 1 : index
    %c0_146 = arith.constant 0 : index
    %c0_147 = arith.constant 0 : index
    %273 = vector.load %arg21[%c1_145, %c0_146, %c0_147] : memref<2x1x32xf32, #tpu.memory_space<vmem>>, vector<1x1x32xf32>
    %274 = vector.shape_cast %273 : vector<1x1x32xf32> to vector<1x32xf32>
    %cst_148 = arith.constant dense<0.000000e+00> : vector<8xf32>
    %275 = vector.multi_reduction <add>, %270, %cst_148 [1] : vector<8x32xf32> to vector<8xf32>
    %276 = vector.shape_cast %275 : vector<8xf32> to vector<8x1xf32>
    %cst_149 = arith.constant 3.200000e+01 : f32
    %277 = vector.broadcast %cst_149 : f32 to vector<8x1xf32>
    %278 = arith.divf %276, %277 : vector<8x1xf32>
    %279 = vector.broadcast %278 : vector<8x1xf32> to vector<8x32xf32>
    %280 = arith.subf %270, %279 : vector<8x32xf32>
    %281 = arith.mulf %280, %280 : vector<8x32xf32>
    %cst_150 = arith.constant dense<0.000000e+00> : vector<8xf32>
    %282 = vector.multi_reduction <add>, %281, %cst_150 [1] : vector<8x32xf32> to vector<8xf32>
    %283 = vector.shape_cast %282 : vector<8xf32> to vector<8x1xf32>
    %cst_151 = arith.constant 3.200000e+01 : f32
    %284 = vector.broadcast %cst_151 : f32 to vector<8x1xf32>
    %285 = arith.divf %283, %284 : vector<8x1xf32>
    %286 = vector.broadcast %278 : vector<8x1xf32> to vector<8x32xf32>
    %287 = arith.subf %270, %286 : vector<8x32xf32>
    %cst_152 = arith.constant 9.99999974E-6 : f32
    %288 = vector.broadcast %cst_152 : f32 to vector<8x1xf32>
    %289 = arith.addf %285, %288 : vector<8x1xf32>
    %290 = math.rsqrt %289 : vector<8x1xf32>
    %291 = vector.broadcast %290 : vector<8x1xf32> to vector<8x32xf32>
    %292 = arith.mulf %287, %291 : vector<8x32xf32>
    %293 = vector.broadcast %272 : vector<1x32xf32> to vector<8x32xf32>
    %294 = arith.mulf %292, %293 : vector<8x32xf32>
    %295 = vector.broadcast %274 : vector<1x32xf32> to vector<8x32xf32>
    %296 = arith.addf %294, %295 : vector<8x32xf32>
    %297 = vector.extract_strided_slice %296 {offsets = [0, 0], sizes = [4, 32], strides = [1, 1]} : vector<8x32xf32> to vector<4x32xf32>
    %298 = arith.truncf %297 : vector<4x32xf32> to vector<4x32xbf16>
    %c0_153 = arith.constant 0 : index
    %c0_154 = arith.constant 0 : index
    %299 = vector.load %arg22[%c0_153, %c0_154] : memref<32x4xbf16, #tpu.memory_space<vmem>>, vector<32x4xbf16>
    %cst_155 = arith.constant dense<0.000000e+00> : vector<4x4xf32>
    %300 = tpu.matmul %298, %299, %cst_155 {dimension_numbers = #tpu.dot_dimension_numbers<[1], [0], [0], [1], [0, 0, 1, 1], [], []>} : vector<4x32xbf16>, vector<32x4xbf16>, vector<4x4xf32> -> vector<4x4xf32>
    %c0_156 = arith.constant 0 : index
    %c0_157 = arith.constant 0 : index
    %301 = vector.load %arg23[%c0_156, %c0_157] : memref<1x4xf32, #tpu.memory_space<vmem>>, vector<1x4xf32>
    %302 = vector.broadcast %301 : vector<1x4xf32> to vector<4x4xf32>
    %303 = arith.addf %300, %302 : vector<4x4xf32>
    %c0_158 = arith.constant 0 : index
    %c0_159 = arith.constant 0 : index
    %c0_160 = arith.constant 0 : index
    %304 = vector.load %arg4[%c0_158, %c0_159, %c0_160] : memref<1x4x1xf32, #tpu.memory_space<vmem>>, vector<1x4x1xf32>
    %305 = vector.shape_cast %304 : vector<1x4x1xf32> to vector<4x1xf32>
    %306 = vector.broadcast %305 : vector<4x1xf32> to vector<4x4xf32>
    %307 = arith.mulf %303, %306 : vector<4x4xf32>
    %c0_161 = arith.constant 0 : index
    %c0_162 = arith.constant 0 : index
    %c0_163 = arith.constant 0 : index
    %308 = vector.load %arg24[%c0_161, %c0_162, %c0_163] : memref<1x4x4xf32, #tpu.memory_space<vmem>>, vector<1x4x4xf32>
    %309 = vector.shape_cast %308 : vector<1x4x4xf32> to vector<4x4xf32>
    %310 = vector.shape_cast %307 : vector<4x4xf32> to vector<1x4x4xf32>
    tpu.vector_store %arg24[%c0_161, %c0_162, %c0_163], %310 {strides = array<i32>} : memref<1x4x4xf32, #tpu.memory_space<vmem>>, vector<1x4x4xf32>,
    return
  }
  func.func @transform_0(%arg0: i32) -> (i32, i32, i32) {
    %c0_i32 = arith.constant 0 : i32
    %c0_i32_0 = arith.constant 0 : i32
    %c0_i32_1 = arith.constant 0 : i32
    return %arg0, %c0_i32, %c0_i32_0 : i32, i32, i32
  }
  func.func @transform_1(%arg0: i32) -> (i32, i32, i32) {
    %c0_i32 = arith.constant 0 : i32
    %c0_i32_0 = arith.constant 0 : i32
    %c0_i32_1 = arith.constant 0 : i32
    return %arg0, %c0_i32, %c0_i32_0 : i32, i32, i32
  }
  func.func @transform_2(%arg0: i32) -> (i32, i32, i32) {
    %c0_i32 = arith.constant 0 : i32
    %c0_i32_0 = arith.constant 0 : i32
    %c0_i32_1 = arith.constant 0 : i32
    return %arg0, %c0_i32, %c0_i32_0 : i32, i32, i32
  }
  func.func @transform_3(%arg0: i32) -> (i32, i32, i32) {
    %c0_i32 = arith.constant 0 : i32
    %c0_i32_0 = arith.constant 0 : i32
    %c0_i32_1 = arith.constant 0 : i32
    return %arg0, %c0_i32, %c0_i32_0 : i32, i32, i32
  }
  func.func @transform_4(%arg0: i32) -> (i32, i32) {
    %c0_i32 = arith.constant 0 : i32
    %c0_i32_0 = arith.constant 0 : i32
    %c0_i32_1 = arith.constant 0 : i32
    return %c0_i32, %c0_i32_0 : i32, i32
  }
  func.func @transform_5(%arg0: i32) -> (i32, i32) {
    %c0_i32 = arith.constant 0 : i32
    %c0_i32_0 = arith.constant 0 : i32
    %c0_i32_1 = arith.constant 0 : i32
    return %c0_i32, %c0_i32_0 : i32, i32
  }
  func.func @transform_6(%arg0: i32) -> (i32, i32) {
    %c0_i32 = arith.constant 0 : i32
    %c0_i32_0 = arith.constant 0 : i32
    %c0_i32_1 = arith.constant 0 : i32
    return %c0_i32, %c0_i32_0 : i32, i32
  }
  func.func @transform_7(%arg0: i32) -> (i32, i32, i32, i32) {
    %c0_i32 = arith.constant 0 : i32
    %c0_i32_0 = arith.constant 0 : i32
    %c0_i32_1 = arith.constant 0 : i32
    %c0_i32_2 = arith.constant 0 : i32
    %c0_i32_3 = arith.constant 0 : i32
    return %c0_i32, %c0_i32_0, %c0_i32_1, %c0_i32_2 : i32, i32, i32, i32
  }
  func.func @transform_8(%arg0: i32) -> (i32, i32, i32, i32) {
    %c0_i32 = arith.constant 0 : i32
    %c0_i32_0 = arith.constant 0 : i32
    %c0_i32_1 = arith.constant 0 : i32
    %c0_i32_2 = arith.constant 0 : i32
    %c0_i32_3 = arith.constant 0 : i32
    return %c0_i32, %c0_i32_0, %c0_i32_1, %c0_i32_2 : i32, i32, i32, i32
  }
  func.func @transform_9(%arg0: i32) -> (i32, i32, i32, i32) {
    %c0_i32 = arith.constant 0 : i32
    %c0_i32_0 = arith.constant 0 : i32
    %c0_i32_1 = arith.constant 0 : i32
    %c0_i32_2 = arith.constant 0 : i32
    %c0_i32_3 = arith.constant 0 : i32
    return %c0_i32, %c0_i32_0, %c0_i32_1, %c0_i32_2 : i32, i32, i32, i32
  }
  func.func @transform_10(%arg0: i32) -> (i32, i32, i32) {
    %c0_i32 = arith.constant 0 : i32
    %c0_i32_0 = arith.constant 0 : i32
    %c0_i32_1 = arith.constant 0 : i32
    %c0_i32_2 = arith.constant 0 : i32
    return %c0_i32, %c0_i32_0, %c0_i32_1 : i32, i32, i32
  }
  func.func @transform_11(%arg0: i32) -> (i32, i32, i32) {
    %c0_i32 = arith.constant 0 : i32
    %c0_i32_0 = arith.constant 0 : i32
    %c0_i32_1 = arith.constant 0 : i32
    %c0_i32_2 = arith.constant 0 : i32
    return %c0_i32, %c0_i32_0, %c0_i32_1 : i32, i32, i32
  }
  func.func @transform_12(%arg0: i32) -> (i32, i32, i32) {
    %c0_i32 = arith.constant 0 : i32
    %c0_i32_0 = arith.constant 0 : i32
    %c0_i32_1 = arith.constant 0 : i32
    %c0_i32_2 = arith.constant 0 : i32
    return %c0_i32, %c0_i32_0, %c0_i32_1 : i32, i32, i32
  }
  func.func @transform_13(%arg0: i32) -> (i32, i32, i32) {
    %c0_i32 = arith.constant 0 : i32
    %c0_i32_0 = arith.constant 0 : i32
    %c0_i32_1 = arith.constant 0 : i32
    %c0_i32_2 = arith.constant 0 : i32
    return %c0_i32, %c0_i32_0, %c0_i32_1 : i32, i32, i32
  }
  func.func @transform_14(%arg0: i32) -> (i32, i32, i32) {
    %c0_i32 = arith.constant 0 : i32
    %c0_i32_0 = arith.constant 0 : i32
    %c0_i32_1 = arith.constant 0 : i32
    %c0_i32_2 = arith.constant 0 : i32
    return %c0_i32, %c0_i32_0, %c0_i32_1 : i32, i32, i32
  }
  func.func @transform_15(%arg0: i32) -> (i32, i32, i32) {
    %c0_i32 = arith.constant 0 : i32
    %c0_i32_0 = arith.constant 0 : i32
    %c0_i32_1 = arith.constant 0 : i32
    %c0_i32_2 = arith.constant 0 : i32
    return %c0_i32, %c0_i32_0, %c0_i32_1 : i32, i32, i32
  }
  func.func @transform_16(%arg0: i32) -> (i32, i32, i32) {
    %c0_i32 = arith.constant 0 : i32
    %c0_i32_0 = arith.constant 0 : i32
    %c0_i32_1 = arith.constant 0 : i32
    %c0_i32_2 = arith.constant 0 : i32
    return %c0_i32, %c0_i32_0, %c0_i32_1 : i32, i32, i32
  }
  func.func @transform_17(%arg0: i32) -> (i32, i32, i32) {
    %c0_i32 = arith.constant 0 : i32
    %c0_i32_0 = arith.constant 0 : i32
    %c0_i32_1 = arith.constant 0 : i32
    %c0_i32_2 = arith.constant 0 : i32
    return %c0_i32, %c0_i32_0, %c0_i32_1 : i32, i32, i32
  }
  func.func @transform_18(%arg0: i32) -> (i32, i32, i32) {
    %c0_i32 = arith.constant 0 : i32
    %c0_i32_0 = arith.constant 0 : i32
    %c0_i32_1 = arith.constant 0 : i32
    %c0_i32_2 = arith.constant 0 : i32
    return %c0_i32, %c0_i32_0, %c0_i32_1 : i32, i32, i32
  }
  func.func @transform_19(%arg0: i32) -> (i32, i32, i32) {
    %c0_i32 = arith.constant 0 : i32
    %c0_i32_0 = arith.constant 0 : i32
    %c0_i32_1 = arith.constant 0 : i32
    %c0_i32_2 = arith.constant 0 : i32
    return %c0_i32, %c0_i32_0, %c0_i32_1 : i32, i32, i32
  }
  func.func @transform_20(%arg0: i32) -> (i32, i32, i32) {
    %c0_i32 = arith.constant 0 : i32
    %c0_i32_0 = arith.constant 0 : i32
    %c0_i32_1 = arith.constant 0 : i32
    %c0_i32_2 = arith.constant 0 : i32
    return %c0_i32, %c0_i32_0, %c0_i32_1 : i32, i32, i32
  }
  func.func @transform_21(%arg0: i32) -> (i32, i32) {
    %c0_i32 = arith.constant 0 : i32
    %c0_i32_0 = arith.constant 0 : i32
    %c0_i32_1 = arith.constant 0 : i32
    return %c0_i32, %c0_i32_0 : i32, i32
  }
  func.func @transform_22(%arg0: i32) -> (i32, i32) {
    %c0_i32 = arith.constant 0 : i32
    %c0_i32_0 = arith.constant 0 : i32
    %c0_i32_1 = arith.constant 0 : i32
    return %c0_i32, %c0_i32_0 : i32, i32
  }
  func.func @transform_23(%arg0: i32) -> (i32, i32, i32) {
    %c0_i32 = arith.constant 0 : i32
    %c0_i32_0 = arith.constant 0 : i32
    %c0_i32_1 = arith.constant 0 : i32
    return %arg0, %c0_i32, %c0_i32_0 : i32, i32, i32
  }
}

</mosaic_0001>

<llo_original>
// kernel: tpu_custom_call.1
$region0: #{tpu_custom_call.1}
  #allocation0 [shape = 'u32[]', space=smem, size = 0x4, offset = 0x4, fixed_abs, tag = 'smem constant byte address 0x4 - core index']
  #allocation1 [shape = 'u32[144,128]{1,0:T(1,128)}', space=vmem, size = 0x12000, scoped, tag = 'internal scratch']
  %s0 = inlined_call_operand.hbm [shape: f32[2,8,4], index: 0, kind: input, shape index: {}]
  %s1 = inlined_call_operand.hbm [shape: f32[2,8,1], index: 1, kind: input, shape index: {}]
  %s2 = inlined_call_operand.hbm [shape: f32[2,1,8], index: 2, kind: input, shape index: {}]
  %s3 = inlined_call_operand.hbm [shape: f32[2,4,1], index: 3, kind: input, shape index: {}]
  %s4 = inlined_call_operand.hbm [shape: f32[8,32], index: 4, kind: input, shape index: {}]
  %s5 = inlined_call_operand.hbm [shape: bf16[4,32], index: 5, kind: input, shape index: {}]
  %s6 = inlined_call_operand.hbm [shape: f32[1,32], index: 6, kind: input, shape index: {}]
  %s7 = inlined_call_operand.hbm [shape: bf16[2,24,32,4], index: 7, kind: input, shape index: {}]
  %s8 = inlined_call_operand.hbm [shape: f32[2,24,1,4], index: 8, kind: input, shape index: {}]
  %s9 = inlined_call_operand.hbm [shape: bf16[2,8,4,32], index: 9, kind: input, shape index: {}]
  %s10 = inlined_call_operand.hbm [shape: f32[2,1,32], index: 10, kind: input, shape index: {}]
  %s11 = inlined_call_operand.hbm [shape: f32[2,1,32], index: 11, kind: input, shape index: {}]
  %s12 = inlined_call_operand.hbm [shape: f32[2,1,32], index: 12, kind: input, shape index: {}]
  %s13 = inlined_call_operand.hbm [shape: f32[2,1,32], index: 13, kind: input, shape index: {}]
  %s14 = inlined_call_operand.hbm [shape: f32[2,1,32], index: 14, kind: input, shape index: {}]
  %s15 = inlined_call_operand.hbm [shape: bf16[2,32,128], index: 15, kind: input, shape index: {}]
  %s16 = inlined_call_operand.hbm [shape: f32[2,1,128], index: 16, kind: input, shape index: {}]
  %s17 = inlined_call_operand.hbm [shape: bf16[2,128,32], index: 17, kind: input, shape index: {}]
  %s18 = inlined_call_operand.hbm [shape: f32[2,1,32], index: 18, kind: input, shape index: {}]
  %s19 = inlined_call_operand.hbm [shape: f32[2,1,32], index: 19, kind: input, shape index: {}]
  %s20 = inlined_call_operand.hbm [shape: f32[2,1,32], index: 20, kind: input, shape index: {}]
  %s21 = inlined_call_operand.hbm [shape: bf16[32,4], index: 21, kind: input, shape index: {}]
  %s22 = inlined_call_operand.hbm [shape: f32[1,4], index: 22, kind: input, shape index: {}]
  %s23 = inlined_call_operand.hbm [shape: f32[2,4,4], index: 23, kind: output, shape index: {}]
  %s24 = sld [smem:[#allocation0]]
  $region217: #{tpu_custom_call.1} parent=0
    _
  %s26 = ssub.s32 1, %s24
  %s27 = scalar_select 0, %s26, %s24
  $region1: #{tpu_custom_call.1} parent=0
    #allocation2 [shape = 'u8[8192]{0}', space=vmem, size = 0x2000, scoped, tag = 'input window, operand 0']
    #allocation3 [shape = 's32[2]{0}', space=sflag, size = 0x8, scoped, tag = 'scoped memory for tpu_custom_call.1']
    #allocation4 [shape = 's32[2]{0}', space=sflag, size = 0x8, scoped, tag = 'scoped memory for tpu_custom_call.1']
    #allocation5 [shape = 'u8[8192]{0}', space=vmem, size = 0x2000, scoped, tag = 'input window, operand 1']
    #allocation6 [shape = 's32[2]{0}', space=sflag, size = 0x8, scoped, tag = 'scoped memory for tpu_custom_call.1']
    #allocation7 [shape = 'u8[1024]{0}', space=vmem, size = 0x400, scoped, tag = 'input window, operand 2']
    #allocation8 [shape = 'u8[4096]{0}', space=vmem, size = 0x1000, scoped, tag = 'input window, operand 3']
    #allocation9 [shape = 's32[2]{0}', space=sflag, size = 0x8, scoped, tag = 'scoped memory for tpu_custom_call.1']
    #allocation10 [shape = 'u8[4096]{0}', space=vmem, size = 0x1000, scoped, tag = 'input window, operand 4, single buffered']
    #allocation11 [shape = 'u8[1024]{0}', space=vmem, size = 0x400, scoped, tag = 'input window, operand 5, single buffered']
    #allocation12 [shape = 's32[1]{0}', space=sflag, size = 0x4, scoped, tag = 'scoped memory for tpu_custom_call.1']
    #allocation13 [shape = 'u8[512]{0}', space=vmem, size = 0x400, scoped, tag = 'input window, operand 6, single buffered']
    #allocation14 [shape = 'u8[393216]{0}', space=vmem, size = 0x60000, scoped, tag = 'input window, operand 7, single buffered']
    #allocation15 [shape = 's32[1]{0}', space=sflag, size = 0x4, scoped, tag = 'scoped memory for tpu_custom_call.1']
    #allocation16 [shape = 'u8[24576]{0}', space=vmem, size = 0x6000, scoped, tag = 'input window, operand 8, single buffered']
    #allocation17 [shape = 'u8[16384]{0}', space=vmem, size = 0x4000, scoped, tag = 'input window, operand 9, single buffered']
    #allocation18 [shape = 's32[1]{0}', space=sflag, size = 0x4, scoped, tag = 'scoped memory for tpu_custom_call.1']
    #allocation19 [shape = 'u8[1024]{0}', space=vmem, size = 0x400, scoped, tag = 'input window, operand 10, single buffered']
    #allocation20 [shape = 'u8[1024]{0}', space=vmem, size = 0x400, scoped, tag = 'input window, operand 11, single buffered']
    #allocation21 [shape = 's32[1]{0}', space=sflag, size = 0x4, scoped, tag = 'scoped memory for tpu_custom_call.1']
    #allocation22 [shape = 'u8[1024]{0}', space=vmem, size = 0x400, scoped, tag = 'input window, operand 12, single buffered']
    #allocation23 [shape = 'u8[1024]{0}', space=vmem, size = 0x400, scoped, tag = 'input window, operand 13, single buffered']
    #allocation24 [shape = 's32[1]{0}', space=sflag, size = 0x4, scoped, tag = 'scoped memory for tpu_custom_call.1']
    #allocation25 [shape = 'u8[1024]{0}', space=vmem, size = 0x400, scoped, tag = 'input window, operand 14, single buffered']
    #allocation26 [shape = 'u8[16384]{0}', space=vmem, size = 0x4000, scoped, tag = 'input window, operand 15, single buffered']
    #allocation27 [shape = 's32[1]{0}', space=sflag, size = 0x4, scoped, tag = 'scoped memory for tpu_custom_call.1']
    #allocation28 [shape = 'u8[1024]{0}', space=vmem, size = 0x400, scoped, tag = 'input window, operand 16, single buffered']
    #allocation29 [shape = 'u8[65536]{0}', space=vmem, size = 0x10000, scoped, tag = 'input window, operand 17, single buffered']
    #allocation30 [shape = 's32[1]{0}', space=sflag, size = 0x4, scoped, tag = 'scoped memory for tpu_custom_call.1']
    #allocation31 [shape = 'u8[1024]{0}', space=vmem, size = 0x400, scoped, tag = 'input window, operand 18, single buffered']
    #allocation32 [shape = 'u8[1024]{0}', space=vmem, size = 0x400, scoped, tag = 'input window, operand 19, single buffered']
    #allocation33 [shape = 's32[1]{0}', space=sflag, size = 0x4, scoped, tag = 'scoped memory for tpu_custom_call.1']
    #allocation34 [shape = 'u8[1024]{0}', space=vmem, size = 0x400, scoped, tag = 'input window, operand 20, single buffered']
    #allocation35 [shape = 'u8[8192]{0}', space=vmem, size = 0x2000, scoped, tag = 'input window, operand 21, single buffered']
    #allocation36 [shape = 's32[1]{0}', space=sflag, size = 0x4, scoped, tag = 'scoped memory for tpu_custom_call.1']
    #allocation37 [shape = 'u8[512]{0}', space=vmem, size = 0x400, scoped, tag = 'input window, operand 22, single buffered']
    #allocation38 [shape = 'u8[4096]{0}', space=vmem, size = 0x1000, scoped, tag = 'output window, operand 0']
    %28 = vsyncpa [#allocation3], 0
    %s29 = scalar_lea.sflag [#allocation3], 1
    %30 = vsyncpa %s29, 0
    %31 = vsyncpa [#allocation6], 0
    %s32 = scalar_lea.sflag [#allocation6], 1
    %33 = vsyncpa %s32, 0
    %34 = vsyncpa [#allocation9], 0
    %s35 = scalar_lea.sflag [#allocation9], 1
    %36 = vsyncpa %s35, 0
    %37 = vsyncpa [#allocation12], 0
    %38 = vsyncpa [#allocation15], 0
    %39 = vsyncpa [#allocation18], 0
    %40 = vsyncpa [#allocation21], 0
    %41 = vsyncpa [#allocation24], 0
    %42 = vsyncpa [#allocation27], 0
    %43 = vsyncpa [#allocation30], 0
    %44 = vsyncpa [#allocation33], 0
    %45 = vsyncpa [#allocation36], 0
    %46 = vsyncpa [#allocation4], 0
    %s47 = scalar_lea.sflag [#allocation4], 1
    %48 = vsyncpa %s47, 0
    loop: start=0, step=1, limit=4
    $region2: #{tpu_custom_call.1} parent=1 // loop_pre_header
      _
    $region3: #{tpu_custom_call.1} parent=1 // loop_header
      %s50 = sphi 0, %s54
      %p51 = scmp.ge.s32.totalorder %s50, 4
      %s60 = sphi 0, %s62
      %s63 = sphi 0, %s60
      %s64 = sphi 0, %s63
      %s80 = sphi 0, %s64
      %s86 = sphi 0, %s88
      %s89 = sphi 0, %s86
      %s90 = sphi 0, %s89
      %s106 = sphi 0, %s90
      %s112 = sphi 0, %s114
      %s115 = sphi 0, %s112
      %s116 = sphi 0, %s115
      %s132 = sphi 0, %s116
      %s138 = sphi 0, %s140
      %s141 = sphi 0, %s138
      %s142 = sphi 0, %s141
      %s158 = sphi 0, %s142
      %s162 = sphi 0, %s162
      %s164 = sphi 0, %s162
      %s165 = sphi 0, %s164
      %s179 = sphi 0, %s165
      %s183 = sphi 0, %s183
      %s185 = sphi 0, %s183
      %s186 = sphi 0, %s185
      %s200 = sphi 0, %s186
      %s204 = sphi 0, %s204
      %s206 = sphi 0, %s204
      %s207 = sphi 0, %s206
      %s221 = sphi 0, %s207
      %s225 = sphi 0, %s225
      %s227 = sphi 0, %s225
      %s228 = sphi 0, %s227
      %s242 = sphi 0, %s228
      %s246 = sphi 0, %s246
      %s248 = sphi 0, %s246
      %s249 = sphi 0, %s248
      %s263 = sphi 0, %s249
      %s267 = sphi 0, %s267
      %s269 = sphi 0, %s267
      %s270 = sphi 0, %s269
      %s284 = sphi 0, %s270
      %s288 = sphi 0, %s288
      %s290 = sphi 0, %s288
      %s291 = sphi 0, %s290
      %s305 = sphi 0, %s291
      %s309 = sphi 0, %s309
      %s311 = sphi 0, %s309
      %s312 = sphi 0, %s311
      %s326 = sphi 0, %s312
      %s330 = sphi 0, %s330
      %s332 = sphi 0, %s330
      %s333 = sphi 0, %s332
      %s347 = sphi 0, %s333
      %s351 = sphi 0, %s351
      %s353 = sphi 0, %s351
      %s354 = sphi 0, %s353
      %s368 = sphi 0, %s354
      %s372 = sphi 0, %s372
      %s374 = sphi 0, %s372
      %s375 = sphi 0, %s374
      %s389 = sphi 0, %s375
      %s393 = sphi 0, %s393
      %s395 = sphi 0, %s393
      %s396 = sphi 0, %s395
      %s410 = sphi 0, %s396
      %s414 = sphi 0, %s414
      %s416 = sphi 0, %s414
      %s417 = sphi 0, %s416
      %s431 = sphi 0, %s417
      %s435 = sphi 0, %s435
      %s437 = sphi 0, %s435
      %s438 = sphi 0, %s437
      %s452 = sphi 0, %s438
      %s456 = sphi 0, %s456
      %s458 = sphi 0, %s456
      %s459 = sphi 0, %s458
      %s473 = sphi 0, %s459
      %s477 = sphi 0, %s477
      %s479 = sphi 0, %s477
      %s480 = sphi 0, %s479
      %s494 = sphi 0, %s480
      %s498 = sphi 0, %s498
      %s500 = sphi 0, %s498
      %s501 = sphi 0, %s500
      %s515 = sphi 0, %s501
      %s519 = sphi 0, %s519
      %s521 = sphi 0, %s519
      %s522 = sphi 0, %s521
      %s536 = sphi 0, %s522
      %s540 = sphi 0, %s540
      %s542 = sphi 0, %s540
      %s543 = sphi 0, %s542
      %s557 = sphi 0, %s543
      %s563 = sphi 0, %s565
      %s566 = sphi 0, %s563
      %s567 = sphi 0, %s566
      %s583 = sphi 0, %s567
    $region4: #{tpu_custom_call.1} parent=1 // loop_header_branch
      %53 = sbr.rel (%p51) target = $region8
    $region5: #{tpu_custom_call.1} parent=1 // loop_body
      %s55 = ssub.s32 %s50, 1
      %s56 = ssub.s32 %s50, 2
      %s57 = sadd.s32 %s50, 1
      %s58 = ssub.s32 %s50, %s57
      %p59 = scmp.eq.s32.totalorder %s58, 0
      %s61 = sadd.s32 %s60, 1
      %s62 = scalar_select %p59, %s60, %s61
      %p65 = pneg %p59
      %p66 = scmp.eq.s32.totalorder %s50, 1
      %p67 = por %p65, %p66
      %p68 = scmp.ne.s32.totalorder %s60, %s63
      %p69 = scmp.eq.s32.totalorder %s50, 0
      %p70 = por %p68, %p69
      %p71 = scmp.ne.s32.totalorder %s60, %s63
      %p72 = scmp.eq.s32.totalorder %s55, 1
      %p73 = por %p71, %p72
      %p74 = scmp.ne.s32.totalorder %s63, %s64
      %p75 = scmp.eq.s32.totalorder %s55, 0
      %p76 = por %p74, %p75
      %p77 = scmp.ne.s32.totalorder %s63, %s64
      %p78 = scmp.eq.s32.totalorder %s56, 1
      %p79 = por %p77, %p78
      %p81 = scmp.ne.s32.totalorder %s64, %s80
      %p82 = scmp.eq.s32.totalorder %s56, 0
      %p83 = por %p81, %p82
      %s84 = ssub.s32 %s50, %s57
      %p85 = scmp.eq.s32.totalorder %s84, 0
      %s87 = sadd.s32 %s86, 1
      %s88 = scalar_select %p85, %s86, %s87
      %p91 = pneg %p85
      %p92 = scmp.eq.s32.totalorder %s50, 1
      %p93 = por %p91, %p92
      %p94 = scmp.ne.s32.totalorder %s86, %s89
      %p95 = scmp.eq.s32.totalorder %s50, 0
      %p96 = por %p94, %p95
      %p97 = scmp.ne.s32.totalorder %s86, %s89
      %p98 = scmp.eq.s32.totalorder %s55, 1
      %p99 = por %p97, %p98
      %p100 = scmp.ne.s32.totalorder %s89, %s90
      %p101 = scmp.eq.s32.totalorder %s55, 0
      %p102 = por %p100, %p101
      %p103 = scmp.ne.s32.totalorder %s89, %s90
      %p104 = scmp.eq.s32.totalorder %s56, 1
      %p105 = por %p103, %p104
      %p107 = scmp.ne.s32.totalorder %s90, %s106
      %p108 = scmp.eq.s32.totalorder %s56, 0
      %p109 = por %p107, %p108
      %s110 = ssub.s32 %s50, %s57
      %p111 = scmp.eq.s32.totalorder %s110, 0
      %s113 = sadd.s32 %s112, 1
      %s114 = scalar_select %p111, %s112, %s113
      %p117 = pneg %p111
      %p118 = scmp.eq.s32.totalorder %s50, 1
      %p119 = por %p117, %p118
      %p120 = scmp.ne.s32.totalorder %s112, %s115
      %p121 = scmp.eq.s32.totalorder %s50, 0
      %p122 = por %p120, %p121
      %p123 = scmp.ne.s32.totalorder %s112, %s115
      %p124 = scmp.eq.s32.totalorder %s55, 1
      %p125 = por %p123, %p124
      %p126 = scmp.ne.s32.totalorder %s115, %s116
      %p127 = scmp.eq.s32.totalorder %s55, 0
      %p128 = por %p126, %p127
      %p129 = scmp.ne.s32.totalorder %s115, %s116
      %p130 = scmp.eq.s32.totalorder %s56, 1
      %p131 = por %p129, %p130
      %p133 = scmp.ne.s32.totalorder %s116, %s132
      %p134 = scmp.eq.s32.totalorder %s56, 0
      %p135 = por %p133, %p134
      %s136 = ssub.s32 %s50, %s57
      %p137 = scmp.eq.s32.totalorder %s136, 0
      %s139 = sadd.s32 %s138, 1
      %s140 = scalar_select %p137, %s138, %s139
      %p143 = pneg %p137
      %p144 = scmp.eq.s32.totalorder %s50, 1
      %p145 = por %p143, %p144
      %p146 = scmp.ne.s32.totalorder %s138, %s141
      %p147 = scmp.eq.s32.totalorder %s50, 0
      %p148 = por %p146, %p147
      %p149 = scmp.ne.s32.totalorder %s138, %s141
      %p150 = scmp.eq.s32.totalorder %s55, 1
      %p151 = por %p149, %p150
      %p152 = scmp.ne.s32.totalorder %s141, %s142
      %p153 = scmp.eq.s32.totalorder %s55, 0
      %p154 = por %p152, %p153
      %p155 = scmp.ne.s32.totalorder %s141, %s142
      %p156 = scmp.eq.s32.totalorder %s56, 1
      %p157 = por %p155, %p156
      %p159 = scmp.ne.s32.totalorder %s142, %s158
      %p160 = scmp.eq.s32.totalorder %s56, 0
      %p161 = por %p159, %p160
      %s163 = sadd.s32 %s162, 1
      %p166 = scmp.eq.s32.totalorder %s50, 1
      %p167 = scmp.ne.s32.totalorder %s162, %s164
      %p168 = scmp.eq.s32.totalorder %s50, 0
      %p169 = por %p167, %p168
      %p170 = scmp.ne.s32.totalorder %s162, %s164
      %p171 = scmp.eq.s32.totalorder %s55, 1
      %p172 = por %p170, %p171
      %p173 = scmp.ne.s32.totalorder %s164, %s165
      %p174 = scmp.eq.s32.totalorder %s55, 0
      %p175 = por %p173, %p174
      %p176 = scmp.ne.s32.totalorder %s164, %s165
      %p177 = scmp.eq.s32.totalorder %s56, 1
      %p178 = por %p176, %p177
      %p180 = scmp.ne.s32.totalorder %s165, %s179
      %p181 = scmp.eq.s32.totalorder %s56, 0
      %p182 = por %p180, %p181
      %s184 = sadd.s32 %s183, 1
      %p187 = scmp.eq.s32.totalorder %s50, 1
      %p188 = scmp.ne.s32.totalorder %s183, %s185
      %p189 = scmp.eq.s32.totalorder %s50, 0
      %p190 = por %p188, %p189
      %p191 = scmp.ne.s32.totalorder %s183, %s185
      %p192 = scmp.eq.s32.totalorder %s55, 1
      %p193 = por %p191, %p192
      %p194 = scmp.ne.s32.totalorder %s185, %s186
      %p195 = scmp.eq.s32.totalorder %s55, 0
      %p196 = por %p194, %p195
      %p197 = scmp.ne.s32.totalorder %s185, %s186
      %p198 = scmp.eq.s32.totalorder %s56, 1
      %p199 = por %p197, %p198
      %p201 = scmp.ne.s32.totalorder %s186, %s200
      %p202 = scmp.eq.s32.totalorder %s56, 0
      %p203 = por %p201, %p202
      %s205 = sadd.s32 %s204, 1
      %p208 = scmp.eq.s32.totalorder %s50, 1
      %p209 = scmp.ne.s32.totalorder %s204, %s206
      %p210 = scmp.eq.s32.totalorder %s50, 0
      %p211 = por %p209, %p210
      %p212 = scmp.ne.s32.totalorder %s204, %s206
      %p213 = scmp.eq.s32.totalorder %s55, 1
      %p214 = por %p212, %p213
      %p215 = scmp.ne.s32.totalorder %s206, %s207
      %p216 = scmp.eq.s32.totalorder %s55, 0
      %p217 = por %p215, %p216
      %p218 = scmp.ne.s32.totalorder %s206, %s207
      %p219 = scmp.eq.s32.totalorder %s56, 1
      %p220 = por %p218, %p219
      %p222 = scmp.ne.s32.totalorder %s207, %s221
      %p223 = scmp.eq.s32.totalorder %s56, 0
      %p224 = por %p222, %p223
      %s226 = sadd.s32 %s225, 1
      %p229 = scmp.eq.s32.totalorder %s50, 1
      %p230 = scmp.ne.s32.totalorder %s225, %s227
      %p231 = scmp.eq.s32.totalorder %s50, 0
      %p232 = por %p230, %p231
      %p233 = scmp.ne.s32.totalorder %s225, %s227
      %p234 = scmp.eq.s32.totalorder %s55, 1
      %p235 = por %p233, %p234
      %p236 = scmp.ne.s32.totalorder %s227, %s228
      %p237 = scmp.eq.s32.totalorder %s55, 0
      %p238 = por %p236, %p237
      %p239 = scmp.ne.s32.totalorder %s227, %s228
      %p240 = scmp.eq.s32.totalorder %s56, 1
      %p241 = por %p239, %p240
      %p243 = scmp.ne.s32.totalorder %s228, %s242
      %p244 = scmp.eq.s32.totalorder %s56, 0
      %p245 = por %p243, %p244
      %s247 = sadd.s32 %s246, 1
      %p250 = scmp.eq.s32.totalorder %s50, 1
      %p251 = scmp.ne.s32.totalorder %s246, %s248
      %p252 = scmp.eq.s32.totalorder %s50, 0
      %p253 = por %p251, %p252
      %p254 = scmp.ne.s32.totalorder %s246, %s248
      %p255 = scmp.eq.s32.totalorder %s55, 1
      %p256 = por %p254, %p255
      %p257 = scmp.ne.s32.totalorder %s248, %s249
      %p258 = scmp.eq.s32.totalorder %s55, 0
      %p259 = por %p257, %p258
      %p260 = scmp.ne.s32.totalorder %s248, %s249
      %p261 = scmp.eq.s32.totalorder %s56, 1
      %p262 = por %p260, %p261
      %p264 = scmp.ne.s32.totalorder %s249, %s263
      %p265 = scmp.eq.s32.totalorder %s56, 0
      %p266 = por %p264, %p265
      %s268 = sadd.s32 %s267, 1
      %p271 = scmp.eq.s32.totalorder %s50, 1
      %p272 = scmp.ne.s32.totalorder %s267, %s269
      %p273 = scmp.eq.s32.totalorder %s50, 0
      %p274 = por %p272, %p273
      %p275 = scmp.ne.s32.totalorder %s267, %s269
      %p276 = scmp.eq.s32.totalorder %s55, 1
      %p277 = por %p275, %p276
      %p278 = scmp.ne.s32.totalorder %s269, %s270
      %p279 = scmp.eq.s32.totalorder %s55, 0
      %p280 = por %p278, %p279
      %p281 = scmp.ne.s32.totalorder %s269, %s270
      %p282 = scmp.eq.s32.totalorder %s56, 1
      %p283 = por %p281, %p282
      %p285 = scmp.ne.s32.totalorder %s270, %s284
      %p286 = scmp.eq.s32.totalorder %s56, 0
      %p287 = por %p285, %p286
      %s289 = sadd.s32 %s288, 1
      %p292 = scmp.eq.s32.totalorder %s50, 1
      %p293 = scmp.ne.s32.totalorder %s288, %s290
      %p294 = scmp.eq.s32.totalorder %s50, 0
      %p295 = por %p293, %p294
      %p296 = scmp.ne.s32.totalorder %s288, %s290
      %p297 = scmp.eq.s32.totalorder %s55, 1
      %p298 = por %p296, %p297
      %p299 = scmp.ne.s32.totalorder %s290, %s291
      %p300 = scmp.eq.s32.totalorder %s55, 0
      %p301 = por %p299, %p300
      %p302 = scmp.ne.s32.totalorder %s290, %s291
      %p303 = scmp.eq.s32.totalorder %s56, 1
      %p304 = por %p302, %p303
      %p306 = scmp.ne.s32.totalorder %s291, %s305
      %p307 = scmp.eq.s32.totalorder %s56, 0
      %p308 = por %p306, %p307
      %s310 = sadd.s32 %s309, 1
      %p313 = scmp.eq.s32.totalorder %s50, 1
      %p314 = scmp.ne.s32.totalorder %s309, %s311
      %p315 = scmp.eq.s32.totalorder %s50, 0
      %p316 = por %p314, %p315
      %p317 = scmp.ne.s32.totalorder %s309, %s311
      %p318 = scmp.eq.s32.totalorder %s55, 1
      %p319 = por %p317, %p318
      %p320 = scmp.ne.s32.totalorder %s311, %s312
      %p321 = scmp.eq.s32.totalorder %s55, 0
      %p322 = por %p320, %p321
      %p323 = scmp.ne.s32.totalorder %s311, %s312
      %p324 = scmp.eq.s32.totalorder %s56, 1
      %p325 = por %p323, %p324
      %p327 = scmp.ne.s32.totalorder %s312, %s326
      %p328 = scmp.eq.s32.totalorder %s56, 0
      %p329 = por %p327, %p328
      %s331 = sadd.s32 %s330, 1
      %p334 = scmp.eq.s32.totalorder %s50, 1
      %p335 = scmp.ne.s32.totalorder %s330, %s332
      %p336 = scmp.eq.s32.totalorder %s50, 0
      %p337 = por %p335, %p336
      %p338 = scmp.ne.s32.totalorder %s330, %s332
      %p339 = scmp.eq.s32.totalorder %s55, 1
      %p340 = por %p338, %p339
      %p341 = scmp.ne.s32.totalorder %s332, %s333
      %p342 = scmp.eq.s32.totalorder %s55, 0
      %p343 = por %p341, %p342
      %p344 = scmp.ne.s32.totalorder %s332, %s333
      %p345 = scmp.eq.s32.totalorder %s56, 1
      %p346 = por %p344, %p345
      %p348 = scmp.ne.s32.totalorder %s333, %s347
      %p349 = scmp.eq.s32.totalorder %s56, 0
      %p350 = por %p348, %p349
      %s352 = sadd.s32 %s351, 1
      %p355 = scmp.eq.s32.totalorder %s50, 1
      %p356 = scmp.ne.s32.totalorder %s351, %s353
      %p357 = scmp.eq.s32.totalorder %s50, 0
      %p358 = por %p356, %p357
      %p359 = scmp.ne.s32.totalorder %s351, %s353
      %p360 = scmp.eq.s32.totalorder %s55, 1
      %p361 = por %p359, %p360
      %p362 = scmp.ne.s32.totalorder %s353, %s354
      %p363 = scmp.eq.s32.totalorder %s55, 0
      %p364 = por %p362, %p363
      %p365 = scmp.ne.s32.totalorder %s353, %s354
      %p366 = scmp.eq.s32.totalorder %s56, 1
      %p367 = por %p365, %p366
      %p369 = scmp.ne.s32.totalorder %s354, %s368
      %p370 = scmp.eq.s32.totalorder %s56, 0
      %p371 = por %p369, %p370
      %s373 = sadd.s32 %s372, 1
      %p376 = scmp.eq.s32.totalorder %s50, 1
      %p377 = scmp.ne.s32.totalorder %s372, %s374
      %p378 = scmp.eq.s32.totalorder %s50, 0
      %p379 = por %p377, %p378
      %p380 = scmp.ne.s32.totalorder %s372, %s374
      %p381 = scmp.eq.s32.totalorder %s55, 1
      %p382 = por %p380, %p381
      %p383 = scmp.ne.s32.totalorder %s374, %s375
      %p384 = scmp.eq.s32.totalorder %s55, 0
      %p385 = por %p383, %p384
      %p386 = scmp.ne.s32.totalorder %s374, %s375
      %p387 = scmp.eq.s32.totalorder %s56, 1
      %p388 = por %p386, %p387
      %p390 = scmp.ne.s32.totalorder %s375, %s389
      %p391 = scmp.eq.s32.totalorder %s56, 0
      %p392 = por %p390, %p391
      %s394 = sadd.s32 %s393, 1
      %p397 = scmp.eq.s32.totalorder %s50, 1
      %p398 = scmp.ne.s32.totalorder %s393, %s395
      %p399 = scmp.eq.s32.totalorder %s50, 0
      %p400 = por %p398, %p399
      %p401 = scmp.ne.s32.totalorder %s393, %s395
      %p402 = scmp.eq.s32.totalorder %s55, 1
      %p403 = por %p401, %p402
      %p404 = scmp.ne.s32.totalorder %s395, %s396
      %p405 = scmp.eq.s32.totalorder %s55, 0
      %p406 = por %p404, %p405
      %p407 = scmp.ne.s32.totalorder %s395, %s396
      %p408 = scmp.eq.s32.totalorder %s56, 1
      %p409 = por %p407, %p408
      %p411 = scmp.ne.s32.totalorder %s396, %s410
      %p412 = scmp.eq.s32.totalorder %s56, 0
      %p413 = por %p411, %p412
      %s415 = sadd.s32 %s414, 1
      %p418 = scmp.eq.s32.totalorder %s50, 1
      %p419 = scmp.ne.s32.totalorder %s414, %s416
      %p420 = scmp.eq.s32.totalorder %s50, 0
      %p421 = por %p419, %p420
      %p422 = scmp.ne.s32.totalorder %s414, %s416
      %p423 = scmp.eq.s32.totalorder %s55, 1
      %p424 = por %p422, %p423
      %p425 = scmp.ne.s32.totalorder %s416, %s417
      %p426 = scmp.eq.s32.totalorder %s55, 0
      %p427 = por %p425, %p426
      %p428 = scmp.ne.s32.totalorder %s416, %s417
      %p429 = scmp.eq.s32.totalorder %s56, 1
      %p430 = por %p428, %p429
      %p432 = scmp.ne.s32.totalorder %s417, %s431
      %p433 = scmp.eq.s32.totalorder %s56, 0
      %p434 = por %p432, %p433
      %s436 = sadd.s32 %s435, 1
      %p439 = scmp.eq.s32.totalorder %s50, 1
      %p440 = scmp.ne.s32.totalorder %s435, %s437
      %p441 = scmp.eq.s32.totalorder %s50, 0
      %p442 = por %p440, %p441
      %p443 = scmp.ne.s32.totalorder %s435, %s437
      %p444 = scmp.eq.s32.totalorder %s55, 1
      %p445 = por %p443, %p444
      %p446 = scmp.ne.s32.totalorder %s437, %s438
      %p447 = scmp.eq.s32.totalorder %s55, 0
      %p448 = por %p446, %p447
      %p449 = scmp.ne.s32.totalorder %s437, %s438
      %p450 = scmp.eq.s32.totalorder %s56, 1
      %p451 = por %p449, %p450
      %p453 = scmp.ne.s32.totalorder %s438, %s452
      %p454 = scmp.eq.s32.totalorder %s56, 0
      %p455 = por %p453, %p454
      %s457 = sadd.s32 %s456, 1
      %p460 = scmp.eq.s32.totalorder %s50, 1
      %p461 = scmp.ne.s32.totalorder %s456, %s458
      %p462 = scmp.eq.s32.totalorder %s50, 0
      %p463 = por %p461, %p462
      %p464 = scmp.ne.s32.totalorder %s456, %s458
      %p465 = scmp.eq.s32.totalorder %s55, 1
      %p466 = por %p464, %p465
      %p467 = scmp.ne.s32.totalorder %s458, %s459
      %p468 = scmp.eq.s32.totalorder %s55, 0
      %p469 = por %p467, %p468
      %p470 = scmp.ne.s32.totalorder %s458, %s459
      %p471 = scmp.eq.s32.totalorder %s56, 1
      %p472 = por %p470, %p471
      %p474 = scmp.ne.s32.totalorder %s459, %s473
      %p475 = scmp.eq.s32.totalorder %s56, 0
      %p476 = por %p474, %p475
      %s478 = sadd.s32 %s477, 1
      %p481 = scmp.eq.s32.totalorder %s50, 1
      %p482 = scmp.ne.s32.totalorder %s477, %s479
      %p483 = scmp.eq.s32.totalorder %s50, 0
      %p484 = por %p482, %p483
      %p485 = scmp.ne.s32.totalorder %s477, %s479
      %p486 = scmp.eq.s32.totalorder %s55, 1
      %p487 = por %p485, %p486
      %p488 = scmp.ne.s32.totalorder %s479, %s480
      %p489 = scmp.eq.s32.totalorder %s55, 0
      %p490 = por %p488, %p489
      %p491 = scmp.ne.s32.totalorder %s479, %s480
      %p492 = scmp.eq.s32.totalorder %s56, 1
      %p493 = por %p491, %p492
      %p495 = scmp.ne.s32.totalorder %s480, %s494
      %p496 = scmp.eq.s32.totalorder %s56, 0
      %p497 = por %p495, %p496
      %s499 = sadd.s32 %s498, 1
      %p502 = scmp.eq.s32.totalorder %s50, 1
      %p503 = scmp.ne.s32.totalorder %s498, %s500
      %p504 = scmp.eq.s32.totalorder %s50, 0
      %p505 = por %p503, %p504
      %p506 = scmp.ne.s32.totalorder %s498, %s500
      %p507 = scmp.eq.s32.totalorder %s55, 1
      %p508 = por %p506, %p507
      %p509 = scmp.ne.s32.totalorder %s500, %s501
      %p510 = scmp.eq.s32.totalorder %s55, 0
      %p511 = por %p509, %p510
      %p512 = scmp.ne.s32.totalorder %s500, %s501
      %p513 = scmp.eq.s32.totalorder %s56, 1
      %p514 = por %p512, %p513
      %p516 = scmp.ne.s32.totalorder %s501, %s515
      %p517 = scmp.eq.s32.totalorder %s56, 0
      %p518 = por %p516, %p517
      %s520 = sadd.s32 %s519, 1
      %p523 = scmp.eq.s32.totalorder %s50, 1
      %p524 = scmp.ne.s32.totalorder %s519, %s521
      %p525 = scmp.eq.s32.totalorder %s50, 0
      %p526 = por %p524, %p525
      %p527 = scmp.ne.s32.totalorder %s519, %s521
      %p528 = scmp.eq.s32.totalorder %s55, 1
      %p529 = por %p527, %p528
      %p530 = scmp.ne.s32.totalorder %s521, %s522
      %p531 = scmp.eq.s32.totalorder %s55, 0
      %p532 = por %p530, %p531
      %p533 = scmp.ne.s32.totalorder %s521, %s522
      %p534 = scmp.eq.s32.totalorder %s56, 1
      %p535 = por %p533, %p534
      %p537 = scmp.ne.s32.totalorder %s522, %s536
      %p538 = scmp.eq.s32.totalorder %s56, 0
      %p539 = por %p537, %p538
      %s541 = sadd.s32 %s540, 1
      %p544 = scmp.eq.s32.totalorder %s50, 1
      %p545 = scmp.ne.s32.totalorder %s540, %s542
      %p546 = scmp.eq.s32.totalorder %s50, 0
      %p547 = por %p545, %p546
      %p548 = scmp.ne.s32.totalorder %s540, %s542
      %p549 = scmp.eq.s32.totalorder %s55, 1
      %p550 = por %p548, %p549
      %p551 = scmp.ne.s32.totalorder %s542, %s543
      %p552 = scmp.eq.s32.totalorder %s55, 0
      %p553 = por %p551, %p552
      %p554 = scmp.ne.s32.totalorder %s542, %s543
      %p555 = scmp.eq.s32.totalorder %s56, 1
      %p556 = por %p554, %p555
      %p558 = scmp.ne.s32.totalorder %s543, %s557
      %p559 = scmp.eq.s32.totalorder %s56, 0
      %p560 = por %p558, %p559
      %s561 = ssub.s32 %s50, %s57
      %p562 = scmp.eq.s32.totalorder %s561, 0
      %s564 = sadd.s32 %s563, 1
      %s565 = scalar_select %p562, %s563, %s564
      %p568 = pneg %p562
      %p569 = scmp.eq.s32.totalorder %s50, 1
      %p570 = por %p568, %p569
      %p571 = scmp.ne.s32.totalorder %s563, %s566
      %p572 = scmp.eq.s32.totalorder %s50, 0
      %p573 = por %p571, %p572
      %p574 = scmp.ne.s32.totalorder %s563, %s566
      %p575 = scmp.eq.s32.totalorder %s55, 1
      %p576 = por %p574, %p575
      %p577 = scmp.ne.s32.totalorder %s566, %s567
      %p578 = scmp.eq.s32.totalorder %s55, 0
      %p579 = por %p577, %p578
      %p580 = scmp.ne.s32.totalorder %s566, %s567
      %p581 = scmp.eq.s32.totalorder %s56, 1
      %p582 = por %p580, %p581
      %p584 = scmp.ne.s32.totalorder %s567, %s583
      %p585 = scmp.eq.s32.totalorder %s56, 0
      %p586 = por %p584, %p585
      %p587 = scmp.le.s32.totalorder 1, %s50
      %p588 = scmp.lt.s32.totalorder %s50, 3
      %p589 = pnand %p587, %p588
      %p590 = pneg %p589
      // Predicated region
      $region9: #{tpu_custom_call.1} parent=5 // pred_check
        _
      $region10: #{tpu_custom_call.1} parent=5 // pred_check_branch
        %592 = sbr.rel (%p589) target = $region12
      $region11: #{tpu_custom_call.1} parent=5 // pred_region
        %s593 = ssub.s32 %s50, 1
        // Predicated region
        $region13: #{tpu_custom_call.1} parent=11 // pred_check
          %p594 = pneg %p175
        $region14: #{tpu_custom_call.1} parent=11 // pred_check_branch
          %596 = sbr.rel (%p594) target = $region16
        $region15: #{tpu_custom_call.1} parent=11 // pred_region
          %s598 = ssub.s32 128, 128
          %599 = vsyncadd [#allocation9], %s598
          %s601 = sshll.u32 [#allocation10], 4
          %s602 = int_to_ptr.vmem [resolvable:$true] %s601
          %604 = dma.hbm_to_vmem [thread:$0]  %s4, 128, %s602, [#allocation9]
        $region16: #{tpu_custom_call.1} parent=11 // pred_fallthru
          _
        // Predicated region
        $region17: #{tpu_custom_call.1} parent=11 // pred_check
          %p605 = pneg %p196
        $region18: #{tpu_custom_call.1} parent=11 // pred_check_branch
          %607 = sbr.rel (%p605) target = $region20
        $region19: #{tpu_custom_call.1} parent=11 // pred_region
          %s609 = ssub.s32 32, 32
          %610 = vsyncadd [#allocation12], %s609
          %s612 = sshll.u32 [#allocation11], 4
          %s613 = int_to_ptr.vmem [resolvable:$true] %s612
          %615 = dma.hbm_to_vmem [thread:$0]  %s5, 32, %s613, [#allocation12]
        $region20: #{tpu_custom_call.1} parent=11 // pred_fallthru
          _
        // Predicated region
        $region21: #{tpu_custom_call.1} parent=11 // pred_check
          %p616 = pneg %p217
        $region22: #{tpu_custom_call.1} parent=11 // pred_check_branch
          %618 = sbr.rel (%p616) target = $region24
        $region23: #{tpu_custom_call.1} parent=11 // pred_region
          %s620 = ssub.s32 16, 16
          %621 = vsyncadd [#allocation12], %s620
          %s623 = sshll.u32 [#allocation13], 4
          %s624 = int_to_ptr.vmem [resolvable:$true] %s623
          %626 = dma.hbm_to_vmem [thread:$0]  %s6, 16, %s624, [#allocation12]
        $region24: #{tpu_custom_call.1} parent=11 // pred_fallthru
          _
        // Predicated region
        $region25: #{tpu_custom_call.1} parent=11 // pred_check
          %p627 = pneg %p238
        $region26: #{tpu_custom_call.1} parent=11 // pred_check_branch
          %629 = sbr.rel (%p627) target = $region28
        $region27: #{tpu_custom_call.1} parent=11 // pred_region
          %s631 = ssub.s32 12288, 12288
          %632 = vsyncadd [#allocation15], %s631
          %s633 = sshll.u32 [#allocation14], 4
          %s634 = int_to_ptr.vmem [resolvable:$true] %s633
          %639 = dma.hbm_to_vmem [thread:$0]  %s7, 12288, %s634, [#allocation15], 64, 64, 4
        $region28: #{tpu_custom_call.1} parent=11 // pred_fallthru
          _
        // Predicated region
        $region29: #{tpu_custom_call.1} parent=11 // pred_check
          %p640 = pneg %p259
        $region30: #{tpu_custom_call.1} parent=11 // pred_check_branch
          %642 = sbr.rel (%p640) target = $region32
        $region31: #{tpu_custom_call.1} parent=11 // pred_region
          %s644 = ssub.s32 768, 768
          %645 = vsyncadd [#allocation15], %s644
          %s646 = sshll.u32 [#allocation16], 4
          %s647 = int_to_ptr.vmem [resolvable:$true] %s646
          %652 = dma.hbm_to_vmem [thread:$0]  %s8, 768, %s647, [#allocation15], 16, 16, 1
        $region32: #{tpu_custom_call.1} parent=11 // pred_fallthru
          _
        // Predicated region
        $region33: #{tpu_custom_call.1} parent=11 // pred_check
          %p653 = pneg %p280
        $region34: #{tpu_custom_call.1} parent=11 // pred_check_branch
          %655 = sbr.rel (%p653) target = $region36
        $region35: #{tpu_custom_call.1} parent=11 // pred_region
          %s657 = ssub.s32 512, 512
          %658 = vsyncadd [#allocation18], %s657
          %s659 = sshll.u32 [#allocation17], 4
          %s660 = int_to_ptr.vmem [resolvable:$true] %s659
          %665 = dma.hbm_to_vmem [thread:$0]  %s9, 512, %s660, [#allocation18], 32, 32, 2
        $region36: #{tpu_custom_call.1} parent=11 // pred_fallthru
          _
        // Predicated region
        $region37: #{tpu_custom_call.1} parent=11 // pred_check
          %p666 = pneg %p301
        $region38: #{tpu_custom_call.1} parent=11 // pred_check_branch
          %668 = sbr.rel (%p666) target = $region40
        $region39: #{tpu_custom_call.1} parent=11 // pred_region
          %s670 = ssub.s32 32, 32
          %671 = vsyncadd [#allocation18], %s670
          %s672 = sshll.u32 [#allocation19], 4
          %s673 = int_to_ptr.vmem [resolvable:$true] %s672
          %678 = dma.hbm_to_vmem [thread:$0]  %s10, 32, %s673, [#allocation18], 16, 16, 1
        $region40: #{tpu_custom_call.1} parent=11 // pred_fallthru
          _
        // Predicated region
        $region41: #{tpu_custom_call.1} parent=11 // pred_check
          %p679 = pneg %p322
        $region42: #{tpu_custom_call.1} parent=11 // pred_check_branch
          %681 = sbr.rel (%p679) target = $region44
        $region43: #{tpu_custom_call.1} parent=11 // pred_region
          %s683 = ssub.s32 32, 32
          %684 = vsyncadd [#allocation21], %s683
          %s685 = sshll.u32 [#allocation20], 4
          %s686 = int_to_ptr.vmem [resolvable:$true] %s685
          %691 = dma.hbm_to_vmem [thread:$0]  %s11, 32, %s686, [#allocation21], 16, 16, 1
        $region44: #{tpu_custom_call.1} parent=11 // pred_fallthru
          _
        // Predicated region
        $region45: #{tpu_custom_call.1} parent=11 // pred_check
          %p692 = pneg %p343
        $region46: #{tpu_custom_call.1} parent=11 // pred_check_branch
          %694 = sbr.rel (%p692) target = $region48
        $region47: #{tpu_custom_call.1} parent=11 // pred_region
          %s696 = ssub.s32 32, 32
          %697 = vsyncadd [#allocation21], %s696
          %s698 = sshll.u32 [#allocation22], 4
          %s699 = int_to_ptr.vmem [resolvable:$true] %s698
          %704 = dma.hbm_to_vmem [thread:$0]  %s12, 32, %s699, [#allocation21], 16, 16, 1
        $region48: #{tpu_custom_call.1} parent=11 // pred_fallthru
          _
        // Predicated region
        $region49: #{tpu_custom_call.1} parent=11 // pred_check
          %p705 = pneg %p364
        $region50: #{tpu_custom_call.1} parent=11 // pred_check_branch
          %707 = sbr.rel (%p705) target = $region52
        $region51: #{tpu_custom_call.1} parent=11 // pred_region
          %s709 = ssub.s32 32, 32
          %710 = vsyncadd [#allocation24], %s709
          %s711 = sshll.u32 [#allocation23], 4
          %s712 = int_to_ptr.vmem [resolvable:$true] %s711
          %717 = dma.hbm_to_vmem [thread:$0]  %s13, 32, %s712, [#allocation24], 16, 16, 1
        $region52: #{tpu_custom_call.1} parent=11 // pred_fallthru
          _
        // Predicated region
        $region53: #{tpu_custom_call.1} parent=11 // pred_check
          %p718 = pneg %p385
        $region54: #{tpu_custom_call.1} parent=11 // pred_check_branch
          %720 = sbr.rel (%p718) target = $region56
        $region55: #{tpu_custom_call.1} parent=11 // pred_region
          %s722 = ssub.s32 32, 32
          %723 = vsyncadd [#allocation24], %s722
          %s724 = sshll.u32 [#allocation25], 4
          %s725 = int_to_ptr.vmem [resolvable:$true] %s724
          %730 = dma.hbm_to_vmem [thread:$0]  %s14, 32, %s725, [#allocation24], 16, 16, 1
        $region56: #{tpu_custom_call.1} parent=11 // pred_fallthru
          _
        // Predicated region
        $region57: #{tpu_custom_call.1} parent=11 // pred_check
          %p731 = pneg %p406
        $region58: #{tpu_custom_call.1} parent=11 // pred_check_branch
          %733 = sbr.rel (%p731) target = $region60
        $region59: #{tpu_custom_call.1} parent=11 // pred_region
          %s735 = ssub.s32 512, 512
          %736 = vsyncadd [#allocation27], %s735
          %s737 = sshll.u32 [#allocation26], 4
          %s738 = int_to_ptr.vmem [resolvable:$true] %s737
          %743 = dma.hbm_to_vmem [thread:$0]  %s15, 512, %s738, [#allocation27], 64, 64, 4
        $region60: #{tpu_custom_call.1} parent=11 // pred_fallthru
          _
        // Predicated region
        $region61: #{tpu_custom_call.1} parent=11 // pred_check
          %p744 = pneg %p427
        $region62: #{tpu_custom_call.1} parent=11 // pred_check_branch
          %746 = sbr.rel (%p744) target = $region64
        $region63: #{tpu_custom_call.1} parent=11 // pred_region
          %s748 = ssub.s32 32, 32
          %749 = vsyncadd [#allocation27], %s748
          %s750 = sshll.u32 [#allocation28], 4
          %s751 = int_to_ptr.vmem [resolvable:$true] %s750
          %756 = dma.hbm_to_vmem [thread:$0]  %s16, 32, %s751, [#allocation27], 16, 16, 1
        $region64: #{tpu_custom_call.1} parent=11 // pred_fallthru
          _
        // Predicated region
        $region65: #{tpu_custom_call.1} parent=11 // pred_check
          %p757 = pneg %p448
        $region66: #{tpu_custom_call.1} parent=11 // pred_check_branch
          %759 = sbr.rel (%p757) target = $region68
        $region67: #{tpu_custom_call.1} parent=11 // pred_region
          %s761 = ssub.s32 2048, 2048
          %762 = vsyncadd [#allocation30], %s761
          %s763 = sshll.u32 [#allocation29], 4
          %s764 = int_to_ptr.vmem [resolvable:$true] %s763
          %769 = dma.hbm_to_vmem [thread:$0]  %s17, 2048, %s764, [#allocation30], 64, 64, 4
        $region68: #{tpu_custom_call.1} parent=11 // pred_fallthru
          _
        // Predicated region
        $region69: #{tpu_custom_call.1} parent=11 // pred_check
          %p770 = pneg %p469
        $region70: #{tpu_custom_call.1} parent=11 // pred_check_branch
          %772 = sbr.rel (%p770) target = $region72
        $region71: #{tpu_custom_call.1} parent=11 // pred_region
          %s774 = ssub.s32 32, 32
          %775 = vsyncadd [#allocation30], %s774
          %s776 = sshll.u32 [#allocation31], 4
          %s777 = int_to_ptr.vmem [resolvable:$true] %s776
          %782 = dma.hbm_to_vmem [thread:$0]  %s18, 32, %s777, [#allocation30], 16, 16, 1
        $region72: #{tpu_custom_call.1} parent=11 // pred_fallthru
          _
        // Predicated region
        $region73: #{tpu_custom_call.1} parent=11 // pred_check
          %p783 = pneg %p490
        $region74: #{tpu_custom_call.1} parent=11 // pred_check_branch
          %785 = sbr.rel (%p783) target = $region76
        $region75: #{tpu_custom_call.1} parent=11 // pred_region
          %s787 = ssub.s32 32, 32
          %788 = vsyncadd [#allocation33], %s787
          %s789 = sshll.u32 [#allocation32], 4
          %s790 = int_to_ptr.vmem [resolvable:$true] %s789
          %795 = dma.hbm_to_vmem [thread:$0]  %s19, 32, %s790, [#allocation33], 16, 16, 1
        $region76: #{tpu_custom_call.1} parent=11 // pred_fallthru
          _
        // Predicated region
        $region77: #{tpu_custom_call.1} parent=11 // pred_check
          %p796 = pneg %p511
        $region78: #{tpu_custom_call.1} parent=11 // pred_check_branch
          %798 = sbr.rel (%p796) target = $region80
        $region79: #{tpu_custom_call.1} parent=11 // pred_region
          %s800 = ssub.s32 32, 32
          %801 = vsyncadd [#allocation33], %s800
          %s802 = sshll.u32 [#allocation34], 4
          %s803 = int_to_ptr.vmem [resolvable:$true] %s802
          %808 = dma.hbm_to_vmem [thread:$0]  %s20, 32, %s803, [#allocation33], 16, 16, 1
        $region80: #{tpu_custom_call.1} parent=11 // pred_fallthru
          _
        // Predicated region
        $region81: #{tpu_custom_call.1} parent=11 // pred_check
          %p809 = pneg %p532
        $region82: #{tpu_custom_call.1} parent=11 // pred_check_branch
          %811 = sbr.rel (%p809) target = $region84
        $region83: #{tpu_custom_call.1} parent=11 // pred_region
          %s813 = ssub.s32 256, 256
          %814 = vsyncadd [#allocation36], %s813
          %s815 = sshll.u32 [#allocation35], 4
          %s816 = int_to_ptr.vmem [resolvable:$true] %s815
          %821 = dma.hbm_to_vmem [thread:$0]  %s21, 256, %s816, [#allocation36], 64, 64, 4
        $region84: #{tpu_custom_call.1} parent=11 // pred_fallthru
          _
        // Predicated region
        $region85: #{tpu_custom_call.1} parent=11 // pred_check
          %p822 = pneg %p553
        $region86: #{tpu_custom_call.1} parent=11 // pred_check_branch
          %824 = sbr.rel (%p822) target = $region88
        $region87: #{tpu_custom_call.1} parent=11 // pred_region
          %s826 = ssub.s32 16, 16
          %827 = vsyncadd [#allocation36], %s826
          %s829 = sshll.u32 [#allocation37], 4
          %s830 = int_to_ptr.vmem [resolvable:$true] %s829
          %832 = dma.hbm_to_vmem [thread:$0]  %s22, 16, %s830, [#allocation36]
        $region88: #{tpu_custom_call.1} parent=11 // pred_fallthru
          _
      $region12: #{tpu_custom_call.1} parent=5 // pred_fallthru
        _
      %p833 = scmp.lt.s32.totalorder %s50, 2
      // Predicated region
      $region89: #{tpu_custom_call.1} parent=5 // pred_check
        %p834 = pneg %p833
      $region90: #{tpu_custom_call.1} parent=5 // pred_check_branch
        %836 = sbr.rel (%p834) target = $region92
      $region91: #{tpu_custom_call.1} parent=5 // pred_region
        // Predicated region
        $region93: #{tpu_custom_call.1} parent=91 // pred_check
          %p837 = pneg %p70
        $region94: #{tpu_custom_call.1} parent=91 // pred_check_branch
          %839 = sbr.rel (%p837) target = $region96
        $region95: #{tpu_custom_call.1} parent=91 // pred_region
          %s840 = sand.u32 %s60, 1
          %s841 = scalar_lea.sflag [#allocation3], %s840
          %s842 = sand.u32 %s60, 1
          %s843 = smul.addr %s842, 8
          %s844 = scalar_lea.vmem [#allocation2], %s843
          %s846 = ssub.s32 128, 128
          %847 = vsyncadd %s841, %s846
          %s848 = smul.addr %s50, 128
          %s849 = scalar_lea.hbm %s0, %s848
          %s851 = sshll.u32 %s844, 4
          %s852 = int_to_ptr.vmem [resolvable:$true] %s851
          %854 = dma.hbm_to_vmem [thread:$0]  %s849, 128, %s852, %s841
        $region96: #{tpu_custom_call.1} parent=91 // pred_fallthru
          _
        // Predicated region
        $region97: #{tpu_custom_call.1} parent=91 // pred_check
          %p855 = pneg %p96
        $region98: #{tpu_custom_call.1} parent=91 // pred_check_branch
          %857 = sbr.rel (%p855) target = $region100
        $region99: #{tpu_custom_call.1} parent=91 // pred_region
          %s858 = sand.u32 %s50, 1
          %s859 = scalar_lea.sflag [#allocation6], %s858
          %s860 = sand.u32 %s86, 1
          %s861 = smul.addr %s860, 8
          %s862 = scalar_lea.vmem [#allocation5], %s861
          %s864 = ssub.s32 128, 128
          %865 = vsyncadd %s859, %s864
          %s866 = smul.addr %s50, 128
          %s867 = scalar_lea.hbm %s1, %s866
          %s869 = sshll.u32 %s862, 4
          %s870 = int_to_ptr.vmem [resolvable:$true] %s869
          %872 = dma.hbm_to_vmem [thread:$0]  %s867, 128, %s870, %s859
        $region100: #{tpu_custom_call.1} parent=91 // pred_fallthru
          _
        // Predicated region
        $region101: #{tpu_custom_call.1} parent=91 // pred_check
          %p873 = pneg %p122
        $region102: #{tpu_custom_call.1} parent=91 // pred_check_branch
          %875 = sbr.rel (%p873) target = $region104
        $region103: #{tpu_custom_call.1} parent=91 // pred_region
          %s876 = sand.u32 %s50, 1
          %s877 = scalar_lea.sflag [#allocation6], %s876
          %s878 = sand.u32 %s112, 1
          %s879 = scalar_lea.vmem [#allocation7], %s878
          %s881 = ssub.s32 16, 16
          %882 = vsyncadd %s877, %s881
          %s883 = smul.addr %s50, 16
          %s884 = scalar_lea.hbm %s2, %s883
          %s886 = sshll.u32 %s879, 4
          %s887 = int_to_ptr.vmem [resolvable:$true] %s886
          %889 = dma.hbm_to_vmem [thread:$0]  %s884, 16, %s887, %s877
        $region104: #{tpu_custom_call.1} parent=91 // pred_fallthru
          _
        // Predicated region
        $region105: #{tpu_custom_call.1} parent=91 // pred_check
          %p890 = pneg %p148
        $region106: #{tpu_custom_call.1} parent=91 // pred_check_branch
          %892 = sbr.rel (%p890) target = $region108
        $region107: #{tpu_custom_call.1} parent=91 // pred_region
          %s893 = sand.u32 %s50, 1
          %s894 = scalar_lea.sflag [#allocation9], %s893
          %s895 = sand.u32 %s138, 1
          %s896 = smul.addr %s895, 4
          %s897 = scalar_lea.vmem [#allocation8], %s896
          %s899 = ssub.s32 64, 64
          %900 = vsyncadd %s894, %s899
          %s901 = smul.addr %s50, 64
          %s902 = scalar_lea.hbm %s3, %s901
          %s904 = sshll.u32 %s897, 4
          %s905 = int_to_ptr.vmem [resolvable:$true] %s904
          %907 = dma.hbm_to_vmem [thread:$0]  %s902, 64, %s905, %s894
        $region108: #{tpu_custom_call.1} parent=91 // pred_fallthru
          _
      $region92: #{tpu_custom_call.1} parent=5 // pred_fallthru
        _
      %p908 = scmp.le.s32.totalorder 1, %s50
      %p909 = scmp.lt.s32.totalorder %s50, 3
      %p910 = pnand %p908, %p909
      %p911 = pneg %p910
      // Predicated region
      $region109: #{tpu_custom_call.1} parent=5 // pred_check
        _
      $region110: #{tpu_custom_call.1} parent=5 // pred_check_branch
        %913 = sbr.rel (%p910) target = $region112
      $region111: #{tpu_custom_call.1} parent=5 // pred_region
        %s914 = ssub.s32 %s50, 1
        %s915 = sand.u32 %s63, 1
        %s916 = scalar_lea.sflag [#allocation3], %s915
        %s917 = sand.u32 %s63, 1
        %s918 = smul.addr %s917, 8
        %s919 = scalar_lea.vmem [#allocation2], %s918
        // Predicated region
        $region113: #{tpu_custom_call.1} parent=111 // pred_check
          %p920 = pneg %p76
        $region114: #{tpu_custom_call.1} parent=111 // pred_check_branch
          %922 = sbr.rel (%p920) target = $region116
        $region115: #{tpu_custom_call.1} parent=111 // pred_region
          %923 = dma.done %s916, 128
        $region116: #{tpu_custom_call.1} parent=111 // pred_fallthru
          _
        %s924 = sand.u32 %s55, 1
        %s925 = scalar_lea.sflag [#allocation6], %s924
        %s926 = sand.u32 %s89, 1
        %s927 = smul.addr %s926, 8
        %s928 = scalar_lea.vmem [#allocation5], %s927
        // Predicated region
        $region117: #{tpu_custom_call.1} parent=111 // pred_check
          %p929 = pneg %p102
        $region118: #{tpu_custom_call.1} parent=111 // pred_check_branch
          %931 = sbr.rel (%p929) target = $region120
        $region119: #{tpu_custom_call.1} parent=111 // pred_region
          %932 = dma.done %s925, 128
        $region120: #{tpu_custom_call.1} parent=111 // pred_fallthru
          _
        %s933 = sand.u32 %s55, 1
        %s934 = scalar_lea.sflag [#allocation6], %s933
        %s935 = sand.u32 %s115, 1
        %s936 = scalar_lea.vmem [#allocation7], %s935
        // Predicated region
        $region121: #{tpu_custom_call.1} parent=111 // pred_check
          %p937 = pneg %p128
        $region122: #{tpu_custom_call.1} parent=111 // pred_check_branch
          %939 = sbr.rel (%p937) target = $region124
        $region123: #{tpu_custom_call.1} parent=111 // pred_region
          %940 = dma.done %s934, 16
        $region124: #{tpu_custom_call.1} parent=111 // pred_fallthru
          _
        %s941 = sand.u32 %s55, 1
        %s942 = scalar_lea.sflag [#allocation9], %s941
        %s943 = sand.u32 %s141, 1
        %s944 = smul.addr %s943, 4
        %s945 = scalar_lea.vmem [#allocation8], %s944
        // Predicated region
        $region125: #{tpu_custom_call.1} parent=111 // pred_check
          %p946 = pneg %p154
        $region126: #{tpu_custom_call.1} parent=111 // pred_check_branch
          %948 = sbr.rel (%p946) target = $region128
        $region127: #{tpu_custom_call.1} parent=111 // pred_region
          %949 = dma.done %s942, 64
        $region128: #{tpu_custom_call.1} parent=111 // pred_fallthru
          _
        // Predicated region
        $region129: #{tpu_custom_call.1} parent=111 // pred_check
          %p950 = pneg %p175
        $region130: #{tpu_custom_call.1} parent=111 // pred_check_branch
          %952 = sbr.rel (%p950) target = $region132
        $region131: #{tpu_custom_call.1} parent=111 // pred_region
          %953 = dma.done [#allocation9], 128
        $region132: #{tpu_custom_call.1} parent=111 // pred_fallthru
          _
        // Predicated region
        $region133: #{tpu_custom_call.1} parent=111 // pred_check
          %p954 = pneg %p196
        $region134: #{tpu_custom_call.1} parent=111 // pred_check_branch
          %956 = sbr.rel (%p954) target = $region136
        $region135: #{tpu_custom_call.1} parent=111 // pred_region
          %957 = dma.done [#allocation12], 32
        $region136: #{tpu_custom_call.1} parent=111 // pred_fallthru
          _
        // Predicated region
        $region137: #{tpu_custom_call.1} parent=111 // pred_check
          %p958 = pneg %p217
        $region138: #{tpu_custom_call.1} parent=111 // pred_check_branch
          %960 = sbr.rel (%p958) target = $region140
        $region139: #{tpu_custom_call.1} parent=111 // pred_region
          %961 = dma.done [#allocation12], 16
        $region140: #{tpu_custom_call.1} parent=111 // pred_fallthru
          _
        // Predicated region
        $region141: #{tpu_custom_call.1} parent=111 // pred_check
          %p962 = pneg %p238
        $region142: #{tpu_custom_call.1} parent=111 // pred_check_branch
          %964 = sbr.rel (%p962) target = $region144
        $region143: #{tpu_custom_call.1} parent=111 // pred_region
          %965 = dma.done [#allocation15], 12288
        $region144: #{tpu_custom_call.1} parent=111 // pred_fallthru
          _
        // Predicated region
        $region145: #{tpu_custom_call.1} parent=111 // pred_check
          %p966 = pneg %p259
        $region146: #{tpu_custom_call.1} parent=111 // pred_check_branch
          %968 = sbr.rel (%p966) target = $region148
        $region147: #{tpu_custom_call.1} parent=111 // pred_region
          %969 = dma.done [#allocation15], 768
        $region148: #{tpu_custom_call.1} parent=111 // pred_fallthru
          _
        // Predicated region
        $region149: #{tpu_custom_call.1} parent=111 // pred_check
          %p970 = pneg %p280
        $region150: #{tpu_custom_call.1} parent=111 // pred_check_branch
          %972 = sbr.rel (%p970) target = $region152
        $region151: #{tpu_custom_call.1} parent=111 // pred_region
          %973 = dma.done [#allocation18], 512
        $region152: #{tpu_custom_call.1} parent=111 // pred_fallthru
          _
        // Predicated region
        $region153: #{tpu_custom_call.1} parent=111 // pred_check
          %p974 = pneg %p301
        $region154: #{tpu_custom_call.1} parent=111 // pred_check_branch
          %976 = sbr.rel (%p974) target = $region156
        $region155: #{tpu_custom_call.1} parent=111 // pred_region
          %977 = dma.done [#allocation18], 32
        $region156: #{tpu_custom_call.1} parent=111 // pred_fallthru
          _
        // Predicated region
        $region157: #{tpu_custom_call.1} parent=111 // pred_check
          %p978 = pneg %p322
        $region158: #{tpu_custom_call.1} parent=111 // pred_check_branch
          %980 = sbr.rel (%p978) target = $region160
        $region159: #{tpu_custom_call.1} parent=111 // pred_region
          %981 = dma.done [#allocation21], 32
        $region160: #{tpu_custom_call.1} parent=111 // pred_fallthru
          _
        // Predicated region
        $region161: #{tpu_custom_call.1} parent=111 // pred_check
          %p982 = pneg %p343
        $region162: #{tpu_custom_call.1} parent=111 // pred_check_branch
          %984 = sbr.rel (%p982) target = $region164
        $region163: #{tpu_custom_call.1} parent=111 // pred_region
          %985 = dma.done [#allocation21], 32
        $region164: #{tpu_custom_call.1} parent=111 // pred_fallthru
          _
        // Predicated region
        $region165: #{tpu_custom_call.1} parent=111 // pred_check
          %p986 = pneg %p364
        $region166: #{tpu_custom_call.1} parent=111 // pred_check_branch
          %988 = sbr.rel (%p986) target = $region168
        $region167: #{tpu_custom_call.1} parent=111 // pred_region
          %989 = dma.done [#allocation24], 32
        $region168: #{tpu_custom_call.1} parent=111 // pred_fallthru
          _
        // Predicated region
        $region169: #{tpu_custom_call.1} parent=111 // pred_check
          %p990 = pneg %p385
        $region170: #{tpu_custom_call.1} parent=111 // pred_check_branch
          %992 = sbr.rel (%p990) target = $region172
        $region171: #{tpu_custom_call.1} parent=111 // pred_region
          %993 = dma.done [#allocation24], 32
        $region172: #{tpu_custom_call.1} parent=111 // pred_fallthru
          _
        // Predicated region
        $region173: #{tpu_custom_call.1} parent=111 // pred_check
          %p994 = pneg %p406
        $region174: #{tpu_custom_call.1} parent=111 // pred_check_branch
          %996 = sbr.rel (%p994) target = $region176
        $region175: #{tpu_custom_call.1} parent=111 // pred_region
          %997 = dma.done [#allocation27], 512
        $region176: #{tpu_custom_call.1} parent=111 // pred_fallthru
          _
        // Predicated region
        $region177: #{tpu_custom_call.1} parent=111 // pred_check
          %p998 = pneg %p427
        $region178: #{tpu_custom_call.1} parent=111 // pred_check_branch
          %1000 = sbr.rel (%p998) target = $region180
        $region179: #{tpu_custom_call.1} parent=111 // pred_region
          %1001 = dma.done [#allocation27], 32
        $region180: #{tpu_custom_call.1} parent=111 // pred_fallthru
          _
        // Predicated region
        $region181: #{tpu_custom_call.1} parent=111 // pred_check
          %p1002 = pneg %p448
        $region182: #{tpu_custom_call.1} parent=111 // pred_check_branch
          %1004 = sbr.rel (%p1002) target = $region184
        $region183: #{tpu_custom_call.1} parent=111 // pred_region
          %1005 = dma.done [#allocation30], 2048
        $region184: #{tpu_custom_call.1} parent=111 // pred_fallthru
          _
        // Predicated region
        $region185: #{tpu_custom_call.1} parent=111 // pred_check
          %p1006 = pneg %p469
        $region186: #{tpu_custom_call.1} parent=111 // pred_check_branch
          %1008 = sbr.rel (%p1006) target = $region188
        $region187: #{tpu_custom_call.1} parent=111 // pred_region
          %1009 = dma.done [#allocation30], 32
        $region188: #{tpu_custom_call.1} parent=111 // pred_fallthru
          _
        // Predicated region
        $region189: #{tpu_custom_call.1} parent=111 // pred_check
          %p1010 = pneg %p490
        $region190: #{tpu_custom_call.1} parent=111 // pred_check_branch
          %1012 = sbr.rel (%p1010) target = $region192
        $region191: #{tpu_custom_call.1} parent=111 // pred_region
          %1013 = dma.done [#allocation33], 32
        $region192: #{tpu_custom_call.1} parent=111 // pred_fallthru
          _
        // Predicated region
        $region193: #{tpu_custom_call.1} parent=111 // pred_check
          %p1014 = pneg %p511
        $region194: #{tpu_custom_call.1} parent=111 // pred_check_branch
          %1016 = sbr.rel (%p1014) target = $region196
        $region195: #{tpu_custom_call.1} parent=111 // pred_region
          %1017 = dma.done [#allocation33], 32
        $region196: #{tpu_custom_call.1} parent=111 // pred_fallthru
          _
        // Predicated region
        $region197: #{tpu_custom_call.1} parent=111 // pred_check
          %p1018 = pneg %p532
        $region198: #{tpu_custom_call.1} parent=111 // pred_check_branch
          %1020 = sbr.rel (%p1018) target = $region200
        $region199: #{tpu_custom_call.1} parent=111 // pred_region
          %1021 = dma.done [#allocation36], 256
        $region200: #{tpu_custom_call.1} parent=111 // pred_fallthru
          _
        // Predicated region
        $region201: #{tpu_custom_call.1} parent=111 // pred_check
          %p1022 = pneg %p553
        $region202: #{tpu_custom_call.1} parent=111 // pred_check_branch
          %1024 = sbr.rel (%p1022) target = $region204
        $region203: #{tpu_custom_call.1} parent=111 // pred_region
          %1025 = dma.done [#allocation36], 16
        $region204: #{tpu_custom_call.1} parent=111 // pred_fallthru
          _
        %s1026 = sand.u32 %s63, 1
        %s1027 = scalar_lea.sflag [#allocation3], %s1026
        %s1028 = sand.u32 %s63, 1
        %s1029 = smul.addr %s1028, 8
        %s1030 = scalar_lea.vmem [#allocation2], %s1029
        %p1031 = pneg %p76
        %p1032 = pneg %p73
        %s1033 = sand.u32 %s55, 1
        %s1034 = scalar_lea.sflag [#allocation6], %s1033
        %s1035 = sand.u32 %s89, 1
        %s1036 = smul.addr %s1035, 8
        %s1037 = scalar_lea.vmem [#allocation5], %s1036
        %p1038 = pneg %p102
        %p1039 = pneg %p99
        %s1040 = sand.u32 %s55, 1
        %s1041 = scalar_lea.sflag [#allocation6], %s1040
        %s1042 = sand.u32 %s115, 1
        %s1043 = scalar_lea.vmem [#allocation7], %s1042
        %p1044 = pneg %p128
        %p1045 = pneg %p125
        %s1046 = sand.u32 %s55, 1
        %s1047 = scalar_lea.sflag [#allocation9], %s1046
        %s1048 = sand.u32 %s141, 1
        %s1049 = smul.addr %s1048, 4
        %s1050 = scalar_lea.vmem [#allocation8], %s1049
        %p1051 = pneg %p154
        %p1052 = pneg %p151
        %p1053 = pneg %p175
        %p1054 = pneg %p172
        %p1055 = pneg %p196
        %p1056 = pneg %p193
        %p1057 = pneg %p217
        %p1058 = pneg %p214
        %p1059 = pneg %p238
        %p1060 = pneg %p235
        %p1061 = pneg %p259
        %p1062 = pneg %p256
        %p1063 = pneg %p280
        %p1064 = pneg %p277
        %p1065 = pneg %p301
        %p1066 = pneg %p298
        %p1067 = pneg %p322
        %p1068 = pneg %p319
        %p1069 = pneg %p343
        %p1070 = pneg %p340
        %p1071 = pneg %p364
        %p1072 = pneg %p361
        %p1073 = pneg %p385
        %p1074 = pneg %p382
        %p1075 = pneg %p406
        %p1076 = pneg %p403
        %p1077 = pneg %p427
        %p1078 = pneg %p424
        %p1079 = pneg %p448
        %p1080 = pneg %p445
        %p1081 = pneg %p469
        %p1082 = pneg %p466
        %p1083 = pneg %p490
        %p1084 = pneg %p487
        %p1085 = pneg %p511
        %p1086 = pneg %p508
        %p1087 = pneg %p532
        %p1088 = pneg %p529
        %p1089 = pneg %p553
        %p1090 = pneg %p550
        %p1091 = pneg %p579
        %p1092 = pneg %p576
        %s1093 = sand.u32 %s566, 1
        %s1094 = scalar_lea.sflag [#allocation4], %s1093
        %s1095 = sand.u32 %s566, 1
        %s1096 = smul.addr %s1095, 4
        %s1097 = scalar_lea.vmem [#allocation38], %s1096
        %v1099 = vld [vmem:[%s919] sm:$0xff]
        %v1100 = vld [vmem:[%s928] sm:$0xff]
        %v1101 = vld [vmem:[%s936] sm:$0x1]
        %v1102 = vpack.c.bf16 %v1099, %v1099
        %v1103 = vld [vmem:[#allocation11] sm:$0x3]
        %v1104 = vld [vmem:[#allocation13] sm:$0x1]
        %v1106 = vlaneseq
        %v1107 = vshrl.u32 %v1106, 7
        %v1108 = vsub.s32 0, %v1107
        %v1109 = vrot.slane %v1104, %v1108
        %vm1111 = vcmask 31744
        %v1113 = vsel %vm1111, %v1102, 0
        %vm1115 = vcmask 1041408
        %v1117 = vsel %vm1115, %v1103, 0
        %1119 = vmatprep.subr.bf16.mxu0 0
        %1120 = vmatpush1.bf16.msra.mxu0 %v1117
        %1121 = vmatprep.subr.bf16.mxu0 0
        %1122 = vmatpush1.bf16.msra.mxu0 0
        %1123 = vmatprep.subr.bf16.mxu0 0
        %1124 = vmatpush1.bf16.msra.mxu0 0
        %1125 = vmatprep.subr.bf16.mxu0 0
        %1126 = vmatpush1.bf16.msra.mxu0 0
        %1127 = vmatprep.subr.bf16.mxu0 0
        %1128 = vmatpush1.bf16.msra.mxu0 0
        %1129 = vmatprep.subr.bf16.mxu0 0
        %1130 = vmatpush1.bf16.msra.mxu0 0
        %1131 = vmatprep.subr.bf16.mxu0 0
        %1132 = vmatpush1.bf16.msra.mxu0 0
        %1133 = vmatprep.subr.bf16.mxu0 0
        %1134 = vmatpush1.bf16.msra.mxu0 0
        %1135 = vmatprep.subr.bf16.mxu0 0
        %1136 = vmatpush1.bf16.msra.mxu0 0
        %1137 = vmatprep.subr.bf16.mxu0 0
        %1138 = vmatpush1.bf16.msra.mxu0 0
        %1139 = vmatprep.subr.bf16.mxu0 0
        %1140 = vmatpush1.bf16.msra.mxu0 0
        %1141 = vmatprep.subr.bf16.mxu0 0
        %1142 = vmatpush1.bf16.msra.mxu0 0
        %1143 = vmatprep.subr.bf16.mxu0 0
        %1144 = vmatpush1.bf16.msra.mxu0 0
        %1145 = vmatprep.subr.bf16.mxu0 0
        %1146 = vmatpush1.bf16.msra.mxu0 0
        %1147 = vmatprep.subr.bf16.mxu0 0
        %1148 = vmatpush1.bf16.msra.mxu0 0
        %1149 = vmatprep.subr.bf16.mxu0 0
        %1150 = vmatpush1.bf16.msra.mxu0 0
        %1151 = vmatprep.mubr.bf16.mxu0 0
        %1152 = vmatmul.mubr.bf16.gmra.mrb[0].mxu0 %v1113
        %v1153 = vpop.f32.mrb[0].mxu0
        %v1154 = vadd.f32 %v1109, %v1153
        %v1155 = vpop.f32.mrb[0].mxu0
        %v1156 = vpop.f32.mrb[0].mxu0
        %v1157 = vpop.f32.mrb[0].mxu0
        %1158 = vdwg.mxu0
        %v1159 = vld [vmem:[#allocation10] sm:$0xff]
        %v1160 = vadd.f32 %v1154, %v1159
        %v1161 = vpack.c.bf16 %v1160, %v1160
        %v1162 = vld [vmem:[#allocation14] sm:$0xf]
        %v1163 = vld [vmem:[#allocation14 + $0x4] sm:$0xf]
        %v1164 = vld [vmem:[#allocation14 + $0x8] sm:$0xf]
        %v1165 = vld [vmem:[#allocation14 + $0xc] sm:$0xf]
        %v1166 = vld [vmem:[#allocation14 + $0x10] sm:$0xf]
        %v1167 = vld [vmem:[#allocation14 + $0x14] sm:$0xf]
        %v1168 = vld [vmem:[#allocation14 + $0x18] sm:$0xf]
        %v1169 = vld [vmem:[#allocation14 + $0x1c] sm:$0xf]
        %v1170 = vld [vmem:[#allocation14 + $0x20] sm:$0xf]
        %v1171 = vld [vmem:[#allocation14 + $0x24] sm:$0xf]
        %v1172 = vld [vmem:[#allocation14 + $0x28] sm:$0xf]
        %v1173 = vld [vmem:[#allocation14 + $0x2c] sm:$0xf]
        %v1174 = vld [vmem:[#allocation14 + $0x30] sm:$0xf]
        %v1175 = vld [vmem:[#allocation14 + $0x34] sm:$0xf]
        %v1176 = vld [vmem:[#allocation14 + $0x38] sm:$0xf]
        %v1177 = vld [vmem:[#allocation14 + $0x3c] sm:$0xf]
        %v1178 = vld [vmem:[#allocation14 + $0x40] sm:$0xf]
        %v1179 = vld [vmem:[#allocation14 + $0x44] sm:$0xf]
        %v1180 = vld [vmem:[#allocation14 + $0x48] sm:$0xf]
        %v1181 = vld [vmem:[#allocation14 + $0x4c] sm:$0xf]
        %v1182 = vld [vmem:[#allocation14 + $0x50] sm:$0xf]
        %v1183 = vld [vmem:[#allocation14 + $0x54] sm:$0xf]
        %v1184 = vld [vmem:[#allocation14 + $0x58] sm:$0xf]
        %v1185 = vld [vmem:[#allocation14 + $0x5c] sm:$0xf]
        %v1186 = vld [vmem:[#allocation14 + $0x60] sm:$0xf]
        %v1187 = vld [vmem:[#allocation14 + $0x64] sm:$0xf]
        %v1188 = vld [vmem:[#allocation14 + $0x68] sm:$0xf]
        %v1189 = vld [vmem:[#allocation14 + $0x6c] sm:$0xf]
        %v1190 = vld [vmem:[#allocation14 + $0x70] sm:$0xf]
        %v1191 = vld [vmem:[#allocation14 + $0x74] sm:$0xf]
        %v1192 = vld [vmem:[#allocation14 + $0x78] sm:$0xf]
        %v1193 = vld [vmem:[#allocation14 + $0x7c] sm:$0xf]
        %v1194 = vld [vmem:[#allocation14 + $0x80] sm:$0xf]
        %v1195 = vld [vmem:[#allocation14 + $0x84] sm:$0xf]
        %v1196 = vld [vmem:[#allocation14 + $0x88] sm:$0xf]
        %v1197 = vld [vmem:[#allocation14 + $0x8c] sm:$0xf]
        %v1198 = vld [vmem:[#allocation14 + $0x90] sm:$0xf]
        %v1199 = vld [vmem:[#allocation14 + $0x94] sm:$0xf]
        %v1200 = vld [vmem:[#allocation14 + $0x98] sm:$0xf]
        %v1201 = vld [vmem:[#allocation14 + $0x9c] sm:$0xf]
        %v1202 = vld [vmem:[#allocation14 + $0xa0] sm:$0xf]
        %v1203 = vld [vmem:[#allocation14 + $0xa4] sm:$0xf]
        %v1204 = vld [vmem:[#allocation14 + $0xa8] sm:$0xf]
        %v1205 = vld [vmem:[#allocation14 + $0xac] sm:$0xf]
        %v1206 = vld [vmem:[#allocation14 + $0xb0] sm:$0xf]
        %v1207 = vld [vmem:[#allocation14 + $0xb4] sm:$0xf]
        %v1208 = vld [vmem:[#allocation14 + $0xb8] sm:$0xf]
        %v1209 = vld [vmem:[#allocation14 + $0xbc] sm:$0xf]
        %v1210 = vld [vmem:[#allocation14 + $0xc0] sm:$0xf]
        %v1211 = vld [vmem:[#allocation14 + $0xc4] sm:$0xf]
        %v1212 = vld [vmem:[#allocation14 + $0xc8] sm:$0xf]
        %v1213 = vld [vmem:[#allocation14 + $0xcc] sm:$0xf]
        %v1214 = vld [vmem:[#allocation14 + $0xd0] sm:$0xf]
        %v1215 = vld [vmem:[#allocation14 + $0xd4] sm:$0xf]
        %v1216 = vld [vmem:[#allocation14 + $0xd8] sm:$0xf]
        %v1217 = vld [vmem:[#allocation14 + $0xdc] sm:$0xf]
        %v1218 = vld [vmem:[#allocation14 + $0xe0] sm:$0xf]
        %v1219 = vld [vmem:[#allocation14 + $0xe4] sm:$0xf]
        %v1220 = vld [vmem:[#allocation14 + $0xe8] sm:$0xf]
        %v1221 = vld [vmem:[#allocation14 + $0xec] sm:$0xf]
        %v1222 = vld [vmem:[#allocation14 + $0xf0] sm:$0xf]
        %v1223 = vld [vmem:[#allocation14 + $0xf4] sm:$0xf]
        %v1224 = vld [vmem:[#allocation14 + $0xf8] sm:$0xf]
        %v1225 = vld [vmem:[#allocation14 + $0xfc] sm:$0xf]
        %v1226 = vld [vmem:[#allocation14 + $0x100] sm:$0xf]
        %v1227 = vld [vmem:[#allocation14 + $0x104] sm:$0xf]
        %v1228 = vld [vmem:[#allocation14 + $0x108] sm:$0xf]
        %v1229 = vld [vmem:[#allocation14 + $0x10c] sm:$0xf]
        %v1230 = vld [vmem:[#allocation14 + $0x110] sm:$0xf]
        %v1231 = vld [vmem:[#allocation14 + $0x114] sm:$0xf]
        %v1232 = vld [vmem:[#allocation14 + $0x118] sm:$0xf]
        %v1233 = vld [vmem:[#allocation14 + $0x11c] sm:$0xf]
        %v1234 = vld [vmem:[#allocation14 + $0x120] sm:$0xf]
        %v1235 = vld [vmem:[#allocation14 + $0x124] sm:$0xf]
        %v1236 = vld [vmem:[#allocation14 + $0x128] sm:$0xf]
        %v1237 = vld [vmem:[#allocation14 + $0x12c] sm:$0xf]
        %v1238 = vld [vmem:[#allocation14 + $0x130] sm:$0xf]
        %v1239 = vld [vmem:[#allocation14 + $0x134] sm:$0xf]
        %v1240 = vld [vmem:[#allocation14 + $0x138] sm:$0xf]
        %v1241 = vld [vmem:[#allocation14 + $0x13c] sm:$0xf]
        %v1242 = vld [vmem:[#allocation14 + $0x140] sm:$0xf]
        %v1243 = vld [vmem:[#allocation14 + $0x144] sm:$0xf]
        %v1244 = vld [vmem:[#allocation14 + $0x148] sm:$0xf]
        %v1245 = vld [vmem:[#allocation14 + $0x14c] sm:$0xf]
        %v1246 = vld [vmem:[#allocation14 + $0x150] sm:$0xf]
        %v1247 = vld [vmem:[#allocation14 + $0x154] sm:$0xf]
        %v1248 = vld [vmem:[#allocation14 + $0x158] sm:$0xf]
        %v1249 = vld [vmem:[#allocation14 + $0x15c] sm:$0xf]
        %v1250 = vld [vmem:[#allocation14 + $0x160] sm:$0xf]
        %v1251 = vld [vmem:[#allocation14 + $0x164] sm:$0xf]
        %v1252 = vld [vmem:[#allocation14 + $0x168] sm:$0xf]
        %v1253 = vld [vmem:[#allocation14 + $0x16c] sm:$0xf]
        %v1254 = vld [vmem:[#allocation14 + $0x170] sm:$0xf]
        %v1255 = vld [vmem:[#allocation14 + $0x174] sm:$0xf]
        %v1256 = vld [vmem:[#allocation14 + $0x178] sm:$0xf]
        %v1257 = vld [vmem:[#allocation14 + $0x17c] sm:$0xf]
        %v1258 = vld [vmem:[#allocation16] sm:$0x1]
        %v1259 = vld [vmem:[#allocation16 + $0x1] sm:$0x1]
        %v1260 = vld [vmem:[#allocation16 + $0x2] sm:$0x1]
        %v1261 = vld [vmem:[#allocation16 + $0x3] sm:$0x1]
        %v1262 = vld [vmem:[#allocation16 + $0x4] sm:$0x1]
        %v1263 = vld [vmem:[#allocation16 + $0x5] sm:$0x1]
        %v1264 = vld [vmem:[#allocation16 + $0x6] sm:$0x1]
        %v1265 = vld [vmem:[#allocation16 + $0x7] sm:$0x1]
        %v1266 = vld [vmem:[#allocation16 + $0x8] sm:$0x1]
        %v1267 = vld [vmem:[#allocation16 + $0x9] sm:$0x1]
        %v1268 = vld [vmem:[#allocation16 + $0xa] sm:$0x1]
        %v1269 = vld [vmem:[#allocation16 + $0xb] sm:$0x1]
        %v1270 = vld [vmem:[#allocation16 + $0xc] sm:$0x1]
        %v1271 = vld [vmem:[#allocation16 + $0xd] sm:$0x1]
        %v1272 = vld [vmem:[#allocation16 + $0xe] sm:$0x1]
        %v1273 = vld [vmem:[#allocation16 + $0xf] sm:$0x1]
        %v1274 = vld [vmem:[#allocation16 + $0x10] sm:$0x1]
        %v1275 = vld [vmem:[#allocation16 + $0x11] sm:$0x1]
        %v1276 = vld [vmem:[#allocation16 + $0x12] sm:$0x1]
        %v1277 = vld [vmem:[#allocation16 + $0x13] sm:$0x1]
        %v1278 = vld [vmem:[#allocation16 + $0x14] sm:$0x1]
        %v1279 = vld [vmem:[#allocation16 + $0x15] sm:$0x1]
        %v1280 = vld [vmem:[#allocation16 + $0x16] sm:$0x1]
        %v1281 = vld [vmem:[#allocation16 + $0x17] sm:$0x1]
        %v1306 = vlaneseq
        %v1307 = vshrl.u32 %v1306, 7
        %v1308 = vsub.s32 0, %v1307
        %v1309 = vrot.slane %v1258, %v1308
        %v1310 = vlaneseq
        %v1311 = vshrl.u32 %v1310, 7
        %v1312 = vsub.s32 0, %v1311
        %v1313 = vrot.slane %v1259, %v1312
        %v1314 = vlaneseq
        %v1315 = vshrl.u32 %v1314, 7
        %v1316 = vsub.s32 0, %v1315
        %v1317 = vrot.slane %v1260, %v1316
        %v1318 = vlaneseq
        %v1319 = vshrl.u32 %v1318, 7
        %v1320 = vsub.s32 0, %v1319
        %v1321 = vrot.slane %v1261, %v1320
        %v1322 = vlaneseq
        %v1323 = vshrl.u32 %v1322, 7
        %v1324 = vsub.s32 0, %v1323
        %v1325 = vrot.slane %v1262, %v1324
        %v1326 = vlaneseq
        %v1327 = vshrl.u32 %v1326, 7
        %v1328 = vsub.s32 0, %v1327
        %v1329 = vrot.slane %v1263, %v1328
        %v1330 = vlaneseq
        %v1331 = vshrl.u32 %v1330, 7
        %v1332 = vsub.s32 0, %v1331
        %v1333 = vrot.slane %v1264, %v1332
        %v1334 = vlaneseq
        %v1335 = vshrl.u32 %v1334, 7
        %v1336 = vsub.s32 0, %v1335
        %v1337 = vrot.slane %v1265, %v1336
        %v1338 = vlaneseq
        %v1339 = vshrl.u32 %v1338, 7
        %v1340 = vsub.s32 0, %v1339
        %v1341 = vrot.slane %v1266, %v1340
        %v1342 = vlaneseq
        %v1343 = vshrl.u32 %v1342, 7
        %v1344 = vsub.s32 0, %v1343
        %v1345 = vrot.slane %v1267, %v1344
        %v1346 = vlaneseq
        %v1347 = vshrl.u32 %v1346, 7
        %v1348 = vsub.s32 0, %v1347
        %v1349 = vrot.slane %v1268, %v1348
        %v1350 = vlaneseq
        %v1351 = vshrl.u32 %v1350, 7
        %v1352 = vsub.s32 0, %v1351
        %v1353 = vrot.slane %v1269, %v1352
        %v1354 = vlaneseq
        %v1355 = vshrl.u32 %v1354, 7
        %v1356 = vsub.s32 0, %v1355
        %v1357 = vrot.slane %v1270, %v1356
        %v1358 = vlaneseq
        %v1359 = vshrl.u32 %v1358, 7
        %v1360 = vsub.s32 0, %v1359
        %v1361 = vrot.slane %v1271, %v1360
        %v1362 = vlaneseq
        %v1363 = vshrl.u32 %v1362, 7
        %v1364 = vsub.s32 0, %v1363
        %v1365 = vrot.slane %v1272, %v1364
        %v1366 = vlaneseq
        %v1367 = vshrl.u32 %v1366, 7
        %v1368 = vsub.s32 0, %v1367
        %v1369 = vrot.slane %v1273, %v1368
        %v1370 = vlaneseq
        %v1371 = vshrl.u32 %v1370, 7
        %v1372 = vsub.s32 0, %v1371
        %v1373 = vrot.slane %v1274, %v1372
        %v1374 = vlaneseq
        %v1375 = vshrl.u32 %v1374, 7
        %v1376 = vsub.s32 0, %v1375
        %v1377 = vrot.slane %v1275, %v1376
        %v1378 = vlaneseq
        %v1379 = vshrl.u32 %v1378, 7
        %v1380 = vsub.s32 0, %v1379
        %v1381 = vrot.slane %v1276, %v1380
        %v1382 = vlaneseq
        %v1383 = vshrl.u32 %v1382, 7
        %v1384 = vsub.s32 0, %v1383
        %v1385 = vrot.slane %v1277, %v1384
        %v1386 = vlaneseq
        %v1387 = vshrl.u32 %v1386, 7
        %v1388 = vsub.s32 0, %v1387
        %v1389 = vrot.slane %v1278, %v1388
        %v1390 = vlaneseq
        %v1391 = vshrl.u32 %v1390, 7
        %v1392 = vsub.s32 0, %v1391
        %v1393 = vrot.slane %v1279, %v1392
        %v1394 = vlaneseq
        %v1395 = vshrl.u32 %v1394, 7
        %v1396 = vsub.s32 0, %v1395
        %v1397 = vrot.slane %v1280, %v1396
        %v1398 = vlaneseq
        %v1399 = vshrl.u32 %v1398, 7
        %v1400 = vsub.s32 0, %v1399
        %v1401 = vrot.slane %v1281, %v1400
        %v1430 = vunpack.c.l.b16 %v1162
        %v1431 = vunpack.c.l.b16 %v1163
        %v1432 = vunpack.c.l.b16 %v1164
        %v1433 = vunpack.c.l.b16 %v1165
        %v1434 = vpack.c.b16 %v1431, %v1430
        %v1435 = vpack.c.b16 %v1433, %v1432
        %vm1438 = vcmask 261120
        %v1440 = vsel %vm1438, %v1161, 0
        %1442 = vmatprep.subr.bf16.mxu0 0
        %1443 = vmatpush1.bf16.msra.mxu0 %v1434
        %1444 = vmatprep.subr.bf16.mxu0 0
        %1445 = vmatpush1.bf16.msra.mxu0 %v1435
        %1446 = vmatprep.subr.bf16.mxu0 0
        %1447 = vmatpush1.bf16.msra.mxu0 0
        %1448 = vmatprep.subr.bf16.mxu0 0
        %1449 = vmatpush1.bf16.msra.mxu0 0
        %1450 = vmatprep.subr.bf16.mxu0 0
        %1451 = vmatpush1.bf16.msra.mxu0 0
        %1452 = vmatprep.subr.bf16.mxu0 0
        %1453 = vmatpush1.bf16.msra.mxu0 0
        %1454 = vmatprep.subr.bf16.mxu0 0
        %1455 = vmatpush1.bf16.msra.mxu0 0
        %1456 = vmatprep.subr.bf16.mxu0 0
        %1457 = vmatpush1.bf16.msra.mxu0 0
        %1458 = vmatprep.subr.bf16.mxu0 0
        %1459 = vmatpush1.bf16.msra.mxu0 0
        %1460 = vmatprep.subr.bf16.mxu0 0
        %1461 = vmatpush1.bf16.msra.mxu0 0
        %1462 = vmatprep.subr.bf16.mxu0 0
        %1463 = vmatpush1.bf16.msra.mxu0 0
        %1464 = vmatprep.subr.bf16.mxu0 0
        %1465 = vmatpush1.bf16.msra.mxu0 0
        %1466 = vmatprep.subr.bf16.mxu0 0
        %1467 = vmatpush1.bf16.msra.mxu0 0
        %1468 = vmatprep.subr.bf16.mxu0 0
        %1469 = vmatpush1.bf16.msra.mxu0 0
        %1470 = vmatprep.subr.bf16.mxu0 0
        %1471 = vmatpush1.bf16.msra.mxu0 0
        %1472 = vmatprep.subr.bf16.mxu0 0
        %1473 = vmatpush1.bf16.msra.mxu0 0
        %1474 = vmatprep.mubr.bf16.mxu0 0
        %1475 = vmatmul.mubr.bf16.gmra.mrb[0].mxu0 %v1440
        %v1476 = vpop.f32.mrb[0].mxu0
        %v1477 = vadd.f32 %v1309, %v1476
        %v1478 = vpop.f32.mrb[0].mxu0
        %v1479 = vpop.f32.mrb[0].mxu0
        %v1480 = vpop.f32.mrb[0].mxu0
        %1481 = vdwg.mxu0
        %v1486 = vunpack.c.l.b16 %v1166
        %v1487 = vunpack.c.l.b16 %v1167
        %v1488 = vunpack.c.l.b16 %v1168
        %v1489 = vunpack.c.l.b16 %v1169
        %v1490 = vpack.c.b16 %v1487, %v1486
        %v1491 = vpack.c.b16 %v1489, %v1488
        %1494 = vmatprep.subr.bf16.mxu0 0
        %1495 = vmatpush1.bf16.msra.mxu0 %v1490
        %1496 = vmatprep.subr.bf16.mxu0 0
        %1497 = vmatpush1.bf16.msra.mxu0 %v1491
        %1498 = vmatprep.subr.bf16.mxu0 0
        %1499 = vmatpush1.bf16.msra.mxu0 0
        %1500 = vmatprep.subr.bf16.mxu0 0
        %1501 = vmatpush1.bf16.msra.mxu0 0
        %1502 = vmatprep.subr.bf16.mxu0 0
        %1503 = vmatpush1.bf16.msra.mxu0 0
        %1504 = vmatprep.subr.bf16.mxu0 0
        %1505 = vmatpush1.bf16.msra.mxu0 0
        %1506 = vmatprep.subr.bf16.mxu0 0
        %1507 = vmatpush1.bf16.msra.mxu0 0
        %1508 = vmatprep.subr.bf16.mxu0 0
        %1509 = vmatpush1.bf16.msra.mxu0 0
        %1510 = vmatprep.subr.bf16.mxu0 0
        %1511 = vmatpush1.bf16.msra.mxu0 0
        %1512 = vmatprep.subr.bf16.mxu0 0
        %1513 = vmatpush1.bf16.msra.mxu0 0
        %1514 = vmatprep.subr.bf16.mxu0 0
        %1515 = vmatpush1.bf16.msra.mxu0 0
        %1516 = vmatprep.subr.bf16.mxu0 0
        %1517 = vmatpush1.bf16.msra.mxu0 0
        %1518 = vmatprep.subr.bf16.mxu0 0
        %1519 = vmatpush1.bf16.msra.mxu0 0
        %1520 = vmatprep.subr.bf16.mxu0 0
        %1521 = vmatpush1.bf16.msra.mxu0 0
        %1522 = vmatprep.subr.bf16.mxu0 0
        %1523 = vmatpush1.bf16.msra.mxu0 0
        %1524 = vmatprep.subr.bf16.mxu0 0
        %1525 = vmatpush1.bf16.msra.mxu0 0
        %1526 = vmatprep.mubr.bf16.mxu0 0
        %1527 = vmatmul.mubr.bf16.gmra.mrb[0].mxu0 %v1440
        %v1528 = vpop.f32.mrb[0].mxu0
        %v1529 = vadd.f32 %v1313, %v1528
        %v1530 = vpop.f32.mrb[0].mxu0
        %v1531 = vpop.f32.mrb[0].mxu0
        %v1532 = vpop.f32.mrb[0].mxu0
        %1533 = vdwg.mxu0
        %v1538 = vunpack.c.l.b16 %v1170
        %v1539 = vunpack.c.l.b16 %v1171
        %v1540 = vunpack.c.l.b16 %v1172
        %v1541 = vunpack.c.l.b16 %v1173
        %v1542 = vpack.c.b16 %v1539, %v1538
        %v1543 = vpack.c.b16 %v1541, %v1540
        %1546 = vmatprep.subr.bf16.mxu0 0
        %1547 = vmatpush1.bf16.msra.mxu0 %v1542
        %1548 = vmatprep.subr.bf16.mxu0 0
        %1549 = vmatpush1.bf16.msra.mxu0 %v1543
        %1550 = vmatprep.subr.bf16.mxu0 0
        %1551 = vmatpush1.bf16.msra.mxu0 0
        %1552 = vmatprep.subr.bf16.mxu0 0
        %1553 = vmatpush1.bf16.msra.mxu0 0
        %1554 = vmatprep.subr.bf16.mxu0 0
        %1555 = vmatpush1.bf16.msra.mxu0 0
        %1556 = vmatprep.subr.bf16.mxu0 0
        %1557 = vmatpush1.bf16.msra.mxu0 0
        %1558 = vmatprep.subr.bf16.mxu0 0
        %1559 = vmatpush1.bf16.msra.mxu0 0
        %1560 = vmatprep.subr.bf16.mxu0 0
        %1561 = vmatpush1.bf16.msra.mxu0 0
        %1562 = vmatprep.subr.bf16.mxu0 0
        %1563 = vmatpush1.bf16.msra.mxu0 0
        %1564 = vmatprep.subr.bf16.mxu0 0
        %1565 = vmatpush1.bf16.msra.mxu0 0
        %1566 = vmatprep.subr.bf16.mxu0 0
        %1567 = vmatpush1.bf16.msra.mxu0 0
        %1568 = vmatprep.subr.bf16.mxu0 0
        %1569 = vmatpush1.bf16.msra.mxu0 0
        %1570 = vmatprep.subr.bf16.mxu0 0
        %1571 = vmatpush1.bf16.msra.mxu0 0
        %1572 = vmatprep.subr.bf16.mxu0 0
        %1573 = vmatpush1.bf16.msra.mxu0 0
        %1574 = vmatprep.subr.bf16.mxu0 0
        %1575 = vmatpush1.bf16.msra.mxu0 0
        %1576 = vmatprep.subr.bf16.mxu0 0
        %1577 = vmatpush1.bf16.msra.mxu0 0
        %1578 = vmatprep.mubr.bf16.mxu0 0
        %1579 = vmatmul.mubr.bf16.gmra.mrb[0].mxu0 %v1440
        %v1580 = vpop.f32.mrb[0].mxu0
        %v1581 = vadd.f32 %v1317, %v1580
        %v1582 = vpop.f32.mrb[0].mxu0
        %v1583 = vpop.f32.mrb[0].mxu0
        %v1584 = vpop.f32.mrb[0].mxu0
        %1585 = vdwg.mxu0
        %v1590 = vunpack.c.l.b16 %v1174
        %v1591 = vunpack.c.l.b16 %v1175
        %v1592 = vunpack.c.l.b16 %v1176
        %v1593 = vunpack.c.l.b16 %v1177
        %v1594 = vpack.c.b16 %v1591, %v1590
        %v1595 = vpack.c.b16 %v1593, %v1592
        %1598 = vmatprep.subr.bf16.mxu0 0
        %1599 = vmatpush1.bf16.msra.mxu0 %v1594
        %1600 = vmatprep.subr.bf16.mxu0 0
        %1601 = vmatpush1.bf16.msra.mxu0 %v1595
        %1602 = vmatprep.subr.bf16.mxu0 0
        %1603 = vmatpush1.bf16.msra.mxu0 0
        %1604 = vmatprep.subr.bf16.mxu0 0
        %1605 = vmatpush1.bf16.msra.mxu0 0
        %1606 = vmatprep.subr.bf16.mxu0 0
        %1607 = vmatpush1.bf16.msra.mxu0 0
        %1608 = vmatprep.subr.bf16.mxu0 0
        %1609 = vmatpush1.bf16.msra.mxu0 0
        %1610 = vmatprep.subr.bf16.mxu0 0
        %1611 = vmatpush1.bf16.msra.mxu0 0
        %1612 = vmatprep.subr.bf16.mxu0 0
        %1613 = vmatpush1.bf16.msra.mxu0 0
        %1614 = vmatprep.subr.bf16.mxu0 0
        %1615 = vmatpush1.bf16.msra.mxu0 0
        %1616 = vmatprep.subr.bf16.mxu0 0
        %1617 = vmatpush1.bf16.msra.mxu0 0
        %1618 = vmatprep.subr.bf16.mxu0 0
        %1619 = vmatpush1.bf16.msra.mxu0 0
        %1620 = vmatprep.subr.bf16.mxu0 0
        %1621 = vmatpush1.bf16.msra.mxu0 0
        %1622 = vmatprep.subr.bf16.mxu0 0
        %1623 = vmatpush1.bf16.msra.mxu0 0
        %1624 = vmatprep.subr.bf16.mxu0 0
        %1625 = vmatpush1.bf16.msra.mxu0 0
        %1626 = vmatprep.subr.bf16.mxu0 0
        %1627 = vmatpush1.bf16.msra.mxu0 0
        %1628 = vmatprep.subr.bf16.mxu0 0
        %1629 = vmatpush1.bf16.msra.mxu0 0
        %1630 = vmatprep.mubr.bf16.mxu0 0
        %1631 = vmatmul.mubr.bf16.gmra.mrb[0].mxu0 %v1440
        %v1632 = vpop.f32.mrb[0].mxu0
        %v1633 = vadd.f32 %v1321, %v1632
        %v1634 = vpop.f32.mrb[0].mxu0
        %v1635 = vpop.f32.mrb[0].mxu0
        %v1636 = vpop.f32.mrb[0].mxu0
        %1637 = vdwg.mxu0
        %v1642 = vunpack.c.l.b16 %v1178
        %v1643 = vunpack.c.l.b16 %v1179
        %v1644 = vunpack.c.l.b16 %v1180
        %v1645 = vunpack.c.l.b16 %v1181
        %v1646 = vpack.c.b16 %v1643, %v1642
        %v1647 = vpack.c.b16 %v1645, %v1644
        %1650 = vmatprep.subr.bf16.mxu0 0
        %1651 = vmatpush1.bf16.msra.mxu0 %v1646
        %1652 = vmatprep.subr.bf16.mxu0 0
        %1653 = vmatpush1.bf16.msra.mxu0 %v1647
        %1654 = vmatprep.subr.bf16.mxu0 0
        %1655 = vmatpush1.bf16.msra.mxu0 0
        %1656 = vmatprep.subr.bf16.mxu0 0
        %1657 = vmatpush1.bf16.msra.mxu0 0
        %1658 = vmatprep.subr.bf16.mxu0 0
        %1659 = vmatpush1.bf16.msra.mxu0 0
        %1660 = vmatprep.subr.bf16.mxu0 0
        %1661 = vmatpush1.bf16.msra.mxu0 0
        %1662 = vmatprep.subr.bf16.mxu0 0
        %1663 = vmatpush1.bf16.msra.mxu0 0
        %1664 = vmatprep.subr.bf16.mxu0 0
        %1665 = vmatpush1.bf16.msra.mxu0 0
        %1666 = vmatprep.subr.bf16.mxu0 0
        %1667 = vmatpush1.bf16.msra.mxu0 0
        %1668 = vmatprep.subr.bf16.mxu0 0
        %1669 = vmatpush1.bf16.msra.mxu0 0
        %1670 = vmatprep.subr.bf16.mxu0 0
        %1671 = vmatpush1.bf16.msra.mxu0 0
        %1672 = vmatprep.subr.bf16.mxu0 0
        %1673 = vmatpush1.bf16.msra.mxu0 0
        %1674 = vmatprep.subr.bf16.mxu0 0
        %1675 = vmatpush1.bf16.msra.mxu0 0
        %1676 = vmatprep.subr.bf16.mxu0 0
        %1677 = vmatpush1.bf16.msra.mxu0 0
        %1678 = vmatprep.subr.bf16.mxu0 0
        %1679 = vmatpush1.bf16.msra.mxu0 0
        %1680 = vmatprep.subr.bf16.mxu0 0
        %1681 = vmatpush1.bf16.msra.mxu0 0
        %1682 = vmatprep.mubr.bf16.mxu0 0
        %1683 = vmatmul.mubr.bf16.gmra.mrb[0].mxu0 %v1440
        %v1684 = vpop.f32.mrb[0].mxu0
        %v1685 = vadd.f32 %v1325, %v1684
        %v1686 = vpop.f32.mrb[0].mxu0
        %v1687 = vpop.f32.mrb[0].mxu0
        %v1688 = vpop.f32.mrb[0].mxu0
        %1689 = vdwg.mxu0
        %v1694 = vunpack.c.l.b16 %v1182
        %v1695 = vunpack.c.l.b16 %v1183
        %v1696 = vunpack.c.l.b16 %v1184
        %v1697 = vunpack.c.l.b16 %v1185
        %v1698 = vpack.c.b16 %v1695, %v1694
        %v1699 = vpack.c.b16 %v1697, %v1696
        %1702 = vmatprep.subr.bf16.mxu0 0
        %1703 = vmatpush1.bf16.msra.mxu0 %v1698
        %1704 = vmatprep.subr.bf16.mxu0 0
        %1705 = vmatpush1.bf16.msra.mxu0 %v1699
        %1706 = vmatprep.subr.bf16.mxu0 0
        %1707 = vmatpush1.bf16.msra.mxu0 0
        %1708 = vmatprep.subr.bf16.mxu0 0
        %1709 = vmatpush1.bf16.msra.mxu0 0
        %1710 = vmatprep.subr.bf16.mxu0 0
        %1711 = vmatpush1.bf16.msra.mxu0 0
        %1712 = vmatprep.subr.bf16.mxu0 0
        %1713 = vmatpush1.bf16.msra.mxu0 0
        %1714 = vmatprep.subr.bf16.mxu0 0
        %1715 = vmatpush1.bf16.msra.mxu0 0
        %1716 = vmatprep.subr.bf16.mxu0 0
        %1717 = vmatpush1.bf16.msra.mxu0 0
        %1718 = vmatprep.subr.bf16.mxu0 0
        %1719 = vmatpush1.bf16.msra.mxu0 0
        %1720 = vmatprep.subr.bf16.mxu0 0
        %1721 = vmatpush1.bf16.msra.mxu0 0
        %1722 = vmatprep.subr.bf16.mxu0 0
        %1723 = vmatpush1.bf16.msra.mxu0 0
        %1724 = vmatprep.subr.bf16.mxu0 0
        %1725 = vmatpush1.bf16.msra.mxu0 0
        %1726 = vmatprep.subr.bf16.mxu0 0
        %1727 = vmatpush1.bf16.msra.mxu0 0
        %1728 = vmatprep.subr.bf16.mxu0 0
        %1729 = vmatpush1.bf16.msra.mxu0 0
        %1730 = vmatprep.subr.bf16.mxu0 0
        %1731 = vmatpush1.bf16.msra.mxu0 0
        %1732 = vmatprep.subr.bf16.mxu0 0
        %1733 = vmatpush1.bf16.msra.mxu0 0
        %1734 = vmatprep.mubr.bf16.mxu0 0
        %1735 = vmatmul.mubr.bf16.gmra.mrb[0].mxu0 %v1440
        %v1736 = vpop.f32.mrb[0].mxu0
        %v1737 = vadd.f32 %v1329, %v1736
        %v1738 = vpop.f32.mrb[0].mxu0
        %v1739 = vpop.f32.mrb[0].mxu0
        %v1740 = vpop.f32.mrb[0].mxu0
        %1741 = vdwg.mxu0
        %v1746 = vunpack.c.l.b16 %v1186
        %v1747 = vunpack.c.l.b16 %v1187
        %v1748 = vunpack.c.l.b16 %v1188
        %v1749 = vunpack.c.l.b16 %v1189
        %v1750 = vpack.c.b16 %v1747, %v1746
        %v1751 = vpack.c.b16 %v1749, %v1748
        %1754 = vmatprep.subr.bf16.mxu0 0
        %1755 = vmatpush1.bf16.msra.mxu0 %v1750
        %1756 = vmatprep.subr.bf16.mxu0 0
        %1757 = vmatpush1.bf16.msra.mxu0 %v1751
        %1758 = vmatprep.subr.bf16.mxu0 0
        %1759 = vmatpush1.bf16.msra.mxu0 0
        %1760 = vmatprep.subr.bf16.mxu0 0
        %1761 = vmatpush1.bf16.msra.mxu0 0
        %1762 = vmatprep.subr.bf16.mxu0 0
        %1763 = vmatpush1.bf16.msra.mxu0 0
        %1764 = vmatprep.subr.bf16.mxu0 0
        %1765 = vmatpush1.bf16.msra.mxu0 0
        %1766 = vmatprep.subr.bf16.mxu0 0
        %1767 = vmatpush1.bf16.msra.mxu0 0
        %1768 = vmatprep.subr.bf16.mxu0 0
        %1769 = vmatpush1.bf16.msra.mxu0 0
        %1770 = vmatprep.subr.bf16.mxu0 0
        %1771 = vmatpush1.bf16.msra.mxu0 0
        %1772 = vmatprep.subr.bf16.mxu0 0
        %1773 = vmatpush1.bf16.msra.mxu0 0
        %1774 = vmatprep.subr.bf16.mxu0 0
        %1775 = vmatpush1.bf16.msra.mxu0 0
        %1776 = vmatprep.subr.bf16.mxu0 0
        %1777 = vmatpush1.bf16.msra.mxu0 0
        %1778 = vmatprep.subr.bf16.mxu0 0
        %1779 = vmatpush1.bf16.msra.mxu0 0
        %1780 = vmatprep.subr.bf16.mxu0 0
        %1781 = vmatpush1.bf16.msra.mxu0 0
        %1782 = vmatprep.subr.bf16.mxu0 0
        %1783 = vmatpush1.bf16.msra.mxu0 0
        %1784 = vmatprep.subr.bf16.mxu0 0
        %1785 = vmatpush1.bf16.msra.mxu0 0
        %1786 = vmatprep.mubr.bf16.mxu0 0
        %1787 = vmatmul.mubr.bf16.gmra.mrb[0].mxu0 %v1440
        %v1788 = vpop.f32.mrb[0].mxu0
        %v1789 = vadd.f32 %v1333, %v1788
        %v1790 = vpop.f32.mrb[0].mxu0
        %v1791 = vpop.f32.mrb[0].mxu0
        %v1792 = vpop.f32.mrb[0].mxu0
        %1793 = vdwg.mxu0
        %v1798 = vunpack.c.l.b16 %v1190
        %v1799 = vunpack.c.l.b16 %v1191
        %v1800 = vunpack.c.l.b16 %v1192
        %v1801 = vunpack.c.l.b16 %v1193
        %v1802 = vpack.c.b16 %v1799, %v1798
        %v1803 = vpack.c.b16 %v1801, %v1800
        %1806 = vmatprep.subr.bf16.mxu0 0
        %1807 = vmatpush1.bf16.msra.mxu0 %v1802
        %1808 = vmatprep.subr.bf16.mxu0 0
        %1809 = vmatpush1.bf16.msra.mxu0 %v1803
        %1810 = vmatprep.subr.bf16.mxu0 0
        %1811 = vmatpush1.bf16.msra.mxu0 0
        %1812 = vmatprep.subr.bf16.mxu0 0
        %1813 = vmatpush1.bf16.msra.mxu0 0
        %1814 = vmatprep.subr.bf16.mxu0 0
        %1815 = vmatpush1.bf16.msra.mxu0 0
        %1816 = vmatprep.subr.bf16.mxu0 0
        %1817 = vmatpush1.bf16.msra.mxu0 0
        %1818 = vmatprep.subr.bf16.mxu0 0
        %1819 = vmatpush1.bf16.msra.mxu0 0
        %1820 = vmatprep.subr.bf16.mxu0 0
        %1821 = vmatpush1.bf16.msra.mxu0 0
        %1822 = vmatprep.subr.bf16.mxu0 0
        %1823 = vmatpush1.bf16.msra.mxu0 0
        %1824 = vmatprep.subr.bf16.mxu0 0
        %1825 = vmatpush1.bf16.msra.mxu0 0
        %1826 = vmatprep.subr.bf16.mxu0 0
        %1827 = vmatpush1.bf16.msra.mxu0 0
        %1828 = vmatprep.subr.bf16.mxu0 0
        %1829 = vmatpush1.bf16.msra.mxu0 0
        %1830 = vmatprep.subr.bf16.mxu0 0
        %1831 = vmatpush1.bf16.msra.mxu0 0
        %1832 = vmatprep.subr.bf16.mxu0 0
        %1833 = vmatpush1.bf16.msra.mxu0 0
        %1834 = vmatprep.subr.bf16.mxu0 0
        %1835 = vmatpush1.bf16.msra.mxu0 0
        %1836 = vmatprep.subr.bf16.mxu0 0
        %1837 = vmatpush1.bf16.msra.mxu0 0
        %1838 = vmatprep.mubr.bf16.mxu0 0
        %1839 = vmatmul.mubr.bf16.gmra.mrb[0].mxu0 %v1440
        %v1840 = vpop.f32.mrb[0].mxu0
        %v1841 = vadd.f32 %v1337, %v1840
        %v1842 = vpop.f32.mrb[0].mxu0
        %v1843 = vpop.f32.mrb[0].mxu0
        %v1844 = vpop.f32.mrb[0].mxu0
        %1845 = vdwg.mxu0
        %v1850 = vunpack.c.l.b16 %v1194
        %v1851 = vunpack.c.l.b16 %v1195
        %v1852 = vunpack.c.l.b16 %v1196
        %v1853 = vunpack.c.l.b16 %v1197
        %v1854 = vpack.c.b16 %v1851, %v1850
        %v1855 = vpack.c.b16 %v1853, %v1852
        %1858 = vmatprep.subr.bf16.mxu0 0
        %1859 = vmatpush1.bf16.msra.mxu0 %v1854
        %1860 = vmatprep.subr.bf16.mxu0 0
        %1861 = vmatpush1.bf16.msra.mxu0 %v1855
        %1862 = vmatprep.subr.bf16.mxu0 0
        %1863 = vmatpush1.bf16.msra.mxu0 0
        %1864 = vmatprep.subr.bf16.mxu0 0
        %1865 = vmatpush1.bf16.msra.mxu0 0
        %1866 = vmatprep.subr.bf16.mxu0 0
        %1867 = vmatpush1.bf16.msra.mxu0 0
        %1868 = vmatprep.subr.bf16.mxu0 0
        %1869 = vmatpush1.bf16.msra.mxu0 0
        %1870 = vmatprep.subr.bf16.mxu0 0
        %1871 = vmatpush1.bf16.msra.mxu0 0
        %1872 = vmatprep.subr.bf16.mxu0 0
        %1873 = vmatpush1.bf16.msra.mxu0 0
        %1874 = vmatprep.subr.bf16.mxu0 0
        %1875 = vmatpush1.bf16.msra.mxu0 0
        %1876 = vmatprep.subr.bf16.mxu0 0
        %1877 = vmatpush1.bf16.msra.mxu0 0
        %1878 = vmatprep.subr.bf16.mxu0 0
        %1879 = vmatpush1.bf16.msra.mxu0 0
        %1880 = vmatprep.subr.bf16.mxu0 0
        %1881 = vmatpush1.bf16.msra.mxu0 0
        %1882 = vmatprep.subr.bf16.mxu0 0
        %1883 = vmatpush1.bf16.msra.mxu0 0
        %1884 = vmatprep.subr.bf16.mxu0 0
        %1885 = vmatpush1.bf16.msra.mxu0 0
        %1886 = vmatprep.subr.bf16.mxu0 0
        %1887 = vmatpush1.bf16.msra.mxu0 0
        %1888 = vmatprep.subr.bf16.mxu0 0
        %1889 = vmatpush1.bf16.msra.mxu0 0
        %1890 = vmatprep.mubr.bf16.mxu0 0
        %1891 = vmatmul.mubr.bf16.gmra.mrb[0].mxu0 %v1440
        %v1892 = vpop.f32.mrb[0].mxu0
        %v1893 = vadd.f32 %v1341, %v1892
        %v1894 = vpop.f32.mrb[0].mxu0
        %v1895 = vpop.f32.mrb[0].mxu0
        %v1896 = vpop.f32.mrb[0].mxu0
        %1897 = vdwg.mxu0
        %v1902 = vunpack.c.l.b16 %v1198
        %v1903 = vunpack.c.l.b16 %v1199
        %v1904 = vunpack.c.l.b16 %v1200
        %v1905 = vunpack.c.l.b16 %v1201
        %v1906 = vpack.c.b16 %v1903, %v1902
        %v1907 = vpack.c.b16 %v1905, %v1904
        %1910 = vmatprep.subr.bf16.mxu0 0
        %1911 = vmatpush1.bf16.msra.mxu0 %v1906
        %1912 = vmatprep.subr.bf16.mxu0 0
        %1913 = vmatpush1.bf16.msra.mxu0 %v1907
        %1914 = vmatprep.subr.bf16.mxu0 0
        %1915 = vmatpush1.bf16.msra.mxu0 0
        %1916 = vmatprep.subr.bf16.mxu0 0
        %1917 = vmatpush1.bf16.msra.mxu0 0
        %1918 = vmatprep.subr.bf16.mxu0 0
        %1919 = vmatpush1.bf16.msra.mxu0 0
        %1920 = vmatprep.subr.bf16.mxu0 0
        %1921 = vmatpush1.bf16.msra.mxu0 0
        %1922 = vmatprep.subr.bf16.mxu0 0
        %1923 = vmatpush1.bf16.msra.mxu0 0
        %1924 = vmatprep.subr.bf16.mxu0 0
        %1925 = vmatpush1.bf16.msra.mxu0 0
        %1926 = vmatprep.subr.bf16.mxu0 0
        %1927 = vmatpush1.bf16.msra.mxu0 0
        %1928 = vmatprep.subr.bf16.mxu0 0
        %1929 = vmatpush1.bf16.msra.mxu0 0
        %1930 = vmatprep.subr.bf16.mxu0 0
        %1931 = vmatpush1.bf16.msra.mxu0 0
        %1932 = vmatprep.subr.bf16.mxu0 0
        %1933 = vmatpush1.bf16.msra.mxu0 0
        %1934 = vmatprep.subr.bf16.mxu0 0
        %1935 = vmatpush1.bf16.msra.mxu0 0
        %1936 = vmatprep.subr.bf16.mxu0 0
        %1937 = vmatpush1.bf16.msra.mxu0 0
        %1938 = vmatprep.subr.bf16.mxu0 0
        %1939 = vmatpush1.bf16.msra.mxu0 0
        %1940 = vmatprep.subr.bf16.mxu0 0
        %1941 = vmatpush1.bf16.msra.mxu0 0
        %1942 = vmatprep.mubr.bf16.mxu0 0
        %1943 = vmatmul.mubr.bf16.gmra.mrb[0].mxu0 %v1440
        %v1944 = vpop.f32.mrb[0].mxu0
        %v1945 = vadd.f32 %v1345, %v1944
        %v1946 = vpop.f32.mrb[0].mxu0
        %v1947 = vpop.f32.mrb[0].mxu0
        %v1948 = vpop.f32.mrb[0].mxu0
        %1949 = vdwg.mxu0
        %v1954 = vunpack.c.l.b16 %v1202
        %v1955 = vunpack.c.l.b16 %v1203
        %v1956 = vunpack.c.l.b16 %v1204
        %v1957 = vunpack.c.l.b16 %v1205
        %v1958 = vpack.c.b16 %v1955, %v1954
        %v1959 = vpack.c.b16 %v1957, %v1956
        %1962 = vmatprep.subr.bf16.mxu0 0
        %1963 = vmatpush1.bf16.msra.mxu0 %v1958
        %1964 = vmatprep.subr.bf16.mxu0 0
        %1965 = vmatpush1.bf16.msra.mxu0 %v1959
        %1966 = vmatprep.subr.bf16.mxu0 0
        %1967 = vmatpush1.bf16.msra.mxu0 0
        %1968 = vmatprep.subr.bf16.mxu0 0
        %1969 = vmatpush1.bf16.msra.mxu0 0
        %1970 = vmatprep.subr.bf16.mxu0 0
        %1971 = vmatpush1.bf16.msra.mxu0 0
        %1972 = vmatprep.subr.bf16.mxu0 0
        %1973 = vmatpush1.bf16.msra.mxu0 0
        %1974 = vmatprep.subr.bf16.mxu0 0
        %1975 = vmatpush1.bf16.msra.mxu0 0
        %1976 = vmatprep.subr.bf16.mxu0 0
        %1977 = vmatpush1.bf16.msra.mxu0 0
        %1978 = vmatprep.subr.bf16.mxu0 0
        %1979 = vmatpush1.bf16.msra.mxu0 0
        %1980 = vmatprep.subr.bf16.mxu0 0
        %1981 = vmatpush1.bf16.msra.mxu0 0
        %1982 = vmatprep.subr.bf16.mxu0 0
        %1983 = vmatpush1.bf16.msra.mxu0 0
        %1984 = vmatprep.subr.bf16.mxu0 0
        %1985 = vmatpush1.bf16.msra.mxu0 0
        %1986 = vmatprep.subr.bf16.mxu0 0
        %1987 = vmatpush1.bf16.msra.mxu0 0
        %1988 = vmatprep.subr.bf16.mxu0 0
        %1989 = vmatpush1.bf16.msra.mxu0 0
        %1990 = vmatprep.subr.bf16.mxu0 0
        %1991 = vmatpush1.bf16.msra.mxu0 0
        %1992 = vmatprep.subr.bf16.mxu0 0
        %1993 = vmatpush1.bf16.msra.mxu0 0
        %1994 = vmatprep.mubr.bf16.mxu0 0
        %1995 = vmatmul.mubr.bf16.gmra.mrb[0].mxu0 %v1440
        %v1996 = vpop.f32.mrb[0].mxu0
        %v1997 = vadd.f32 %v1349, %v1996
        %v1998 = vpop.f32.mrb[0].mxu0
        %v1999 = vpop.f32.mrb[0].mxu0
        %v2000 = vpop.f32.mrb[0].mxu0
        %2001 = vdwg.mxu0
        %v2006 = vunpack.c.l.b16 %v1206
        %v2007 = vunpack.c.l.b16 %v1207
        %v2008 = vunpack.c.l.b16 %v1208
        %v2009 = vunpack.c.l.b16 %v1209
        %v2010 = vpack.c.b16 %v2007, %v2006
        %v2011 = vpack.c.b16 %v2009, %v2008
        %2014 = vmatprep.subr.bf16.mxu0 0
        %2015 = vmatpush1.bf16.msra.mxu0 %v2010
        %2016 = vmatprep.subr.bf16.mxu0 0
        %2017 = vmatpush1.bf16.msra.mxu0 %v2011
        %2018 = vmatprep.subr.bf16.mxu0 0
        %2019 = vmatpush1.bf16.msra.mxu0 0
        %2020 = vmatprep.subr.bf16.mxu0 0
        %2021 = vmatpush1.bf16.msra.mxu0 0
        %2022 = vmatprep.subr.bf16.mxu0 0
        %2023 = vmatpush1.bf16.msra.mxu0 0
        %2024 = vmatprep.subr.bf16.mxu0 0
        %2025 = vmatpush1.bf16.msra.mxu0 0
        %2026 = vmatprep.subr.bf16.mxu0 0
        %2027 = vmatpush1.bf16.msra.mxu0 0
        %2028 = vmatprep.subr.bf16.mxu0 0
        %2029 = vmatpush1.bf16.msra.mxu0 0
        %2030 = vmatprep.subr.bf16.mxu0 0
        %2031 = vmatpush1.bf16.msra.mxu0 0
        %2032 = vmatprep.subr.bf16.mxu0 0
        %2033 = vmatpush1.bf16.msra.mxu0 0
        %2034 = vmatprep.subr.bf16.mxu0 0
        %2035 = vmatpush1.bf16.msra.mxu0 0
        %2036 = vmatprep.subr.bf16.mxu0 0
        %2037 = vmatpush1.bf16.msra.mxu0 0
        %2038 = vmatprep.subr.bf16.mxu0 0
        %2039 = vmatpush1.bf16.msra.mxu0 0
        %2040 = vmatprep.subr.bf16.mxu0 0
        %2041 = vmatpush1.bf16.msra.mxu0 0
        %2042 = vmatprep.subr.bf16.mxu0 0
        %2043 = vmatpush1.bf16.msra.mxu0 0
        %2044 = vmatprep.subr.bf16.mxu0 0
        %2045 = vmatpush1.bf16.msra.mxu0 0
        %2046 = vmatprep.mubr.bf16.mxu0 0
        %2047 = vmatmul.mubr.bf16.gmra.mrb[0].mxu0 %v1440
        %v2048 = vpop.f32.mrb[0].mxu0
        %v2049 = vadd.f32 %v1353, %v2048
        %v2050 = vpop.f32.mrb[0].mxu0
        %v2051 = vpop.f32.mrb[0].mxu0
        %v2052 = vpop.f32.mrb[0].mxu0
        %2053 = vdwg.mxu0
        %v2058 = vunpack.c.l.b16 %v1210
        %v2059 = vunpack.c.l.b16 %v1211
        %v2060 = vunpack.c.l.b16 %v1212
        %v2061 = vunpack.c.l.b16 %v1213
        %v2062 = vpack.c.b16 %v2059, %v2058
        %v2063 = vpack.c.b16 %v2061, %v2060
        %2066 = vmatprep.subr.bf16.mxu0 0
        %2067 = vmatpush1.bf16.msra.mxu0 %v2062
        %2068 = vmatprep.subr.bf16.mxu0 0
        %2069 = vmatpush1.bf16.msra.mxu0 %v2063
        %2070 = vmatprep.subr.bf16.mxu0 0
        %2071 = vmatpush1.bf16.msra.mxu0 0
        %2072 = vmatprep.subr.bf16.mxu0 0
        %2073 = vmatpush1.bf16.msra.mxu0 0
        %2074 = vmatprep.subr.bf16.mxu0 0
        %2075 = vmatpush1.bf16.msra.mxu0 0
        %2076 = vmatprep.subr.bf16.mxu0 0
        %2077 = vmatpush1.bf16.msra.mxu0 0
        %2078 = vmatprep.subr.bf16.mxu0 0
        %2079 = vmatpush1.bf16.msra.mxu0 0
        %2080 = vmatprep.subr.bf16.mxu0 0
        %2081 = vmatpush1.bf16.msra.mxu0 0
        %2082 = vmatprep.subr.bf16.mxu0 0
        %2083 = vmatpush1.bf16.msra.mxu0 0
        %2084 = vmatprep.subr.bf16.mxu0 0
        %2085 = vmatpush1.bf16.msra.mxu0 0
        %2086 = vmatprep.subr.bf16.mxu0 0
        %2087 = vmatpush1.bf16.msra.mxu0 0
        %2088 = vmatprep.subr.bf16.mxu0 0
        %2089 = vmatpush1.bf16.msra.mxu0 0
        %2090 = vmatprep.subr.bf16.mxu0 0
        %2091 = vmatpush1.bf16.msra.mxu0 0
        %2092 = vmatprep.subr.bf16.mxu0 0
        %2093 = vmatpush1.bf16.msra.mxu0 0
        %2094 = vmatprep.subr.bf16.mxu0 0
        %2095 = vmatpush1.bf16.msra.mxu0 0
        %2096 = vmatprep.subr.bf16.mxu0 0
        %2097 = vmatpush1.bf16.msra.mxu0 0
        %2098 = vmatprep.mubr.bf16.mxu0 0
        %2099 = vmatmul.mubr.bf16.gmra.mrb[0].mxu0 %v1440
        %v2100 = vpop.f32.mrb[0].mxu0
        %v2101 = vadd.f32 %v1357, %v2100
        %v2102 = vpop.f32.mrb[0].mxu0
        %v2103 = vpop.f32.mrb[0].mxu0
        %v2104 = vpop.f32.mrb[0].mxu0
        %2105 = vdwg.mxu0
        %v2110 = vunpack.c.l.b16 %v1214
        %v2111 = vunpack.c.l.b16 %v1215
        %v2112 = vunpack.c.l.b16 %v1216
        %v2113 = vunpack.c.l.b16 %v1217
        %v2114 = vpack.c.b16 %v2111, %v2110
        %v2115 = vpack.c.b16 %v2113, %v2112
        %2118 = vmatprep.subr.bf16.mxu0 0
        %2119 = vmatpush1.bf16.msra.mxu0 %v2114
        %2120 = vmatprep.subr.bf16.mxu0 0
        %2121 = vmatpush1.bf16.msra.mxu0 %v2115
        %2122 = vmatprep.subr.bf16.mxu0 0
        %2123 = vmatpush1.bf16.msra.mxu0 0
        %2124 = vmatprep.subr.bf16.mxu0 0
        %2125 = vmatpush1.bf16.msra.mxu0 0
        %2126 = vmatprep.subr.bf16.mxu0 0
        %2127 = vmatpush1.bf16.msra.mxu0 0
        %2128 = vmatprep.subr.bf16.mxu0 0
        %2129 = vmatpush1.bf16.msra.mxu0 0
        %2130 = vmatprep.subr.bf16.mxu0 0
        %2131 = vmatpush1.bf16.msra.mxu0 0
        %2132 = vmatprep.subr.bf16.mxu0 0
        %2133 = vmatpush1.bf16.msra.mxu0 0
        %2134 = vmatprep.subr.bf16.mxu0 0
        %2135 = vmatpush1.bf16.msra.mxu0 0
        %2136 = vmatprep.subr.bf16.mxu0 0
        %2137 = vmatpush1.bf16.msra.mxu0 0
        %2138 = vmatprep.subr.bf16.mxu0 0
        %2139 = vmatpush1.bf16.msra.mxu0 0
        %2140 = vmatprep.subr.bf16.mxu0 0
        %2141 = vmatpush1.bf16.msra.mxu0 0
        %2142 = vmatprep.subr.bf16.mxu0 0
        %2143 = vmatpush1.bf16.msra.mxu0 0
        %2144 = vmatprep.subr.bf16.mxu0 0
        %2145 = vmatpush1.bf16.msra.mxu0 0
        %2146 = vmatprep.subr.bf16.mxu0 0
        %2147 = vmatpush1.bf16.msra.mxu0 0
        %2148 = vmatprep.subr.bf16.mxu0 0
        %2149 = vmatpush1.bf16.msra.mxu0 0
        %2150 = vmatprep.mubr.bf16.mxu0 0
        %2151 = vmatmul.mubr.bf16.gmra.mrb[0].mxu0 %v1440
        %v2152 = vpop.f32.mrb[0].mxu0
        %v2153 = vadd.f32 %v1361, %v2152
        %v2154 = vpop.f32.mrb[0].mxu0
        %v2155 = vpop.f32.mrb[0].mxu0
        %v2156 = vpop.f32.mrb[0].mxu0
        %2157 = vdwg.mxu0
        %v2162 = vunpack.c.l.b16 %v1218
        %v2163 = vunpack.c.l.b16 %v1219
        %v2164 = vunpack.c.l.b16 %v1220
        %v2165 = vunpack.c.l.b16 %v1221
        %v2166 = vpack.c.b16 %v2163, %v2162
        %v2167 = vpack.c.b16 %v2165, %v2164
        %2170 = vmatprep.subr.bf16.mxu0 0
        %2171 = vmatpush1.bf16.msra.mxu0 %v2166
        %2172 = vmatprep.subr.bf16.mxu0 0
        %2173 = vmatpush1.bf16.msra.mxu0 %v2167
        %2174 = vmatprep.subr.bf16.mxu0 0
        %2175 = vmatpush1.bf16.msra.mxu0 0
        %2176 = vmatprep.subr.bf16.mxu0 0
        %2177 = vmatpush1.bf16.msra.mxu0 0
        %2178 = vmatprep.subr.bf16.mxu0 0
        %2179 = vmatpush1.bf16.msra.mxu0 0
        %2180 = vmatprep.subr.bf16.mxu0 0
        %2181 = vmatpush1.bf16.msra.mxu0 0
        %2182 = vmatprep.subr.bf16.mxu0 0
        %2183 = vmatpush1.bf16.msra.mxu0 0
        %2184 = vmatprep.subr.bf16.mxu0 0
        %2185 = vmatpush1.bf16.msra.mxu0 0
        %2186 = vmatprep.subr.bf16.mxu0 0
        %2187 = vmatpush1.bf16.msra.mxu0 0
        %2188 = vmatprep.subr.bf16.mxu0 0
        %2189 = vmatpush1.bf16.msra.mxu0 0
        %2190 = vmatprep.subr.bf16.mxu0 0
        %2191 = vmatpush1.bf16.msra.mxu0 0
        %2192 = vmatprep.subr.bf16.mxu0 0
        %2193 = vmatpush1.bf16.msra.mxu0 0
        %2194 = vmatprep.subr.bf16.mxu0 0
        %2195 = vmatpush1.bf16.msra.mxu0 0
        %2196 = vmatprep.subr.bf16.mxu0 0
        %2197 = vmatpush1.bf16.msra.mxu0 0
        %2198 = vmatprep.subr.bf16.mxu0 0
        %2199 = vmatpush1.bf16.msra.mxu0 0
        %2200 = vmatprep.subr.bf16.mxu0 0
        %2201 = vmatpush1.bf16.msra.mxu0 0
        %2202 = vmatprep.mubr.bf16.mxu0 0
        %2203 = vmatmul.mubr.bf16.gmra.mrb[0].mxu0 %v1440
        %v2204 = vpop.f32.mrb[0].mxu0
        %v2205 = vadd.f32 %v1365, %v2204
        %v2206 = vpop.f32.mrb[0].mxu0
        %v2207 = vpop.f32.mrb[0].mxu0
        %v2208 = vpop.f32.mrb[0].mxu0
        %2209 = vdwg.mxu0
        %v2214 = vunpack.c.l.b16 %v1222
        %v2215 = vunpack.c.l.b16 %v1223
        %v2216 = vunpack.c.l.b16 %v1224
        %v2217 = vunpack.c.l.b16 %v1225
        %v2218 = vpack.c.b16 %v2215, %v2214
        %v2219 = vpack.c.b16 %v2217, %v2216
        %2222 = vmatprep.subr.bf16.mxu0 0
        %2223 = vmatpush1.bf16.msra.mxu0 %v2218
        %2224 = vmatprep.subr.bf16.mxu0 0
        %2225 = vmatpush1.bf16.msra.mxu0 %v2219
        %2226 = vmatprep.subr.bf16.mxu0 0
        %2227 = vmatpush1.bf16.msra.mxu0 0
        %2228 = vmatprep.subr.bf16.mxu0 0
        %2229 = vmatpush1.bf16.msra.mxu0 0
        %2230 = vmatprep.subr.bf16.mxu0 0
        %2231 = vmatpush1.bf16.msra.mxu0 0
        %2232 = vmatprep.subr.bf16.mxu0 0
        %2233 = vmatpush1.bf16.msra.mxu0 0
        %2234 = vmatprep.subr.bf16.mxu0 0
        %2235 = vmatpush1.bf16.msra.mxu0 0
        %2236 = vmatprep.subr.bf16.mxu0 0
        %2237 = vmatpush1.bf16.msra.mxu0 0
        %2238 = vmatprep.subr.bf16.mxu0 0
        %2239 = vmatpush1.bf16.msra.mxu0 0
        %2240 = vmatprep.subr.bf16.mxu0 0
        %2241 = vmatpush1.bf16.msra.mxu0 0
        %2242 = vmatprep.subr.bf16.mxu0 0
        %2243 = vmatpush1.bf16.msra.mxu0 0
        %2244 = vmatprep.subr.bf16.mxu0 0
        %2245 = vmatpush1.bf16.msra.mxu0 0
        %2246 = vmatprep.subr.bf16.mxu0 0
        %2247 = vmatpush1.bf16.msra.mxu0 0
        %2248 = vmatprep.subr.bf16.mxu0 0
        %2249 = vmatpush1.bf16.msra.mxu0 0
        %2250 = vmatprep.subr.bf16.mxu0 0
        %2251 = vmatpush1.bf16.msra.mxu0 0
        %2252 = vmatprep.subr.bf16.mxu0 0
        %2253 = vmatpush1.bf16.msra.mxu0 0
        %2254 = vmatprep.mubr.bf16.mxu0 0
        %2255 = vmatmul.mubr.bf16.gmra.mrb[0].mxu0 %v1440
        %v2256 = vpop.f32.mrb[0].mxu0
        %v2257 = vadd.f32 %v1369, %v2256
        %v2258 = vpop.f32.mrb[0].mxu0
        %v2259 = vpop.f32.mrb[0].mxu0
        %v2260 = vpop.f32.mrb[0].mxu0
        %2261 = vdwg.mxu0
        %v2266 = vunpack.c.l.b16 %v1226
        %v2267 = vunpack.c.l.b16 %v1227
        %v2268 = vunpack.c.l.b16 %v1228
        %v2269 = vunpack.c.l.b16 %v1229
        %v2270 = vpack.c.b16 %v2267, %v2266
        %v2271 = vpack.c.b16 %v2269, %v2268
        %2274 = vmatprep.subr.bf16.mxu0 0
        %2275 = vmatpush1.bf16.msra.mxu0 %v2270
        %2276 = vmatprep.subr.bf16.mxu0 0
        %2277 = vmatpush1.bf16.msra.mxu0 %v2271
        %2278 = vmatprep.subr.bf16.mxu0 0
        %2279 = vmatpush1.bf16.msra.mxu0 0
        %2280 = vmatprep.subr.bf16.mxu0 0
        %2281 = vmatpush1.bf16.msra.mxu0 0
        %2282 = vmatprep.subr.bf16.mxu0 0
        %2283 = vmatpush1.bf16.msra.mxu0 0
        %2284 = vmatprep.subr.bf16.mxu0 0
        %2285 = vmatpush1.bf16.msra.mxu0 0
        %2286 = vmatprep.subr.bf16.mxu0 0
        %2287 = vmatpush1.bf16.msra.mxu0 0
        %2288 = vmatprep.subr.bf16.mxu0 0
        %2289 = vmatpush1.bf16.msra.mxu0 0
        %2290 = vmatprep.subr.bf16.mxu0 0
        %2291 = vmatpush1.bf16.msra.mxu0 0
        %2292 = vmatprep.subr.bf16.mxu0 0
        %2293 = vmatpush1.bf16.msra.mxu0 0
        %2294 = vmatprep.subr.bf16.mxu0 0
        %2295 = vmatpush1.bf16.msra.mxu0 0
        %2296 = vmatprep.subr.bf16.mxu0 0
        %2297 = vmatpush1.bf16.msra.mxu0 0
        %2298 = vmatprep.subr.bf16.mxu0 0
        %2299 = vmatpush1.bf16.msra.mxu0 0
        %2300 = vmatprep.subr.bf16.mxu0 0
        %2301 = vmatpush1.bf16.msra.mxu0 0
        %2302 = vmatprep.subr.bf16.mxu0 0
        %2303 = vmatpush1.bf16.msra.mxu0 0
        %2304 = vmatprep.subr.bf16.mxu0 0
        %2305 = vmatpush1.bf16.msra.mxu0 0
        %2306 = vmatprep.mubr.bf16.mxu0 0
        %2307 = vmatmul.mubr.bf16.gmra.mrb[0].mxu0 %v1440
        %v2308 = vpop.f32.mrb[0].mxu0
        %v2309 = vadd.f32 %v1373, %v2308
        %v2310 = vpop.f32.mrb[0].mxu0
        %v2311 = vpop.f32.mrb[0].mxu0
        %v2312 = vpop.f32.mrb[0].mxu0
        %2313 = vdwg.mxu0
        %v2318 = vunpack.c.l.b16 %v1230
        %v2319 = vunpack.c.l.b16 %v1231
        %v2320 = vunpack.c.l.b16 %v1232
        %v2321 = vunpack.c.l.b16 %v1233
        %v2322 = vpack.c.b16 %v2319, %v2318
        %v2323 = vpack.c.b16 %v2321, %v2320
        %2326 = vmatprep.subr.bf16.mxu0 0
        %2327 = vmatpush1.bf16.msra.mxu0 %v2322
        %2328 = vmatprep.subr.bf16.mxu0 0
        %2329 = vmatpush1.bf16.msra.mxu0 %v2323
        %2330 = vmatprep.subr.bf16.mxu0 0
        %2331 = vmatpush1.bf16.msra.mxu0 0
        %2332 = vmatprep.subr.bf16.mxu0 0
        %2333 = vmatpush1.bf16.msra.mxu0 0
        %2334 = vmatprep.subr.bf16.mxu0 0
        %2335 = vmatpush1.bf16.msra.mxu0 0
        %2336 = vmatprep.subr.bf16.mxu0 0
        %2337 = vmatpush1.bf16.msra.mxu0 0
        %2338 = vmatprep.subr.bf16.mxu0 0
        %2339 = vmatpush1.bf16.msra.mxu0 0
        %2340 = vmatprep.subr.bf16.mxu0 0
        %2341 = vmatpush1.bf16.msra.mxu0 0
        %2342 = vmatprep.subr.bf16.mxu0 0
        %2343 = vmatpush1.bf16.msra.mxu0 0
        %2344 = vmatprep.subr.bf16.mxu0 0
        %2345 = vmatpush1.bf16.msra.mxu0 0
        %2346 = vmatprep.subr.bf16.mxu0 0
        %2347 = vmatpush1.bf16.msra.mxu0 0
        %2348 = vmatprep.subr.bf16.mxu0 0
        %2349 = vmatpush1.bf16.msra.mxu0 0
        %2350 = vmatprep.subr.bf16.mxu0 0
        %2351 = vmatpush1.bf16.msra.mxu0 0
        %2352 = vmatprep.subr.bf16.mxu0 0
        %2353 = vmatpush1.bf16.msra.mxu0 0
        %2354 = vmatprep.subr.bf16.mxu0 0
        %2355 = vmatpush1.bf16.msra.mxu0 0
        %2356 = vmatprep.subr.bf16.mxu0 0
        %2357 = vmatpush1.bf16.msra.mxu0 0
        %2358 = vmatprep.mubr.bf16.mxu0 0
        %2359 = vmatmul.mubr.bf16.gmra.mrb[0].mxu0 %v1440
        %v2360 = vpop.f32.mrb[0].mxu0
        %v2361 = vadd.f32 %v1377, %v2360
        %v2362 = vpop.f32.mrb[0].mxu0
        %v2363 = vpop.f32.mrb[0].mxu0
        %v2364 = vpop.f32.mrb[0].mxu0
        %2365 = vdwg.mxu0
        %v2370 = vunpack.c.l.b16 %v1234
        %v2371 = vunpack.c.l.b16 %v1235
        %v2372 = vunpack.c.l.b16 %v1236
        %v2373 = vunpack.c.l.b16 %v1237
        %v2374 = vpack.c.b16 %v2371, %v2370
        %v2375 = vpack.c.b16 %v2373, %v2372
        %2378 = vmatprep.subr.bf16.mxu0 0
        %2379 = vmatpush1.bf16.msra.mxu0 %v2374
        %2380 = vmatprep.subr.bf16.mxu0 0
        %2381 = vmatpush1.bf16.msra.mxu0 %v2375
        %2382 = vmatprep.subr.bf16.mxu0 0
        %2383 = vmatpush1.bf16.msra.mxu0 0
        %2384 = vmatprep.subr.bf16.mxu0 0
        %2385 = vmatpush1.bf16.msra.mxu0 0
        %2386 = vmatprep.subr.bf16.mxu0 0
        %2387 = vmatpush1.bf16.msra.mxu0 0
        %2388 = vmatprep.subr.bf16.mxu0 0
        %2389 = vmatpush1.bf16.msra.mxu0 0
        %2390 = vmatprep.subr.bf16.mxu0 0
        %2391 = vmatpush1.bf16.msra.mxu0 0
        %2392 = vmatprep.subr.bf16.mxu0 0
        %2393 = vmatpush1.bf16.msra.mxu0 0
        %2394 = vmatprep.subr.bf16.mxu0 0
        %2395 = vmatpush1.bf16.msra.mxu0 0
        %2396 = vmatprep.subr.bf16.mxu0 0
        %2397 = vmatpush1.bf16.msra.mxu0 0
        %2398 = vmatprep.subr.bf16.mxu0 0
        %2399 = vmatpush1.bf16.msra.mxu0 0
        %2400 = vmatprep.subr.bf16.mxu0 0
        %2401 = vmatpush1.bf16.msra.mxu0 0
        %2402 = vmatprep.subr.bf16.mxu0 0
        %2403 = vmatpush1.bf16.msra.mxu0 0
        %2404 = vmatprep.subr.bf16.mxu0 0
        %2405 = vmatpush1.bf16.msra.mxu0 0
        %2406 = vmatprep.subr.bf16.mxu0 0
        %2407 = vmatpush1.bf16.msra.mxu0 0
        %2408 = vmatprep.subr.bf16.mxu0 0
        %2409 = vmatpush1.bf16.msra.mxu0 0
        %2410 = vmatprep.mubr.bf16.mxu0 0
        %2411 = vmatmul.mubr.bf16.gmra.mrb[0].mxu0 %v1440
        %v2412 = vpop.f32.mrb[0].mxu0
        %v2413 = vadd.f32 %v1381, %v2412
        %v2414 = vpop.f32.mrb[0].mxu0
        %v2415 = vpop.f32.mrb[0].mxu0
        %v2416 = vpop.f32.mrb[0].mxu0
        %2417 = vdwg.mxu0
        %v2422 = vunpack.c.l.b16 %v1238
        %v2423 = vunpack.c.l.b16 %v1239
        %v2424 = vunpack.c.l.b16 %v1240
        %v2425 = vunpack.c.l.b16 %v1241
        %v2426 = vpack.c.b16 %v2423, %v2422
        %v2427 = vpack.c.b16 %v2425, %v2424
        %2430 = vmatprep.subr.bf16.mxu0 0
        %2431 = vmatpush1.bf16.msra.mxu0 %v2426
        %2432 = vmatprep.subr.bf16.mxu0 0
        %2433 = vmatpush1.bf16.msra.mxu0 %v2427
        %2434 = vmatprep.subr.bf16.mxu0 0
        %2435 = vmatpush1.bf16.msra.mxu0 0
        %2436 = vmatprep.subr.bf16.mxu0 0
        %2437 = vmatpush1.bf16.msra.mxu0 0
        %2438 = vmatprep.subr.bf16.mxu0 0
        %2439 = vmatpush1.bf16.msra.mxu0 0
        %2440 = vmatprep.subr.bf16.mxu0 0
        %2441 = vmatpush1.bf16.msra.mxu0 0
        %2442 = vmatprep.subr.bf16.mxu0 0
        %2443 = vmatpush1.bf16.msra.mxu0 0
        %2444 = vmatprep.subr.bf16.mxu0 0
        %2445 = vmatpush1.bf16.msra.mxu0 0
        %2446 = vmatprep.subr.bf16.mxu0 0
        %2447 = vmatpush1.bf16.msra.mxu0 0
        %2448 = vmatprep.subr.bf16.mxu0 0
        %2449 = vmatpush1.bf16.msra.mxu0 0
        %2450 = vmatprep.subr.bf16.mxu0 0
        %2451 = vmatpush1.bf16.msra.mxu0 0
        %2452 = vmatprep.subr.bf16.mxu0 0
        %2453 = vmatpush1.bf16.msra.mxu0 0
        %2454 = vmatprep.subr.bf16.mxu0 0
        %2455 = vmatpush1.bf16.msra.mxu0 0
        %2456 = vmatprep.subr.bf16.mxu0 0
        %2457 = vmatpush1.bf16.msra.mxu0 0
        %2458 = vmatprep.subr.bf16.mxu0 0
        %2459 = vmatpush1.bf16.msra.mxu0 0
        %2460 = vmatprep.subr.bf16.mxu0 0
        %2461 = vmatpush1.bf16.msra.mxu0 0
        %2462 = vmatprep.mubr.bf16.mxu0 0
        %2463 = vmatmul.mubr.bf16.gmra.mrb[0].mxu0 %v1440
        %v2464 = vpop.f32.mrb[0].mxu0
        %v2465 = vadd.f32 %v1385, %v2464
        %v2466 = vpop.f32.mrb[0].mxu0
        %v2467 = vpop.f32.mrb[0].mxu0
        %v2468 = vpop.f32.mrb[0].mxu0
        %2469 = vdwg.mxu0
        %v2474 = vunpack.c.l.b16 %v1242
        %v2475 = vunpack.c.l.b16 %v1243
        %v2476 = vunpack.c.l.b16 %v1244
        %v2477 = vunpack.c.l.b16 %v1245
        %v2478 = vpack.c.b16 %v2475, %v2474
        %v2479 = vpack.c.b16 %v2477, %v2476
        %2482 = vmatprep.subr.bf16.mxu0 0
        %2483 = vmatpush1.bf16.msra.mxu0 %v2478
        %2484 = vmatprep.subr.bf16.mxu0 0
        %2485 = vmatpush1.bf16.msra.mxu0 %v2479
        %2486 = vmatprep.subr.bf16.mxu0 0
        %2487 = vmatpush1.bf16.msra.mxu0 0
        %2488 = vmatprep.subr.bf16.mxu0 0
        %2489 = vmatpush1.bf16.msra.mxu0 0
        %2490 = vmatprep.subr.bf16.mxu0 0
        %2491 = vmatpush1.bf16.msra.mxu0 0
        %2492 = vmatprep.subr.bf16.mxu0 0
        %2493 = vmatpush1.bf16.msra.mxu0 0
        %2494 = vmatprep.subr.bf16.mxu0 0
        %2495 = vmatpush1.bf16.msra.mxu0 0
        %2496 = vmatprep.subr.bf16.mxu0 0
        %2497 = vmatpush1.bf16.msra.mxu0 0
        %2498 = vmatprep.subr.bf16.mxu0 0
        %2499 = vmatpush1.bf16.msra.mxu0 0
        %2500 = vmatprep.subr.bf16.mxu0 0
        %2501 = vmatpush1.bf16.msra.mxu0 0
        %2502 = vmatprep.subr.bf16.mxu0 0
        %2503 = vmatpush1.bf16.msra.mxu0 0
        %2504 = vmatprep.subr.bf16.mxu0 0
        %2505 = vmatpush1.bf16.msra.mxu0 0
        %2506 = vmatprep.subr.bf16.mxu0 0
        %2507 = vmatpush1.bf16.msra.mxu0 0
        %2508 = vmatprep.subr.bf16.mxu0 0
        %2509 = vmatpush1.bf16.msra.mxu0 0
        %2510 = vmatprep.subr.bf16.mxu0 0
        %2511 = vmatpush1.bf16.msra.mxu0 0
        %2512 = vmatprep.subr.bf16.mxu0 0
        %2513 = vmatpush1.bf16.msra.mxu0 0
        %2514 = vmatprep.mubr.bf16.mxu0 0
        %2515 = vmatmul.mubr.bf16.gmra.mrb[0].mxu0 %v1440
        %v2516 = vpop.f32.mrb[0].mxu0
        %v2517 = vadd.f32 %v1389, %v2516
        %v2518 = vpop.f32.mrb[0].mxu0
        %v2519 = vpop.f32.mrb[0].mxu0
        %v2520 = vpop.f32.mrb[0].mxu0
        %2521 = vdwg.mxu0
        %v2526 = vunpack.c.l.b16 %v1246
        %v2527 = vunpack.c.l.b16 %v1247
        %v2528 = vunpack.c.l.b16 %v1248
        %v2529 = vunpack.c.l.b16 %v1249
        %v2530 = vpack.c.b16 %v2527, %v2526
        %v2531 = vpack.c.b16 %v2529, %v2528
        %2534 = vmatprep.subr.bf16.mxu0 0
        %2535 = vmatpush1.bf16.msra.mxu0 %v2530
        %2536 = vmatprep.subr.bf16.mxu0 0
        %2537 = vmatpush1.bf16.msra.mxu0 %v2531
        %2538 = vmatprep.subr.bf16.mxu0 0
        %2539 = vmatpush1.bf16.msra.mxu0 0
        %2540 = vmatprep.subr.bf16.mxu0 0
        %2541 = vmatpush1.bf16.msra.mxu0 0
        %2542 = vmatprep.subr.bf16.mxu0 0
        %2543 = vmatpush1.bf16.msra.mxu0 0
        %2544 = vmatprep.subr.bf16.mxu0 0
        %2545 = vmatpush1.bf16.msra.mxu0 0
        %2546 = vmatprep.subr.bf16.mxu0 0
        %2547 = vmatpush1.bf16.msra.mxu0 0
        %2548 = vmatprep.subr.bf16.mxu0 0
        %2549 = vmatpush1.bf16.msra.mxu0 0
        %2550 = vmatprep.subr.bf16.mxu0 0
        %2551 = vmatpush1.bf16.msra.mxu0 0
        %2552 = vmatprep.subr.bf16.mxu0 0
        %2553 = vmatpush1.bf16.msra.mxu0 0
        %2554 = vmatprep.subr.bf16.mxu0 0
        %2555 = vmatpush1.bf16.msra.mxu0 0
        %2556 = vmatprep.subr.bf16.mxu0 0
        %2557 = vmatpush1.bf16.msra.mxu0 0
        %2558 = vmatprep.subr.bf16.mxu0 0
        %2559 = vmatpush1.bf16.msra.mxu0 0
        %2560 = vmatprep.subr.bf16.mxu0 0
        %2561 = vmatpush1.bf16.msra.mxu0 0
        %2562 = vmatprep.subr.bf16.mxu0 0
        %2563 = vmatpush1.bf16.msra.mxu0 0
        %2564 = vmatprep.subr.bf16.mxu0 0
        %2565 = vmatpush1.bf16.msra.mxu0 0
        %2566 = vmatprep.mubr.bf16.mxu0 0
        %2567 = vmatmul.mubr.bf16.gmra.mrb[0].mxu0 %v1440
        %v2568 = vpop.f32.mrb[0].mxu0
        %v2569 = vadd.f32 %v1393, %v2568
        %v2570 = vpop.f32.mrb[0].mxu0
        %v2571 = vpop.f32.mrb[0].mxu0
        %v2572 = vpop.f32.mrb[0].mxu0
        %2573 = vdwg.mxu0
        %v2578 = vunpack.c.l.b16 %v1250
        %v2579 = vunpack.c.l.b16 %v1251
        %v2580 = vunpack.c.l.b16 %v1252
        %v2581 = vunpack.c.l.b16 %v1253
        %v2582 = vpack.c.b16 %v2579, %v2578
        %v2583 = vpack.c.b16 %v2581, %v2580
        %2586 = vmatprep.subr.bf16.mxu0 0
        %2587 = vmatpush1.bf16.msra.mxu0 %v2582
        %2588 = vmatprep.subr.bf16.mxu0 0
        %2589 = vmatpush1.bf16.msra.mxu0 %v2583
        %2590 = vmatprep.subr.bf16.mxu0 0
        %2591 = vmatpush1.bf16.msra.mxu0 0
        %2592 = vmatprep.subr.bf16.mxu0 0
        %2593 = vmatpush1.bf16.msra.mxu0 0
        %2594 = vmatprep.subr.bf16.mxu0 0
        %2595 = vmatpush1.bf16.msra.mxu0 0
        %2596 = vmatprep.subr.bf16.mxu0 0
        %2597 = vmatpush1.bf16.msra.mxu0 0
        %2598 = vmatprep.subr.bf16.mxu0 0
        %2599 = vmatpush1.bf16.msra.mxu0 0
        %2600 = vmatprep.subr.bf16.mxu0 0
        %2601 = vmatpush1.bf16.msra.mxu0 0
        %2602 = vmatprep.subr.bf16.mxu0 0
        %2603 = vmatpush1.bf16.msra.mxu0 0
        %2604 = vmatprep.subr.bf16.mxu0 0
        %2605 = vmatpush1.bf16.msra.mxu0 0
        %2606 = vmatprep.subr.bf16.mxu0 0
        %2607 = vmatpush1.bf16.msra.mxu0 0
        %2608 = vmatprep.subr.bf16.mxu0 0
        %2609 = vmatpush1.bf16.msra.mxu0 0
        %2610 = vmatprep.subr.bf16.mxu0 0
        %2611 = vmatpush1.bf16.msra.mxu0 0
        %2612 = vmatprep.subr.bf16.mxu0 0
        %2613 = vmatpush1.bf16.msra.mxu0 0
        %2614 = vmatprep.subr.bf16.mxu0 0
        %2615 = vmatpush1.bf16.msra.mxu0 0
        %2616 = vmatprep.subr.bf16.mxu0 0
        %2617 = vmatpush1.bf16.msra.mxu0 0
        %2618 = vmatprep.mubr.bf16.mxu0 0
        %2619 = vmatmul.mubr.bf16.gmra.mrb[0].mxu0 %v1440
        %v2620 = vpop.f32.mrb[0].mxu0
        %v2621 = vadd.f32 %v1397, %v2620
        %v2622 = vpop.f32.mrb[0].mxu0
        %v2623 = vpop.f32.mrb[0].mxu0
        %v2624 = vpop.f32.mrb[0].mxu0
        %2625 = vdwg.mxu0
        %v2630 = vunpack.c.l.b16 %v1254
        %v2631 = vunpack.c.l.b16 %v1255
        %v2632 = vunpack.c.l.b16 %v1256
        %v2633 = vunpack.c.l.b16 %v1257
        %v2634 = vpack.c.b16 %v2631, %v2630
        %v2635 = vpack.c.b16 %v2633, %v2632
        %2638 = vmatprep.subr.bf16.mxu0 0
        %2639 = vmatpush1.bf16.msra.mxu0 %v2634
        %2640 = vmatprep.subr.bf16.mxu0 0
        %2641 = vmatpush1.bf16.msra.mxu0 %v2635
        %2642 = vmatprep.subr.bf16.mxu0 0
        %2643 = vmatpush1.bf16.msra.mxu0 0
        %2644 = vmatprep.subr.bf16.mxu0 0
        %2645 = vmatpush1.bf16.msra.mxu0 0
        %2646 = vmatprep.subr.bf16.mxu0 0
        %2647 = vmatpush1.bf16.msra.mxu0 0
        %2648 = vmatprep.subr.bf16.mxu0 0
        %2649 = vmatpush1.bf16.msra.mxu0 0
        %2650 = vmatprep.subr.bf16.mxu0 0
        %2651 = vmatpush1.bf16.msra.mxu0 0
        %2652 = vmatprep.subr.bf16.mxu0 0
        %2653 = vmatpush1.bf16.msra.mxu0 0
        %2654 = vmatprep.subr.bf16.mxu0 0
        %2655 = vmatpush1.bf16.msra.mxu0 0
        %2656 = vmatprep.subr.bf16.mxu0 0
        %2657 = vmatpush1.bf16.msra.mxu0 0
        %2658 = vmatprep.subr.bf16.mxu0 0
        %2659 = vmatpush1.bf16.msra.mxu0 0
        %2660 = vmatprep.subr.bf16.mxu0 0
        %2661 = vmatpush1.bf16.msra.mxu0 0
        %2662 = vmatprep.subr.bf16.mxu0 0
        %2663 = vmatpush1.bf16.msra.mxu0 0
        %2664 = vmatprep.subr.bf16.mxu0 0
        %2665 = vmatpush1.bf16.msra.mxu0 0
        %2666 = vmatprep.subr.bf16.mxu0 0
        %2667 = vmatpush1.bf16.msra.mxu0 0
        %2668 = vmatprep.subr.bf16.mxu0 0
        %2669 = vmatpush1.bf16.msra.mxu0 0
        %2670 = vmatprep.mubr.bf16.mxu0 0
        %2671 = vmatmul.mubr.bf16.gmra.mrb[0].mxu0 %v1440
        %v2672 = vpop.f32.mrb[0].mxu0
        %v2673 = vadd.f32 %v1401, %v2672
        %v2674 = vpop.f32.mrb[0].mxu0
        %v2675 = vpop.f32.mrb[0].mxu0
        %v2676 = vpop.f32.mrb[0].mxu0
        %2677 = vdwg.mxu0
        %v2678 = vpack.c.bf16 %v1477, %v1477
        %v2679 = vpack.c.bf16 %v1529, %v1529
        %v2680 = vpack.c.bf16 %v1581, %v1581
        %v2681 = vpack.c.bf16 %v1633, %v1633
        %v2682 = vpack.c.bf16 %v1685, %v1685
        %v2683 = vpack.c.bf16 %v1737, %v1737
        %v2684 = vpack.c.bf16 %v1789, %v1789
        %v2685 = vpack.c.bf16 %v1841, %v1841
        %v2686 = vpack.c.bf16 %v1893, %v1893
        %v2687 = vpack.c.bf16 %v1945, %v1945
        %v2688 = vpack.c.bf16 %v1997, %v1997
        %v2689 = vpack.c.bf16 %v2049, %v2049
        %v2690 = vpack.c.bf16 %v2101, %v2101
        %v2691 = vpack.c.bf16 %v2153, %v2153
        %v2692 = vpack.c.bf16 %v2205, %v2205
        %v2693 = vpack.c.bf16 %v2257, %v2257
        %v2695 = vlaneseq
        %v2696 = vshrl.u32 %v2695, 7
        %v2697 = vsub.s32 0, %v2696
        %v2698 = vrot.slane %v1101, %v2697
        %v2701 = vsel %vm1111, %v2678, 0
        %v2704 = vsel %vm1111, %v2686, 0
        %2706 = vmatprep.subr.bf16.mxu0 0
        %2707 = vmatpush1.bf16.xpose.msra.mxu0 %v2704
        %2708 = vmatprep.subr.bf16.mxu0 0
        %2709 = vmatpush1.bf16.xpose.msra.mxu0 0
        %2710 = vmatprep.subr.bf16.mxu0 0
        %2711 = vmatpush1.bf16.xpose.msra.mxu0 0
        %2712 = vmatprep.subr.bf16.mxu0 0
        %2713 = vmatpush1.bf16.xpose.msra.mxu0 0
        %2714 = vmatprep.subr.bf16.mxu0 0
        %2715 = vmatpush1.bf16.xpose.msra.mxu0 0
        %2716 = vmatprep.subr.bf16.mxu0 0
        %2717 = vmatpush1.bf16.xpose.msra.mxu0 0
        %2718 = vmatprep.subr.bf16.mxu0 0
        %2719 = vmatpush1.bf16.xpose.msra.mxu0 0
        %2720 = vmatprep.subr.bf16.mxu0 0
        %2721 = vmatpush1.bf16.xpose.msra.mxu0 0
        %2722 = vmatprep.subr.bf16.mxu0 0
        %2723 = vmatpush1.bf16.xpose.msra.mxu0 0
        %2724 = vmatprep.subr.bf16.mxu0 0
        %2725 = vmatpush1.bf16.xpose.msra.mxu0 0
        %2726 = vmatprep.subr.bf16.mxu0 0
        %2727 = vmatpush1.bf16.xpose.msra.mxu0 0
        %2728 = vmatprep.subr.bf16.mxu0 0
        %2729 = vmatpush1.bf16.xpose.msra.mxu0 0
        %2730 = vmatprep.subr.bf16.mxu0 0
        %2731 = vmatpush1.bf16.xpose.msra.mxu0 0
        %2732 = vmatprep.subr.bf16.mxu0 0
        %2733 = vmatpush1.bf16.xpose.msra.mxu0 0
        %2734 = vmatprep.subr.bf16.mxu0 0
        %2735 = vmatpush1.bf16.xpose.msra.mxu0 0
        %2736 = vmatprep.subr.bf16.mxu0 0
        %2737 = vmatpush1.bf16.xpose.msra.mxu0 0
        %2738 = vmatprep.mubr.bf16.mxu0 0
        %2739 = vmatmul.mubr.bf16.gmra.mrb[0].mxu0 %v2701
        %v2740 = vpop.f32.mrb[0].mxu0
        %v2741 = vadd.f32 %v2698, %v2740
        %v2742 = vpop.f32.mrb[0].mxu0
        %v2743 = vpop.f32.mrb[0].mxu0
        %v2744 = vpop.f32.mrb[0].mxu0
        %2745 = vdwg.mxu0
        %v2747 = vsel %vm1111, %v2679, 0
        %v2750 = vsel %vm1111, %v2687, 0
        %2752 = vmatprep.subr.bf16.mxu0 0
        %2753 = vmatpush1.bf16.xpose.msra.mxu0 %v2750
        %2754 = vmatprep.subr.bf16.mxu0 0
        %2755 = vmatpush1.bf16.xpose.msra.mxu0 0
        %2756 = vmatprep.subr.bf16.mxu0 0
        %2757 = vmatpush1.bf16.xpose.msra.mxu0 0
        %2758 = vmatprep.subr.bf16.mxu0 0
        %2759 = vmatpush1.bf16.xpose.msra.mxu0 0
        %2760 = vmatprep.subr.bf16.mxu0 0
        %2761 = vmatpush1.bf16.xpose.msra.mxu0 0
        %2762 = vmatprep.subr.bf16.mxu0 0
        %2763 = vmatpush1.bf16.xpose.msra.mxu0 0
        %2764 = vmatprep.subr.bf16.mxu0 0
        %2765 = vmatpush1.bf16.xpose.msra.mxu0 0
        %2766 = vmatprep.subr.bf16.mxu0 0
        %2767 = vmatpush1.bf16.xpose.msra.mxu0 0
        %2768 = vmatprep.subr.bf16.mxu0 0
        %2769 = vmatpush1.bf16.xpose.msra.mxu0 0
        %2770 = vmatprep.subr.bf16.mxu0 0
        %2771 = vmatpush1.bf16.xpose.msra.mxu0 0
        %2772 = vmatprep.subr.bf16.mxu0 0
        %2773 = vmatpush1.bf16.xpose.msra.mxu0 0
        %2774 = vmatprep.subr.bf16.mxu0 0
        %2775 = vmatpush1.bf16.xpose.msra.mxu0 0
        %2776 = vmatprep.subr.bf16.mxu0 0
        %2777 = vmatpush1.bf16.xpose.msra.mxu0 0
        %2778 = vmatprep.subr.bf16.mxu0 0
        %2779 = vmatpush1.bf16.xpose.msra.mxu0 0
        %2780 = vmatprep.subr.bf16.mxu0 0
        %2781 = vmatpush1.bf16.xpose.msra.mxu0 0
        %2782 = vmatprep.subr.bf16.mxu0 0
        %2783 = vmatpush1.bf16.xpose.msra.mxu0 0
        %2784 = vmatprep.mubr.bf16.mxu0 0
        %2785 = vmatmul.mubr.bf16.gmra.mrb[0].mxu0 %v2747
        %v2786 = vpop.f32.mrb[0].mxu0
        %v2787 = vadd.f32 %v2698, %v2786
        %v2788 = vpop.f32.mrb[0].mxu0
        %v2789 = vpop.f32.mrb[0].mxu0
        %v2790 = vpop.f32.mrb[0].mxu0
        %2791 = vdwg.mxu0
        %v2793 = vsel %vm1111, %v2680, 0
        %v2796 = vsel %vm1111, %v2688, 0
        %2798 = vmatprep.subr.bf16.mxu0 0
        %2799 = vmatpush1.bf16.xpose.msra.mxu0 %v2796
        %2800 = vmatprep.subr.bf16.mxu0 0
        %2801 = vmatpush1.bf16.xpose.msra.mxu0 0
        %2802 = vmatprep.subr.bf16.mxu0 0
        %2803 = vmatpush1.bf16.xpose.msra.mxu0 0
        %2804 = vmatprep.subr.bf16.mxu0 0
        %2805 = vmatpush1.bf16.xpose.msra.mxu0 0
        %2806 = vmatprep.subr.bf16.mxu0 0
        %2807 = vmatpush1.bf16.xpose.msra.mxu0 0
        %2808 = vmatprep.subr.bf16.mxu0 0
        %2809 = vmatpush1.bf16.xpose.msra.mxu0 0
        %2810 = vmatprep.subr.bf16.mxu0 0
        %2811 = vmatpush1.bf16.xpose.msra.mxu0 0
        %2812 = vmatprep.subr.bf16.mxu0 0
        %2813 = vmatpush1.bf16.xpose.msra.mxu0 0
        %2814 = vmatprep.subr.bf16.mxu0 0
        %2815 = vmatpush1.bf16.xpose.msra.mxu0 0
        %2816 = vmatprep.subr.bf16.mxu0 0
        %2817 = vmatpush1.bf16.xpose.msra.mxu0 0
        %2818 = vmatprep.subr.bf16.mxu0 0
        %2819 = vmatpush1.bf16.xpose.msra.mxu0 0
        %2820 = vmatprep.subr.bf16.mxu0 0
        %2821 = vmatpush1.bf16.xpose.msra.mxu0 0
        %2822 = vmatprep.subr.bf16.mxu0 0
        %2823 = vmatpush1.bf16.xpose.msra.mxu0 0
        %2824 = vmatprep.subr.bf16.mxu0 0
        %2825 = vmatpush1.bf16.xpose.msra.mxu0 0
        %2826 = vmatprep.subr.bf16.mxu0 0
        %2827 = vmatpush1.bf16.xpose.msra.mxu0 0
        %2828 = vmatprep.subr.bf16.mxu0 0
        %2829 = vmatpush1.bf16.xpose.msra.mxu0 0
        %2830 = vmatprep.mubr.bf16.mxu0 0
        %2831 = vmatmul.mubr.bf16.gmra.mrb[0].mxu0 %v2793
        %v2832 = vpop.f32.mrb[0].mxu0
        %v2833 = vadd.f32 %v2698, %v2832
        %v2834 = vpop.f32.mrb[0].mxu0
        %v2835 = vpop.f32.mrb[0].mxu0
        %v2836 = vpop.f32.mrb[0].mxu0
        %2837 = vdwg.mxu0
        %v2839 = vsel %vm1111, %v2681, 0
        %v2842 = vsel %vm1111, %v2689, 0
        %2844 = vmatprep.subr.bf16.mxu0 0
        %2845 = vmatpush1.bf16.xpose.msra.mxu0 %v2842
        %2846 = vmatprep.subr.bf16.mxu0 0
        %2847 = vmatpush1.bf16.xpose.msra.mxu0 0
        %2848 = vmatprep.subr.bf16.mxu0 0
        %2849 = vmatpush1.bf16.xpose.msra.mxu0 0
        %2850 = vmatprep.subr.bf16.mxu0 0
        %2851 = vmatpush1.bf16.xpose.msra.mxu0 0
        %2852 = vmatprep.subr.bf16.mxu0 0
        %2853 = vmatpush1.bf16.xpose.msra.mxu0 0
        %2854 = vmatprep.subr.bf16.mxu0 0
        %2855 = vmatpush1.bf16.xpose.msra.mxu0 0
        %2856 = vmatprep.subr.bf16.mxu0 0
        %2857 = vmatpush1.bf16.xpose.msra.mxu0 0
        %2858 = vmatprep.subr.bf16.mxu0 0
        %2859 = vmatpush1.bf16.xpose.msra.mxu0 0
        %2860 = vmatprep.subr.bf16.mxu0 0
        %2861 = vmatpush1.bf16.xpose.msra.mxu0 0
        %2862 = vmatprep.subr.bf16.mxu0 0
        %2863 = vmatpush1.bf16.xpose.msra.mxu0 0
        %2864 = vmatprep.subr.bf16.mxu0 0
        %2865 = vmatpush1.bf16.xpose.msra.mxu0 0
        %2866 = vmatprep.subr.bf16.mxu0 0
        %2867 = vmatpush1.bf16.xpose.msra.mxu0 0
        %2868 = vmatprep.subr.bf16.mxu0 0
        %2869 = vmatpush1.bf16.xpose.msra.mxu0 0
        %2870 = vmatprep.subr.bf16.mxu0 0
        %2871 = vmatpush1.bf16.xpose.msra.mxu0 0
        %2872 = vmatprep.subr.bf16.mxu0 0
        %2873 = vmatpush1.bf16.xpose.msra.mxu0 0
        %2874 = vmatprep.subr.bf16.mxu0 0
        %2875 = vmatpush1.bf16.xpose.msra.mxu0 0
        %2876 = vmatprep.mubr.bf16.mxu0 0
        %2877 = vmatmul.mubr.bf16.gmra.mrb[0].mxu0 %v2839
        %v2878 = vpop.f32.mrb[0].mxu0
        %v2879 = vadd.f32 %v2698, %v2878
        %v2880 = vpop.f32.mrb[0].mxu0
        %v2881 = vpop.f32.mrb[0].mxu0
        %v2882 = vpop.f32.mrb[0].mxu0
        %2883 = vdwg.mxu0
        %v2885 = vsel %vm1111, %v2682, 0
        %v2888 = vsel %vm1111, %v2690, 0
        %2890 = vmatprep.subr.bf16.mxu0 0
        %2891 = vmatpush1.bf16.xpose.msra.mxu0 %v2888
        %2892 = vmatprep.subr.bf16.mxu0 0
        %2893 = vmatpush1.bf16.xpose.msra.mxu0 0
        %2894 = vmatprep.subr.bf16.mxu0 0
        %2895 = vmatpush1.bf16.xpose.msra.mxu0 0
        %2896 = vmatprep.subr.bf16.mxu0 0
        %2897 = vmatpush1.bf16.xpose.msra.mxu0 0
        %2898 = vmatprep.subr.bf16.mxu0 0
        %2899 = vmatpush1.bf16.xpose.msra.mxu0 0
        %2900 = vmatprep.subr.bf16.mxu0 0
        %2901 = vmatpush1.bf16.xpose.msra.mxu0 0
        %2902 = vmatprep.subr.bf16.mxu0 0
        %2903 = vmatpush1.bf16.xpose.msra.mxu0 0
        %2904 = vmatprep.subr.bf16.mxu0 0
        %2905 = vmatpush1.bf16.xpose.msra.mxu0 0
        %2906 = vmatprep.subr.bf16.mxu0 0
        %2907 = vmatpush1.bf16.xpose.msra.mxu0 0
        %2908 = vmatprep.subr.bf16.mxu0 0
        %2909 = vmatpush1.bf16.xpose.msra.mxu0 0
        %2910 = vmatprep.subr.bf16.mxu0 0
        %2911 = vmatpush1.bf16.xpose.msra.mxu0 0
        %2912 = vmatprep.subr.bf16.mxu0 0
        %2913 = vmatpush1.bf16.xpose.msra.mxu0 0
        %2914 = vmatprep.subr.bf16.mxu0 0
        %2915 = vmatpush1.bf16.xpose.msra.mxu0 0
        %2916 = vmatprep.subr.bf16.mxu0 0
        %2917 = vmatpush1.bf16.xpose.msra.mxu0 0
        %2918 = vmatprep.subr.bf16.mxu0 0
        %2919 = vmatpush1.bf16.xpose.msra.mxu0 0
        %2920 = vmatprep.subr.bf16.mxu0 0
        %2921 = vmatpush1.bf16.xpose.msra.mxu0 0
        %2922 = vmatprep.mubr.bf16.mxu0 0
        %2923 = vmatmul.mubr.bf16.gmra.mrb[0].mxu0 %v2885
        %v2924 = vpop.f32.mrb[0].mxu0
        %v2925 = vadd.f32 %v2698, %v2924
        %v2926 = vpop.f32.mrb[0].mxu0
        %v2927 = vpop.f32.mrb[0].mxu0
        %v2928 = vpop.f32.mrb[0].mxu0
        %2929 = vdwg.mxu0
        %v2931 = vsel %vm1111, %v2683, 0
        %v2934 = vsel %vm1111, %v2691, 0
        %2936 = vmatprep.subr.bf16.mxu0 0
        %2937 = vmatpush1.bf16.xpose.msra.mxu0 %v2934
        %2938 = vmatprep.subr.bf16.mxu0 0
        %2939 = vmatpush1.bf16.xpose.msra.mxu0 0
        %2940 = vmatprep.subr.bf16.mxu0 0
        %2941 = vmatpush1.bf16.xpose.msra.mxu0 0
        %2942 = vmatprep.subr.bf16.mxu0 0
        %2943 = vmatpush1.bf16.xpose.msra.mxu0 0
        %2944 = vmatprep.subr.bf16.mxu0 0
        %2945 = vmatpush1.bf16.xpose.msra.mxu0 0
        %2946 = vmatprep.subr.bf16.mxu0 0
        %2947 = vmatpush1.bf16.xpose.msra.mxu0 0
        %2948 = vmatprep.subr.bf16.mxu0 0
        %2949 = vmatpush1.bf16.xpose.msra.mxu0 0
        %2950 = vmatprep.subr.bf16.mxu0 0
        %2951 = vmatpush1.bf16.xpose.msra.mxu0 0
        %2952 = vmatprep.subr.bf16.mxu0 0
        %2953 = vmatpush1.bf16.xpose.msra.mxu0 0
        %2954 = vmatprep.subr.bf16.mxu0 0
        %2955 = vmatpush1.bf16.xpose.msra.mxu0 0
        %2956 = vmatprep.subr.bf16.mxu0 0
        %2957 = vmatpush1.bf16.xpose.msra.mxu0 0
        %2958 = vmatprep.subr.bf16.mxu0 0
        %2959 = vmatpush1.bf16.xpose.msra.mxu0 0
        %2960 = vmatprep.subr.bf16.mxu0 0
        %2961 = vmatpush1.bf16.xpose.msra.mxu0 0
        %2962 = vmatprep.subr.bf16.mxu0 0
        %2963 = vmatpush1.bf16.xpose.msra.mxu0 0
        %2964 = vmatprep.subr.bf16.mxu0 0
        %2965 = vmatpush1.bf16.xpose.msra.mxu0 0
        %2966 = vmatprep.subr.bf16.mxu0 0
        %2967 = vmatpush1.bf16.xpose.msra.mxu0 0
        %2968 = vmatprep.mubr.bf16.mxu0 0
        %2969 = vmatmul.mubr.bf16.gmra.mrb[0].mxu0 %v2931
        %v2970 = vpop.f32.mrb[0].mxu0
        %v2971 = vadd.f32 %v2698, %v2970
        %v2972 = vpop.f32.mrb[0].mxu0
        %v2973 = vpop.f32.mrb[0].mxu0
        %v2974 = vpop.f32.mrb[0].mxu0
        %2975 = vdwg.mxu0
        %v2977 = vsel %vm1111, %v2684, 0
        %v2980 = vsel %vm1111, %v2692, 0
        %2982 = vmatprep.subr.bf16.mxu0 0
        %2983 = vmatpush1.bf16.xpose.msra.mxu0 %v2980
        %2984 = vmatprep.subr.bf16.mxu0 0
        %2985 = vmatpush1.bf16.xpose.msra.mxu0 0
        %2986 = vmatprep.subr.bf16.mxu0 0
        %2987 = vmatpush1.bf16.xpose.msra.mxu0 0
        %2988 = vmatprep.subr.bf16.mxu0 0
        %2989 = vmatpush1.bf16.xpose.msra.mxu0 0
        %2990 = vmatprep.subr.bf16.mxu0 0
        %2991 = vmatpush1.bf16.xpose.msra.mxu0 0
        %2992 = vmatprep.subr.bf16.mxu0 0
        %2993 = vmatpush1.bf16.xpose.msra.mxu0 0
        %2994 = vmatprep.subr.bf16.mxu0 0
        %2995 = vmatpush1.bf16.xpose.msra.mxu0 0
        %2996 = vmatprep.subr.bf16.mxu0 0
        %2997 = vmatpush1.bf16.xpose.msra.mxu0 0
        %2998 = vmatprep.subr.bf16.mxu0 0
        %2999 = vmatpush1.bf16.xpose.msra.mxu0 0
        %3000 = vmatprep.subr.bf16.mxu0 0
        %3001 = vmatpush1.bf16.xpose.msra.mxu0 0
        %3002 = vmatprep.subr.bf16.mxu0 0
        %3003 = vmatpush1.bf16.xpose.msra.mxu0 0
        %3004 = vmatprep.subr.bf16.mxu0 0
        %3005 = vmatpush1.bf16.xpose.msra.mxu0 0
        %3006 = vmatprep.subr.bf16.mxu0 0
        %3007 = vmatpush1.bf16.xpose.msra.mxu0 0
        %3008 = vmatprep.subr.bf16.mxu0 0
        %3009 = vmatpush1.bf16.xpose.msra.mxu0 0
        %3010 = vmatprep.subr.bf16.mxu0 0
        %3011 = vmatpush1.bf16.xpose.msra.mxu0 0
        %3012 = vmatprep.subr.bf16.mxu0 0
        %3013 = vmatpush1.bf16.xpose.msra.mxu0 0
        %3014 = vmatprep.mubr.bf16.mxu0 0
        %3015 = vmatmul.mubr.bf16.gmra.mrb[0].mxu0 %v2977
        %v3016 = vpop.f32.mrb[0].mxu0
        %v3017 = vadd.f32 %v2698, %v3016
        %v3018 = vpop.f32.mrb[0].mxu0
        %v3019 = vpop.f32.mrb[0].mxu0
        %v3020 = vpop.f32.mrb[0].mxu0
        %3021 = vdwg.mxu0
        %v3023 = vsel %vm1111, %v2685, 0
        %v3026 = vsel %vm1111, %v2693, 0
        %3028 = vmatprep.subr.bf16.mxu0 0
        %3029 = vmatpush1.bf16.xpose.msra.mxu0 %v3026
        %3030 = vmatprep.subr.bf16.mxu0 0
        %3031 = vmatpush1.bf16.xpose.msra.mxu0 0
        %3032 = vmatprep.subr.bf16.mxu0 0
        %3033 = vmatpush1.bf16.xpose.msra.mxu0 0
        %3034 = vmatprep.subr.bf16.mxu0 0
        %3035 = vmatpush1.bf16.xpose.msra.mxu0 0
        %3036 = vmatprep.subr.bf16.mxu0 0
        %3037 = vmatpush1.bf16.xpose.msra.mxu0 0
        %3038 = vmatprep.subr.bf16.mxu0 0
        %3039 = vmatpush1.bf16.xpose.msra.mxu0 0
        %3040 = vmatprep.subr.bf16.mxu0 0
        %3041 = vmatpush1.bf16.xpose.msra.mxu0 0
        %3042 = vmatprep.subr.bf16.mxu0 0
        %3043 = vmatpush1.bf16.xpose.msra.mxu0 0
        %3044 = vmatprep.subr.bf16.mxu0 0
        %3045 = vmatpush1.bf16.xpose.msra.mxu0 0
        %3046 = vmatprep.subr.bf16.mxu0 0
        %3047 = vmatpush1.bf16.xpose.msra.mxu0 0
        %3048 = vmatprep.subr.bf16.mxu0 0
        %3049 = vmatpush1.bf16.xpose.msra.mxu0 0
        %3050 = vmatprep.subr.bf16.mxu0 0
        %3051 = vmatpush1.bf16.xpose.msra.mxu0 0
        %3052 = vmatprep.subr.bf16.mxu0 0
        %3053 = vmatpush1.bf16.xpose.msra.mxu0 0
        %3054 = vmatprep.subr.bf16.mxu0 0
        %3055 = vmatpush1.bf16.xpose.msra.mxu0 0
        %3056 = vmatprep.subr.bf16.mxu0 0
        %3057 = vmatpush1.bf16.xpose.msra.mxu0 0
        %3058 = vmatprep.subr.bf16.mxu0 0
        %3059 = vmatpush1.bf16.xpose.msra.mxu0 0
        %3060 = vmatprep.mubr.bf16.mxu0 0
        %3061 = vmatmul.mubr.bf16.gmra.mrb[0].mxu0 %v3023
        %v3062 = vpop.f32.mrb[0].mxu0
        %v3063 = vadd.f32 %v2698, %v3062
        %v3064 = vpop.f32.mrb[0].mxu0
        %v3065 = vpop.f32.mrb[0].mxu0
        %v3066 = vpop.f32.mrb[0].mxu0
        %3067 = vdwg.mxu0
        %vm3068 = vcmask 64512
        %v3069 = vsel %vm3068, %v2741, -inf
        %3070 = vmax.xlane.f32.xlu0 %v3069
        %v3071 = vpop.xlane.xlu0 %3070
        %v3072 = vsel %vm3068, %v2787, -inf
        %3073 = vmax.xlane.f32.xlu0 %v3072
        %v3074 = vpop.xlane.xlu0 %3073
        %v3075 = vsel %vm3068, %v2833, -inf
        %3076 = vmax.xlane.f32.xlu0 %v3075
        %v3077 = vpop.xlane.xlu0 %3076
        %v3078 = vsel %vm3068, %v2879, -inf
        %3079 = vmax.xlane.f32.xlu0 %v3078
        %v3080 = vpop.xlane.xlu0 %3079
        %v3081 = vsel %vm3068, %v2925, -inf
        %3082 = vmax.xlane.f32.xlu0 %v3081
        %v3083 = vpop.xlane.xlu0 %3082
        %v3084 = vsel %vm3068, %v2971, -inf
        %3085 = vmax.xlane.f32.xlu0 %v3084
        %v3086 = vpop.xlane.xlu0 %3085
        %v3087 = vsel %vm3068, %v3017, -inf
        %3088 = vmax.xlane.f32.xlu0 %v3087
        %v3089 = vpop.xlane.xlu0 %3088
        %v3090 = vsel %vm3068, %v3063, -inf
        %3091 = vmax.xlane.f32.xlu0 %v3090
        %v3092 = vpop.xlane.xlu0 %3091
        %v3093 = vsub.f32 %v2741, %v3071
        %v3094 = vsub.f32 %v2787, %v3074
        %v3095 = vsub.f32 %v2833, %v3077
        %v3096 = vsub.f32 %v2879, %v3080
        %v3097 = vsub.f32 %v2925, %v3083
        %v3098 = vsub.f32 %v2971, %v3086
        %v3099 = vsub.f32 %v3017, %v3089
        %v3100 = vsub.f32 %v3063, %v3092
        %v3101 = vmul.f32 %v3093, 1.442695
        %v3102 = vpow.pop %v3101
        %v3103 = vmul.f32 %v3094, 1.442695
        %v3104 = vpow.pop %v3103
        %v3105 = vmul.f32 %v3095, 1.442695
        %v3106 = vpow.pop %v3105
        %v3107 = vmul.f32 %v3096, 1.442695
        %v3108 = vpow.pop %v3107
        %v3109 = vmul.f32 %v3097, 1.442695
        %v3110 = vpow.pop %v3109
        %v3111 = vmul.f32 %v3098, 1.442695
        %v3112 = vpow.pop %v3111
        %v3113 = vmul.f32 %v3099, 1.442695
        %v3114 = vpow.pop %v3113
        %v3115 = vmul.f32 %v3100, 1.442695
        %v3116 = vpow.pop %v3115
        %v3117 = vsel %vm3068, %v3102, 0.0
        %3118 = vadd.xlane.f32.xlu0 %v3117
        %v3119 = vpop.xlane.xlu0 %3118
        %v3120 = vsel %vm3068, %v3104, 0.0
        %3121 = vadd.xlane.f32.xlu0 %v3120
        %v3122 = vpop.xlane.xlu0 %3121
        %v3123 = vsel %vm3068, %v3106, 0.0
        %3124 = vadd.xlane.f32.xlu0 %v3123
        %v3125 = vpop.xlane.xlu0 %3124
        %v3126 = vsel %vm3068, %v3108, 0.0
        %3127 = vadd.xlane.f32.xlu0 %v3126
        %v3128 = vpop.xlane.xlu0 %3127
        %v3129 = vsel %vm3068, %v3110, 0.0
        %3130 = vadd.xlane.f32.xlu0 %v3129
        %v3131 = vpop.xlane.xlu0 %3130
        %v3132 = vsel %vm3068, %v3112, 0.0
        %3133 = vadd.xlane.f32.xlu0 %v3132
        %v3134 = vpop.xlane.xlu0 %3133
        %v3135 = vsel %vm3068, %v3114, 0.0
        %3136 = vadd.xlane.f32.xlu0 %v3135
        %v3137 = vpop.xlane.xlu0 %3136
        %v3138 = vsel %vm3068, %v3116, 0.0
        %3139 = vadd.xlane.f32.xlu0 %v3138
        %v3140 = vpop.xlane.xlu0 %3139
        %v3141 = vrcp.pop %v3119
        %v3142 = vrcp.pop %v3122
        %v3143 = vrcp.pop %v3125
        %v3144 = vrcp.pop %v3128
        %v3145 = vrcp.pop %v3131
        %v3146 = vrcp.pop %v3134
        %v3147 = vrcp.pop %v3137
        %v3148 = vrcp.pop %v3140
        %v3149 = vmul.f32 %v3102, %v3141
        %v3150 = vmul.f32 %v3104, %v3142
        %v3151 = vmul.f32 %v3106, %v3143
        %v3152 = vmul.f32 %v3108, %v3144
        %v3153 = vmul.f32 %v3110, %v3145
        %v3154 = vmul.f32 %v3112, %v3146
        %v3155 = vmul.f32 %v3114, %v3147
        %v3156 = vmul.f32 %v3116, %v3148
        %v3157 = vpack.c.bf16 %v3149, %v3149
        %v3158 = vpack.c.bf16 %v3150, %v3150
        %v3159 = vpack.c.bf16 %v3151, %v3151
        %v3160 = vpack.c.bf16 %v3152, %v3152
        %v3161 = vpack.c.bf16 %v3153, %v3153
        %v3162 = vpack.c.bf16 %v3154, %v3154
        %v3163 = vpack.c.bf16 %v3155, %v3155
        %v3164 = vpack.c.bf16 %v3156, %v3156
        %v3165 = vpack.c.bf16 %v2309, %v2309
        %v3166 = vpack.c.bf16 %v2361, %v2361
        %v3167 = vpack.c.bf16 %v2413, %v2413
        %v3168 = vpack.c.bf16 %v2465, %v2465
        %v3169 = vpack.c.bf16 %v2517, %v2517
        %v3170 = vpack.c.bf16 %v2569, %v2569
        %v3171 = vpack.c.bf16 %v2621, %v2621
        %v3172 = vpack.c.bf16 %v2673, %v2673
        %v3174 = vsel %vm3068, %v3157, 0
        %vm3176 = vcmask 1043456
        %v3178 = vsel %vm3176, %v3165, 0
        %3180 = vmatprep.subr.bf16.mxu0 0
        %3181 = vmatpush1.bf16.msra.mxu0 %v3178
        %3182 = vmatprep.subr.bf16.mxu0 0
        %3183 = vmatpush1.bf16.msra.mxu0 0
        %3184 = vmatprep.subr.bf16.mxu0 0
        %3185 = vmatpush1.bf16.msra.mxu0 0
        %3186 = vmatprep.subr.bf16.mxu0 0
        %3187 = vmatpush1.bf16.msra.mxu0 0
        %3188 = vmatprep.subr.bf16.mxu0 0
        %3189 = vmatpush1.bf16.msra.mxu0 0
        %3190 = vmatprep.subr.bf16.mxu0 0
        %3191 = vmatpush1.bf16.msra.mxu0 0
        %3192 = vmatprep.subr.bf16.mxu0 0
        %3193 = vmatpush1.bf16.msra.mxu0 0
        %3194 = vmatprep.subr.bf16.mxu0 0
        %3195 = vmatpush1.bf16.msra.mxu0 0
        %3196 = vmatprep.subr.bf16.mxu0 0
        %3197 = vmatpush1.bf16.msra.mxu0 0
        %3198 = vmatprep.subr.bf16.mxu0 0
        %3199 = vmatpush1.bf16.msra.mxu0 0
        %3200 = vmatprep.subr.bf16.mxu0 0
        %3201 = vmatpush1.bf16.msra.mxu0 0
        %3202 = vmatprep.subr.bf16.mxu0 0
        %3203 = vmatpush1.bf16.msra.mxu0 0
        %3204 = vmatprep.subr.bf16.mxu0 0
        %3205 = vmatpush1.bf16.msra.mxu0 0
        %3206 = vmatprep.subr.bf16.mxu0 0
        %3207 = vmatpush1.bf16.msra.mxu0 0
        %3208 = vmatprep.subr.bf16.mxu0 0
        %3209 = vmatpush1.bf16.msra.mxu0 0
        %3210 = vmatprep.subr.bf16.mxu0 0
        %3211 = vmatpush1.bf16.msra.mxu0 0
        %3212 = vmatprep.mubr.bf16.mxu0 0
        %3213 = vmatmul.mubr.bf16.gmra.mrb[0].mxu0 %v3174
        %v3214 = vpop.f32.mrb[0].mxu0
        %v3215 = vadd.f32 0.0, %v3214
        %v3216 = vpop.f32.mrb[0].mxu0
        %v3217 = vpop.f32.mrb[0].mxu0
        %v3218 = vpop.f32.mrb[0].mxu0
        %3219 = vdwg.mxu0
        %v3221 = vsel %vm3068, %v3158, 0
        %v3224 = vsel %vm3176, %v3166, 0
        %3226 = vmatprep.subr.bf16.mxu0 0
        %3227 = vmatpush1.bf16.msra.mxu0 %v3224
        %3228 = vmatprep.subr.bf16.mxu0 0
        %3229 = vmatpush1.bf16.msra.mxu0 0
        %3230 = vmatprep.subr.bf16.mxu0 0
        %3231 = vmatpush1.bf16.msra.mxu0 0
        %3232 = vmatprep.subr.bf16.mxu0 0
        %3233 = vmatpush1.bf16.msra.mxu0 0
        %3234 = vmatprep.subr.bf16.mxu0 0
        %3235 = vmatpush1.bf16.msra.mxu0 0
        %3236 = vmatprep.subr.bf16.mxu0 0
        %3237 = vmatpush1.bf16.msra.mxu0 0
        %3238 = vmatprep.subr.bf16.mxu0 0
        %3239 = vmatpush1.bf16.msra.mxu0 0
        %3240 = vmatprep.subr.bf16.mxu0 0
        %3241 = vmatpush1.bf16.msra.mxu0 0
        %3242 = vmatprep.subr.bf16.mxu0 0
        %3243 = vmatpush1.bf16.msra.mxu0 0
        %3244 = vmatprep.subr.bf16.mxu0 0
        %3245 = vmatpush1.bf16.msra.mxu0 0
        %3246 = vmatprep.subr.bf16.mxu0 0
        %3247 = vmatpush1.bf16.msra.mxu0 0
        %3248 = vmatprep.subr.bf16.mxu0 0
        %3249 = vmatpush1.bf16.msra.mxu0 0
        %3250 = vmatprep.subr.bf16.mxu0 0
        %3251 = vmatpush1.bf16.msra.mxu0 0
        %3252 = vmatprep.subr.bf16.mxu0 0
        %3253 = vmatpush1.bf16.msra.mxu0 0
        %3254 = vmatprep.subr.bf16.mxu0 0
        %3255 = vmatpush1.bf16.msra.mxu0 0
        %3256 = vmatprep.subr.bf16.mxu0 0
        %3257 = vmatpush1.bf16.msra.mxu0 0
        %3258 = vmatprep.mubr.bf16.mxu0 0
        %3259 = vmatmul.mubr.bf16.gmra.mrb[0].mxu0 %v3221
        %v3260 = vpop.f32.mrb[0].mxu0
        %v3261 = vadd.f32 0.0, %v3260
        %v3262 = vpop.f32.mrb[0].mxu0
        %v3263 = vpop.f32.mrb[0].mxu0
        %v3264 = vpop.f32.mrb[0].mxu0
        %3265 = vdwg.mxu0
        %v3267 = vsel %vm3068, %v3159, 0
        %v3270 = vsel %vm3176, %v3167, 0
        %3272 = vmatprep.subr.bf16.mxu0 0
        %3273 = vmatpush1.bf16.msra.mxu0 %v3270
        %3274 = vmatprep.subr.bf16.mxu0 0
        %3275 = vmatpush1.bf16.msra.mxu0 0
        %3276 = vmatprep.subr.bf16.mxu0 0
        %3277 = vmatpush1.bf16.msra.mxu0 0
        %3278 = vmatprep.subr.bf16.mxu0 0
        %3279 = vmatpush1.bf16.msra.mxu0 0
        %3280 = vmatprep.subr.bf16.mxu0 0
        %3281 = vmatpush1.bf16.msra.mxu0 0
        %3282 = vmatprep.subr.bf16.mxu0 0
        %3283 = vmatpush1.bf16.msra.mxu0 0
        %3284 = vmatprep.subr.bf16.mxu0 0
        %3285 = vmatpush1.bf16.msra.mxu0 0
        %3286 = vmatprep.subr.bf16.mxu0 0
        %3287 = vmatpush1.bf16.msra.mxu0 0
        %3288 = vmatprep.subr.bf16.mxu0 0
        %3289 = vmatpush1.bf16.msra.mxu0 0
        %3290 = vmatprep.subr.bf16.mxu0 0
        %3291 = vmatpush1.bf16.msra.mxu0 0
        %3292 = vmatprep.subr.bf16.mxu0 0
        %3293 = vmatpush1.bf16.msra.mxu0 0
        %3294 = vmatprep.subr.bf16.mxu0 0
        %3295 = vmatpush1.bf16.msra.mxu0 0
        %3296 = vmatprep.subr.bf16.mxu0 0
        %3297 = vmatpush1.bf16.msra.mxu0 0
        %3298 = vmatprep.subr.bf16.mxu0 0
        %3299 = vmatpush1.bf16.msra.mxu0 0
        %3300 = vmatprep.subr.bf16.mxu0 0
        %3301 = vmatpush1.bf16.msra.mxu0 0
        %3302 = vmatprep.subr.bf16.mxu0 0
        %3303 = vmatpush1.bf16.msra.mxu0 0
        %3304 = vmatprep.mubr.bf16.mxu0 0
        %3305 = vmatmul.mubr.bf16.gmra.mrb[0].mxu0 %v3267
        %v3306 = vpop.f32.mrb[0].mxu0
        %v3307 = vadd.f32 0.0, %v3306
        %v3308 = vpop.f32.mrb[0].mxu0
        %v3309 = vpop.f32.mrb[0].mxu0
        %v3310 = vpop.f32.mrb[0].mxu0
        %3311 = vdwg.mxu0
        %v3313 = vsel %vm3068, %v3160, 0
        %v3316 = vsel %vm3176, %v3168, 0
        %3318 = vmatprep.subr.bf16.mxu0 0
        %3319 = vmatpush1.bf16.msra.mxu0 %v3316
        %3320 = vmatprep.subr.bf16.mxu0 0
        %3321 = vmatpush1.bf16.msra.mxu0 0
        %3322 = vmatprep.subr.bf16.mxu0 0
        %3323 = vmatpush1.bf16.msra.mxu0 0
        %3324 = vmatprep.subr.bf16.mxu0 0
        %3325 = vmatpush1.bf16.msra.mxu0 0
        %3326 = vmatprep.subr.bf16.mxu0 0
        %3327 = vmatpush1.bf16.msra.mxu0 0
        %3328 = vmatprep.subr.bf16.mxu0 0
        %3329 = vmatpush1.bf16.msra.mxu0 0
        %3330 = vmatprep.subr.bf16.mxu0 0
        %3331 = vmatpush1.bf16.msra.mxu0 0
        %3332 = vmatprep.subr.bf16.mxu0 0
        %3333 = vmatpush1.bf16.msra.mxu0 0
        %3334 = vmatprep.subr.bf16.mxu0 0
        %3335 = vmatpush1.bf16.msra.mxu0 0
        %3336 = vmatprep.subr.bf16.mxu0 0
        %3337 = vmatpush1.bf16.msra.mxu0 0
        %3338 = vmatprep.subr.bf16.mxu0 0
        %3339 = vmatpush1.bf16.msra.mxu0 0
        %3340 = vmatprep.subr.bf16.mxu0 0
        %3341 = vmatpush1.bf16.msra.mxu0 0
        %3342 = vmatprep.subr.bf16.mxu0 0
        %3343 = vmatpush1.bf16.msra.mxu0 0
        %3344 = vmatprep.subr.bf16.mxu0 0
        %3345 = vmatpush1.bf16.msra.mxu0 0
        %3346 = vmatprep.subr.bf16.mxu0 0
        %3347 = vmatpush1.bf16.msra.mxu0 0
        %3348 = vmatprep.subr.bf16.mxu0 0
        %3349 = vmatpush1.bf16.msra.mxu0 0
        %3350 = vmatprep.mubr.bf16.mxu0 0
        %3351 = vmatmul.mubr.bf16.gmra.mrb[0].mxu0 %v3313
        %v3352 = vpop.f32.mrb[0].mxu0
        %v3353 = vadd.f32 0.0, %v3352
        %v3354 = vpop.f32.mrb[0].mxu0
        %v3355 = vpop.f32.mrb[0].mxu0
        %v3356 = vpop.f32.mrb[0].mxu0
        %3357 = vdwg.mxu0
        %v3359 = vsel %vm3068, %v3161, 0
        %v3362 = vsel %vm3176, %v3169, 0
        %3364 = vmatprep.subr.bf16.mxu0 0
        %3365 = vmatpush1.bf16.msra.mxu0 %v3362
        %3366 = vmatprep.subr.bf16.mxu0 0
        %3367 = vmatpush1.bf16.msra.mxu0 0
        %3368 = vmatprep.subr.bf16.mxu0 0
        %3369 = vmatpush1.bf16.msra.mxu0 0
        %3370 = vmatprep.subr.bf16.mxu0 0
        %3371 = vmatpush1.bf16.msra.mxu0 0
        %3372 = vmatprep.subr.bf16.mxu0 0
        %3373 = vmatpush1.bf16.msra.mxu0 0
        %3374 = vmatprep.subr.bf16.mxu0 0
        %3375 = vmatpush1.bf16.msra.mxu0 0
        %3376 = vmatprep.subr.bf16.mxu0 0
        %3377 = vmatpush1.bf16.msra.mxu0 0
        %3378 = vmatprep.subr.bf16.mxu0 0
        %3379 = vmatpush1.bf16.msra.mxu0 0
        %3380 = vmatprep.subr.bf16.mxu0 0
        %3381 = vmatpush1.bf16.msra.mxu0 0
        %3382 = vmatprep.subr.bf16.mxu0 0
        %3383 = vmatpush1.bf16.msra.mxu0 0
        %3384 = vmatprep.subr.bf16.mxu0 0
        %3385 = vmatpush1.bf16.msra.mxu0 0
        %3386 = vmatprep.subr.bf16.mxu0 0
        %3387 = vmatpush1.bf16.msra.mxu0 0
        %3388 = vmatprep.subr.bf16.mxu0 0
        %3389 = vmatpush1.bf16.msra.mxu0 0
        %3390 = vmatprep.subr.bf16.mxu0 0
        %3391 = vmatpush1.bf16.msra.mxu0 0
        %3392 = vmatprep.subr.bf16.mxu0 0
        %3393 = vmatpush1.bf16.msra.mxu0 0
        %3394 = vmatprep.subr.bf16.mxu0 0
        %3395 = vmatpush1.bf16.msra.mxu0 0
        %3396 = vmatprep.mubr.bf16.mxu0 0
        %3397 = vmatmul.mubr.bf16.gmra.mrb[0].mxu0 %v3359
        %v3398 = vpop.f32.mrb[0].mxu0
        %v3399 = vadd.f32 0.0, %v3398
        %v3400 = vpop.f32.mrb[0].mxu0
        %v3401 = vpop.f32.mrb[0].mxu0
        %v3402 = vpop.f32.mrb[0].mxu0
        %3403 = vdwg.mxu0
        %v3405 = vsel %vm3068, %v3162, 0
        %v3408 = vsel %vm3176, %v3170, 0
        %3410 = vmatprep.subr.bf16.mxu0 0
        %3411 = vmatpush1.bf16.msra.mxu0 %v3408
        %3412 = vmatprep.subr.bf16.mxu0 0
        %3413 = vmatpush1.bf16.msra.mxu0 0
        %3414 = vmatprep.subr.bf16.mxu0 0
        %3415 = vmatpush1.bf16.msra.mxu0 0
        %3416 = vmatprep.subr.bf16.mxu0 0
        %3417 = vmatpush1.bf16.msra.mxu0 0
        %3418 = vmatprep.subr.bf16.mxu0 0
        %3419 = vmatpush1.bf16.msra.mxu0 0
        %3420 = vmatprep.subr.bf16.mxu0 0
        %3421 = vmatpush1.bf16.msra.mxu0 0
        %3422 = vmatprep.subr.bf16.mxu0 0
        %3423 = vmatpush1.bf16.msra.mxu0 0
        %3424 = vmatprep.subr.bf16.mxu0 0
        %3425 = vmatpush1.bf16.msra.mxu0 0
        %3426 = vmatprep.subr.bf16.mxu0 0
        %3427 = vmatpush1.bf16.msra.mxu0 0
        %3428 = vmatprep.subr.bf16.mxu0 0
        %3429 = vmatpush1.bf16.msra.mxu0 0
        %3430 = vmatprep.subr.bf16.mxu0 0
        %3431 = vmatpush1.bf16.msra.mxu0 0
        %3432 = vmatprep.subr.bf16.mxu0 0
        %3433 = vmatpush1.bf16.msra.mxu0 0
        %3434 = vmatprep.subr.bf16.mxu0 0
        %3435 = vmatpush1.bf16.msra.mxu0 0
        %3436 = vmatprep.subr.bf16.mxu0 0
        %3437 = vmatpush1.bf16.msra.mxu0 0
        %3438 = vmatprep.subr.bf16.mxu0 0
        %3439 = vmatpush1.bf16.msra.mxu0 0
        %3440 = vmatprep.subr.bf16.mxu0 0
        %3441 = vmatpush1.bf16.msra.mxu0 0
        %3442 = vmatprep.mubr.bf16.mxu0 0
        %3443 = vmatmul.mubr.bf16.gmra.mrb[0].mxu0 %v3405
        %v3444 = vpop.f32.mrb[0].mxu0
        %v3445 = vadd.f32 0.0, %v3444
        %v3446 = vpop.f32.mrb[0].mxu0
        %v3447 = vpop.f32.mrb[0].mxu0
        %v3448 = vpop.f32.mrb[0].mxu0
        %3449 = vdwg.mxu0
        %v3451 = vsel %vm3068, %v3163, 0
        %v3454 = vsel %vm3176, %v3171, 0
        %3456 = vmatprep.subr.bf16.mxu0 0
        %3457 = vmatpush1.bf16.msra.mxu0 %v3454
        %3458 = vmatprep.subr.bf16.mxu0 0
        %3459 = vmatpush1.bf16.msra.mxu0 0
        %3460 = vmatprep.subr.bf16.mxu0 0
        %3461 = vmatpush1.bf16.msra.mxu0 0
        %3462 = vmatprep.subr.bf16.mxu0 0
        %3463 = vmatpush1.bf16.msra.mxu0 0
        %3464 = vmatprep.subr.bf16.mxu0 0
        %3465 = vmatpush1.bf16.msra.mxu0 0
        %3466 = vmatprep.subr.bf16.mxu0 0
        %3467 = vmatpush1.bf16.msra.mxu0 0
        %3468 = vmatprep.subr.bf16.mxu0 0
        %3469 = vmatpush1.bf16.msra.mxu0 0
        %3470 = vmatprep.subr.bf16.mxu0 0
        %3471 = vmatpush1.bf16.msra.mxu0 0
        %3472 = vmatprep.subr.bf16.mxu0 0
        %3473 = vmatpush1.bf16.msra.mxu0 0
        %3474 = vmatprep.subr.bf16.mxu0 0
        %3475 = vmatpush1.bf16.msra.mxu0 0
        %3476 = vmatprep.subr.bf16.mxu0 0
        %3477 = vmatpush1.bf16.msra.mxu0 0
        %3478 = vmatprep.subr.bf16.mxu0 0
        %3479 = vmatpush1.bf16.msra.mxu0 0
        %3480 = vmatprep.subr.bf16.mxu0 0
        %3481 = vmatpush1.bf16.msra.mxu0 0
        %3482 = vmatprep.subr.bf16.mxu0 0
        %3483 = vmatpush1.bf16.msra.mxu0 0
        %3484 = vmatprep.subr.bf16.mxu0 0
        %3485 = vmatpush1.bf16.msra.mxu0 0
        %3486 = vmatprep.subr.bf16.mxu0 0
        %3487 = vmatpush1.bf16.msra.mxu0 0
        %3488 = vmatprep.mubr.bf16.mxu0 0
        %3489 = vmatmul.mubr.bf16.gmra.mrb[0].mxu0 %v3451
        %v3490 = vpop.f32.mrb[0].mxu0
        %v3491 = vadd.f32 0.0, %v3490
        %v3492 = vpop.f32.mrb[0].mxu0
        %v3493 = vpop.f32.mrb[0].mxu0
        %v3494 = vpop.f32.mrb[0].mxu0
        %3495 = vdwg.mxu0
        %v3497 = vsel %vm3068, %v3164, 0
        %v3500 = vsel %vm3176, %v3172, 0
        %3502 = vmatprep.subr.bf16.mxu0 0
        %3503 = vmatpush1.bf16.msra.mxu0 %v3500
        %3504 = vmatprep.subr.bf16.mxu0 0
        %3505 = vmatpush1.bf16.msra.mxu0 0
        %3506 = vmatprep.subr.bf16.mxu0 0
        %3507 = vmatpush1.bf16.msra.mxu0 0
        %3508 = vmatprep.subr.bf16.mxu0 0
        %3509 = vmatpush1.bf16.msra.mxu0 0
        %3510 = vmatprep.subr.bf16.mxu0 0
        %3511 = vmatpush1.bf16.msra.mxu0 0
        %3512 = vmatprep.subr.bf16.mxu0 0
        %3513 = vmatpush1.bf16.msra.mxu0 0
        %3514 = vmatprep.subr.bf16.mxu0 0
        %3515 = vmatpush1.bf16.msra.mxu0 0
        %3516 = vmatprep.subr.bf16.mxu0 0
        %3517 = vmatpush1.bf16.msra.mxu0 0
        %3518 = vmatprep.subr.bf16.mxu0 0
        %3519 = vmatpush1.bf16.msra.mxu0 0
        %3520 = vmatprep.subr.bf16.mxu0 0
        %3521 = vmatpush1.bf16.msra.mxu0 0
        %3522 = vmatprep.subr.bf16.mxu0 0
        %3523 = vmatpush1.bf16.msra.mxu0 0
        %3524 = vmatprep.subr.bf16.mxu0 0
        %3525 = vmatpush1.bf16.msra.mxu0 0
        %3526 = vmatprep.subr.bf16.mxu0 0
        %3527 = vmatpush1.bf16.msra.mxu0 0
        %3528 = vmatprep.subr.bf16.mxu0 0
        %3529 = vmatpush1.bf16.msra.mxu0 0
        %3530 = vmatprep.subr.bf16.mxu0 0
        %3531 = vmatpush1.bf16.msra.mxu0 0
        %3532 = vmatprep.subr.bf16.mxu0 0
        %3533 = vmatpush1.bf16.msra.mxu0 0
        %3534 = vmatprep.mubr.bf16.mxu0 0
        %3535 = vmatmul.mubr.bf16.gmra.mrb[0].mxu0 %v3497
        %v3536 = vpop.f32.mrb[0].mxu0
        %v3537 = vadd.f32 0.0, %v3536
        %v3538 = vpop.f32.mrb[0].mxu0
        %v3539 = vpop.f32.mrb[0].mxu0
        %v3540 = vpop.f32.mrb[0].mxu0
        %3541 = vdwg.mxu0
        %v3542 = vpack.c.bf16 %v3215, %v3215
        %v3543 = vpack.c.bf16 %v3261, %v3261
        %v3544 = vpack.c.bf16 %v3307, %v3307
        %v3545 = vpack.c.bf16 %v3353, %v3353
        %v3546 = vpack.c.bf16 %v3399, %v3399
        %v3547 = vpack.c.bf16 %v3445, %v3445
        %v3548 = vpack.c.bf16 %v3491, %v3491
        %v3549 = vpack.c.bf16 %v3537, %v3537
        %v3550 = vld [vmem:[#allocation17] sm:$0x3]
        %v3551 = vld [vmem:[#allocation17 + $0x2] sm:$0x3]
        %v3552 = vld [vmem:[#allocation17 + $0x4] sm:$0x3]
        %v3553 = vld [vmem:[#allocation17 + $0x6] sm:$0x3]
        %v3554 = vld [vmem:[#allocation17 + $0x8] sm:$0x3]
        %v3555 = vld [vmem:[#allocation17 + $0xa] sm:$0x3]
        %v3556 = vld [vmem:[#allocation17 + $0xc] sm:$0x3]
        %v3557 = vld [vmem:[#allocation17 + $0xe] sm:$0x3]
        %v3559 = vsel %vm1111, %v3542, 0
        %v3562 = vsel %vm1115, %v3550, 0
        %3564 = vmatprep.subr.bf16.mxu0 0
        %3565 = vmatpush1.bf16.msra.mxu0 %v3562
        %3566 = vmatprep.subr.bf16.mxu0 0
        %3567 = vmatpush1.bf16.msra.mxu0 0
        %3568 = vmatprep.subr.bf16.mxu0 0
        %3569 = vmatpush1.bf16.msra.mxu0 0
        %3570 = vmatprep.subr.bf16.mxu0 0
        %3571 = vmatpush1.bf16.msra.mxu0 0
        %3572 = vmatprep.subr.bf16.mxu0 0
        %3573 = vmatpush1.bf16.msra.mxu0 0
        %3574 = vmatprep.subr.bf16.mxu0 0
        %3575 = vmatpush1.bf16.msra.mxu0 0
        %3576 = vmatprep.subr.bf16.mxu0 0
        %3577 = vmatpush1.bf16.msra.mxu0 0
        %3578 = vmatprep.subr.bf16.mxu0 0
        %3579 = vmatpush1.bf16.msra.mxu0 0
        %3580 = vmatprep.subr.bf16.mxu0 0
        %3581 = vmatpush1.bf16.msra.mxu0 0
        %3582 = vmatprep.subr.bf16.mxu0 0
        %3583 = vmatpush1.bf16.msra.mxu0 0
        %3584 = vmatprep.subr.bf16.mxu0 0
        %3585 = vmatpush1.bf16.msra.mxu0 0
        %3586 = vmatprep.subr.bf16.mxu0 0
        %3587 = vmatpush1.bf16.msra.mxu0 0
        %3588 = vmatprep.subr.bf16.mxu0 0
        %3589 = vmatpush1.bf16.msra.mxu0 0
        %3590 = vmatprep.subr.bf16.mxu0 0
        %3591 = vmatpush1.bf16.msra.mxu0 0
        %3592 = vmatprep.subr.bf16.mxu0 0
        %3593 = vmatpush1.bf16.msra.mxu0 0
        %3594 = vmatprep.subr.bf16.mxu0 0
        %3595 = vmatpush1.bf16.msra.mxu0 0
        %3596 = vmatprep.mubr.bf16.mxu0 0
        %3597 = vmatmul.mubr.bf16.gmra.mrb[0].mxu0 %v3559
        %v3598 = vpop.f32.mrb[0].mxu0
        %v3599 = vadd.f32 0.0, %v3598
        %v3600 = vpop.f32.mrb[0].mxu0
        %v3601 = vpop.f32.mrb[0].mxu0
        %v3602 = vpop.f32.mrb[0].mxu0
        %3603 = vdwg.mxu0
        %v3605 = vsel %vm1111, %v3543, 0
        %v3608 = vsel %vm1115, %v3551, 0
        %3610 = vmatprep.subr.bf16.mxu0 0
        %3611 = vmatpush1.bf16.msra.mxu0 %v3608
        %3612 = vmatprep.subr.bf16.mxu0 0
        %3613 = vmatpush1.bf16.msra.mxu0 0
        %3614 = vmatprep.subr.bf16.mxu0 0
        %3615 = vmatpush1.bf16.msra.mxu0 0
        %3616 = vmatprep.subr.bf16.mxu0 0
        %3617 = vmatpush1.bf16.msra.mxu0 0
        %3618 = vmatprep.subr.bf16.mxu0 0
        %3619 = vmatpush1.bf16.msra.mxu0 0
        %3620 = vmatprep.subr.bf16.mxu0 0
        %3621 = vmatpush1.bf16.msra.mxu0 0
        %3622 = vmatprep.subr.bf16.mxu0 0
        %3623 = vmatpush1.bf16.msra.mxu0 0
        %3624 = vmatprep.subr.bf16.mxu0 0
        %3625 = vmatpush1.bf16.msra.mxu0 0
        %3626 = vmatprep.subr.bf16.mxu0 0
        %3627 = vmatpush1.bf16.msra.mxu0 0
        %3628 = vmatprep.subr.bf16.mxu0 0
        %3629 = vmatpush1.bf16.msra.mxu0 0
        %3630 = vmatprep.subr.bf16.mxu0 0
        %3631 = vmatpush1.bf16.msra.mxu0 0
        %3632 = vmatprep.subr.bf16.mxu0 0
        %3633 = vmatpush1.bf16.msra.mxu0 0
        %3634 = vmatprep.subr.bf16.mxu0 0
        %3635 = vmatpush1.bf16.msra.mxu0 0
        %3636 = vmatprep.subr.bf16.mxu0 0
        %3637 = vmatpush1.bf16.msra.mxu0 0
        %3638 = vmatprep.subr.bf16.mxu0 0
        %3639 = vmatpush1.bf16.msra.mxu0 0
        %3640 = vmatprep.subr.bf16.mxu0 0
        %3641 = vmatpush1.bf16.msra.mxu0 0
        %3642 = vmatprep.mubr.bf16.mxu0 0
        %3643 = vmatmul.mubr.bf16.gmra.mrb[0].mxu0 %v3605
        %v3644 = vpop.f32.mrb[0].mxu0
        %v3645 = vadd.f32 0.0, %v3644
        %v3646 = vpop.f32.mrb[0].mxu0
        %v3647 = vpop.f32.mrb[0].mxu0
        %v3648 = vpop.f32.mrb[0].mxu0
        %3649 = vdwg.mxu0
        %v3651 = vsel %vm1111, %v3544, 0
        %v3654 = vsel %vm1115, %v3552, 0
        %3656 = vmatprep.subr.bf16.mxu0 0
        %3657 = vmatpush1.bf16.msra.mxu0 %v3654
        %3658 = vmatprep.subr.bf16.mxu0 0
        %3659 = vmatpush1.bf16.msra.mxu0 0
        %3660 = vmatprep.subr.bf16.mxu0 0
        %3661 = vmatpush1.bf16.msra.mxu0 0
        %3662 = vmatprep.subr.bf16.mxu0 0
        %3663 = vmatpush1.bf16.msra.mxu0 0
        %3664 = vmatprep.subr.bf16.mxu0 0
        %3665 = vmatpush1.bf16.msra.mxu0 0
        %3666 = vmatprep.subr.bf16.mxu0 0
        %3667 = vmatpush1.bf16.msra.mxu0 0
        %3668 = vmatprep.subr.bf16.mxu0 0
        %3669 = vmatpush1.bf16.msra.mxu0 0
        %3670 = vmatprep.subr.bf16.mxu0 0
        %3671 = vmatpush1.bf16.msra.mxu0 0
        %3672 = vmatprep.subr.bf16.mxu0 0
        %3673 = vmatpush1.bf16.msra.mxu0 0
        %3674 = vmatprep.subr.bf16.mxu0 0
        %3675 = vmatpush1.bf16.msra.mxu0 0
        %3676 = vmatprep.subr.bf16.mxu0 0
        %3677 = vmatpush1.bf16.msra.mxu0 0
        %3678 = vmatprep.subr.bf16.mxu0 0
        %3679 = vmatpush1.bf16.msra.mxu0 0
        %3680 = vmatprep.subr.bf16.mxu0 0
        %3681 = vmatpush1.bf16.msra.mxu0 0
        %3682 = vmatprep.subr.bf16.mxu0 0
        %3683 = vmatpush1.bf16.msra.mxu0 0
        %3684 = vmatprep.subr.bf16.mxu0 0
        %3685 = vmatpush1.bf16.msra.mxu0 0
        %3686 = vmatprep.subr.bf16.mxu0 0
        %3687 = vmatpush1.bf16.msra.mxu0 0
        %3688 = vmatprep.mubr.bf16.mxu0 0
        %3689 = vmatmul.mubr.bf16.gmra.mrb[0].mxu0 %v3651
        %v3690 = vpop.f32.mrb[0].mxu0
        %v3691 = vadd.f32 0.0, %v3690
        %v3692 = vpop.f32.mrb[0].mxu0
        %v3693 = vpop.f32.mrb[0].mxu0
        %v3694 = vpop.f32.mrb[0].mxu0
        %3695 = vdwg.mxu0
        %v3697 = vsel %vm1111, %v3545, 0
        %v3700 = vsel %vm1115, %v3553, 0
        %3702 = vmatprep.subr.bf16.mxu0 0
        %3703 = vmatpush1.bf16.msra.mxu0 %v3700
        %3704 = vmatprep.subr.bf16.mxu0 0
        %3705 = vmatpush1.bf16.msra.mxu0 0
        %3706 = vmatprep.subr.bf16.mxu0 0
        %3707 = vmatpush1.bf16.msra.mxu0 0
        %3708 = vmatprep.subr.bf16.mxu0 0
        %3709 = vmatpush1.bf16.msra.mxu0 0
        %3710 = vmatprep.subr.bf16.mxu0 0
        %3711 = vmatpush1.bf16.msra.mxu0 0
        %3712 = vmatprep.subr.bf16.mxu0 0
        %3713 = vmatpush1.bf16.msra.mxu0 0
        %3714 = vmatprep.subr.bf16.mxu0 0
        %3715 = vmatpush1.bf16.msra.mxu0 0
        %3716 = vmatprep.subr.bf16.mxu0 0
        %3717 = vmatpush1.bf16.msra.mxu0 0
        %3718 = vmatprep.subr.bf16.mxu0 0
        %3719 = vmatpush1.bf16.msra.mxu0 0
        %3720 = vmatprep.subr.bf16.mxu0 0
        %3721 = vmatpush1.bf16.msra.mxu0 0
        %3722 = vmatprep.subr.bf16.mxu0 0
        %3723 = vmatpush1.bf16.msra.mxu0 0
        %3724 = vmatprep.subr.bf16.mxu0 0
        %3725 = vmatpush1.bf16.msra.mxu0 0
        %3726 = vmatprep.subr.bf16.mxu0 0
        %3727 = vmatpush1.bf16.msra.mxu0 0
        %3728 = vmatprep.subr.bf16.mxu0 0
        %3729 = vmatpush1.bf16.msra.mxu0 0
        %3730 = vmatprep.subr.bf16.mxu0 0
        %3731 = vmatpush1.bf16.msra.mxu0 0
        %3732 = vmatprep.subr.bf16.mxu0 0
        %3733 = vmatpush1.bf16.msra.mxu0 0
        %3734 = vmatprep.mubr.bf16.mxu0 0
        %3735 = vmatmul.mubr.bf16.gmra.mrb[0].mxu0 %v3697
        %v3736 = vpop.f32.mrb[0].mxu0
        %v3737 = vadd.f32 0.0, %v3736
        %v3738 = vpop.f32.mrb[0].mxu0
        %v3739 = vpop.f32.mrb[0].mxu0
        %v3740 = vpop.f32.mrb[0].mxu0
        %3741 = vdwg.mxu0
        %v3743 = vsel %vm1111, %v3546, 0
        %v3746 = vsel %vm1115, %v3554, 0
        %3748 = vmatprep.subr.bf16.mxu0 0
        %3749 = vmatpush1.bf16.msra.mxu0 %v3746
        %3750 = vmatprep.subr.bf16.mxu0 0
        %3751 = vmatpush1.bf16.msra.mxu0 0
        %3752 = vmatprep.subr.bf16.mxu0 0
        %3753 = vmatpush1.bf16.msra.mxu0 0
        %3754 = vmatprep.subr.bf16.mxu0 0
        %3755 = vmatpush1.bf16.msra.mxu0 0
        %3756 = vmatprep.subr.bf16.mxu0 0
        %3757 = vmatpush1.bf16.msra.mxu0 0
        %3758 = vmatprep.subr.bf16.mxu0 0
        %3759 = vmatpush1.bf16.msra.mxu0 0
        %3760 = vmatprep.subr.bf16.mxu0 0
        %3761 = vmatpush1.bf16.msra.mxu0 0
        %3762 = vmatprep.subr.bf16.mxu0 0
        %3763 = vmatpush1.bf16.msra.mxu0 0
        %3764 = vmatprep.subr.bf16.mxu0 0
        %3765 = vmatpush1.bf16.msra.mxu0 0
        %3766 = vmatprep.subr.bf16.mxu0 0
        %3767 = vmatpush1.bf16.msra.mxu0 0
        %3768 = vmatprep.subr.bf16.mxu0 0
        %3769 = vmatpush1.bf16.msra.mxu0 0
        %3770 = vmatprep.subr.bf16.mxu0 0
        %3771 = vmatpush1.bf16.msra.mxu0 0
        %3772 = vmatprep.subr.bf16.mxu0 0
        %3773 = vmatpush1.bf16.msra.mxu0 0
        %3774 = vmatprep.subr.bf16.mxu0 0
        %3775 = vmatpush1.bf16.msra.mxu0 0
        %3776 = vmatprep.subr.bf16.mxu0 0
        %3777 = vmatpush1.bf16.msra.mxu0 0
        %3778 = vmatprep.subr.bf16.mxu0 0
        %3779 = vmatpush1.bf16.msra.mxu0 0
        %3780 = vmatprep.mubr.bf16.mxu0 0
        %3781 = vmatmul.mubr.bf16.gmra.mrb[0].mxu0 %v3743
        %v3782 = vpop.f32.mrb[0].mxu0
        %v3783 = vadd.f32 0.0, %v3782
        %v3784 = vpop.f32.mrb[0].mxu0
        %v3785 = vpop.f32.mrb[0].mxu0
        %v3786 = vpop.f32.mrb[0].mxu0
        %3787 = vdwg.mxu0
        %v3789 = vsel %vm1111, %v3547, 0
        %v3792 = vsel %vm1115, %v3555, 0
        %3794 = vmatprep.subr.bf16.mxu0 0
        %3795 = vmatpush1.bf16.msra.mxu0 %v3792
        %3796 = vmatprep.subr.bf16.mxu0 0
        %3797 = vmatpush1.bf16.msra.mxu0 0
        %3798 = vmatprep.subr.bf16.mxu0 0
        %3799 = vmatpush1.bf16.msra.mxu0 0
        %3800 = vmatprep.subr.bf16.mxu0 0
        %3801 = vmatpush1.bf16.msra.mxu0 0
        %3802 = vmatprep.subr.bf16.mxu0 0
        %3803 = vmatpush1.bf16.msra.mxu0 0
        %3804 = vmatprep.subr.bf16.mxu0 0
        %3805 = vmatpush1.bf16.msra.mxu0 0
        %3806 = vmatprep.subr.bf16.mxu0 0
        %3807 = vmatpush1.bf16.msra.mxu0 0
        %3808 = vmatprep.subr.bf16.mxu0 0
        %3809 = vmatpush1.bf16.msra.mxu0 0
        %3810 = vmatprep.subr.bf16.mxu0 0
        %3811 = vmatpush1.bf16.msra.mxu0 0
        %3812 = vmatprep.subr.bf16.mxu0 0
        %3813 = vmatpush1.bf16.msra.mxu0 0
        %3814 = vmatprep.subr.bf16.mxu0 0
        %3815 = vmatpush1.bf16.msra.mxu0 0
        %3816 = vmatprep.subr.bf16.mxu0 0
        %3817 = vmatpush1.bf16.msra.mxu0 0
        %3818 = vmatprep.subr.bf16.mxu0 0
        %3819 = vmatpush1.bf16.msra.mxu0 0
        %3820 = vmatprep.subr.bf16.mxu0 0
        %3821 = vmatpush1.bf16.msra.mxu0 0
        %3822 = vmatprep.subr.bf16.mxu0 0
        %3823 = vmatpush1.bf16.msra.mxu0 0
        %3824 = vmatprep.subr.bf16.mxu0 0
        %3825 = vmatpush1.bf16.msra.mxu0 0
        %3826 = vmatprep.mubr.bf16.mxu0 0
        %3827 = vmatmul.mubr.bf16.gmra.mrb[0].mxu0 %v3789
        %v3828 = vpop.f32.mrb[0].mxu0
        %v3829 = vadd.f32 0.0, %v3828
        %v3830 = vpop.f32.mrb[0].mxu0
        %v3831 = vpop.f32.mrb[0].mxu0
        %v3832 = vpop.f32.mrb[0].mxu0
        %3833 = vdwg.mxu0
        %v3835 = vsel %vm1111, %v3548, 0
        %v3838 = vsel %vm1115, %v3556, 0
        %3840 = vmatprep.subr.bf16.mxu0 0
        %3841 = vmatpush1.bf16.msra.mxu0 %v3838
        %3842 = vmatprep.subr.bf16.mxu0 0
        %3843 = vmatpush1.bf16.msra.mxu0 0
        %3844 = vmatprep.subr.bf16.mxu0 0
        %3845 = vmatpush1.bf16.msra.mxu0 0
        %3846 = vmatprep.subr.bf16.mxu0 0
        %3847 = vmatpush1.bf16.msra.mxu0 0
        %3848 = vmatprep.subr.bf16.mxu0 0
        %3849 = vmatpush1.bf16.msra.mxu0 0
        %3850 = vmatprep.subr.bf16.mxu0 0
        %3851 = vmatpush1.bf16.msra.mxu0 0
        %3852 = vmatprep.subr.bf16.mxu0 0
        %3853 = vmatpush1.bf16.msra.mxu0 0
        %3854 = vmatprep.subr.bf16.mxu0 0
        %3855 = vmatpush1.bf16.msra.mxu0 0
        %3856 = vmatprep.subr.bf16.mxu0 0
        %3857 = vmatpush1.bf16.msra.mxu0 0
        %3858 = vmatprep.subr.bf16.mxu0 0
        %3859 = vmatpush1.bf16.msra.mxu0 0
        %3860 = vmatprep.subr.bf16.mxu0 0
        %3861 = vmatpush1.bf16.msra.mxu0 0
        %3862 = vmatprep.subr.bf16.mxu0 0
        %3863 = vmatpush1.bf16.msra.mxu0 0
        %3864 = vmatprep.subr.bf16.mxu0 0
        %3865 = vmatpush1.bf16.msra.mxu0 0
        %3866 = vmatprep.subr.bf16.mxu0 0
        %3867 = vmatpush1.bf16.msra.mxu0 0
        %3868 = vmatprep.subr.bf16.mxu0 0
        %3869 = vmatpush1.bf16.msra.mxu0 0
        %3870 = vmatprep.subr.bf16.mxu0 0
        %3871 = vmatpush1.bf16.msra.mxu0 0
        %3872 = vmatprep.mubr.bf16.mxu0 0
        %3873 = vmatmul.mubr.bf16.gmra.mrb[0].mxu0 %v3835
        %v3874 = vpop.f32.mrb[0].mxu0
        %v3875 = vadd.f32 0.0, %v3874
        %v3876 = vpop.f32.mrb[0].mxu0
        %v3877 = vpop.f32.mrb[0].mxu0
        %v3878 = vpop.f32.mrb[0].mxu0
        %3879 = vdwg.mxu0
        %v3881 = vsel %vm1111, %v3549, 0
        %v3884 = vsel %vm1115, %v3557, 0
        %3886 = vmatprep.subr.bf16.mxu0 0
        %3887 = vmatpush1.bf16.msra.mxu0 %v3884
        %3888 = vmatprep.subr.bf16.mxu0 0
        %3889 = vmatpush1.bf16.msra.mxu0 0
        %3890 = vmatprep.subr.bf16.mxu0 0
        %3891 = vmatpush1.bf16.msra.mxu0 0
        %3892 = vmatprep.subr.bf16.mxu0 0
        %3893 = vmatpush1.bf16.msra.mxu0 0
        %3894 = vmatprep.subr.bf16.mxu0 0
        %3895 = vmatpush1.bf16.msra.mxu0 0
        %3896 = vmatprep.subr.bf16.mxu0 0
        %3897 = vmatpush1.bf16.msra.mxu0 0
        %3898 = vmatprep.subr.bf16.mxu0 0
        %3899 = vmatpush1.bf16.msra.mxu0 0
        %3900 = vmatprep.subr.bf16.mxu0 0
        %3901 = vmatpush1.bf16.msra.mxu0 0
        %3902 = vmatprep.subr.bf16.mxu0 0
        %3903 = vmatpush1.bf16.msra.mxu0 0
        %3904 = vmatprep.subr.bf16.mxu0 0
        %3905 = vmatpush1.bf16.msra.mxu0 0
        %3906 = vmatprep.subr.bf16.mxu0 0
        %3907 = vmatpush1.bf16.msra.mxu0 0
        %3908 = vmatprep.subr.bf16.mxu0 0
        %3909 = vmatpush1.bf16.msra.mxu0 0
        %3910 = vmatprep.subr.bf16.mxu0 0
        %3911 = vmatpush1.bf16.msra.mxu0 0
        %3912 = vmatprep.subr.bf16.mxu0 0
        %3913 = vmatpush1.bf16.msra.mxu0 0
        %3914 = vmatprep.subr.bf16.mxu0 0
        %3915 = vmatpush1.bf16.msra.mxu0 0
        %3916 = vmatprep.subr.bf16.mxu0 0
        %3917 = vmatpush1.bf16.msra.mxu0 0
        %3918 = vmatprep.mubr.bf16.mxu0 0
        %3919 = vmatmul.mubr.bf16.gmra.mrb[0].mxu0 %v3881
        %v3920 = vpop.f32.mrb[0].mxu0
        %v3921 = vadd.f32 0.0, %v3920
        %v3922 = vpop.f32.mrb[0].mxu0
        %v3923 = vpop.f32.mrb[0].mxu0
        %v3924 = vpop.f32.mrb[0].mxu0
        %3925 = vdwg.mxu0
        %v3926 = vsel %vm1438, %v3599, 0.0
        %v3927 = vsel %vm1438, %v3645, 0.0
        %v3928 = vadd.f32 %v3926, %v3927
        %v3929 = vsel %vm1438, %v3691, 0.0
        %v3930 = vadd.f32 %v3928, %v3929
        %v3931 = vsel %vm1438, %v3737, 0.0
        %v3932 = vadd.f32 %v3930, %v3931
        %v3933 = vsel %vm1438, %v3783, 0.0
        %v3934 = vadd.f32 %v3932, %v3933
        %v3935 = vsel %vm1438, %v3829, 0.0
        %v3936 = vadd.f32 %v3934, %v3935
        %v3937 = vsel %vm1438, %v3875, 0.0
        %v3938 = vadd.f32 %v3936, %v3937
        %v3939 = vsel %vm1438, %v3921, 0.0
        %v3940 = vadd.f32 %v3938, %v3939
        %v3941 = vld [vmem:[#allocation19] sm:$0x1]
        %v3943 = vlaneseq
        %v3944 = vshrl.u32 %v3943, 7
        %v3945 = vsub.s32 0, %v3944
        %v3946 = vrot.slane %v3941, %v3945
        %v3948 = vadd.f32 %v3940, %v3946
        %v3949 = vadd.f32 %v1160, %v3948
        %v3950 = vld [vmem:[#allocation20] sm:$0x1]
        %v3951 = vld [vmem:[#allocation22] sm:$0x1]
        %v3952 = vsel %vm1438, %v3949, 0.0
        %3953 = vadd.xlane.f32.xlu0 %v3952
        %v3954 = vpop.xlane.xlu0 %3953
        %v3955 = vrcp.pop 32.0
        %v3956 = vmul.f32 %v3954, %v3955
        %v3957 = vsub.f32 %v3949, %v3956
        %v3958 = vmul.f32 %v3957, %v3957
        %v3959 = vsel %vm1438, %v3958, 0.0
        %3960 = vadd.xlane.f32.xlu0 %v3959
        %v3961 = vpop.xlane.xlu0 %3960
        %v3962 = vmul.f32 %v3961, %v3955
        %v3963 = vadd.f32 %v3962, 1e-05
        %v3964 = vrsqrt.pop %v3963
        %v3965 = vmul.f32 %v3957, %v3964
        %v3967 = vlaneseq
        %v3968 = vshrl.u32 %v3967, 7
        %v3969 = vsub.s32 0, %v3968
        %v3970 = vrot.slane %v3950, %v3969
        %v3972 = vmul.f32 %v3965, %v3970
        %v3974 = vlaneseq
        %v3975 = vshrl.u32 %v3974, 7
        %v3976 = vsub.s32 0, %v3975
        %v3977 = vrot.slane %v3951, %v3976
        %v3979 = vadd.f32 %v3972, %v3977
        %v3980 = vpack.c.bf16 %v3979, %v3979
        %v3981 = vld [vmem:[#allocation26] sm:$0xf]
        %v3982 = vld [vmem:[#allocation26 + $0x4] sm:$0xf]
        %v3983 = vld [vmem:[#allocation26 + $0x8] sm:$0xf]
        %v3984 = vld [vmem:[#allocation26 + $0xc] sm:$0xf]
        %v3985 = vld [vmem:[#allocation28] sm:$0x1]
        %v3987 = vlaneseq
        %v3988 = vshrl.u32 %v3987, 7
        %v3989 = vsub.s32 0, %v3988
        %v3990 = vrot.slane %v3985, %v3989
        %v3996 = vunpack.c.l.b16 %v3981
        %v3997 = vunpack.c.l.b16 %v3982
        %v3998 = vunpack.c.l.b16 %v3983
        %v3999 = vunpack.c.l.b16 %v3984
        %v4000 = vpack.c.b16 %v3997, %v3996
        %v4001 = vpack.c.b16 %v3999, %v3998
        %v4005 = vsel %vm1438, %v3980, 0
        %4007 = vmatprep.subr.bf16.mxu0 0
        %4008 = vmatpush1.bf16.msra.mxu0 %v4000
        %4009 = vmatprep.subr.bf16.mxu0 0
        %4010 = vmatpush1.bf16.msra.mxu0 %v4001
        %4011 = vmatprep.subr.bf16.mxu0 0
        %4012 = vmatpush1.bf16.msra.mxu0 0
        %4013 = vmatprep.subr.bf16.mxu0 0
        %4014 = vmatpush1.bf16.msra.mxu0 0
        %4015 = vmatprep.subr.bf16.mxu0 0
        %4016 = vmatpush1.bf16.msra.mxu0 0
        %4017 = vmatprep.subr.bf16.mxu0 0
        %4018 = vmatpush1.bf16.msra.mxu0 0
        %4019 = vmatprep.subr.bf16.mxu0 0
        %4020 = vmatpush1.bf16.msra.mxu0 0
        %4021 = vmatprep.subr.bf16.mxu0 0
        %4022 = vmatpush1.bf16.msra.mxu0 0
        %4023 = vmatprep.subr.bf16.mxu0 0
        %4024 = vmatpush1.bf16.msra.mxu0 0
        %4025 = vmatprep.subr.bf16.mxu0 0
        %4026 = vmatpush1.bf16.msra.mxu0 0
        %4027 = vmatprep.subr.bf16.mxu0 0
        %4028 = vmatpush1.bf16.msra.mxu0 0
        %4029 = vmatprep.subr.bf16.mxu0 0
        %4030 = vmatpush1.bf16.msra.mxu0 0
        %4031 = vmatprep.subr.bf16.mxu0 0
        %4032 = vmatpush1.bf16.msra.mxu0 0
        %4033 = vmatprep.subr.bf16.mxu0 0
        %4034 = vmatpush1.bf16.msra.mxu0 0
        %4035 = vmatprep.subr.bf16.mxu0 0
        %4036 = vmatpush1.bf16.msra.mxu0 0
        %4037 = vmatprep.subr.bf16.mxu0 0
        %4038 = vmatpush1.bf16.msra.mxu0 0
        %4039 = vmatprep.mubr.bf16.mxu0 0
        %4040 = vmatmul.mubr.bf16.gmra.mrb[0].mxu0 %v4005
        %v4041 = vpop.f32.mrb[0].mxu0
        %v4042 = vadd.f32 %v3990, %v4041
        %v4043 = vpop.f32.mrb[0].mxu0
        %v4044 = vpop.f32.mrb[0].mxu0
        %v4045 = vpop.f32.mrb[0].mxu0
        %4046 = vdwg.mxu0
        %v4047 = vmax.f32 %v4042, 0.0
        %v4048 = vpack.c.bf16 %v4047, %v4047
        %v4049 = vld [vmem:[#allocation29] sm:$0xf]
        %v4050 = vld [vmem:[#allocation29 + $0x4] sm:$0xf]
        %v4051 = vld [vmem:[#allocation29 + $0x8] sm:$0xf]
        %v4052 = vld [vmem:[#allocation29 + $0xc] sm:$0xf]
        %v4053 = vld [vmem:[#allocation29 + $0x10] sm:$0xf]
        %v4054 = vld [vmem:[#allocation29 + $0x14] sm:$0xf]
        %v4055 = vld [vmem:[#allocation29 + $0x18] sm:$0xf]
        %v4056 = vld [vmem:[#allocation29 + $0x1c] sm:$0xf]
        %v4057 = vld [vmem:[#allocation29 + $0x20] sm:$0xf]
        %v4058 = vld [vmem:[#allocation29 + $0x24] sm:$0xf]
        %v4059 = vld [vmem:[#allocation29 + $0x28] sm:$0xf]
        %v4060 = vld [vmem:[#allocation29 + $0x2c] sm:$0xf]
        %v4061 = vld [vmem:[#allocation29 + $0x30] sm:$0xf]
        %v4062 = vld [vmem:[#allocation29 + $0x34] sm:$0xf]
        %v4063 = vld [vmem:[#allocation29 + $0x38] sm:$0xf]
        %v4064 = vld [vmem:[#allocation29 + $0x3c] sm:$0xf]
        %v4065 = vld [vmem:[#allocation31] sm:$0x1]
        %v4067 = vlaneseq
        %v4068 = vshrl.u32 %v4067, 7
        %v4069 = vsub.s32 0, %v4068
        %v4070 = vrot.slane %v4065, %v4069
        %v4088 = vunpack.c.l.b16 %v4049
        %v4089 = vunpack.c.l.b16 %v4050
        %v4090 = vunpack.c.l.b16 %v4051
        %v4091 = vunpack.c.l.b16 %v4052
        %v4092 = vunpack.c.l.b16 %v4053
        %v4093 = vunpack.c.l.b16 %v4054
        %v4094 = vunpack.c.l.b16 %v4055
        %v4095 = vunpack.c.l.b16 %v4056
        %v4096 = vunpack.c.l.b16 %v4057
        %v4097 = vunpack.c.l.b16 %v4058
        %v4098 = vunpack.c.l.b16 %v4059
        %v4099 = vunpack.c.l.b16 %v4060
        %v4100 = vunpack.c.l.b16 %v4061
        %v4101 = vunpack.c.l.b16 %v4062
        %v4102 = vunpack.c.l.b16 %v4063
        %v4103 = vunpack.c.l.b16 %v4064
        %v4104 = vpack.c.b16 %v4089, %v4088
        %v4105 = vpack.c.b16 %v4091, %v4090
        %v4106 = vpack.c.b16 %v4093, %v4092
        %v4107 = vpack.c.b16 %v4095, %v4094
        %v4108 = vpack.c.b16 %v4097, %v4096
        %v4109 = vpack.c.b16 %v4099, %v4098
        %v4110 = vpack.c.b16 %v4101, %v4100
        %v4111 = vpack.c.b16 %v4103, %v4102
        %4120 = vmatprep.subr.bf16.mxu0 0
        %4121 = vmatpush1.bf16.msra.mxu0 %v4104
        %4122 = vmatprep.subr.bf16.mxu0 0
        %4123 = vmatpush1.bf16.msra.mxu0 %v4105
        %4124 = vmatprep.subr.bf16.mxu0 0
        %4125 = vmatpush1.bf16.msra.mxu0 %v4106
        %4126 = vmatprep.subr.bf16.mxu0 0
        %4127 = vmatpush1.bf16.msra.mxu0 %v4107
        %4128 = vmatprep.subr.bf16.mxu0 0
        %4129 = vmatpush1.bf16.msra.mxu0 %v4108
        %4130 = vmatprep.subr.bf16.mxu0 0
        %4131 = vmatpush1.bf16.msra.mxu0 %v4109
        %4132 = vmatprep.subr.bf16.mxu0 0
        %4133 = vmatpush1.bf16.msra.mxu0 %v4110
        %4134 = vmatprep.subr.bf16.mxu0 0
        %4135 = vmatpush1.bf16.msra.mxu0 %v4111
        %4136 = vmatprep.subr.bf16.mxu0 0
        %4137 = vmatpush1.bf16.msra.mxu0 0
        %4138 = vmatprep.subr.bf16.mxu0 0
        %4139 = vmatpush1.bf16.msra.mxu0 0
        %4140 = vmatprep.subr.bf16.mxu0 0
        %4141 = vmatpush1.bf16.msra.mxu0 0
        %4142 = vmatprep.subr.bf16.mxu0 0
        %4143 = vmatpush1.bf16.msra.mxu0 0
        %4144 = vmatprep.subr.bf16.mxu0 0
        %4145 = vmatpush1.bf16.msra.mxu0 0
        %4146 = vmatprep.subr.bf16.mxu0 0
        %4147 = vmatpush1.bf16.msra.mxu0 0
        %4148 = vmatprep.subr.bf16.mxu0 0
        %4149 = vmatpush1.bf16.msra.mxu0 0
        %4150 = vmatprep.subr.bf16.mxu0 0
        %4151 = vmatpush1.bf16.msra.mxu0 0
        %4152 = vmatprep.mubr.bf16.mxu0 0
        %4153 = vmatmul.mubr.bf16.gmra.mrb[0].mxu0 %v4048
        %v4154 = vpop.f32.mrb[0].mxu0
        %v4155 = vadd.f32 %v4070, %v4154
        %v4156 = vpop.f32.mrb[0].mxu0
        %v4157 = vpop.f32.mrb[0].mxu0
        %v4158 = vpop.f32.mrb[0].mxu0
        %4159 = vdwg.mxu0
        %v4160 = vadd.f32 %v3979, %v4155
        %v4161 = vld [vmem:[#allocation23] sm:$0x1]
        %v4162 = vld [vmem:[#allocation25] sm:$0x1]
        %v4163 = vsel %vm1438, %v4160, 0.0
        %4164 = vadd.xlane.f32.xlu0 %v4163
        %v4165 = vpop.xlane.xlu0 %4164
        %v4166 = vmul.f32 %v4165, %v3955
        %v4167 = vsub.f32 %v4160, %v4166
        %v4168 = vmul.f32 %v4167, %v4167
        %v4169 = vsel %vm1438, %v4168, 0.0
        %4170 = vadd.xlane.f32.xlu0 %v4169
        %v4171 = vpop.xlane.xlu0 %4170
        %v4172 = vmul.f32 %v4171, %v3955
        %v4173 = vadd.f32 %v4172, 1e-05
        %v4174 = vrsqrt.pop %v4173
        %v4175 = vmul.f32 %v4167, %v4174
        %v4177 = vlaneseq
        %v4178 = vshrl.u32 %v4177, 7
        %v4179 = vsub.s32 0, %v4178
        %v4180 = vrot.slane %v4161, %v4179
        %v4182 = vmul.f32 %v4175, %v4180
        %v4184 = vlaneseq
        %v4185 = vshrl.u32 %v4184, 7
        %v4186 = vsub.s32 0, %v4185
        %v4187 = vrot.slane %v4162, %v4186
        %v4189 = vadd.f32 %v4182, %v4187
        %4191 = vset.pattern.permute.xlu0 0
        %4192 = vperm.xlu0 %4191, %v1100
        %v4193 = vpop.permute.xlu0 %4192
        %v4195 = vmul.f32 %v4189, %v4193
        %v4196 = vadd.f32 %v4195, %v1160
        %v4197 = vld [vmem:[#allocation32] sm:$0x1]
        %v4198 = vld [vmem:[#allocation34] sm:$0x1]
        %v4199 = vsel %vm1438, %v4196, 0.0
        %4200 = vadd.xlane.f32.xlu0 %v4199
        %v4201 = vpop.xlane.xlu0 %4200
        %v4202 = vmul.f32 %v4201, %v3955
        %v4203 = vsub.f32 %v4196, %v4202
        %v4204 = vmul.f32 %v4203, %v4203
        %v4205 = vsel %vm1438, %v4204, 0.0
        %4206 = vadd.xlane.f32.xlu0 %v4205
        %v4207 = vpop.xlane.xlu0 %4206
        %v4208 = vmul.f32 %v4207, %v3955
        %v4209 = vadd.f32 %v4208, 1e-05
        %v4210 = vrsqrt.pop %v4209
        %v4211 = vmul.f32 %v4203, %v4210
        %v4213 = vlaneseq
        %v4214 = vshrl.u32 %v4213, 7
        %v4215 = vsub.s32 0, %v4214
        %v4216 = vrot.slane %v4197, %v4215
        %v4218 = vmul.f32 %v4211, %v4216
        %v4220 = vlaneseq
        %v4221 = vshrl.u32 %v4220, 7
        %v4222 = vsub.s32 0, %v4221
        %v4223 = vrot.slane %v4198, %v4222
        %v4225 = vadd.f32 %v4218, %v4223
        %v4226 = vpack.c.bf16 %v4225, %v4225
        %s4227 = scalar_lea.vmem [#allocation14], 384
        %v4228 = vld [vmem:[%s4227] sm:$0xf]
        %v4229 = vld [vmem:[%s4227 + $0x4] sm:$0xf]
        %v4230 = vld [vmem:[%s4227 + $0x8] sm:$0xf]
        %v4231 = vld [vmem:[%s4227 + $0xc] sm:$0xf]
        %v4232 = vld [vmem:[%s4227 + $0x10] sm:$0xf]
        %v4233 = vld [vmem:[%s4227 + $0x14] sm:$0xf]
        %v4234 = vld [vmem:[%s4227 + $0x18] sm:$0xf]
        %v4235 = vld [vmem:[%s4227 + $0x1c] sm:$0xf]
        %v4236 = vld [vmem:[%s4227 + $0x20] sm:$0xf]
        %v4237 = vld [vmem:[%s4227 + $0x24] sm:$0xf]
        %v4238 = vld [vmem:[%s4227 + $0x28] sm:$0xf]
        %v4239 = vld [vmem:[%s4227 + $0x2c] sm:$0xf]
        %v4240 = vld [vmem:[%s4227 + $0x30] sm:$0xf]
        %v4241 = vld [vmem:[%s4227 + $0x34] sm:$0xf]
        %v4242 = vld [vmem:[%s4227 + $0x38] sm:$0xf]
        %v4243 = vld [vmem:[%s4227 + $0x3c] sm:$0xf]
        %v4244 = vld [vmem:[%s4227 + $0x40] sm:$0xf]
        %v4245 = vld [vmem:[%s4227 + $0x44] sm:$0xf]
        %v4246 = vld [vmem:[%s4227 + $0x48] sm:$0xf]
        %v4247 = vld [vmem:[%s4227 + $0x4c] sm:$0xf]
        %v4248 = vld [vmem:[%s4227 + $0x50] sm:$0xf]
        %v4249 = vld [vmem:[%s4227 + $0x54] sm:$0xf]
        %v4250 = vld [vmem:[%s4227 + $0x58] sm:$0xf]
        %v4251 = vld [vmem:[%s4227 + $0x5c] sm:$0xf]
        %v4252 = vld [vmem:[%s4227 + $0x60] sm:$0xf]
        %v4253 = vld [vmem:[%s4227 + $0x64] sm:$0xf]
        %v4254 = vld [vmem:[%s4227 + $0x68] sm:$0xf]
        %v4255 = vld [vmem:[%s4227 + $0x6c] sm:$0xf]
        %v4256 = vld [vmem:[%s4227 + $0x70] sm:$0xf]
        %v4257 = vld [vmem:[%s4227 + $0x74] sm:$0xf]
        %v4258 = vld [vmem:[%s4227 + $0x78] sm:$0xf]
        %v4259 = vld [vmem:[%s4227 + $0x7c] sm:$0xf]
        %v4260 = vld [vmem:[%s4227 + $0x80] sm:$0xf]
        %v4261 = vld [vmem:[%s4227 + $0x84] sm:$0xf]
        %v4262 = vld [vmem:[%s4227 + $0x88] sm:$0xf]
        %v4263 = vld [vmem:[%s4227 + $0x8c] sm:$0xf]
        %v4264 = vld [vmem:[%s4227 + $0x90] sm:$0xf]
        %v4265 = vld [vmem:[%s4227 + $0x94] sm:$0xf]
        %v4266 = vld [vmem:[%s4227 + $0x98] sm:$0xf]
        %v4267 = vld [vmem:[%s4227 + $0x9c] sm:$0xf]
        %v4268 = vld [vmem:[%s4227 + $0xa0] sm:$0xf]
        %v4269 = vld [vmem:[%s4227 + $0xa4] sm:$0xf]
        %v4270 = vld [vmem:[%s4227 + $0xa8] sm:$0xf]
        %v4271 = vld [vmem:[%s4227 + $0xac] sm:$0xf]
        %v4272 = vld [vmem:[%s4227 + $0xb0] sm:$0xf]
        %v4273 = vld [vmem:[%s4227 + $0xb4] sm:$0xf]
        %v4274 = vld [vmem:[%s4227 + $0xb8] sm:$0xf]
        %v4275 = vld [vmem:[%s4227 + $0xbc] sm:$0xf]
        %v4276 = vld [vmem:[%s4227 + $0xc0] sm:$0xf]
        %v4277 = vld [vmem:[%s4227 + $0xc4] sm:$0xf]
        %v4278 = vld [vmem:[%s4227 + $0xc8] sm:$0xf]
        %v4279 = vld [vmem:[%s4227 + $0xcc] sm:$0xf]
        %v4280 = vld [vmem:[%s4227 + $0xd0] sm:$0xf]
        %v4281 = vld [vmem:[%s4227 + $0xd4] sm:$0xf]
        %v4282 = vld [vmem:[%s4227 + $0xd8] sm:$0xf]
        %v4283 = vld [vmem:[%s4227 + $0xdc] sm:$0xf]
        %v4284 = vld [vmem:[%s4227 + $0xe0] sm:$0xf]
        %v4285 = vld [vmem:[%s4227 + $0xe4] sm:$0xf]
        %v4286 = vld [vmem:[%s4227 + $0xe8] sm:$0xf]
        %v4287 = vld [vmem:[%s4227 + $0xec] sm:$0xf]
        %v4288 = vld [vmem:[%s4227 + $0xf0] sm:$0xf]
        %v4289 = vld [vmem:[%s4227 + $0xf4] sm:$0xf]
        %v4290 = vld [vmem:[%s4227 + $0xf8] sm:$0xf]
        %v4291 = vld [vmem:[%s4227 + $0xfc] sm:$0xf]
        %v4292 = vld [vmem:[%s4227 + $0x100] sm:$0xf]
        %v4293 = vld [vmem:[%s4227 + $0x104] sm:$0xf]
        %v4294 = vld [vmem:[%s4227 + $0x108] sm:$0xf]
        %v4295 = vld [vmem:[%s4227 + $0x10c] sm:$0xf]
        %v4296 = vld [vmem:[%s4227 + $0x110] sm:$0xf]
        %v4297 = vld [vmem:[%s4227 + $0x114] sm:$0xf]
        %v4298 = vld [vmem:[%s4227 + $0x118] sm:$0xf]
        %v4299 = vld [vmem:[%s4227 + $0x11c] sm:$0xf]
        %v4300 = vld [vmem:[%s4227 + $0x120] sm:$0xf]
        %v4301 = vld [vmem:[%s4227 + $0x124] sm:$0xf]
        %v4302 = vld [vmem:[%s4227 + $0x128] sm:$0xf]
        %v4303 = vld [vmem:[%s4227 + $0x12c] sm:$0xf]
        %v4304 = vld [vmem:[%s4227 + $0x130] sm:$0xf]
        %v4305 = vld [vmem:[%s4227 + $0x134] sm:$0xf]
        %v4306 = vld [vmem:[%s4227 + $0x138] sm:$0xf]
        %v4307 = vld [vmem:[%s4227 + $0x13c] sm:$0xf]
        %v4308 = vld [vmem:[%s4227 + $0x140] sm:$0xf]
        %v4309 = vld [vmem:[%s4227 + $0x144] sm:$0xf]
        %v4310 = vld [vmem:[%s4227 + $0x148] sm:$0xf]
        %v4311 = vld [vmem:[%s4227 + $0x14c] sm:$0xf]
        %v4312 = vld [vmem:[%s4227 + $0x150] sm:$0xf]
        %v4313 = vld [vmem:[%s4227 + $0x154] sm:$0xf]
        %v4314 = vld [vmem:[%s4227 + $0x158] sm:$0xf]
        %v4315 = vld [vmem:[%s4227 + $0x15c] sm:$0xf]
        %v4316 = vld [vmem:[%s4227 + $0x160] sm:$0xf]
        %v4317 = vld [vmem:[%s4227 + $0x164] sm:$0xf]
        %v4318 = vld [vmem:[%s4227 + $0x168] sm:$0xf]
        %v4319 = vld [vmem:[%s4227 + $0x16c] sm:$0xf]
        %v4320 = vld [vmem:[%s4227 + $0x170] sm:$0xf]
        %v4321 = vld [vmem:[%s4227 + $0x174] sm:$0xf]
        %v4322 = vld [vmem:[%s4227 + $0x178] sm:$0xf]
        %v4323 = vld [vmem:[%s4227 + $0x17c] sm:$0xf]
        %s4324 = scalar_lea.vmem [#allocation16], 24
        %v4325 = vld [vmem:[%s4324] sm:$0x1]
        %v4326 = vld [vmem:[%s4324 + $0x1] sm:$0x1]
        %v4327 = vld [vmem:[%s4324 + $0x2] sm:$0x1]
        %v4328 = vld [vmem:[%s4324 + $0x3] sm:$0x1]
        %v4329 = vld [vmem:[%s4324 + $0x4] sm:$0x1]
        %v4330 = vld [vmem:[%s4324 + $0x5] sm:$0x1]
        %v4331 = vld [vmem:[%s4324 + $0x6] sm:$0x1]
        %v4332 = vld [vmem:[%s4324 + $0x7] sm:$0x1]
        %v4333 = vld [vmem:[%s4324 + $0x8] sm:$0x1]
        %v4334 = vld [vmem:[%s4324 + $0x9] sm:$0x1]
        %v4335 = vld [vmem:[%s4324 + $0xa] sm:$0x1]
        %v4336 = vld [vmem:[%s4324 + $0xb] sm:$0x1]
        %v4337 = vld [vmem:[%s4324 + $0xc] sm:$0x1]
        %v4338 = vld [vmem:[%s4324 + $0xd] sm:$0x1]
        %v4339 = vld [vmem:[%s4324 + $0xe] sm:$0x1]
        %v4340 = vld [vmem:[%s4324 + $0xf] sm:$0x1]
        %v4341 = vld [vmem:[%s4324 + $0x10] sm:$0x1]
        %v4342 = vld [vmem:[%s4324 + $0x11] sm:$0x1]
        %v4343 = vld [vmem:[%s4324 + $0x12] sm:$0x1]
        %v4344 = vld [vmem:[%s4324 + $0x13] sm:$0x1]
        %v4345 = vld [vmem:[%s4324 + $0x14] sm:$0x1]
        %v4346 = vld [vmem:[%s4324 + $0x15] sm:$0x1]
        %v4347 = vld [vmem:[%s4324 + $0x16] sm:$0x1]
        %v4348 = vld [vmem:[%s4324 + $0x17] sm:$0x1]
        %v4373 = vlaneseq
        %v4374 = vshrl.u32 %v4373, 7
        %v4375 = vsub.s32 0, %v4374
        %v4376 = vrot.slane %v4325, %v4375
        %v4377 = vlaneseq
        %v4378 = vshrl.u32 %v4377, 7
        %v4379 = vsub.s32 0, %v4378
        %v4380 = vrot.slane %v4326, %v4379
        %v4381 = vlaneseq
        %v4382 = vshrl.u32 %v4381, 7
        %v4383 = vsub.s32 0, %v4382
        %v4384 = vrot.slane %v4327, %v4383
        %v4385 = vlaneseq
        %v4386 = vshrl.u32 %v4385, 7
        %v4387 = vsub.s32 0, %v4386
        %v4388 = vrot.slane %v4328, %v4387
        %v4389 = vlaneseq
        %v4390 = vshrl.u32 %v4389, 7
        %v4391 = vsub.s32 0, %v4390
        %v4392 = vrot.slane %v4329, %v4391
        %v4393 = vlaneseq
        %v4394 = vshrl.u32 %v4393, 7
        %v4395 = vsub.s32 0, %v4394
        %v4396 = vrot.slane %v4330, %v4395
        %v4397 = vlaneseq
        %v4398 = vshrl.u32 %v4397, 7
        %v4399 = vsub.s32 0, %v4398
        %v4400 = vrot.slane %v4331, %v4399
        %v4401 = vlaneseq
        %v4402 = vshrl.u32 %v4401, 7
        %v4403 = vsub.s32 0, %v4402
        %v4404 = vrot.slane %v4332, %v4403
        %v4405 = vlaneseq
        %v4406 = vshrl.u32 %v4405, 7
        %v4407 = vsub.s32 0, %v4406
        %v4408 = vrot.slane %v4333, %v4407
        %v4409 = vlaneseq
        %v4410 = vshrl.u32 %v4409, 7
        %v4411 = vsub.s32 0, %v4410
        %v4412 = vrot.slane %v4334, %v4411
        %v4413 = vlaneseq
        %v4414 = vshrl.u32 %v4413, 7
        %v4415 = vsub.s32 0, %v4414
        %v4416 = vrot.slane %v4335, %v4415
        %v4417 = vlaneseq
        %v4418 = vshrl.u32 %v4417, 7
        %v4419 = vsub.s32 0, %v4418
        %v4420 = vrot.slane %v4336, %v4419
        %v4421 = vlaneseq
        %v4422 = vshrl.u32 %v4421, 7
        %v4423 = vsub.s32 0, %v4422
        %v4424 = vrot.slane %v4337, %v4423
        %v4425 = vlaneseq
        %v4426 = vshrl.u32 %v4425, 7
        %v4427 = vsub.s32 0, %v4426
        %v4428 = vrot.slane %v4338, %v4427
        %v4429 = vlaneseq
        %v4430 = vshrl.u32 %v4429, 7
        %v4431 = vsub.s32 0, %v4430
        %v4432 = vrot.slane %v4339, %v4431
        %v4433 = vlaneseq
        %v4434 = vshrl.u32 %v4433, 7
        %v4435 = vsub.s32 0, %v4434
        %v4436 = vrot.slane %v4340, %v4435
        %v4437 = vlaneseq
        %v4438 = vshrl.u32 %v4437, 7
        %v4439 = vsub.s32 0, %v4438
        %v4440 = vrot.slane %v4341, %v4439
        %v4441 = vlaneseq
        %v4442 = vshrl.u32 %v4441, 7
        %v4443 = vsub.s32 0, %v4442
        %v4444 = vrot.slane %v4342, %v4443
        %v4445 = vlaneseq
        %v4446 = vshrl.u32 %v4445, 7
        %v4447 = vsub.s32 0, %v4446
        %v4448 = vrot.slane %v4343, %v4447
        %v4449 = vlaneseq
        %v4450 = vshrl.u32 %v4449, 7
        %v4451 = vsub.s32 0, %v4450
        %v4452 = vrot.slane %v4344, %v4451
        %v4453 = vlaneseq
        %v4454 = vshrl.u32 %v4453, 7
        %v4455 = vsub.s32 0, %v4454
        %v4456 = vrot.slane %v4345, %v4455
        %v4457 = vlaneseq
        %v4458 = vshrl.u32 %v4457, 7
        %v4459 = vsub.s32 0, %v4458
        %v4460 = vrot.slane %v4346, %v4459
        %v4461 = vlaneseq
        %v4462 = vshrl.u32 %v4461, 7
        %v4463 = vsub.s32 0, %v4462
        %v4464 = vrot.slane %v4347, %v4463
        %v4465 = vlaneseq
        %v4466 = vshrl.u32 %v4465, 7
        %v4467 = vsub.s32 0, %v4466
        %v4468 = vrot.slane %v4348, %v4467
        %v4497 = vunpack.c.l.b16 %v4228
        %v4498 = vunpack.c.l.b16 %v4229
        %v4499 = vunpack.c.l.b16 %v4230
        %v4500 = vunpack.c.l.b16 %v4231
        %v4501 = vpack.c.b16 %v4498, %v4497
        %v4502 = vpack.c.b16 %v4500, %v4499
        %v4506 = vsel %vm1438, %v4226, 0
        %4508 = vmatprep.subr.bf16.mxu0 0
        %4509 = vmatpush1.bf16.msra.mxu0 %v4501
        %4510 = vmatprep.subr.bf16.mxu0 0
        %4511 = vmatpush1.bf16.msra.mxu0 %v4502
        %4512 = vmatprep.subr.bf16.mxu0 0
        %4513 = vmatpush1.bf16.msra.mxu0 0
        %4514 = vmatprep.subr.bf16.mxu0 0
        %4515 = vmatpush1.bf16.msra.mxu0 0
        %4516 = vmatprep.subr.bf16.mxu0 0
        %4517 = vmatpush1.bf16.msra.mxu0 0
        %4518 = vmatprep.subr.bf16.mxu0 0
        %4519 = vmatpush1.bf16.msra.mxu0 0
        %4520 = vmatprep.subr.bf16.mxu0 0
        %4521 = vmatpush1.bf16.msra.mxu0 0
        %4522 = vmatprep.subr.bf16.mxu0 0
        %4523 = vmatpush1.bf16.msra.mxu0 0
        %4524 = vmatprep.subr.bf16.mxu0 0
        %4525 = vmatpush1.bf16.msra.mxu0 0
        %4526 = vmatprep.subr.bf16.mxu0 0
        %4527 = vmatpush1.bf16.msra.mxu0 0
        %4528 = vmatprep.subr.bf16.mxu0 0
        %4529 = vmatpush1.bf16.msra.mxu0 0
        %4530 = vmatprep.subr.bf16.mxu0 0
        %4531 = vmatpush1.bf16.msra.mxu0 0
        %4532 = vmatprep.subr.bf16.mxu0 0
        %4533 = vmatpush1.bf16.msra.mxu0 0
        %4534 = vmatprep.subr.bf16.mxu0 0
        %4535 = vmatpush1.bf16.msra.mxu0 0
        %4536 = vmatprep.subr.bf16.mxu0 0
        %4537 = vmatpush1.bf16.msra.mxu0 0
        %4538 = vmatprep.subr.bf16.mxu0 0
        %4539 = vmatpush1.bf16.msra.mxu0 0
        %4540 = vmatprep.mubr.bf16.mxu0 0
        %4541 = vmatmul.mubr.bf16.gmra.mrb[0].mxu0 %v4506
        %v4542 = vpop.f32.mrb[0].mxu0
        %v4543 = vadd.f32 %v4376, %v4542
        %v4544 = vpop.f32.mrb[0].mxu0
        %v4545 = vpop.f32.mrb[0].mxu0
        %v4546 = vpop.f32.mrb[0].mxu0
        %4547 = vdwg.mxu0
        %v4552 = vunpack.c.l.b16 %v4232
        %v4553 = vunpack.c.l.b16 %v4233
        %v4554 = vunpack.c.l.b16 %v4234
        %v4555 = vunpack.c.l.b16 %v4235
        %v4556 = vpack.c.b16 %v4553, %v4552
        %v4557 = vpack.c.b16 %v4555, %v4554
        %4560 = vmatprep.subr.bf16.mxu0 0
        %4561 = vmatpush1.bf16.msra.mxu0 %v4556
        %4562 = vmatprep.subr.bf16.mxu0 0
        %4563 = vmatpush1.bf16.msra.mxu0 %v4557
        %4564 = vmatprep.subr.bf16.mxu0 0
        %4565 = vmatpush1.bf16.msra.mxu0 0
        %4566 = vmatprep.subr.bf16.mxu0 0
        %4567 = vmatpush1.bf16.msra.mxu0 0
        %4568 = vmatprep.subr.bf16.mxu0 0
        %4569 = vmatpush1.bf16.msra.mxu0 0
        %4570 = vmatprep.subr.bf16.mxu0 0
        %4571 = vmatpush1.bf16.msra.mxu0 0
        %4572 = vmatprep.subr.bf16.mxu0 0
        %4573 = vmatpush1.bf16.msra.mxu0 0
        %4574 = vmatprep.subr.bf16.mxu0 0
        %4575 = vmatpush1.bf16.msra.mxu0 0
        %4576 = vmatprep.subr.bf16.mxu0 0
        %4577 = vmatpush1.bf16.msra.mxu0 0
        %4578 = vmatprep.subr.bf16.mxu0 0
        %4579 = vmatpush1.bf16.msra.mxu0 0
        %4580 = vmatprep.subr.bf16.mxu0 0
        %4581 = vmatpush1.bf16.msra.mxu0 0
        %4582 = vmatprep.subr.bf16.mxu0 0
        %4583 = vmatpush1.bf16.msra.mxu0 0
        %4584 = vmatprep.subr.bf16.mxu0 0
        %4585 = vmatpush1.bf16.msra.mxu0 0
        %4586 = vmatprep.subr.bf16.mxu0 0
        %4587 = vmatpush1.bf16.msra.mxu0 0
        %4588 = vmatprep.subr.bf16.mxu0 0
        %4589 = vmatpush1.bf16.msra.mxu0 0
        %4590 = vmatprep.subr.bf16.mxu0 0
        %4591 = vmatpush1.bf16.msra.mxu0 0
        %4592 = vmatprep.mubr.bf16.mxu0 0
        %4593 = vmatmul.mubr.bf16.gmra.mrb[0].mxu0 %v4506
        %v4594 = vpop.f32.mrb[0].mxu0
        %v4595 = vadd.f32 %v4380, %v4594
        %v4596 = vpop.f32.mrb[0].mxu0
        %v4597 = vpop.f32.mrb[0].mxu0
        %v4598 = vpop.f32.mrb[0].mxu0
        %4599 = vdwg.mxu0
        %v4604 = vunpack.c.l.b16 %v4236
        %v4605 = vunpack.c.l.b16 %v4237
        %v4606 = vunpack.c.l.b16 %v4238
        %v4607 = vunpack.c.l.b16 %v4239
        %v4608 = vpack.c.b16 %v4605, %v4604
        %v4609 = vpack.c.b16 %v4607, %v4606
        %4612 = vmatprep.subr.bf16.mxu0 0
        %4613 = vmatpush1.bf16.msra.mxu0 %v4608
        %4614 = vmatprep.subr.bf16.mxu0 0
        %4615 = vmatpush1.bf16.msra.mxu0 %v4609
        %4616 = vmatprep.subr.bf16.mxu0 0
        %4617 = vmatpush1.bf16.msra.mxu0 0
        %4618 = vmatprep.subr.bf16.mxu0 0
        %4619 = vmatpush1.bf16.msra.mxu0 0
        %4620 = vmatprep.subr.bf16.mxu0 0
        %4621 = vmatpush1.bf16.msra.mxu0 0
        %4622 = vmatprep.subr.bf16.mxu0 0
        %4623 = vmatpush1.bf16.msra.mxu0 0
        %4624 = vmatprep.subr.bf16.mxu0 0
        %4625 = vmatpush1.bf16.msra.mxu0 0
        %4626 = vmatprep.subr.bf16.mxu0 0
        %4627 = vmatpush1.bf16.msra.mxu0 0
        %4628 = vmatprep.subr.bf16.mxu0 0
        %4629 = vmatpush1.bf16.msra.mxu0 0
        %4630 = vmatprep.subr.bf16.mxu0 0
        %4631 = vmatpush1.bf16.msra.mxu0 0
        %4632 = vmatprep.subr.bf16.mxu0 0
        %4633 = vmatpush1.bf16.msra.mxu0 0
        %4634 = vmatprep.subr.bf16.mxu0 0
        %4635 = vmatpush1.bf16.msra.mxu0 0
        %4636 = vmatprep.subr.bf16.mxu0 0
        %4637 = vmatpush1.bf16.msra.mxu0 0
        %4638 = vmatprep.subr.bf16.mxu0 0
        %4639 = vmatpush1.bf16.msra.mxu0 0
        %4640 = vmatprep.subr.bf16.mxu0 0
        %4641 = vmatpush1.bf16.msra.mxu0 0
        %4642 = vmatprep.subr.bf16.mxu0 0
        %4643 = vmatpush1.bf16.msra.mxu0 0
        %4644 = vmatprep.mubr.bf16.mxu0 0
        %4645 = vmatmul.mubr.bf16.gmra.mrb[0].mxu0 %v4506
        %v4646 = vpop.f32.mrb[0].mxu0
        %v4647 = vadd.f32 %v4384, %v4646
        %v4648 = vpop.f32.mrb[0].mxu0
        %v4649 = vpop.f32.mrb[0].mxu0
        %v4650 = vpop.f32.mrb[0].mxu0
        %4651 = vdwg.mxu0
        %v4656 = vunpack.c.l.b16 %v4240
        %v4657 = vunpack.c.l.b16 %v4241
        %v4658 = vunpack.c.l.b16 %v4242
        %v4659 = vunpack.c.l.b16 %v4243
        %v4660 = vpack.c.b16 %v4657, %v4656
        %v4661 = vpack.c.b16 %v4659, %v4658
        %4664 = vmatprep.subr.bf16.mxu0 0
        %4665 = vmatpush1.bf16.msra.mxu0 %v4660
        %4666 = vmatprep.subr.bf16.mxu0 0
        %4667 = vmatpush1.bf16.msra.mxu0 %v4661
        %4668 = vmatprep.subr.bf16.mxu0 0
        %4669 = vmatpush1.bf16.msra.mxu0 0
        %4670 = vmatprep.subr.bf16.mxu0 0
        %4671 = vmatpush1.bf16.msra.mxu0 0
        %4672 = vmatprep.subr.bf16.mxu0 0
        %4673 = vmatpush1.bf16.msra.mxu0 0
        %4674 = vmatprep.subr.bf16.mxu0 0
        %4675 = vmatpush1.bf16.msra.mxu0 0
        %4676 = vmatprep.subr.bf16.mxu0 0
        %4677 = vmatpush1.bf16.msra.mxu0 0
        %4678 = vmatprep.subr.bf16.mxu0 0
        %4679 = vmatpush1.bf16.msra.mxu0 0
        %4680 = vmatprep.subr.bf16.mxu0 0
        %4681 = vmatpush1.bf16.msra.mxu0 0
        %4682 = vmatprep.subr.bf16.mxu0 0
        %4683 = vmatpush1.bf16.msra.mxu0 0
        %4684 = vmatprep.subr.bf16.mxu0 0
        %4685 = vmatpush1.bf16.msra.mxu0 0
        %4686 = vmatprep.subr.bf16.mxu0 0
        %4687 = vmatpush1.bf16.msra.mxu0 0
        %4688 = vmatprep.subr.bf16.mxu0 0
        %4689 = vmatpush1.bf16.msra.mxu0 0
        %4690 = vmatprep.subr.bf16.mxu0 0
        %4691 = vmatpush1.bf16.msra.mxu0 0
        %4692 = vmatprep.subr.bf16.mxu0 0
        %4693 = vmatpush1.bf16.msra.mxu0 0
        %4694 = vmatprep.subr.bf16.mxu0 0
        %4695 = vmatpush1.bf16.msra.mxu0 0
        %4696 = vmatprep.mubr.bf16.mxu0 0
        %4697 = vmatmul.mubr.bf16.gmra.mrb[0].mxu0 %v4506
        %v4698 = vpop.f32.mrb[0].mxu0
        %v4699 = vadd.f32 %v4388, %v4698
        %v4700 = vpop.f32.mrb[0].mxu0
        %v4701 = vpop.f32.mrb[0].mxu0
        %v4702 = vpop.f32.mrb[0].mxu0
        %4703 = vdwg.mxu0
        %v4708 = vunpack.c.l.b16 %v4244
        %v4709 = vunpack.c.l.b16 %v4245
        %v4710 = vunpack.c.l.b16 %v4246
        %v4711 = vunpack.c.l.b16 %v4247
        %v4712 = vpack.c.b16 %v4709, %v4708
        %v4713 = vpack.c.b16 %v4711, %v4710
        %4716 = vmatprep.subr.bf16.mxu0 0
        %4717 = vmatpush1.bf16.msra.mxu0 %v4712
        %4718 = vmatprep.subr.bf16.mxu0 0
        %4719 = vmatpush1.bf16.msra.mxu0 %v4713
        %4720 = vmatprep.subr.bf16.mxu0 0
        %4721 = vmatpush1.bf16.msra.mxu0 0
        %4722 = vmatprep.subr.bf16.mxu0 0
        %4723 = vmatpush1.bf16.msra.mxu0 0
        %4724 = vmatprep.subr.bf16.mxu0 0
        %4725 = vmatpush1.bf16.msra.mxu0 0
        %4726 = vmatprep.subr.bf16.mxu0 0
        %4727 = vmatpush1.bf16.msra.mxu0 0
        %4728 = vmatprep.subr.bf16.mxu0 0
        %4729 = vmatpush1.bf16.msra.mxu0 0
        %4730 = vmatprep.subr.bf16.mxu0 0
        %4731 = vmatpush1.bf16.msra.mxu0 0
        %4732 = vmatprep.subr.bf16.mxu0 0
        %4733 = vmatpush1.bf16.msra.mxu0 0
        %4734 = vmatprep.subr.bf16.mxu0 0
        %4735 = vmatpush1.bf16.msra.mxu0 0
        %4736 = vmatprep.subr.bf16.mxu0 0
        %4737 = vmatpush1.bf16.msra.mxu0 0
        %4738 = vmatprep.subr.bf16.mxu0 0
        %4739 = vmatpush1.bf16.msra.mxu0 0
        %4740 = vmatprep.subr.bf16.mxu0 0
        %4741 = vmatpush1.bf16.msra.mxu0 0
        %4742 = vmatprep.subr.bf16.mxu0 0
        %4743 = vmatpush1.bf16.msra.mxu0 0
        %4744 = vmatprep.subr.bf16.mxu0 0
        %4745 = vmatpush1.bf16.msra.mxu0 0
        %4746 = vmatprep.subr.bf16.mxu0 0
        %4747 = vmatpush1.bf16.msra.mxu0 0
        %4748 = vmatprep.mubr.bf16.mxu0 0
        %4749 = vmatmul.mubr.bf16.gmra.mrb[0].mxu0 %v4506
        %v4750 = vpop.f32.mrb[0].mxu0
        %v4751 = vadd.f32 %v4392, %v4750
        %v4752 = vpop.f32.mrb[0].mxu0
        %v4753 = vpop.f32.mrb[0].mxu0
        %v4754 = vpop.f32.mrb[0].mxu0
        %4755 = vdwg.mxu0
        %v4760 = vunpack.c.l.b16 %v4248
        %v4761 = vunpack.c.l.b16 %v4249
        %v4762 = vunpack.c.l.b16 %v4250
        %v4763 = vunpack.c.l.b16 %v4251
        %v4764 = vpack.c.b16 %v4761, %v4760
        %v4765 = vpack.c.b16 %v4763, %v4762
        %4768 = vmatprep.subr.bf16.mxu0 0
        %4769 = vmatpush1.bf16.msra.mxu0 %v4764
        %4770 = vmatprep.subr.bf16.mxu0 0
        %4771 = vmatpush1.bf16.msra.mxu0 %v4765
        %4772 = vmatprep.subr.bf16.mxu0 0
        %4773 = vmatpush1.bf16.msra.mxu0 0
        %4774 = vmatprep.subr.bf16.mxu0 0
        %4775 = vmatpush1.bf16.msra.mxu0 0
        %4776 = vmatprep.subr.bf16.mxu0 0
        %4777 = vmatpush1.bf16.msra.mxu0 0
        %4778 = vmatprep.subr.bf16.mxu0 0
        %4779 = vmatpush1.bf16.msra.mxu0 0
        %4780 = vmatprep.subr.bf16.mxu0 0
        %4781 = vmatpush1.bf16.msra.mxu0 0
        %4782 = vmatprep.subr.bf16.mxu0 0
        %4783 = vmatpush1.bf16.msra.mxu0 0
        %4784 = vmatprep.subr.bf16.mxu0 0
        %4785 = vmatpush1.bf16.msra.mxu0 0
        %4786 = vmatprep.subr.bf16.mxu0 0
        %4787 = vmatpush1.bf16.msra.mxu0 0
        %4788 = vmatprep.subr.bf16.mxu0 0
        %4789 = vmatpush1.bf16.msra.mxu0 0
        %4790 = vmatprep.subr.bf16.mxu0 0
        %4791 = vmatpush1.bf16.msra.mxu0 0
        %4792 = vmatprep.subr.bf16.mxu0 0
        %4793 = vmatpush1.bf16.msra.mxu0 0
        %4794 = vmatprep.subr.bf16.mxu0 0
        %4795 = vmatpush1.bf16.msra.mxu0 0
        %4796 = vmatprep.subr.bf16.mxu0 0
        %4797 = vmatpush1.bf16.msra.mxu0 0
        %4798 = vmatprep.subr.bf16.mxu0 0
        %4799 = vmatpush1.bf16.msra.mxu0 0
        %4800 = vmatprep.mubr.bf16.mxu0 0
        %4801 = vmatmul.mubr.bf16.gmra.mrb[0].mxu0 %v4506
        %v4802 = vpop.f32.mrb[0].mxu0
        %v4803 = vadd.f32 %v4396, %v4802
        %v4804 = vpop.f32.mrb[0].mxu0
        %v4805 = vpop.f32.mrb[0].mxu0
        %v4806 = vpop.f32.mrb[0].mxu0
        %4807 = vdwg.mxu0
        %v4812 = vunpack.c.l.b16 %v4252
        %v4813 = vunpack.c.l.b16 %v4253
        %v4814 = vunpack.c.l.b16 %v4254
        %v4815 = vunpack.c.l.b16 %v4255
        %v4816 = vpack.c.b16 %v4813, %v4812
        %v4817 = vpack.c.b16 %v4815, %v4814
        %4820 = vmatprep.subr.bf16.mxu0 0
        %4821 = vmatpush1.bf16.msra.mxu0 %v4816
        %4822 = vmatprep.subr.bf16.mxu0 0
        %4823 = vmatpush1.bf16.msra.mxu0 %v4817
        %4824 = vmatprep.subr.bf16.mxu0 0
        %4825 = vmatpush1.bf16.msra.mxu0 0
        %4826 = vmatprep.subr.bf16.mxu0 0
        %4827 = vmatpush1.bf16.msra.mxu0 0
        %4828 = vmatprep.subr.bf16.mxu0 0
        %4829 = vmatpush1.bf16.msra.mxu0 0
        %4830 = vmatprep.subr.bf16.mxu0 0
        %4831 = vmatpush1.bf16.msra.mxu0 0
        %4832 = vmatprep.subr.bf16.mxu0 0
        %4833 = vmatpush1.bf16.msra.mxu0 0
        %4834 = vmatprep.subr.bf16.mxu0 0
        %4835 = vmatpush1.bf16.msra.mxu0 0
        %4836 = vmatprep.subr.bf16.mxu0 0
        %4837 = vmatpush1.bf16.msra.mxu0 0
        %4838 = vmatprep.subr.bf16.mxu0 0
        %4839 = vmatpush1.bf16.msra.mxu0 0
        %4840 = vmatprep.subr.bf16.mxu0 0
        %4841 = vmatpush1.bf16.msra.mxu0 0
        %4842 = vmatprep.subr.bf16.mxu0 0
        %4843 = vmatpush1.bf16.msra.mxu0 0
        %4844 = vmatprep.subr.bf16.mxu0 0
        %4845 = vmatpush1.bf16.msra.mxu0 0
        %4846 = vmatprep.subr.bf16.mxu0 0
        %4847 = vmatpush1.bf16.msra.mxu0 0
        %4848 = vmatprep.subr.bf16.mxu0 0
        %4849 = vmatpush1.bf16.msra.mxu0 0
        %4850 = vmatprep.subr.bf16.mxu0 0
        %4851 = vmatpush1.bf16.msra.mxu0 0
        %4852 = vmatprep.mubr.bf16.mxu0 0
        %4853 = vmatmul.mubr.bf16.gmra.mrb[0].mxu0 %v4506
        %v4854 = vpop.f32.mrb[0].mxu0
        %v4855 = vadd.f32 %v4400, %v4854
        %v4856 = vpop.f32.mrb[0].mxu0
        %v4857 = vpop.f32.mrb[0].mxu0
        %v4858 = vpop.f32.mrb[0].mxu0
        %4859 = vdwg.mxu0
        %v4864 = vunpack.c.l.b16 %v4256
        %v4865 = vunpack.c.l.b16 %v4257
        %v4866 = vunpack.c.l.b16 %v4258
        %v4867 = vunpack.c.l.b16 %v4259
        %v4868 = vpack.c.b16 %v4865, %v4864
        %v4869 = vpack.c.b16 %v4867, %v4866
        %4872 = vmatprep.subr.bf16.mxu0 0
        %4873 = vmatpush1.bf16.msra.mxu0 %v4868
        %4874 = vmatprep.subr.bf16.mxu0 0
        %4875 = vmatpush1.bf16.msra.mxu0 %v4869
        %4876 = vmatprep.subr.bf16.mxu0 0
        %4877 = vmatpush1.bf16.msra.mxu0 0
        %4878 = vmatprep.subr.bf16.mxu0 0
        %4879 = vmatpush1.bf16.msra.mxu0 0
        %4880 = vmatprep.subr.bf16.mxu0 0
        %4881 = vmatpush1.bf16.msra.mxu0 0
        %4882 = vmatprep.subr.bf16.mxu0 0
        %4883 = vmatpush1.bf16.msra.mxu0 0
        %4884 = vmatprep.subr.bf16.mxu0 0
        %4885 = vmatpush1.bf16.msra.mxu0 0
        %4886 = vmatprep.subr.bf16.mxu0 0
        %4887 = vmatpush1.bf16.msra.mxu0 0
        %4888 = vmatprep.subr.bf16.mxu0 0
        %4889 = vmatpush1.bf16.msra.mxu0 0
        %4890 = vmatprep.subr.bf16.mxu0 0
        %4891 = vmatpush1.bf16.msra.mxu0 0
        %4892 = vmatprep.subr.bf16.mxu0 0
        %4893 = vmatpush1.bf16.msra.mxu0 0
        %4894 = vmatprep.subr.bf16.mxu0 0
        %4895 = vmatpush1.bf16.msra.mxu0 0
        %4896 = vmatprep.subr.bf16.mxu0 0
        %4897 = vmatpush1.bf16.msra.mxu0 0
        %4898 = vmatprep.subr.bf16.mxu0 0
        %4899 = vmatpush1.bf16.msra.mxu0 0
        %4900 = vmatprep.subr.bf16.mxu0 0
        %4901 = vmatpush1.bf16.msra.mxu0 0
        %4902 = vmatprep.subr.bf16.mxu0 0
        %4903 = vmatpush1.bf16.msra.mxu0 0
        %4904 = vmatprep.mubr.bf16.mxu0 0
        %4905 = vmatmul.mubr.bf16.gmra.mrb[0].mxu0 %v4506
        %v4906 = vpop.f32.mrb[0].mxu0
        %v4907 = vadd.f32 %v4404, %v4906
        %v4908 = vpop.f32.mrb[0].mxu0
        %v4909 = vpop.f32.mrb[0].mxu0
        %v4910 = vpop.f32.mrb[0].mxu0
        %4911 = vdwg.mxu0
        %v4916 = vunpack.c.l.b16 %v4260
        %v4917 = vunpack.c.l.b16 %v4261
        %v4918 = vunpack.c.l.b16 %v4262
        %v4919 = vunpack.c.l.b16 %v4263
        %v4920 = vpack.c.b16 %v4917, %v4916
        %v4921 = vpack.c.b16 %v4919, %v4918
        %4924 = vmatprep.subr.bf16.mxu0 0
        %4925 = vmatpush1.bf16.msra.mxu0 %v4920
        %4926 = vmatprep.subr.bf16.mxu0 0
        %4927 = vmatpush1.bf16.msra.mxu0 %v4921
        %4928 = vmatprep.subr.bf16.mxu0 0
        %4929 = vmatpush1.bf16.msra.mxu0 0
        %4930 = vmatprep.subr.bf16.mxu0 0
        %4931 = vmatpush1.bf16.msra.mxu0 0
        %4932 = vmatprep.subr.bf16.mxu0 0
        %4933 = vmatpush1.bf16.msra.mxu0 0
        %4934 = vmatprep.subr.bf16.mxu0 0
        %4935 = vmatpush1.bf16.msra.mxu0 0
        %4936 = vmatprep.subr.bf16.mxu0 0
        %4937 = vmatpush1.bf16.msra.mxu0 0
        %4938 = vmatprep.subr.bf16.mxu0 0
        %4939 = vmatpush1.bf16.msra.mxu0 0
        %4940 = vmatprep.subr.bf16.mxu0 0
        %4941 = vmatpush1.bf16.msra.mxu0 0
        %4942 = vmatprep.subr.bf16.mxu0 0
        %4943 = vmatpush1.bf16.msra.mxu0 0
        %4944 = vmatprep.subr.bf16.mxu0 0
        %4945 = vmatpush1.bf16.msra.mxu0 0
        %4946 = vmatprep.subr.bf16.mxu0 0
        %4947 = vmatpush1.bf16.msra.mxu0 0
        %4948 = vmatprep.subr.bf16.mxu0 0
        %4949 = vmatpush1.bf16.msra.mxu0 0
        %4950 = vmatprep.subr.bf16.mxu0 0
        %4951 = vmatpush1.bf16.msra.mxu0 0
        %4952 = vmatprep.subr.bf16.mxu0 0
        %4953 = vmatpush1.bf16.msra.mxu0 0
        %4954 = vmatprep.subr.bf16.mxu0 0
        %4955 = vmatpush1.bf16.msra.mxu0 0
        %4956 = vmatprep.mubr.bf16.mxu0 0
        %4957 = vmatmul.mubr.bf16.gmra.mrb[0].mxu0 %v4506
        %v4958 = vpop.f32.mrb[0].mxu0
        %v4959 = vadd.f32 %v4408, %v4958
        %v4960 = vpop.f32.mrb[0].mxu0
        %v4961 = vpop.f32.mrb[0].mxu0
        %v4962 = vpop.f32.mrb[0].mxu0
        %4963 = vdwg.mxu0
        %v4968 = vunpack.c.l.b16 %v4264
        %v4969 = vunpack.c.l.b16 %v4265
        %v4970 = vunpack.c.l.b16 %v4266
        %v4971 = vunpack.c.l.b16 %v4267
        %v4972 = vpack.c.b16 %v4969, %v4968
        %v4973 = vpack.c.b16 %v4971, %v4970
        %4976 = vmatprep.subr.bf16.mxu0 0
        %4977 = vmatpush1.bf16.msra.mxu0 %v4972
        %4978 = vmatprep.subr.bf16.mxu0 0
        %4979 = vmatpush1.bf16.msra.mxu0 %v4973
        %4980 = vmatprep.subr.bf16.mxu0 0
        %4981 = vmatpush1.bf16.msra.mxu0 0
        %4982 = vmatprep.subr.bf16.mxu0 0
        %4983 = vmatpush1.bf16.msra.mxu0 0
        %4984 = vmatprep.subr.bf16.mxu0 0
        %4985 = vmatpush1.bf16.msra.mxu0 0
        %4986 = vmatprep.subr.bf16.mxu0 0
        %4987 = vmatpush1.bf16.msra.mxu0 0
        %4988 = vmatprep.subr.bf16.mxu0 0
        %4989 = vmatpush1.bf16.msra.mxu0 0
        %4990 = vmatprep.subr.bf16.mxu0 0
        %4991 = vmatpush1.bf16.msra.mxu0 0
        %4992 = vmatprep.subr.bf16.mxu0 0
        %4993 = vmatpush1.bf16.msra.mxu0 0
        %4994 = vmatprep.subr.bf16.mxu0 0
        %4995 = vmatpush1.bf16.msra.mxu0 0
        %4996 = vmatprep.subr.bf16.mxu0 0
        %4997 = vmatpush1.bf16.msra.mxu0 0
        %4998 = vmatprep.subr.bf16.mxu0 0
        %4999 = vmatpush1.bf16.msra.mxu0 0
        %5000 = vmatprep.subr.bf16.mxu0 0
        %5001 = vmatpush1.bf16.msra.mxu0 0
        %5002 = vmatprep.subr.bf16.mxu0 0
        %5003 = vmatpush1.bf16.msra.mxu0 0
        %5004 = vmatprep.subr.bf16.mxu0 0
        %5005 = vmatpush1.bf16.msra.mxu0 0
        %5006 = vmatprep.subr.bf16.mxu0 0
        %5007 = vmatpush1.bf16.msra.mxu0 0
        %5008 = vmatprep.mubr.bf16.mxu0 0
        %5009 = vmatmul.mubr.bf16.gmra.mrb[0].mxu0 %v4506
        %v5010 = vpop.f32.mrb[0].mxu0
        %v5011 = vadd.f32 %v4412, %v5010
        %v5012 = vpop.f32.mrb[0].mxu0
        %v5013 = vpop.f32.mrb[0].mxu0
        %v5014 = vpop.f32.mrb[0].mxu0
        %5015 = vdwg.mxu0
        %v5020 = vunpack.c.l.b16 %v4268
        %v5021 = vunpack.c.l.b16 %v4269
        %v5022 = vunpack.c.l.b16 %v4270
        %v5023 = vunpack.c.l.b16 %v4271
        %v5024 = vpack.c.b16 %v5021, %v5020
        %v5025 = vpack.c.b16 %v5023, %v5022
        %5028 = vmatprep.subr.bf16.mxu0 0
        %5029 = vmatpush1.bf16.msra.mxu0 %v5024
        %5030 = vmatprep.subr.bf16.mxu0 0
        %5031 = vmatpush1.bf16.msra.mxu0 %v5025
        %5032 = vmatprep.subr.bf16.mxu0 0
        %5033 = vmatpush1.bf16.msra.mxu0 0
        %5034 = vmatprep.subr.bf16.mxu0 0
        %5035 = vmatpush1.bf16.msra.mxu0 0
        %5036 = vmatprep.subr.bf16.mxu0 0
        %5037 = vmatpush1.bf16.msra.mxu0 0
        %5038 = vmatprep.subr.bf16.mxu0 0
        %5039 = vmatpush1.bf16.msra.mxu0 0
        %5040 = vmatprep.subr.bf16.mxu0 0
        %5041 = vmatpush1.bf16.msra.mxu0 0
        %5042 = vmatprep.subr.bf16.mxu0 0
        %5043 = vmatpush1.bf16.msra.mxu0 0
        %5044 = vmatprep.subr.bf16.mxu0 0
        %5045 = vmatpush1.bf16.msra.mxu0 0
        %5046 = vmatprep.subr.bf16.mxu0 0
        %5047 = vmatpush1.bf16.msra.mxu0 0
        %5048 = vmatprep.subr.bf16.mxu0 0
        %5049 = vmatpush1.bf16.msra.mxu0 0
        %5050 = vmatprep.subr.bf16.mxu0 0
        %5051 = vmatpush1.bf16.msra.mxu0 0
        %5052 = vmatprep.subr.bf16.mxu0 0
        %5053 = vmatpush1.bf16.msra.mxu0 0
        %5054 = vmatprep.subr.bf16.mxu0 0
        %5055 = vmatpush1.bf16.msra.mxu0 0
        %5056 = vmatprep.subr.bf16.mxu0 0
        %5057 = vmatpush1.bf16.msra.mxu0 0
        %5058 = vmatprep.subr.bf16.mxu0 0
        %5059 = vmatpush1.bf16.msra.mxu0 0
        %5060 = vmatprep.mubr.bf16.mxu0 0
        %5061 = vmatmul.mubr.bf16.gmra.mrb[0].mxu0 %v4506
        %v5062 = vpop.f32.mrb[0].mxu0
        %v5063 = vadd.f32 %v4416, %v5062
        %v5064 = vpop.f32.mrb[0].mxu0
        %v5065 = vpop.f32.mrb[0].mxu0
        %v5066 = vpop.f32.mrb[0].mxu0
        %5067 = vdwg.mxu0
        %v5072 = vunpack.c.l.b16 %v4272
        %v5073 = vunpack.c.l.b16 %v4273
        %v5074 = vunpack.c.l.b16 %v4274
        %v5075 = vunpack.c.l.b16 %v4275
        %v5076 = vpack.c.b16 %v5073, %v5072
        %v5077 = vpack.c.b16 %v5075, %v5074
        %5080 = vmatprep.subr.bf16.mxu0 0
        %5081 = vmatpush1.bf16.msra.mxu0 %v5076
        %5082 = vmatprep.subr.bf16.mxu0 0
        %5083 = vmatpush1.bf16.msra.mxu0 %v5077
        %5084 = vmatprep.subr.bf16.mxu0 0
        %5085 = vmatpush1.bf16.msra.mxu0 0
        %5086 = vmatprep.subr.bf16.mxu0 0
        %5087 = vmatpush1.bf16.msra.mxu0 0
        %5088 = vmatprep.subr.bf16.mxu0 0
        %5089 = vmatpush1.bf16.msra.mxu0 0
        %5090 = vmatprep.subr.bf16.mxu0 0
        %5091 = vmatpush1.bf16.msra.mxu0 0
        %5092 = vmatprep.subr.bf16.mxu0 0
        %5093 = vmatpush1.bf16.msra.mxu0 0
        %5094 = vmatprep.subr.bf16.mxu0 0
        %5095 = vmatpush1.bf16.msra.mxu0 0
        %5096 = vmatprep.subr.bf16.mxu0 0
        %5097 = vmatpush1.bf16.msra.mxu0 0
        %5098 = vmatprep.subr.bf16.mxu0 0
        %5099 = vmatpush1.bf16.msra.mxu0 0
        %5100 = vmatprep.subr.bf16.mxu0 0
        %5101 = vmatpush1.bf16.msra.mxu0 0
        %5102 = vmatprep.subr.bf16.mxu0 0
        %5103 = vmatpush1.bf16.msra.mxu0 0
        %5104 = vmatprep.subr.bf16.mxu0 0
        %5105 = vmatpush1.bf16.msra.mxu0 0
        %5106 = vmatprep.subr.bf16.mxu0 0
        %5107 = vmatpush1.bf16.msra.mxu0 0
        %5108 = vmatprep.subr.bf16.mxu0 0
        %5109 = vmatpush1.bf16.msra.mxu0 0
        %5110 = vmatprep.subr.bf16.mxu0 0
        %5111 = vmatpush1.bf16.msra.mxu0 0
        %5112 = vmatprep.mubr.bf16.mxu0 0
        %5113 = vmatmul.mubr.bf16.gmra.mrb[0].mxu0 %v4506
        %v5114 = vpop.f32.mrb[0].mxu0
        %v5115 = vadd.f32 %v4420, %v5114
        %v5116 = vpop.f32.mrb[0].mxu0
        %v5117 = vpop.f32.mrb[0].mxu0
        %v5118 = vpop.f32.mrb[0].mxu0
        %5119 = vdwg.mxu0
        %v5124 = vunpack.c.l.b16 %v4276
        %v5125 = vunpack.c.l.b16 %v4277
        %v5126 = vunpack.c.l.b16 %v4278
        %v5127 = vunpack.c.l.b16 %v4279
        %v5128 = vpack.c.b16 %v5125, %v5124
        %v5129 = vpack.c.b16 %v5127, %v5126
        %5132 = vmatprep.subr.bf16.mxu0 0
        %5133 = vmatpush1.bf16.msra.mxu0 %v5128
        %5134 = vmatprep.subr.bf16.mxu0 0
        %5135 = vmatpush1.bf16.msra.mxu0 %v5129
        %5136 = vmatprep.subr.bf16.mxu0 0
        %5137 = vmatpush1.bf16.msra.mxu0 0
        %5138 = vmatprep.subr.bf16.mxu0 0
        %5139 = vmatpush1.bf16.msra.mxu0 0
        %5140 = vmatprep.subr.bf16.mxu0 0
        %5141 = vmatpush1.bf16.msra.mxu0 0
        %5142 = vmatprep.subr.bf16.mxu0 0
        %5143 = vmatpush1.bf16.msra.mxu0 0
        %5144 = vmatprep.subr.bf16.mxu0 0
        %5145 = vmatpush1.bf16.msra.mxu0 0
        %5146 = vmatprep.subr.bf16.mxu0 0
        %5147 = vmatpush1.bf16.msra.mxu0 0
        %5148 = vmatprep.subr.bf16.mxu0 0
        %5149 = vmatpush1.bf16.msra.mxu0 0
        %5150 = vmatprep.subr.bf16.mxu0 0
        %5151 = vmatpush1.bf16.msra.mxu0 0
        %5152 = vmatprep.subr.bf16.mxu0 0
        %5153 = vmatpush1.bf16.msra.mxu0 0
        %5154 = vmatprep.subr.bf16.mxu0 0
        %5155 = vmatpush1.bf16.msra.mxu0 0
        %5156 = vmatprep.subr.bf16.mxu0 0
        %5157 = vmatpush1.bf16.msra.mxu0 0
        %5158 = vmatprep.subr.bf16.mxu0 0
        %5159 = vmatpush1.bf16.msra.mxu0 0
        %5160 = vmatprep.subr.bf16.mxu0 0
        %5161 = vmatpush1.bf16.msra.mxu0 0
        %5162 = vmatprep.subr.bf16.mxu0 0
        %5163 = vmatpush1.bf16.msra.mxu0 0
        %5164 = vmatprep.mubr.bf16.mxu0 0
        %5165 = vmatmul.mubr.bf16.gmra.mrb[0].mxu0 %v4506
        %v5166 = vpop.f32.mrb[0].mxu0
        %v5167 = vadd.f32 %v4424, %v5166
        %v5168 = vpop.f32.mrb[0].mxu0
        %v5169 = vpop.f32.mrb[0].mxu0
        %v5170 = vpop.f32.mrb[0].mxu0
        %5171 = vdwg.mxu0
        %v5176 = vunpack.c.l.b16 %v4280
        %v5177 = vunpack.c.l.b16 %v4281
        %v5178 = vunpack.c.l.b16 %v4282
        %v5179 = vunpack.c.l.b16 %v4283
        %v5180 = vpack.c.b16 %v5177, %v5176
        %v5181 = vpack.c.b16 %v5179, %v5178
        %5184 = vmatprep.subr.bf16.mxu0 0
        %5185 = vmatpush1.bf16.msra.mxu0 %v5180
        %5186 = vmatprep.subr.bf16.mxu0 0
        %5187 = vmatpush1.bf16.msra.mxu0 %v5181
        %5188 = vmatprep.subr.bf16.mxu0 0
        %5189 = vmatpush1.bf16.msra.mxu0 0
        %5190 = vmatprep.subr.bf16.mxu0 0
        %5191 = vmatpush1.bf16.msra.mxu0 0
        %5192 = vmatprep.subr.bf16.mxu0 0
        %5193 = vmatpush1.bf16.msra.mxu0 0
        %5194 = vmatprep.subr.bf16.mxu0 0
        %5195 = vmatpush1.bf16.msra.mxu0 0
        %5196 = vmatprep.subr.bf16.mxu0 0
        %5197 = vmatpush1.bf16.msra.mxu0 0
        %5198 = vmatprep.subr.bf16.mxu0 0
        %5199 = vmatpush1.bf16.msra.mxu0 0
        %5200 = vmatprep.subr.bf16.mxu0 0
        %5201 = vmatpush1.bf16.msra.mxu0 0
        %5202 = vmatprep.subr.bf16.mxu0 0
        %5203 = vmatpush1.bf16.msra.mxu0 0
        %5204 = vmatprep.subr.bf16.mxu0 0
        %5205 = vmatpush1.bf16.msra.mxu0 0
        %5206 = vmatprep.subr.bf16.mxu0 0
        %5207 = vmatpush1.bf16.msra.mxu0 0
        %5208 = vmatprep.subr.bf16.mxu0 0
        %5209 = vmatpush1.bf16.msra.mxu0 0
        %5210 = vmatprep.subr.bf16.mxu0 0
        %5211 = vmatpush1.bf16.msra.mxu0 0
        %5212 = vmatprep.subr.bf16.mxu0 0
        %5213 = vmatpush1.bf16.msra.mxu0 0
        %5214 = vmatprep.subr.bf16.mxu0 0
        %5215 = vmatpush1.bf16.msra.mxu0 0
        %5216 = vmatprep.mubr.bf16.mxu0 0
        %5217 = vmatmul.mubr.bf16.gmra.mrb[0].mxu0 %v4506
        %v5218 = vpop.f32.mrb[0].mxu0
        %v5219 = vadd.f32 %v4428, %v5218
        %v5220 = vpop.f32.mrb[0].mxu0
        %v5221 = vpop.f32.mrb[0].mxu0
        %v5222 = vpop.f32.mrb[0].mxu0
        %5223 = vdwg.mxu0
        %v5228 = vunpack.c.l.b16 %v4284
        %v5229 = vunpack.c.l.b16 %v4285
        %v5230 = vunpack.c.l.b16 %v4286
        %v5231 = vunpack.c.l.b16 %v4287
        %v5232 = vpack.c.b16 %v5229, %v5228
        %v5233 = vpack.c.b16 %v5231, %v5230
        %5236 = vmatprep.subr.bf16.mxu0 0
        %5237 = vmatpush1.bf16.msra.mxu0 %v5232
        %5238 = vmatprep.subr.bf16.mxu0 0
        %5239 = vmatpush1.bf16.msra.mxu0 %v5233
        %5240 = vmatprep.subr.bf16.mxu0 0
        %5241 = vmatpush1.bf16.msra.mxu0 0
        %5242 = vmatprep.subr.bf16.mxu0 0
        %5243 = vmatpush1.bf16.msra.mxu0 0
        %5244 = vmatprep.subr.bf16.mxu0 0
        %5245 = vmatpush1.bf16.msra.mxu0 0
        %5246 = vmatprep.subr.bf16.mxu0 0
        %5247 = vmatpush1.bf16.msra.mxu0 0
        %5248 = vmatprep.subr.bf16.mxu0 0
        %5249 = vmatpush1.bf16.msra.mxu0 0
        %5250 = vmatprep.subr.bf16.mxu0 0
        %5251 = vmatpush1.bf16.msra.mxu0 0
        %5252 = vmatprep.subr.bf16.mxu0 0
        %5253 = vmatpush1.bf16.msra.mxu0 0
        %5254 = vmatprep.subr.bf16.mxu0 0
        %5255 = vmatpush1.bf16.msra.mxu0 0
        %5256 = vmatprep.subr.bf16.mxu0 0
        %5257 = vmatpush1.bf16.msra.mxu0 0
        %5258 = vmatprep.subr.bf16.mxu0 0
        %5259 = vmatpush1.bf16.msra.mxu0 0
        %5260 = vmatprep.subr.bf16.mxu0 0
        %5261 = vmatpush1.bf16.msra.mxu0 0
        %5262 = vmatprep.subr.bf16.mxu0 0
        %5263 = vmatpush1.bf16.msra.mxu0 0
        %5264 = vmatprep.subr.bf16.mxu0 0
        %5265 = vmatpush1.bf16.msra.mxu0 0
        %5266 = vmatprep.subr.bf16.mxu0 0
        %5267 = vmatpush1.bf16.msra.mxu0 0
        %5268 = vmatprep.mubr.bf16.mxu0 0
        %5269 = vmatmul.mubr.bf16.gmra.mrb[0].mxu0 %v4506
        %v5270 = vpop.f32.mrb[0].mxu0
        %v5271 = vadd.f32 %v4432, %v5270
        %v5272 = vpop.f32.mrb[0].mxu0
        %v5273 = vpop.f32.mrb[0].mxu0
        %v5274 = vpop.f32.mrb[0].mxu0
        %5275 = vdwg.mxu0
        %v5280 = vunpack.c.l.b16 %v4288
        %v5281 = vunpack.c.l.b16 %v4289
        %v5282 = vunpack.c.l.b16 %v4290
        %v5283 = vunpack.c.l.b16 %v4291
        %v5284 = vpack.c.b16 %v5281, %v5280
        %v5285 = vpack.c.b16 %v5283, %v5282
        %5288 = vmatprep.subr.bf16.mxu0 0
        %5289 = vmatpush1.bf16.msra.mxu0 %v5284
        %5290 = vmatprep.subr.bf16.mxu0 0
        %5291 = vmatpush1.bf16.msra.mxu0 %v5285
        %5292 = vmatprep.subr.bf16.mxu0 0
        %5293 = vmatpush1.bf16.msra.mxu0 0
        %5294 = vmatprep.subr.bf16.mxu0 0
        %5295 = vmatpush1.bf16.msra.mxu0 0
        %5296 = vmatprep.subr.bf16.mxu0 0
        %5297 = vmatpush1.bf16.msra.mxu0 0
        %5298 = vmatprep.subr.bf16.mxu0 0
        %5299 = vmatpush1.bf16.msra.mxu0 0
        %5300 = vmatprep.subr.bf16.mxu0 0
        %5301 = vmatpush1.bf16.msra.mxu0 0
        %5302 = vmatprep.subr.bf16.mxu0 0
        %5303 = vmatpush1.bf16.msra.mxu0 0
        %5304 = vmatprep.subr.bf16.mxu0 0
        %5305 = vmatpush1.bf16.msra.mxu0 0
        %5306 = vmatprep.subr.bf16.mxu0 0
        %5307 = vmatpush1.bf16.msra.mxu0 0
        %5308 = vmatprep.subr.bf16.mxu0 0
        %5309 = vmatpush1.bf16.msra.mxu0 0
        %5310 = vmatprep.subr.bf16.mxu0 0
        %5311 = vmatpush1.bf16.msra.mxu0 0
        %5312 = vmatprep.subr.bf16.mxu0 0
        %5313 = vmatpush1.bf16.msra.mxu0 0
        %5314 = vmatprep.subr.bf16.mxu0 0
        %5315 = vmatpush1.bf16.msra.mxu0 0
        %5316 = vmatprep.subr.bf16.mxu0 0
        %5317 = vmatpush1.bf16.msra.mxu0 0
        %5318 = vmatprep.subr.bf16.mxu0 0
        %5319 = vmatpush1.bf16.msra.mxu0 0
        %5320 = vmatprep.mubr.bf16.mxu0 0
        %5321 = vmatmul.mubr.bf16.gmra.mrb[0].mxu0 %v4506
        %v5322 = vpop.f32.mrb[0].mxu0
        %v5323 = vadd.f32 %v4436, %v5322
        %v5324 = vpop.f32.mrb[0].mxu0
        %v5325 = vpop.f32.mrb[0].mxu0
        %v5326 = vpop.f32.mrb[0].mxu0
        %5327 = vdwg.mxu0
        %v5332 = vunpack.c.l.b16 %v4292
        %v5333 = vunpack.c.l.b16 %v4293
        %v5334 = vunpack.c.l.b16 %v4294
        %v5335 = vunpack.c.l.b16 %v4295
        %v5336 = vpack.c.b16 %v5333, %v5332
        %v5337 = vpack.c.b16 %v5335, %v5334
        %5340 = vmatprep.subr.bf16.mxu0 0
        %5341 = vmatpush1.bf16.msra.mxu0 %v5336
        %5342 = vmatprep.subr.bf16.mxu0 0
        %5343 = vmatpush1.bf16.msra.mxu0 %v5337
        %5344 = vmatprep.subr.bf16.mxu0 0
        %5345 = vmatpush1.bf16.msra.mxu0 0
        %5346 = vmatprep.subr.bf16.mxu0 0
        %5347 = vmatpush1.bf16.msra.mxu0 0
        %5348 = vmatprep.subr.bf16.mxu0 0
        %5349 = vmatpush1.bf16.msra.mxu0 0
        %5350 = vmatprep.subr.bf16.mxu0 0
        %5351 = vmatpush1.bf16.msra.mxu0 0
        %5352 = vmatprep.subr.bf16.mxu0 0
        %5353 = vmatpush1.bf16.msra.mxu0 0
        %5354 = vmatprep.subr.bf16.mxu0 0
        %5355 = vmatpush1.bf16.msra.mxu0 0
        %5356 = vmatprep.subr.bf16.mxu0 0
        %5357 = vmatpush1.bf16.msra.mxu0 0
        %5358 = vmatprep.subr.bf16.mxu0 0
        %5359 = vmatpush1.bf16.msra.mxu0 0
        %5360 = vmatprep.subr.bf16.mxu0 0
        %5361 = vmatpush1.bf16.msra.mxu0 0
        %5362 = vmatprep.subr.bf16.mxu0 0
        %5363 = vmatpush1.bf16.msra.mxu0 0
        %5364 = vmatprep.subr.bf16.mxu0 0
        %5365 = vmatpush1.bf16.msra.mxu0 0
        %5366 = vmatprep.subr.bf16.mxu0 0
        %5367 = vmatpush1.bf16.msra.mxu0 0
        %5368 = vmatprep.subr.bf16.mxu0 0
        %5369 = vmatpush1.bf16.msra.mxu0 0
        %5370 = vmatprep.subr.bf16.mxu0 0
        %5371 = vmatpush1.bf16.msra.mxu0 0
        %5372 = vmatprep.mubr.bf16.mxu0 0
        %5373 = vmatmul.mubr.bf16.gmra.mrb[0].mxu0 %v4506
        %v5374 = vpop.f32.mrb[0].mxu0
        %v5375 = vadd.f32 %v4440, %v5374
        %v5376 = vpop.f32.mrb[0].mxu0
        %v5377 = vpop.f32.mrb[0].mxu0
        %v5378 = vpop.f32.mrb[0].mxu0
        %5379 = vdwg.mxu0
        %v5384 = vunpack.c.l.b16 %v4296
        %v5385 = vunpack.c.l.b16 %v4297
        %v5386 = vunpack.c.l.b16 %v4298
        %v5387 = vunpack.c.l.b16 %v4299
        %v5388 = vpack.c.b16 %v5385, %v5384
        %v5389 = vpack.c.b16 %v5387, %v5386
        %5392 = vmatprep.subr.bf16.mxu0 0
        %5393 = vmatpush1.bf16.msra.mxu0 %v5388
        %5394 = vmatprep.subr.bf16.mxu0 0
        %5395 = vmatpush1.bf16.msra.mxu0 %v5389
        %5396 = vmatprep.subr.bf16.mxu0 0
        %5397 = vmatpush1.bf16.msra.mxu0 0
        %5398 = vmatprep.subr.bf16.mxu0 0
        %5399 = vmatpush1.bf16.msra.mxu0 0
        %5400 = vmatprep.subr.bf16.mxu0 0
        %5401 = vmatpush1.bf16.msra.mxu0 0
        %5402 = vmatprep.subr.bf16.mxu0 0
        %5403 = vmatpush1.bf16.msra.mxu0 0
        %5404 = vmatprep.subr.bf16.mxu0 0
        %5405 = vmatpush1.bf16.msra.mxu0 0
        %5406 = vmatprep.subr.bf16.mxu0 0
        %5407 = vmatpush1.bf16.msra.mxu0 0
        %5408 = vmatprep.subr.bf16.mxu0 0
        %5409 = vmatpush1.bf16.msra.mxu0 0
        %5410 = vmatprep.subr.bf16.mxu0 0
        %5411 = vmatpush1.bf16.msra.mxu0 0
        %5412 = vmatprep.subr.bf16.mxu0 0
        %5413 = vmatpush1.bf16.msra.mxu0 0
        %5414 = vmatprep.subr.bf16.mxu0 0
        %5415 = vmatpush1.bf16.msra.mxu0 0
        %5416 = vmatprep.subr.bf16.mxu0 0
        %5417 = vmatpush1.bf16.msra.mxu0 0
        %5418 = vmatprep.subr.bf16.mxu0 0
        %5419 = vmatpush1.bf16.msra.mxu0 0
        %5420 = vmatprep.subr.bf16.mxu0 0
        %5421 = vmatpush1.bf16.msra.mxu0 0
        %5422 = vmatprep.subr.bf16.mxu0 0
        %5423 = vmatpush1.bf16.msra.mxu0 0
        %5424 = vmatprep.mubr.bf16.mxu0 0
        %5425 = vmatmul.mubr.bf16.gmra.mrb[0].mxu0 %v4506
        %v5426 = vpop.f32.mrb[0].mxu0
        %v5427 = vadd.f32 %v4444, %v5426
        %v5428 = vpop.f32.mrb[0].mxu0
        %v5429 = vpop.f32.mrb[0].mxu0
        %v5430 = vpop.f32.mrb[0].mxu0
        %5431 = vdwg.mxu0
        %v5436 = vunpack.c.l.b16 %v4300
        %v5437 = vunpack.c.l.b16 %v4301
        %v5438 = vunpack.c.l.b16 %v4302
        %v5439 = vunpack.c.l.b16 %v4303
        %v5440 = vpack.c.b16 %v5437, %v5436
        %v5441 = vpack.c.b16 %v5439, %v5438
        %5444 = vmatprep.subr.bf16.mxu0 0
        %5445 = vmatpush1.bf16.msra.mxu0 %v5440
        %5446 = vmatprep.subr.bf16.mxu0 0
        %5447 = vmatpush1.bf16.msra.mxu0 %v5441
        %5448 = vmatprep.subr.bf16.mxu0 0
        %5449 = vmatpush1.bf16.msra.mxu0 0
        %5450 = vmatprep.subr.bf16.mxu0 0
        %5451 = vmatpush1.bf16.msra.mxu0 0
        %5452 = vmatprep.subr.bf16.mxu0 0
        %5453 = vmatpush1.bf16.msra.mxu0 0
        %5454 = vmatprep.subr.bf16.mxu0 0
        %5455 = vmatpush1.bf16.msra.mxu0 0
        %5456 = vmatprep.subr.bf16.mxu0 0
        %5457 = vmatpush1.bf16.msra.mxu0 0
        %5458 = vmatprep.subr.bf16.mxu0 0
        %5459 = vmatpush1.bf16.msra.mxu0 0
        %5460 = vmatprep.subr.bf16.mxu0 0
        %5461 = vmatpush1.bf16.msra.mxu0 0
        %5462 = vmatprep.subr.bf16.mxu0 0
        %5463 = vmatpush1.bf16.msra.mxu0 0
        %5464 = vmatprep.subr.bf16.mxu0 0
        %5465 = vmatpush1.bf16.msra.mxu0 0
        %5466 = vmatprep.subr.bf16.mxu0 0
        %5467 = vmatpush1.bf16.msra.mxu0 0
        %5468 = vmatprep.subr.bf16.mxu0 0
        %5469 = vmatpush1.bf16.msra.mxu0 0
        %5470 = vmatprep.subr.bf16.mxu0 0
        %5471 = vmatpush1.bf16.msra.mxu0 0
        %5472 = vmatprep.subr.bf16.mxu0 0
        %5473 = vmatpush1.bf16.msra.mxu0 0
        %5474 = vmatprep.subr.bf16.mxu0 0
        %5475 = vmatpush1.bf16.msra.mxu0 0
        %5476 = vmatprep.mubr.bf16.mxu0 0
        %5477 = vmatmul.mubr.bf16.gmra.mrb[0].mxu0 %v4506
        %v5478 = vpop.f32.mrb[0].mxu0
        %v5479 = vadd.f32 %v4448, %v5478
        %v5480 = vpop.f32.mrb[0].mxu0
        %v5481 = vpop.f32.mrb[0].mxu0
        %v5482 = vpop.f32.mrb[0].mxu0
        %5483 = vdwg.mxu0
        %v5488 = vunpack.c.l.b16 %v4304
        %v5489 = vunpack.c.l.b16 %v4305
        %v5490 = vunpack.c.l.b16 %v4306
        %v5491 = vunpack.c.l.b16 %v4307
        %v5492 = vpack.c.b16 %v5489, %v5488
        %v5493 = vpack.c.b16 %v5491, %v5490
        %5496 = vmatprep.subr.bf16.mxu0 0
        %5497 = vmatpush1.bf16.msra.mxu0 %v5492
        %5498 = vmatprep.subr.bf16.mxu0 0
        %5499 = vmatpush1.bf16.msra.mxu0 %v5493
        %5500 = vmatprep.subr.bf16.mxu0 0
        %5501 = vmatpush1.bf16.msra.mxu0 0
        %5502 = vmatprep.subr.bf16.mxu0 0
        %5503 = vmatpush1.bf16.msra.mxu0 0
        %5504 = vmatprep.subr.bf16.mxu0 0
        %5505 = vmatpush1.bf16.msra.mxu0 0
        %5506 = vmatprep.subr.bf16.mxu0 0
        %5507 = vmatpush1.bf16.msra.mxu0 0
        %5508 = vmatprep.subr.bf16.mxu0 0
        %5509 = vmatpush1.bf16.msra.mxu0 0
        %5510 = vmatprep.subr.bf16.mxu0 0
        %5511 = vmatpush1.bf16.msra.mxu0 0
        %5512 = vmatprep.subr.bf16.mxu0 0
        %5513 = vmatpush1.bf16.msra.mxu0 0
        %5514 = vmatprep.subr.bf16.mxu0 0
        %5515 = vmatpush1.bf16.msra.mxu0 0
        %5516 = vmatprep.subr.bf16.mxu0 0
        %5517 = vmatpush1.bf16.msra.mxu0 0
        %5518 = vmatprep.subr.bf16.mxu0 0
        %5519 = vmatpush1.bf16.msra.mxu0 0
        %5520 = vmatprep.subr.bf16.mxu0 0
        %5521 = vmatpush1.bf16.msra.mxu0 0
        %5522 = vmatprep.subr.bf16.mxu0 0
        %5523 = vmatpush1.bf16.msra.mxu0 0
        %5524 = vmatprep.subr.bf16.mxu0 0
        %5525 = vmatpush1.bf16.msra.mxu0 0
        %5526 = vmatprep.subr.bf16.mxu0 0
        %5527 = vmatpush1.bf16.msra.mxu0 0
        %5528 = vmatprep.mubr.bf16.mxu0 0
        %5529 = vmatmul.mubr.bf16.gmra.mrb[0].mxu0 %v4506
        %v5530 = vpop.f32.mrb[0].mxu0
        %v5531 = vadd.f32 %v4452, %v5530
        %v5532 = vpop.f32.mrb[0].mxu0
        %v5533 = vpop.f32.mrb[0].mxu0
        %v5534 = vpop.f32.mrb[0].mxu0
        %5535 = vdwg.mxu0
        %v5540 = vunpack.c.l.b16 %v4308
        %v5541 = vunpack.c.l.b16 %v4309
        %v5542 = vunpack.c.l.b16 %v4310
        %v5543 = vunpack.c.l.b16 %v4311
        %v5544 = vpack.c.b16 %v5541, %v5540
        %v5545 = vpack.c.b16 %v5543, %v5542
        %5548 = vmatprep.subr.bf16.mxu0 0
        %5549 = vmatpush1.bf16.msra.mxu0 %v5544
        %5550 = vmatprep.subr.bf16.mxu0 0
        %5551 = vmatpush1.bf16.msra.mxu0 %v5545
        %5552 = vmatprep.subr.bf16.mxu0 0
        %5553 = vmatpush1.bf16.msra.mxu0 0
        %5554 = vmatprep.subr.bf16.mxu0 0
        %5555 = vmatpush1.bf16.msra.mxu0 0
        %5556 = vmatprep.subr.bf16.mxu0 0
        %5557 = vmatpush1.bf16.msra.mxu0 0
        %5558 = vmatprep.subr.bf16.mxu0 0
        %5559 = vmatpush1.bf16.msra.mxu0 0
        %5560 = vmatprep.subr.bf16.mxu0 0
        %5561 = vmatpush1.bf16.msra.mxu0 0
        %5562 = vmatprep.subr.bf16.mxu0 0
        %5563 = vmatpush1.bf16.msra.mxu0 0
        %5564 = vmatprep.subr.bf16.mxu0 0
        %5565 = vmatpush1.bf16.msra.mxu0 0
        %5566 = vmatprep.subr.bf16.mxu0 0
        %5567 = vmatpush1.bf16.msra.mxu0 0
        %5568 = vmatprep.subr.bf16.mxu0 0
        %5569 = vmatpush1.bf16.msra.mxu0 0
        %5570 = vmatprep.subr.bf16.mxu0 0
        %5571 = vmatpush1.bf16.msra.mxu0 0
        %5572 = vmatprep.subr.bf16.mxu0 0
        %5573 = vmatpush1.bf16.msra.mxu0 0
        %5574 = vmatprep.subr.bf16.mxu0 0
        %5575 = vmatpush1.bf16.msra.mxu0 0
        %5576 = vmatprep.subr.bf16.mxu0 0
        %5577 = vmatpush1.bf16.msra.mxu0 0
        %5578 = vmatprep.subr.bf16.mxu0 0
        %5579 = vmatpush1.bf16.msra.mxu0 0
        %5580 = vmatprep.mubr.bf16.mxu0 0
        %5581 = vmatmul.mubr.bf16.gmra.mrb[0].mxu0 %v4506
        %v5582 = vpop.f32.mrb[0].mxu0
        %v5583 = vadd.f32 %v4456, %v5582
        %v5584 = vpop.f32.mrb[0].mxu0
        %v5585 = vpop.f32.mrb[0].mxu0
        %v5586 = vpop.f32.mrb[0].mxu0
        %5587 = vdwg.mxu0
        %v5592 = vunpack.c.l.b16 %v4312
        %v5593 = vunpack.c.l.b16 %v4313
        %v5594 = vunpack.c.l.b16 %v4314
        %v5595 = vunpack.c.l.b16 %v4315
        %v5596 = vpack.c.b16 %v5593, %v5592
        %v5597 = vpack.c.b16 %v5595, %v5594
        %5600 = vmatprep.subr.bf16.mxu0 0
        %5601 = vmatpush1.bf16.msra.mxu0 %v5596
        %5602 = vmatprep.subr.bf16.mxu0 0
        %5603 = vmatpush1.bf16.msra.mxu0 %v5597
        %5604 = vmatprep.subr.bf16.mxu0 0
        %5605 = vmatpush1.bf16.msra.mxu0 0
        %5606 = vmatprep.subr.bf16.mxu0 0
        %5607 = vmatpush1.bf16.msra.mxu0 0
        %5608 = vmatprep.subr.bf16.mxu0 0
        %5609 = vmatpush1.bf16.msra.mxu0 0
        %5610 = vmatprep.subr.bf16.mxu0 0
        %5611 = vmatpush1.bf16.msra.mxu0 0
        %5612 = vmatprep.subr.bf16.mxu0 0
        %5613 = vmatpush1.bf16.msra.mxu0 0
        %5614 = vmatprep.subr.bf16.mxu0 0
        %5615 = vmatpush1.bf16.msra.mxu0 0
        %5616 = vmatprep.subr.bf16.mxu0 0
        %5617 = vmatpush1.bf16.msra.mxu0 0
        %5618 = vmatprep.subr.bf16.mxu0 0
        %5619 = vmatpush1.bf16.msra.mxu0 0
        %5620 = vmatprep.subr.bf16.mxu0 0
        %5621 = vmatpush1.bf16.msra.mxu0 0
        %5622 = vmatprep.subr.bf16.mxu0 0
        %5623 = vmatpush1.bf16.msra.mxu0 0
        %5624 = vmatprep.subr.bf16.mxu0 0
        %5625 = vmatpush1.bf16.msra.mxu0 0
        %5626 = vmatprep.subr.bf16.mxu0 0
        %5627 = vmatpush1.bf16.msra.mxu0 0
        %5628 = vmatprep.subr.bf16.mxu0 0
        %5629 = vmatpush1.bf16.msra.mxu0 0
        %5630 = vmatprep.subr.bf16.mxu0 0
        %5631 = vmatpush1.bf16.msra.mxu0 0
        %5632 = vmatprep.mubr.bf16.mxu0 0
        %5633 = vmatmul.mubr.bf16.gmra.mrb[0].mxu0 %v4506
        %v5634 = vpop.f32.mrb[0].mxu0
        %v5635 = vadd.f32 %v4460, %v5634
        %v5636 = vpop.f32.mrb[0].mxu0
        %v5637 = vpop.f32.mrb[0].mxu0
        %v5638 = vpop.f32.mrb[0].mxu0
        %5639 = vdwg.mxu0
        %v5644 = vunpack.c.l.b16 %v4316
        %v5645 = vunpack.c.l.b16 %v4317
        %v5646 = vunpack.c.l.b16 %v4318
        %v5647 = vunpack.c.l.b16 %v4319
        %v5648 = vpack.c.b16 %v5645, %v5644
        %v5649 = vpack.c.b16 %v5647, %v5646
        %5652 = vmatprep.subr.bf16.mxu0 0
        %5653 = vmatpush1.bf16.msra.mxu0 %v5648
        %5654 = vmatprep.subr.bf16.mxu0 0
        %5655 = vmatpush1.bf16.msra.mxu0 %v5649
        %5656 = vmatprep.subr.bf16.mxu0 0
        %5657 = vmatpush1.bf16.msra.mxu0 0
        %5658 = vmatprep.subr.bf16.mxu0 0
        %5659 = vmatpush1.bf16.msra.mxu0 0
        %5660 = vmatprep.subr.bf16.mxu0 0
        %5661 = vmatpush1.bf16.msra.mxu0 0
        %5662 = vmatprep.subr.bf16.mxu0 0
        %5663 = vmatpush1.bf16.msra.mxu0 0
        %5664 = vmatprep.subr.bf16.mxu0 0
        %5665 = vmatpush1.bf16.msra.mxu0 0
        %5666 = vmatprep.subr.bf16.mxu0 0
        %5667 = vmatpush1.bf16.msra.mxu0 0
        %5668 = vmatprep.subr.bf16.mxu0 0
        %5669 = vmatpush1.bf16.msra.mxu0 0
        %5670 = vmatprep.subr.bf16.mxu0 0
        %5671 = vmatpush1.bf16.msra.mxu0 0
        %5672 = vmatprep.subr.bf16.mxu0 0
        %5673 = vmatpush1.bf16.msra.mxu0 0
        %5674 = vmatprep.subr.bf16.mxu0 0
        %5675 = vmatpush1.bf16.msra.mxu0 0
        %5676 = vmatprep.subr.bf16.mxu0 0
        %5677 = vmatpush1.bf16.msra.mxu0 0
        %5678 = vmatprep.subr.bf16.mxu0 0
        %5679 = vmatpush1.bf16.msra.mxu0 0
        %5680 = vmatprep.subr.bf16.mxu0 0
        %5681 = vmatpush1.bf16.msra.mxu0 0
        %5682 = vmatprep.subr.bf16.mxu0 0
        %5683 = vmatpush1.bf16.msra.mxu0 0
        %5684 = vmatprep.mubr.bf16.mxu0 0
        %5685 = vmatmul.mubr.bf16.gmra.mrb[0].mxu0 %v4506
        %v5686 = vpop.f32.mrb[0].mxu0
        %v5687 = vadd.f32 %v4464, %v5686
        %v5688 = vpop.f32.mrb[0].mxu0
        %v5689 = vpop.f32.mrb[0].mxu0
        %v5690 = vpop.f32.mrb[0].mxu0
        %5691 = vdwg.mxu0
        %v5696 = vunpack.c.l.b16 %v4320
        %v5697 = vunpack.c.l.b16 %v4321
        %v5698 = vunpack.c.l.b16 %v4322
        %v5699 = vunpack.c.l.b16 %v4323
        %v5700 = vpack.c.b16 %v5697, %v5696
        %v5701 = vpack.c.b16 %v5699, %v5698
        %5704 = vmatprep.subr.bf16.mxu0 0
        %5705 = vmatpush1.bf16.msra.mxu0 %v5700
        %5706 = vmatprep.subr.bf16.mxu0 0
        %5707 = vmatpush1.bf16.msra.mxu0 %v5701
        %5708 = vmatprep.subr.bf16.mxu0 0
        %5709 = vmatpush1.bf16.msra.mxu0 0
        %5710 = vmatprep.subr.bf16.mxu0 0
        %5711 = vmatpush1.bf16.msra.mxu0 0
        %5712 = vmatprep.subr.bf16.mxu0 0
        %5713 = vmatpush1.bf16.msra.mxu0 0
        %5714 = vmatprep.subr.bf16.mxu0 0
        %5715 = vmatpush1.bf16.msra.mxu0 0
        %5716 = vmatprep.subr.bf16.mxu0 0
        %5717 = vmatpush1.bf16.msra.mxu0 0
        %5718 = vmatprep.subr.bf16.mxu0 0
        %5719 = vmatpush1.bf16.msra.mxu0 0
        %5720 = vmatprep.subr.bf16.mxu0 0
        %5721 = vmatpush1.bf16.msra.mxu0 0
        %5722 = vmatprep.subr.bf16.mxu0 0
        %5723 = vmatpush1.bf16.msra.mxu0 0
        %5724 = vmatprep.subr.bf16.mxu0 0
        %5725 = vmatpush1.bf16.msra.mxu0 0
        %5726 = vmatprep.subr.bf16.mxu0 0
        %5727 = vmatpush1.bf16.msra.mxu0 0
        %5728 = vmatprep.subr.bf16.mxu0 0
        %5729 = vmatpush1.bf16.msra.mxu0 0
        %5730 = vmatprep.subr.bf16.mxu0 0
        %5731 = vmatpush1.bf16.msra.mxu0 0
        %5732 = vmatprep.subr.bf16.mxu0 0
        %5733 = vmatpush1.bf16.msra.mxu0 0
        %5734 = vmatprep.subr.bf16.mxu0 0
        %5735 = vmatpush1.bf16.msra.mxu0 0
        %5736 = vmatprep.mubr.bf16.mxu0 0
        %5737 = vmatmul.mubr.bf16.gmra.mrb[0].mxu0 %v4506
        %v5738 = vpop.f32.mrb[0].mxu0
        %v5739 = vadd.f32 %v4468, %v5738
        %v5740 = vpop.f32.mrb[0].mxu0
        %v5741 = vpop.f32.mrb[0].mxu0
        %v5742 = vpop.f32.mrb[0].mxu0
        %5743 = vdwg.mxu0
        %v5744 = vpack.c.bf16 %v4543, %v4543
        %v5745 = vpack.c.bf16 %v4595, %v4595
        %v5746 = vpack.c.bf16 %v4647, %v4647
        %v5747 = vpack.c.bf16 %v4699, %v4699
        %v5748 = vpack.c.bf16 %v4751, %v4751
        %v5749 = vpack.c.bf16 %v4803, %v4803
        %v5750 = vpack.c.bf16 %v4855, %v4855
        %v5751 = vpack.c.bf16 %v4907, %v4907
        %v5752 = vpack.c.bf16 %v4959, %v4959
        %v5753 = vpack.c.bf16 %v5011, %v5011
        %v5754 = vpack.c.bf16 %v5063, %v5063
        %v5755 = vpack.c.bf16 %v5115, %v5115
        %v5756 = vpack.c.bf16 %v5167, %v5167
        %v5757 = vpack.c.bf16 %v5219, %v5219
        %v5758 = vpack.c.bf16 %v5271, %v5271
        %v5759 = vpack.c.bf16 %v5323, %v5323
        %v5761 = vsel %vm1111, %v5744, 0
        %v5764 = vsel %vm1111, %v5752, 0
        %5766 = vmatprep.subr.bf16.mxu0 0
        %5767 = vmatpush1.bf16.xpose.msra.mxu0 %v5764
        %5768 = vmatprep.subr.bf16.mxu0 0
        %5769 = vmatpush1.bf16.xpose.msra.mxu0 0
        %5770 = vmatprep.subr.bf16.mxu0 0
        %5771 = vmatpush1.bf16.xpose.msra.mxu0 0
        %5772 = vmatprep.subr.bf16.mxu0 0
        %5773 = vmatpush1.bf16.xpose.msra.mxu0 0
        %5774 = vmatprep.subr.bf16.mxu0 0
        %5775 = vmatpush1.bf16.xpose.msra.mxu0 0
        %5776 = vmatprep.subr.bf16.mxu0 0
        %5777 = vmatpush1.bf16.xpose.msra.mxu0 0
        %5778 = vmatprep.subr.bf16.mxu0 0
        %5779 = vmatpush1.bf16.xpose.msra.mxu0 0
        %5780 = vmatprep.subr.bf16.mxu0 0
        %5781 = vmatpush1.bf16.xpose.msra.mxu0 0
        %5782 = vmatprep.subr.bf16.mxu0 0
        %5783 = vmatpush1.bf16.xpose.msra.mxu0 0
        %5784 = vmatprep.subr.bf16.mxu0 0
        %5785 = vmatpush1.bf16.xpose.msra.mxu0 0
        %5786 = vmatprep.subr.bf16.mxu0 0
        %5787 = vmatpush1.bf16.xpose.msra.mxu0 0
        %5788 = vmatprep.subr.bf16.mxu0 0
        %5789 = vmatpush1.bf16.xpose.msra.mxu0 0
        %5790 = vmatprep.subr.bf16.mxu0 0
        %5791 = vmatpush1.bf16.xpose.msra.mxu0 0
        %5792 = vmatprep.subr.bf16.mxu0 0
        %5793 = vmatpush1.bf16.xpose.msra.mxu0 0
        %5794 = vmatprep.subr.bf16.mxu0 0
        %5795 = vmatpush1.bf16.xpose.msra.mxu0 0
        %5796 = vmatprep.subr.bf16.mxu0 0
        %5797 = vmatpush1.bf16.xpose.msra.mxu0 0
        %5798 = vmatprep.mubr.bf16.mxu0 0
        %5799 = vmatmul.mubr.bf16.gmra.mrb[0].mxu0 %v5761
        %v5800 = vpop.f32.mrb[0].mxu0
        %v5801 = vadd.f32 %v2698, %v5800
        %v5802 = vpop.f32.mrb[0].mxu0
        %v5803 = vpop.f32.mrb[0].mxu0
        %v5804 = vpop.f32.mrb[0].mxu0
        %5805 = vdwg.mxu0
        %v5807 = vsel %vm1111, %v5745, 0
        %v5810 = vsel %vm1111, %v5753, 0
        %5812 = vmatprep.subr.bf16.mxu0 0
        %5813 = vmatpush1.bf16.xpose.msra.mxu0 %v5810
        %5814 = vmatprep.subr.bf16.mxu0 0
        %5815 = vmatpush1.bf16.xpose.msra.mxu0 0
        %5816 = vmatprep.subr.bf16.mxu0 0
        %5817 = vmatpush1.bf16.xpose.msra.mxu0 0
        %5818 = vmatprep.subr.bf16.mxu0 0
        %5819 = vmatpush1.bf16.xpose.msra.mxu0 0
        %5820 = vmatprep.subr.bf16.mxu0 0
        %5821 = vmatpush1.bf16.xpose.msra.mxu0 0
        %5822 = vmatprep.subr.bf16.mxu0 0
        %5823 = vmatpush1.bf16.xpose.msra.mxu0 0
        %5824 = vmatprep.subr.bf16.mxu0 0
        %5825 = vmatpush1.bf16.xpose.msra.mxu0 0
        %5826 = vmatprep.subr.bf16.mxu0 0
        %5827 = vmatpush1.bf16.xpose.msra.mxu0 0
        %5828 = vmatprep.subr.bf16.mxu0 0
        %5829 = vmatpush1.bf16.xpose.msra.mxu0 0
        %5830 = vmatprep.subr.bf16.mxu0 0
        %5831 = vmatpush1.bf16.xpose.msra.mxu0 0
        %5832 = vmatprep.subr.bf16.mxu0 0
        %5833 = vmatpush1.bf16.xpose.msra.mxu0 0
        %5834 = vmatprep.subr.bf16.mxu0 0
        %5835 = vmatpush1.bf16.xpose.msra.mxu0 0
        %5836 = vmatprep.subr.bf16.mxu0 0
        %5837 = vmatpush1.bf16.xpose.msra.mxu0 0
        %5838 = vmatprep.subr.bf16.mxu0 0
        %5839 = vmatpush1.bf16.xpose.msra.mxu0 0
        %5840 = vmatprep.subr.bf16.mxu0 0
        %5841 = vmatpush1.bf16.xpose.msra.mxu0 0
        %5842 = vmatprep.subr.bf16.mxu0 0
        %5843 = vmatpush1.bf16.xpose.msra.mxu0 0
        %5844 = vmatprep.mubr.bf16.mxu0 0
        %5845 = vmatmul.mubr.bf16.gmra.mrb[0].mxu0 %v5807
        %v5846 = vpop.f32.mrb[0].mxu0
        %v5847 = vadd.f32 %v2698, %v5846
        %v5848 = vpop.f32.mrb[0].mxu0
        %v5849 = vpop.f32.mrb[0].mxu0
        %v5850 = vpop.f32.mrb[0].mxu0
        %5851 = vdwg.mxu0
        %v5853 = vsel %vm1111, %v5746, 0
        %v5856 = vsel %vm1111, %v5754, 0
        %5858 = vmatprep.subr.bf16.mxu0 0
        %5859 = vmatpush1.bf16.xpose.msra.mxu0 %v5856
        %5860 = vmatprep.subr.bf16.mxu0 0
        %5861 = vmatpush1.bf16.xpose.msra.mxu0 0
        %5862 = vmatprep.subr.bf16.mxu0 0
        %5863 = vmatpush1.bf16.xpose.msra.mxu0 0
        %5864 = vmatprep.subr.bf16.mxu0 0
        %5865 = vmatpush1.bf16.xpose.msra.mxu0 0
        %5866 = vmatprep.subr.bf16.mxu0 0
        %5867 = vmatpush1.bf16.xpose.msra.mxu0 0
        %5868 = vmatprep.subr.bf16.mxu0 0
        %5869 = vmatpush1.bf16.xpose.msra.mxu0 0
        %5870 = vmatprep.subr.bf16.mxu0 0
        %5871 = vmatpush1.bf16.xpose.msra.mxu0 0
        %5872 = vmatprep.subr.bf16.mxu0 0
        %5873 = vmatpush1.bf16.xpose.msra.mxu0 0
        %5874 = vmatprep.subr.bf16.mxu0 0
        %5875 = vmatpush1.bf16.xpose.msra.mxu0 0
        %5876 = vmatprep.subr.bf16.mxu0 0
        %5877 = vmatpush1.bf16.xpose.msra.mxu0 0
        %5878 = vmatprep.subr.bf16.mxu0 0
        %5879 = vmatpush1.bf16.xpose.msra.mxu0 0
        %5880 = vmatprep.subr.bf16.mxu0 0
        %5881 = vmatpush1.bf16.xpose.msra.mxu0 0
        %5882 = vmatprep.subr.bf16.mxu0 0
        %5883 = vmatpush1.bf16.xpose.msra.mxu0 0
        %5884 = vmatprep.subr.bf16.mxu0 0
        %5885 = vmatpush1.bf16.xpose.msra.mxu0 0
        %5886 = vmatprep.subr.bf16.mxu0 0
        %5887 = vmatpush1.bf16.xpose.msra.mxu0 0
        %5888 = vmatprep.subr.bf16.mxu0 0
        %5889 = vmatpush1.bf16.xpose.msra.mxu0 0
        %5890 = vmatprep.mubr.bf16.mxu0 0
        %5891 = vmatmul.mubr.bf16.gmra.mrb[0].mxu0 %v5853
        %v5892 = vpop.f32.mrb[0].mxu0
        %v5893 = vadd.f32 %v2698, %v5892
        %v5894 = vpop.f32.mrb[0].mxu0
        %v5895 = vpop.f32.mrb[0].mxu0
        %v5896 = vpop.f32.mrb[0].mxu0
        %5897 = vdwg.mxu0
        %v5899 = vsel %vm1111, %v5747, 0
        %v5902 = vsel %vm1111, %v5755, 0
        %5904 = vmatprep.subr.bf16.mxu0 0
        %5905 = vmatpush1.bf16.xpose.msra.mxu0 %v5902
        %5906 = vmatprep.subr.bf16.mxu0 0
        %5907 = vmatpush1.bf16.xpose.msra.mxu0 0
        %5908 = vmatprep.subr.bf16.mxu0 0
        %5909 = vmatpush1.bf16.xpose.msra.mxu0 0
        %5910 = vmatprep.subr.bf16.mxu0 0
        %5911 = vmatpush1.bf16.xpose.msra.mxu0 0
        %5912 = vmatprep.subr.bf16.mxu0 0
        %5913 = vmatpush1.bf16.xpose.msra.mxu0 0
        %5914 = vmatprep.subr.bf16.mxu0 0
        %5915 = vmatpush1.bf16.xpose.msra.mxu0 0
        %5916 = vmatprep.subr.bf16.mxu0 0
        %5917 = vmatpush1.bf16.xpose.msra.mxu0 0
        %5918 = vmatprep.subr.bf16.mxu0 0
        %5919 = vmatpush1.bf16.xpose.msra.mxu0 0
        %5920 = vmatprep.subr.bf16.mxu0 0
        %5921 = vmatpush1.bf16.xpose.msra.mxu0 0
        %5922 = vmatprep.subr.bf16.mxu0 0
        %5923 = vmatpush1.bf16.xpose.msra.mxu0 0
        %5924 = vmatprep.subr.bf16.mxu0 0
        %5925 = vmatpush1.bf16.xpose.msra.mxu0 0
        %5926 = vmatprep.subr.bf16.mxu0 0
        %5927 = vmatpush1.bf16.xpose.msra.mxu0 0
        %5928 = vmatprep.subr.bf16.mxu0 0
        %5929 = vmatpush1.bf16.xpose.msra.mxu0 0
        %5930 = vmatprep.subr.bf16.mxu0 0
        %5931 = vmatpush1.bf16.xpose.msra.mxu0 0
        %5932 = vmatprep.subr.bf16.mxu0 0
        %5933 = vmatpush1.bf16.xpose.msra.mxu0 0
        %5934 = vmatprep.subr.bf16.mxu0 0
        %5935 = vmatpush1.bf16.xpose.msra.mxu0 0
        %5936 = vmatprep.mubr.bf16.mxu0 0
        %5937 = vmatmul.mubr.bf16.gmra.mrb[0].mxu0 %v5899
        %v5938 = vpop.f32.mrb[0].mxu0
        %v5939 = vadd.f32 %v2698, %v5938
        %v5940 = vpop.f32.mrb[0].mxu0
        %v5941 = vpop.f32.mrb[0].mxu0
        %v5942 = vpop.f32.mrb[0].mxu0
        %5943 = vdwg.mxu0
        %v5945 = vsel %vm1111, %v5748, 0
        %v5948 = vsel %vm1111, %v5756, 0
        %5950 = vmatprep.subr.bf16.mxu0 0
        %5951 = vmatpush1.bf16.xpose.msra.mxu0 %v5948
        %5952 = vmatprep.subr.bf16.mxu0 0
        %5953 = vmatpush1.bf16.xpose.msra.mxu0 0
        %5954 = vmatprep.subr.bf16.mxu0 0
        %5955 = vmatpush1.bf16.xpose.msra.mxu0 0
        %5956 = vmatprep.subr.bf16.mxu0 0
        %5957 = vmatpush1.bf16.xpose.msra.mxu0 0
        %5958 = vmatprep.subr.bf16.mxu0 0
        %5959 = vmatpush1.bf16.xpose.msra.mxu0 0
        %5960 = vmatprep.subr.bf16.mxu0 0
        %5961 = vmatpush1.bf16.xpose.msra.mxu0 0
        %5962 = vmatprep.subr.bf16.mxu0 0
        %5963 = vmatpush1.bf16.xpose.msra.mxu0 0
        %5964 = vmatprep.subr.bf16.mxu0 0
        %5965 = vmatpush1.bf16.xpose.msra.mxu0 0
        %5966 = vmatprep.subr.bf16.mxu0 0
        %5967 = vmatpush1.bf16.xpose.msra.mxu0 0
        %5968 = vmatprep.subr.bf16.mxu0 0
        %5969 = vmatpush1.bf16.xpose.msra.mxu0 0
        %5970 = vmatprep.subr.bf16.mxu0 0
        %5971 = vmatpush1.bf16.xpose.msra.mxu0 0
        %5972 = vmatprep.subr.bf16.mxu0 0
        %5973 = vmatpush1.bf16.xpose.msra.mxu0 0
        %5974 = vmatprep.subr.bf16.mxu0 0
        %5975 = vmatpush1.bf16.xpose.msra.mxu0 0
        %5976 = vmatprep.subr.bf16.mxu0 0
        %5977 = vmatpush1.bf16.xpose.msra.mxu0 0
        %5978 = vmatprep.subr.bf16.mxu0 0
        %5979 = vmatpush1.bf16.xpose.msra.mxu0 0
        %5980 = vmatprep.subr.bf16.mxu0 0
        %5981 = vmatpush1.bf16.xpose.msra.mxu0 0
        %5982 = vmatprep.mubr.bf16.mxu0 0
        %5983 = vmatmul.mubr.bf16.gmra.mrb[0].mxu0 %v5945
        %v5984 = vpop.f32.mrb[0].mxu0
        %v5985 = vadd.f32 %v2698, %v5984
        %v5986 = vpop.f32.mrb[0].mxu0
        %v5987 = vpop.f32.mrb[0].mxu0
        %v5988 = vpop.f32.mrb[0].mxu0
        %5989 = vdwg.mxu0
        %v5991 = vsel %vm1111, %v5749, 0
        %v5994 = vsel %vm1111, %v5757, 0
        %5996 = vmatprep.subr.bf16.mxu0 0
        %5997 = vmatpush1.bf16.xpose.msra.mxu0 %v5994
        %5998 = vmatprep.subr.bf16.mxu0 0
        %5999 = vmatpush1.bf16.xpose.msra.mxu0 0
        %6000 = vmatprep.subr.bf16.mxu0 0
        %6001 = vmatpush1.bf16.xpose.msra.mxu0 0
        %6002 = vmatprep.subr.bf16.mxu0 0
        %6003 = vmatpush1.bf16.xpose.msra.mxu0 0
        %6004 = vmatprep.subr.bf16.mxu0 0
        %6005 = vmatpush1.bf16.xpose.msra.mxu0 0
        %6006 = vmatprep.subr.bf16.mxu0 0
        %6007 = vmatpush1.bf16.xpose.msra.mxu0 0
        %6008 = vmatprep.subr.bf16.mxu0 0
        %6009 = vmatpush1.bf16.xpose.msra.mxu0 0
        %6010 = vmatprep.subr.bf16.mxu0 0
        %6011 = vmatpush1.bf16.xpose.msra.mxu0 0
        %6012 = vmatprep.subr.bf16.mxu0 0
        %6013 = vmatpush1.bf16.xpose.msra.mxu0 0
        %6014 = vmatprep.subr.bf16.mxu0 0
        %6015 = vmatpush1.bf16.xpose.msra.mxu0 0
        %6016 = vmatprep.subr.bf16.mxu0 0
        %6017 = vmatpush1.bf16.xpose.msra.mxu0 0
        %6018 = vmatprep.subr.bf16.mxu0 0
        %6019 = vmatpush1.bf16.xpose.msra.mxu0 0
        %6020 = vmatprep.subr.bf16.mxu0 0
        %6021 = vmatpush1.bf16.xpose.msra.mxu0 0
        %6022 = vmatprep.subr.bf16.mxu0 0
        %6023 = vmatpush1.bf16.xpose.msra.mxu0 0
        %6024 = vmatprep.subr.bf16.mxu0 0
        %6025 = vmatpush1.bf16.xpose.msra.mxu0 0
        %6026 = vmatprep.subr.bf16.mxu0 0
        %6027 = vmatpush1.bf16.xpose.msra.mxu0 0
        %6028 = vmatprep.mubr.bf16.mxu0 0
        %6029 = vmatmul.mubr.bf16.gmra.mrb[0].mxu0 %v5991
        %v6030 = vpop.f32.mrb[0].mxu0
        %v6031 = vadd.f32 %v2698, %v6030
        %v6032 = vpop.f32.mrb[0].mxu0
        %v6033 = vpop.f32.mrb[0].mxu0
        %v6034 = vpop.f32.mrb[0].mxu0
        %6035 = vdwg.mxu0
        %v6037 = vsel %vm1111, %v5750, 0
        %v6040 = vsel %vm1111, %v5758, 0
        %6042 = vmatprep.subr.bf16.mxu0 0
        %6043 = vmatpush1.bf16.xpose.msra.mxu0 %v6040
        %6044 = vmatprep.subr.bf16.mxu0 0
        %6045 = vmatpush1.bf16.xpose.msra.mxu0 0
        %6046 = vmatprep.subr.bf16.mxu0 0
        %6047 = vmatpush1.bf16.xpose.msra.mxu0 0
        %6048 = vmatprep.subr.bf16.mxu0 0
        %6049 = vmatpush1.bf16.xpose.msra.mxu0 0
        %6050 = vmatprep.subr.bf16.mxu0 0
        %6051 = vmatpush1.bf16.xpose.msra.mxu0 0
        %6052 = vmatprep.subr.bf16.mxu0 0
        %6053 = vmatpush1.bf16.xpose.msra.mxu0 0
        %6054 = vmatprep.subr.bf16.mxu0 0
        %6055 = vmatpush1.bf16.xpose.msra.mxu0 0
        %6056 = vmatprep.subr.bf16.mxu0 0
        %6057 = vmatpush1.bf16.xpose.msra.mxu0 0
        %6058 = vmatprep.subr.bf16.mxu0 0
        %6059 = vmatpush1.bf16.xpose.msra.mxu0 0
        %6060 = vmatprep.subr.bf16.mxu0 0
        %6061 = vmatpush1.bf16.xpose.msra.mxu0 0
        %6062 = vmatprep.subr.bf16.mxu0 0
        %6063 = vmatpush1.bf16.xpose.msra.mxu0 0
        %6064 = vmatprep.subr.bf16.mxu0 0
        %6065 = vmatpush1.bf16.xpose.msra.mxu0 0
        %6066 = vmatprep.subr.bf16.mxu0 0
        %6067 = vmatpush1.bf16.xpose.msra.mxu0 0
        %6068 = vmatprep.subr.bf16.mxu0 0
        %6069 = vmatpush1.bf16.xpose.msra.mxu0 0
        %6070 = vmatprep.subr.bf16.mxu0 0
        %6071 = vmatpush1.bf16.xpose.msra.mxu0 0
        %6072 = vmatprep.subr.bf16.mxu0 0
        %6073 = vmatpush1.bf16.xpose.msra.mxu0 0
        %6074 = vmatprep.mubr.bf16.mxu0 0
        %6075 = vmatmul.mubr.bf16.gmra.mrb[0].mxu0 %v6037
        %v6076 = vpop.f32.mrb[0].mxu0
        %v6077 = vadd.f32 %v2698, %v6076
        %v6078 = vpop.f32.mrb[0].mxu0
        %v6079 = vpop.f32.mrb[0].mxu0
        %v6080 = vpop.f32.mrb[0].mxu0
        %6081 = vdwg.mxu0
        %v6083 = vsel %vm1111, %v5751, 0
        %v6086 = vsel %vm1111, %v5759, 0
        %6088 = vmatprep.subr.bf16.mxu0 0
        %6089 = vmatpush1.bf16.xpose.msra.mxu0 %v6086
        %6090 = vmatprep.subr.bf16.mxu0 0
        %6091 = vmatpush1.bf16.xpose.msra.mxu0 0
        %6092 = vmatprep.subr.bf16.mxu0 0
        %6093 = vmatpush1.bf16.xpose.msra.mxu0 0
        %6094 = vmatprep.subr.bf16.mxu0 0
        %6095 = vmatpush1.bf16.xpose.msra.mxu0 0
        %6096 = vmatprep.subr.bf16.mxu0 0
        %6097 = vmatpush1.bf16.xpose.msra.mxu0 0
        %6098 = vmatprep.subr.bf16.mxu0 0
        %6099 = vmatpush1.bf16.xpose.msra.mxu0 0
        %6100 = vmatprep.subr.bf16.mxu0 0
        %6101 = vmatpush1.bf16.xpose.msra.mxu0 0
        %6102 = vmatprep.subr.bf16.mxu0 0
        %6103 = vmatpush1.bf16.xpose.msra.mxu0 0
        %6104 = vmatprep.subr.bf16.mxu0 0
        %6105 = vmatpush1.bf16.xpose.msra.mxu0 0
        %6106 = vmatprep.subr.bf16.mxu0 0
        %6107 = vmatpush1.bf16.xpose.msra.mxu0 0
        %6108 = vmatprep.subr.bf16.mxu0 0
        %6109 = vmatpush1.bf16.xpose.msra.mxu0 0
        %6110 = vmatprep.subr.bf16.mxu0 0
        %6111 = vmatpush1.bf16.xpose.msra.mxu0 0
        %6112 = vmatprep.subr.bf16.mxu0 0
        %6113 = vmatpush1.bf16.xpose.msra.mxu0 0
        %6114 = vmatprep.subr.bf16.mxu0 0
        %6115 = vmatpush1.bf16.xpose.msra.mxu0 0
        %6116 = vmatprep.subr.bf16.mxu0 0
        %6117 = vmatpush1.bf16.xpose.msra.mxu0 0
        %6118 = vmatprep.subr.bf16.mxu0 0
        %6119 = vmatpush1.bf16.xpose.msra.mxu0 0
        %6120 = vmatprep.mubr.bf16.mxu0 0
        %6121 = vmatmul.mubr.bf16.gmra.mrb[0].mxu0 %v6083
        %v6122 = vpop.f32.mrb[0].mxu0
        %v6123 = vadd.f32 %v2698, %v6122
        %v6124 = vpop.f32.mrb[0].mxu0
        %v6125 = vpop.f32.mrb[0].mxu0
        %v6126 = vpop.f32.mrb[0].mxu0
        %6127 = vdwg.mxu0
        %v6128 = vsel %vm3068, %v5801, -inf
        %6129 = vmax.xlane.f32.xlu0 %v6128
        %v6130 = vpop.xlane.xlu0 %6129
        %v6131 = vsel %vm3068, %v5847, -inf
        %6132 = vmax.xlane.f32.xlu0 %v6131
        %v6133 = vpop.xlane.xlu0 %6132
        %v6134 = vsel %vm3068, %v5893, -inf
        %6135 = vmax.xlane.f32.xlu0 %v6134
        %v6136 = vpop.xlane.xlu0 %6135
        %v6137 = vsel %vm3068, %v5939, -inf
        %6138 = vmax.xlane.f32.xlu0 %v6137
        %v6139 = vpop.xlane.xlu0 %6138
        %v6140 = vsel %vm3068, %v5985, -inf
        %6141 = vmax.xlane.f32.xlu0 %v6140
        %v6142 = vpop.xlane.xlu0 %6141
        %v6143 = vsel %vm3068, %v6031, -inf
        %6144 = vmax.xlane.f32.xlu0 %v6143
        %v6145 = vpop.xlane.xlu0 %6144
        %v6146 = vsel %vm3068, %v6077, -inf
        %6147 = vmax.xlane.f32.xlu0 %v6146
        %v6148 = vpop.xlane.xlu0 %6147
        %v6149 = vsel %vm3068, %v6123, -inf
        %6150 = vmax.xlane.f32.xlu0 %v6149
        %v6151 = vpop.xlane.xlu0 %6150
        %v6152 = vsub.f32 %v5801, %v6130
        %v6153 = vsub.f32 %v5847, %v6133
        %v6154 = vsub.f32 %v5893, %v6136
        %v6155 = vsub.f32 %v5939, %v6139
        %v6156 = vsub.f32 %v5985, %v6142
        %v6157 = vsub.f32 %v6031, %v6145
        %v6158 = vsub.f32 %v6077, %v6148
        %v6159 = vsub.f32 %v6123, %v6151
        %v6160 = vmul.f32 %v6152, 1.442695
        %v6161 = vpow.pop %v6160
        %v6162 = vmul.f32 %v6153, 1.442695
        %v6163 = vpow.pop %v6162
        %v6164 = vmul.f32 %v6154, 1.442695
        %v6165 = vpow.pop %v6164
        %v6166 = vmul.f32 %v6155, 1.442695
        %v6167 = vpow.pop %v6166
        %v6168 = vmul.f32 %v6156, 1.442695
        %v6169 = vpow.pop %v6168
        %v6170 = vmul.f32 %v6157, 1.442695
        %v6171 = vpow.pop %v6170
        %v6172 = vmul.f32 %v6158, 1.442695
        %v6173 = vpow.pop %v6172
        %v6174 = vmul.f32 %v6159, 1.442695
        %v6175 = vpow.pop %v6174
        %v6176 = vsel %vm3068, %v6161, 0.0
        %6177 = vadd.xlane.f32.xlu0 %v6176
        %v6178 = vpop.xlane.xlu0 %6177
        %v6179 = vsel %vm3068, %v6163, 0.0
        %6180 = vadd.xlane.f32.xlu0 %v6179
        %v6181 = vpop.xlane.xlu0 %6180
        %v6182 = vsel %vm3068, %v6165, 0.0
        %6183 = vadd.xlane.f32.xlu0 %v6182
        %v6184 = vpop.xlane.xlu0 %6183
        %v6185 = vsel %vm3068, %v6167, 0.0
        %6186 = vadd.xlane.f32.xlu0 %v6185
        %v6187 = vpop.xlane.xlu0 %6186
        %v6188 = vsel %vm3068, %v6169, 0.0
        %6189 = vadd.xlane.f32.xlu0 %v6188
        %v6190 = vpop.xlane.xlu0 %6189
        %v6191 = vsel %vm3068, %v6171, 0.0
        %6192 = vadd.xlane.f32.xlu0 %v6191
        %v6193 = vpop.xlane.xlu0 %6192
        %v6194 = vsel %vm3068, %v6173, 0.0
        %6195 = vadd.xlane.f32.xlu0 %v6194
        %v6196 = vpop.xlane.xlu0 %6195
        %v6197 = vsel %vm3068, %v6175, 0.0
        %6198 = vadd.xlane.f32.xlu0 %v6197
        %v6199 = vpop.xlane.xlu0 %6198
        %v6200 = vrcp.pop %v6178
        %v6201 = vrcp.pop %v6181
        %v6202 = vrcp.pop %v6184
        %v6203 = vrcp.pop %v6187
        %v6204 = vrcp.pop %v6190
        %v6205 = vrcp.pop %v6193
        %v6206 = vrcp.pop %v6196
        %v6207 = vrcp.pop %v6199
        %v6208 = vmul.f32 %v6161, %v6200
        %v6209 = vmul.f32 %v6163, %v6201
        %v6210 = vmul.f32 %v6165, %v6202
        %v6211 = vmul.f32 %v6167, %v6203
        %v6212 = vmul.f32 %v6169, %v6204
        %v6213 = vmul.f32 %v6171, %v6205
        %v6214 = vmul.f32 %v6173, %v6206
        %v6215 = vmul.f32 %v6175, %v6207
        %v6216 = vpack.c.bf16 %v6208, %v6208
        %v6217 = vpack.c.bf16 %v6209, %v6209
        %v6218 = vpack.c.bf16 %v6210, %v6210
        %v6219 = vpack.c.bf16 %v6211, %v6211
        %v6220 = vpack.c.bf16 %v6212, %v6212
        %v6221 = vpack.c.bf16 %v6213, %v6213
        %v6222 = vpack.c.bf16 %v6214, %v6214
        %v6223 = vpack.c.bf16 %v6215, %v6215
        %v6224 = vpack.c.bf16 %v5375, %v5375
        %v6225 = vpack.c.bf16 %v5427, %v5427
        %v6226 = vpack.c.bf16 %v5479, %v5479
        %v6227 = vpack.c.bf16 %v5531, %v5531
        %v6228 = vpack.c.bf16 %v5583, %v5583
        %v6229 = vpack.c.bf16 %v5635, %v5635
        %v6230 = vpack.c.bf16 %v5687, %v5687
        %v6231 = vpack.c.bf16 %v5739, %v5739
        %v6233 = vsel %vm3068, %v6216, 0
        %v6236 = vsel %vm3176, %v6224, 0
        %6238 = vmatprep.subr.bf16.mxu0 0
        %6239 = vmatpush1.bf16.msra.mxu0 %v6236
        %6240 = vmatprep.subr.bf16.mxu0 0
        %6241 = vmatpush1.bf16.msra.mxu0 0
        %6242 = vmatprep.subr.bf16.mxu0 0
        %6243 = vmatpush1.bf16.msra.mxu0 0
        %6244 = vmatprep.subr.bf16.mxu0 0
        %6245 = vmatpush1.bf16.msra.mxu0 0
        %6246 = vmatprep.subr.bf16.mxu0 0
        %6247 = vmatpush1.bf16.msra.mxu0 0
        %6248 = vmatprep.subr.bf16.mxu0 0
        %6249 = vmatpush1.bf16.msra.mxu0 0
        %6250 = vmatprep.subr.bf16.mxu0 0
        %6251 = vmatpush1.bf16.msra.mxu0 0
        %6252 = vmatprep.subr.bf16.mxu0 0
        %6253 = vmatpush1.bf16.msra.mxu0 0
        %6254 = vmatprep.subr.bf16.mxu0 0
        %6255 = vmatpush1.bf16.msra.mxu0 0
        %6256 = vmatprep.subr.bf16.mxu0 0
        %6257 = vmatpush1.bf16.msra.mxu0 0
        %6258 = vmatprep.subr.bf16.mxu0 0
        %6259 = vmatpush1.bf16.msra.mxu0 0
        %6260 = vmatprep.subr.bf16.mxu0 0
        %6261 = vmatpush1.bf16.msra.mxu0 0
        %6262 = vmatprep.subr.bf16.mxu0 0
        %6263 = vmatpush1.bf16.msra.mxu0 0
        %6264 = vmatprep.subr.bf16.mxu0 0
        %6265 = vmatpush1.bf16.msra.mxu0 0
        %6266 = vmatprep.subr.bf16.mxu0 0
        %6267 = vmatpush1.bf16.msra.mxu0 0
        %6268 = vmatprep.subr.bf16.mxu0 0
        %6269 = vmatpush1.bf16.msra.mxu0 0
        %6270 = vmatprep.mubr.bf16.mxu0 0
        %6271 = vmatmul.mubr.bf16.gmra.mrb[0].mxu0 %v6233
        %v6272 = vpop.f32.mrb[0].mxu0
        %v6273 = vadd.f32 0.0, %v6272
        %v6274 = vpop.f32.mrb[0].mxu0
        %v6275 = vpop.f32.mrb[0].mxu0
        %v6276 = vpop.f32.mrb[0].mxu0
        %6277 = vdwg.mxu0
        %v6279 = vsel %vm3068, %v6217, 0
        %v6282 = vsel %vm3176, %v6225, 0
        %6284 = vmatprep.subr.bf16.mxu0 0
        %6285 = vmatpush1.bf16.msra.mxu0 %v6282
        %6286 = vmatprep.subr.bf16.mxu0 0
        %6287 = vmatpush1.bf16.msra.mxu0 0
        %6288 = vmatprep.subr.bf16.mxu0 0
        %6289 = vmatpush1.bf16.msra.mxu0 0
        %6290 = vmatprep.subr.bf16.mxu0 0
        %6291 = vmatpush1.bf16.msra.mxu0 0
        %6292 = vmatprep.subr.bf16.mxu0 0
        %6293 = vmatpush1.bf16.msra.mxu0 0
        %6294 = vmatprep.subr.bf16.mxu0 0
        %6295 = vmatpush1.bf16.msra.mxu0 0
        %6296 = vmatprep.subr.bf16.mxu0 0
        %6297 = vmatpush1.bf16.msra.mxu0 0
        %6298 = vmatprep.subr.bf16.mxu0 0
        %6299 = vmatpush1.bf16.msra.mxu0 0
        %6300 = vmatprep.subr.bf16.mxu0 0
        %6301 = vmatpush1.bf16.msra.mxu0 0
        %6302 = vmatprep.subr.bf16.mxu0 0
        %6303 = vmatpush1.bf16.msra.mxu0 0
        %6304 = vmatprep.subr.bf16.mxu0 0
        %6305 = vmatpush1.bf16.msra.mxu0 0
        %6306 = vmatprep.subr.bf16.mxu0 0
        %6307 = vmatpush1.bf16.msra.mxu0 0
        %6308 = vmatprep.subr.bf16.mxu0 0
        %6309 = vmatpush1.bf16.msra.mxu0 0
        %6310 = vmatprep.subr.bf16.mxu0 0
        %6311 = vmatpush1.bf16.msra.mxu0 0
        %6312 = vmatprep.subr.bf16.mxu0 0
        %6313 = vmatpush1.bf16.msra.mxu0 0
        %6314 = vmatprep.subr.bf16.mxu0 0
        %6315 = vmatpush1.bf16.msra.mxu0 0
        %6316 = vmatprep.mubr.bf16.mxu0 0
        %6317 = vmatmul.mubr.bf16.gmra.mrb[0].mxu0 %v6279
        %v6318 = vpop.f32.mrb[0].mxu0
        %v6319 = vadd.f32 0.0, %v6318
        %v6320 = vpop.f32.mrb[0].mxu0
        %v6321 = vpop.f32.mrb[0].mxu0
        %v6322 = vpop.f32.mrb[0].mxu0
        %6323 = vdwg.mxu0
        %v6325 = vsel %vm3068, %v6218, 0
        %v6328 = vsel %vm3176, %v6226, 0
        %6330 = vmatprep.subr.bf16.mxu0 0
        %6331 = vmatpush1.bf16.msra.mxu0 %v6328
        %6332 = vmatprep.subr.bf16.mxu0 0
        %6333 = vmatpush1.bf16.msra.mxu0 0
        %6334 = vmatprep.subr.bf16.mxu0 0
        %6335 = vmatpush1.bf16.msra.mxu0 0
        %6336 = vmatprep.subr.bf16.mxu0 0
        %6337 = vmatpush1.bf16.msra.mxu0 0
        %6338 = vmatprep.subr.bf16.mxu0 0
        %6339 = vmatpush1.bf16.msra.mxu0 0
        %6340 = vmatprep.subr.bf16.mxu0 0
        %6341 = vmatpush1.bf16.msra.mxu0 0
        %6342 = vmatprep.subr.bf16.mxu0 0
        %6343 = vmatpush1.bf16.msra.mxu0 0
        %6344 = vmatprep.subr.bf16.mxu0 0
        %6345 = vmatpush1.bf16.msra.mxu0 0
        %6346 = vmatprep.subr.bf16.mxu0 0
        %6347 = vmatpush1.bf16.msra.mxu0 0
        %6348 = vmatprep.subr.bf16.mxu0 0
        %6349 = vmatpush1.bf16.msra.mxu0 0
        %6350 = vmatprep.subr.bf16.mxu0 0
        %6351 = vmatpush1.bf16.msra.mxu0 0
        %6352 = vmatprep.subr.bf16.mxu0 0
        %6353 = vmatpush1.bf16.msra.mxu0 0
        %6354 = vmatprep.subr.bf16.mxu0 0
        %6355 = vmatpush1.bf16.msra.mxu0 0
        %6356 = vmatprep.subr.bf16.mxu0 0
        %6357 = vmatpush1.bf16.msra.mxu0 0
        %6358 = vmatprep.subr.bf16.mxu0 0
        %6359 = vmatpush1.bf16.msra.mxu0 0
        %6360 = vmatprep.subr.bf16.mxu0 0
        %6361 = vmatpush1.bf16.msra.mxu0 0
        %6362 = vmatprep.mubr.bf16.mxu0 0
        %6363 = vmatmul.mubr.bf16.gmra.mrb[0].mxu0 %v6325
        %v6364 = vpop.f32.mrb[0].mxu0
        %v6365 = vadd.f32 0.0, %v6364
        %v6366 = vpop.f32.mrb[0].mxu0
        %v6367 = vpop.f32.mrb[0].mxu0
        %v6368 = vpop.f32.mrb[0].mxu0
        %6369 = vdwg.mxu0
        %v6371 = vsel %vm3068, %v6219, 0
        %v6374 = vsel %vm3176, %v6227, 0
        %6376 = vmatprep.subr.bf16.mxu0 0
        %6377 = vmatpush1.bf16.msra.mxu0 %v6374
        %6378 = vmatprep.subr.bf16.mxu0 0
        %6379 = vmatpush1.bf16.msra.mxu0 0
        %6380 = vmatprep.subr.bf16.mxu0 0
        %6381 = vmatpush1.bf16.msra.mxu0 0
        %6382 = vmatprep.subr.bf16.mxu0 0
        %6383 = vmatpush1.bf16.msra.mxu0 0
        %6384 = vmatprep.subr.bf16.mxu0 0
        %6385 = vmatpush1.bf16.msra.mxu0 0
        %6386 = vmatprep.subr.bf16.mxu0 0
        %6387 = vmatpush1.bf16.msra.mxu0 0
        %6388 = vmatprep.subr.bf16.mxu0 0
        %6389 = vmatpush1.bf16.msra.mxu0 0
        %6390 = vmatprep.subr.bf16.mxu0 0
        %6391 = vmatpush1.bf16.msra.mxu0 0
        %6392 = vmatprep.subr.bf16.mxu0 0
        %6393 = vmatpush1.bf16.msra.mxu0 0
        %6394 = vmatprep.subr.bf16.mxu0 0
        %6395 = vmatpush1.bf16.msra.mxu0 0
        %6396 = vmatprep.subr.bf16.mxu0 0
        %6397 = vmatpush1.bf16.msra.mxu0 0
        %6398 = vmatprep.subr.bf16.mxu0 0
        %6399 = vmatpush1.bf16.msra.mxu0 0
        %6400 = vmatprep.subr.bf16.mxu0 0
        %6401 = vmatpush1.bf16.msra.mxu0 0
        %6402 = vmatprep.subr.bf16.mxu0 0
        %6403 = vmatpush1.bf16.msra.mxu0 0
        %6404 = vmatprep.subr.bf16.mxu0 0
        %6405 = vmatpush1.bf16.msra.mxu0 0
        %6406 = vmatprep.subr.bf16.mxu0 0
        %6407 = vmatpush1.bf16.msra.mxu0 0
        %6408 = vmatprep.mubr.bf16.mxu0 0
        %6409 = vmatmul.mubr.bf16.gmra.mrb[0].mxu0 %v6371
        %v6410 = vpop.f32.mrb[0].mxu0
        %v6411 = vadd.f32 0.0, %v6410
        %v6412 = vpop.f32.mrb[0].mxu0
        %v6413 = vpop.f32.mrb[0].mxu0
        %v6414 = vpop.f32.mrb[0].mxu0
        %6415 = vdwg.mxu0
        %v6417 = vsel %vm3068, %v6220, 0
        %v6420 = vsel %vm3176, %v6228, 0
        %6422 = vmatprep.subr.bf16.mxu0 0
        %6423 = vmatpush1.bf16.msra.mxu0 %v6420
        %6424 = vmatprep.subr.bf16.mxu0 0
        %6425 = vmatpush1.bf16.msra.mxu0 0
        %6426 = vmatprep.subr.bf16.mxu0 0
        %6427 = vmatpush1.bf16.msra.mxu0 0
        %6428 = vmatprep.subr.bf16.mxu0 0
        %6429 = vmatpush1.bf16.msra.mxu0 0
        %6430 = vmatprep.subr.bf16.mxu0 0
        %6431 = vmatpush1.bf16.msra.mxu0 0
        %6432 = vmatprep.subr.bf16.mxu0 0
        %6433 = vmatpush1.bf16.msra.mxu0 0
        %6434 = vmatprep.subr.bf16.mxu0 0
        %6435 = vmatpush1.bf16.msra.mxu0 0
        %6436 = vmatprep.subr.bf16.mxu0 0
        %6437 = vmatpush1.bf16.msra.mxu0 0
        %6438 = vmatprep.subr.bf16.mxu0 0
        %6439 = vmatpush1.bf16.msra.mxu0 0
        %6440 = vmatprep.subr.bf16.mxu0 0
        %6441 = vmatpush1.bf16.msra.mxu0 0
        %6442 = vmatprep.subr.bf16.mxu0 0
        %6443 = vmatpush1.bf16.msra.mxu0 0
        %6444 = vmatprep.subr.bf16.mxu0 0
        %6445 = vmatpush1.bf16.msra.mxu0 0
        %6446 = vmatprep.subr.bf16.mxu0 0
        %6447 = vmatpush1.bf16.msra.mxu0 0
        %6448 = vmatprep.subr.bf16.mxu0 0
        %6449 = vmatpush1.bf16.msra.mxu0 0
        %6450 = vmatprep.subr.bf16.mxu0 0
        %6451 = vmatpush1.bf16.msra.mxu0 0
        %6452 = vmatprep.subr.bf16.mxu0 0
        %6453 = vmatpush1.bf16.msra.mxu0 0
        %6454 = vmatprep.mubr.bf16.mxu0 0
        %6455 = vmatmul.mubr.bf16.gmra.mrb[0].mxu0 %v6417
        %v6456 = vpop.f32.mrb[0].mxu0
        %v6457 = vadd.f32 0.0, %v6456
        %v6458 = vpop.f32.mrb[0].mxu0
        %v6459 = vpop.f32.mrb[0].mxu0
        %v6460 = vpop.f32.mrb[0].mxu0
        %6461 = vdwg.mxu0
        %v6463 = vsel %vm3068, %v6221, 0
        %v6466 = vsel %vm3176, %v6229, 0
        %6468 = vmatprep.subr.bf16.mxu0 0
        %6469 = vmatpush1.bf16.msra.mxu0 %v6466
        %6470 = vmatprep.subr.bf16.mxu0 0
        %6471 = vmatpush1.bf16.msra.mxu0 0
        %6472 = vmatprep.subr.bf16.mxu0 0
        %6473 = vmatpush1.bf16.msra.mxu0 0
        %6474 = vmatprep.subr.bf16.mxu0 0
        %6475 = vmatpush1.bf16.msra.mxu0 0
        %6476 = vmatprep.subr.bf16.mxu0 0
        %6477 = vmatpush1.bf16.msra.mxu0 0
        %6478 = vmatprep.subr.bf16.mxu0 0
        %6479 = vmatpush1.bf16.msra.mxu0 0
        %6480 = vmatprep.subr.bf16.mxu0 0
        %6481 = vmatpush1.bf16.msra.mxu0 0
        %6482 = vmatprep.subr.bf16.mxu0 0
        %6483 = vmatpush1.bf16.msra.mxu0 0
        %6484 = vmatprep.subr.bf16.mxu0 0
        %6485 = vmatpush1.bf16.msra.mxu0 0
        %6486 = vmatprep.subr.bf16.mxu0 0
        %6487 = vmatpush1.bf16.msra.mxu0 0
        %6488 = vmatprep.subr.bf16.mxu0 0
        %6489 = vmatpush1.bf16.msra.mxu0 0
        %6490 = vmatprep.subr.bf16.mxu0 0
        %6491 = vmatpush1.bf16.msra.mxu0 0
        %6492 = vmatprep.subr.bf16.mxu0 0
        %6493 = vmatpush1.bf16.msra.mxu0 0
        %6494 = vmatprep.subr.bf16.mxu0 0
        %6495 = vmatpush1.bf16.msra.mxu0 0
        %6496 = vmatprep.subr.bf16.mxu0 0
        %6497 = vmatpush1.bf16.msra.mxu0 0
        %6498 = vmatprep.subr.bf16.mxu0 0
        %6499 = vmatpush1.bf16.msra.mxu0 0
        %6500 = vmatprep.mubr.bf16.mxu0 0
        %6501 = vmatmul.mubr.bf16.gmra.mrb[0].mxu0 %v6463
        %v6502 = vpop.f32.mrb[0].mxu0
        %v6503 = vadd.f32 0.0, %v6502
        %v6504 = vpop.f32.mrb[0].mxu0
        %v6505 = vpop.f32.mrb[0].mxu0
        %v6506 = vpop.f32.mrb[0].mxu0
        %6507 = vdwg.mxu0
        %v6509 = vsel %vm3068, %v6222, 0
        %v6512 = vsel %vm3176, %v6230, 0
        %6514 = vmatprep.subr.bf16.mxu0 0
        %6515 = vmatpush1.bf16.msra.mxu0 %v6512
        %6516 = vmatprep.subr.bf16.mxu0 0
        %6517 = vmatpush1.bf16.msra.mxu0 0
        %6518 = vmatprep.subr.bf16.mxu0 0
        %6519 = vmatpush1.bf16.msra.mxu0 0
        %6520 = vmatprep.subr.bf16.mxu0 0
        %6521 = vmatpush1.bf16.msra.mxu0 0
        %6522 = vmatprep.subr.bf16.mxu0 0
        %6523 = vmatpush1.bf16.msra.mxu0 0
        %6524 = vmatprep.subr.bf16.mxu0 0
        %6525 = vmatpush1.bf16.msra.mxu0 0
        %6526 = vmatprep.subr.bf16.mxu0 0
        %6527 = vmatpush1.bf16.msra.mxu0 0
        %6528 = vmatprep.subr.bf16.mxu0 0
        %6529 = vmatpush1.bf16.msra.mxu0 0
        %6530 = vmatprep.subr.bf16.mxu0 0
        %6531 = vmatpush1.bf16.msra.mxu0 0
        %6532 = vmatprep.subr.bf16.mxu0 0
        %6533 = vmatpush1.bf16.msra.mxu0 0
        %6534 = vmatprep.subr.bf16.mxu0 0
        %6535 = vmatpush1.bf16.msra.mxu0 0
        %6536 = vmatprep.subr.bf16.mxu0 0
        %6537 = vmatpush1.bf16.msra.mxu0 0
        %6538 = vmatprep.subr.bf16.mxu0 0
        %6539 = vmatpush1.bf16.msra.mxu0 0
        %6540 = vmatprep.subr.bf16.mxu0 0
        %6541 = vmatpush1.bf16.msra.mxu0 0
        %6542 = vmatprep.subr.bf16.mxu0 0
        %6543 = vmatpush1.bf16.msra.mxu0 0
        %6544 = vmatprep.subr.bf16.mxu0 0
        %6545 = vmatpush1.bf16.msra.mxu0 0
        %6546 = vmatprep.mubr.bf16.mxu0 0
        %6547 = vmatmul.mubr.bf16.gmra.mrb[0].mxu0 %v6509
        %v6548 = vpop.f32.mrb[0].mxu0
        %v6549 = vadd.f32 0.0, %v6548
        %v6550 = vpop.f32.mrb[0].mxu0
        %v6551 = vpop.f32.mrb[0].mxu0
        %v6552 = vpop.f32.mrb[0].mxu0
        %6553 = vdwg.mxu0
        %v6555 = vsel %vm3068, %v6223, 0
        %v6558 = vsel %vm3176, %v6231, 0
        %6560 = vmatprep.subr.bf16.mxu0 0
        %6561 = vmatpush1.bf16.msra.mxu0 %v6558
        %6562 = vmatprep.subr.bf16.mxu0 0
        %6563 = vmatpush1.bf16.msra.mxu0 0
        %6564 = vmatprep.subr.bf16.mxu0 0
        %6565 = vmatpush1.bf16.msra.mxu0 0
        %6566 = vmatprep.subr.bf16.mxu0 0
        %6567 = vmatpush1.bf16.msra.mxu0 0
        %6568 = vmatprep.subr.bf16.mxu0 0
        %6569 = vmatpush1.bf16.msra.mxu0 0
        %6570 = vmatprep.subr.bf16.mxu0 0
        %6571 = vmatpush1.bf16.msra.mxu0 0
        %6572 = vmatprep.subr.bf16.mxu0 0
        %6573 = vmatpush1.bf16.msra.mxu0 0
        %6574 = vmatprep.subr.bf16.mxu0 0
        %6575 = vmatpush1.bf16.msra.mxu0 0
        %6576 = vmatprep.subr.bf16.mxu0 0
        %6577 = vmatpush1.bf16.msra.mxu0 0
        %6578 = vmatprep.subr.bf16.mxu0 0
        %6579 = vmatpush1.bf16.msra.mxu0 0
        %6580 = vmatprep.subr.bf16.mxu0 0
        %6581 = vmatpush1.bf16.msra.mxu0 0
        %6582 = vmatprep.subr.bf16.mxu0 0
        %6583 = vmatpush1.bf16.msra.mxu0 0
        %6584 = vmatprep.subr.bf16.mxu0 0
        %6585 = vmatpush1.bf16.msra.mxu0 0
        %6586 = vmatprep.subr.bf16.mxu0 0
        %6587 = vmatpush1.bf16.msra.mxu0 0
        %6588 = vmatprep.subr.bf16.mxu0 0
        %6589 = vmatpush1.bf16.msra.mxu0 0
        %6590 = vmatprep.subr.bf16.mxu0 0
        %6591 = vmatpush1.bf16.msra.mxu0 0
        %6592 = vmatprep.mubr.bf16.mxu0 0
        %6593 = vmatmul.mubr.bf16.gmra.mrb[0].mxu0 %v6555
        %v6594 = vpop.f32.mrb[0].mxu0
        %v6595 = vadd.f32 0.0, %v6594
        %v6596 = vpop.f32.mrb[0].mxu0
        %v6597 = vpop.f32.mrb[0].mxu0
        %v6598 = vpop.f32.mrb[0].mxu0
        %6599 = vdwg.mxu0
        %v6600 = vpack.c.bf16 %v6273, %v6273
        %v6601 = vpack.c.bf16 %v6319, %v6319
        %v6602 = vpack.c.bf16 %v6365, %v6365
        %v6603 = vpack.c.bf16 %v6411, %v6411
        %v6604 = vpack.c.bf16 %v6457, %v6457
        %v6605 = vpack.c.bf16 %v6503, %v6503
        %v6606 = vpack.c.bf16 %v6549, %v6549
        %v6607 = vpack.c.bf16 %v6595, %v6595
        %s6608 = scalar_lea.vmem [#allocation17], 16
        %v6609 = vld [vmem:[%s6608] sm:$0x3]
        %v6610 = vld [vmem:[%s6608 + $0x2] sm:$0x3]
        %v6611 = vld [vmem:[%s6608 + $0x4] sm:$0x3]
        %v6612 = vld [vmem:[%s6608 + $0x6] sm:$0x3]
        %v6613 = vld [vmem:[%s6608 + $0x8] sm:$0x3]
        %v6614 = vld [vmem:[%s6608 + $0xa] sm:$0x3]
        %v6615 = vld [vmem:[%s6608 + $0xc] sm:$0x3]
        %v6616 = vld [vmem:[%s6608 + $0xe] sm:$0x3]
        %v6618 = vsel %vm1111, %v6600, 0
        %v6621 = vsel %vm1115, %v6609, 0
        %6623 = vmatprep.subr.bf16.mxu0 0
        %6624 = vmatpush1.bf16.msra.mxu0 %v6621
        %6625 = vmatprep.subr.bf16.mxu0 0
        %6626 = vmatpush1.bf16.msra.mxu0 0
        %6627 = vmatprep.subr.bf16.mxu0 0
        %6628 = vmatpush1.bf16.msra.mxu0 0
        %6629 = vmatprep.subr.bf16.mxu0 0
        %6630 = vmatpush1.bf16.msra.mxu0 0
        %6631 = vmatprep.subr.bf16.mxu0 0
        %6632 = vmatpush1.bf16.msra.mxu0 0
        %6633 = vmatprep.subr.bf16.mxu0 0
        %6634 = vmatpush1.bf16.msra.mxu0 0
        %6635 = vmatprep.subr.bf16.mxu0 0
        %6636 = vmatpush1.bf16.msra.mxu0 0
        %6637 = vmatprep.subr.bf16.mxu0 0
        %6638 = vmatpush1.bf16.msra.mxu0 0
        %6639 = vmatprep.subr.bf16.mxu0 0
        %6640 = vmatpush1.bf16.msra.mxu0 0
        %6641 = vmatprep.subr.bf16.mxu0 0
        %6642 = vmatpush1.bf16.msra.mxu0 0
        %6643 = vmatprep.subr.bf16.mxu0 0
        %6644 = vmatpush1.bf16.msra.mxu0 0
        %6645 = vmatprep.subr.bf16.mxu0 0
        %6646 = vmatpush1.bf16.msra.mxu0 0
        %6647 = vmatprep.subr.bf16.mxu0 0
        %6648 = vmatpush1.bf16.msra.mxu0 0
        %6649 = vmatprep.subr.bf16.mxu0 0
        %6650 = vmatpush1.bf16.msra.mxu0 0
        %6651 = vmatprep.subr.bf16.mxu0 0
        %6652 = vmatpush1.bf16.msra.mxu0 0
        %6653 = vmatprep.subr.bf16.mxu0 0
        %6654 = vmatpush1.bf16.msra.mxu0 0
        %6655 = vmatprep.mubr.bf16.mxu0 0
        %6656 = vmatmul.mubr.bf16.gmra.mrb[0].mxu0 %v6618
        %v6657 = vpop.f32.mrb[0].mxu0
        %v6658 = vadd.f32 0.0, %v6657
        %v6659 = vpop.f32.mrb[0].mxu0
        %v6660 = vpop.f32.mrb[0].mxu0
        %v6661 = vpop.f32.mrb[0].mxu0
        %6662 = vdwg.mxu0
        %v6664 = vsel %vm1111, %v6601, 0
        %v6667 = vsel %vm1115, %v6610, 0
        %6669 = vmatprep.subr.bf16.mxu0 0
        %6670 = vmatpush1.bf16.msra.mxu0 %v6667
        %6671 = vmatprep.subr.bf16.mxu0 0
        %6672 = vmatpush1.bf16.msra.mxu0 0
        %6673 = vmatprep.subr.bf16.mxu0 0
        %6674 = vmatpush1.bf16.msra.mxu0 0
        %6675 = vmatprep.subr.bf16.mxu0 0
        %6676 = vmatpush1.bf16.msra.mxu0 0
        %6677 = vmatprep.subr.bf16.mxu0 0
        %6678 = vmatpush1.bf16.msra.mxu0 0
        %6679 = vmatprep.subr.bf16.mxu0 0
        %6680 = vmatpush1.bf16.msra.mxu0 0
        %6681 = vmatprep.subr.bf16.mxu0 0
        %6682 = vmatpush1.bf16.msra.mxu0 0
        %6683 = vmatprep.subr.bf16.mxu0 0
        %6684 = vmatpush1.bf16.msra.mxu0 0
        %6685 = vmatprep.subr.bf16.mxu0 0
        %6686 = vmatpush1.bf16.msra.mxu0 0
        %6687 = vmatprep.subr.bf16.mxu0 0
        %6688 = vmatpush1.bf16.msra.mxu0 0
        %6689 = vmatprep.subr.bf16.mxu0 0
        %6690 = vmatpush1.bf16.msra.mxu0 0
        %6691 = vmatprep.subr.bf16.mxu0 0
        %6692 = vmatpush1.bf16.msra.mxu0 0
        %6693 = vmatprep.subr.bf16.mxu0 0
        %6694 = vmatpush1.bf16.msra.mxu0 0
        %6695 = vmatprep.subr.bf16.mxu0 0
        %6696 = vmatpush1.bf16.msra.mxu0 0
        %6697 = vmatprep.subr.bf16.mxu0 0
        %6698 = vmatpush1.bf16.msra.mxu0 0
        %6699 = vmatprep.subr.bf16.mxu0 0
        %6700 = vmatpush1.bf16.msra.mxu0 0
        %6701 = vmatprep.mubr.bf16.mxu0 0
        %6702 = vmatmul.mubr.bf16.gmra.mrb[0].mxu0 %v6664
        %v6703 = vpop.f32.mrb[0].mxu0
        %v6704 = vadd.f32 0.0, %v6703
        %v6705 = vpop.f32.mrb[0].mxu0
        %v6706 = vpop.f32.mrb[0].mxu0
        %v6707 = vpop.f32.mrb[0].mxu0
        %6708 = vdwg.mxu0
        %v6710 = vsel %vm1111, %v6602, 0
        %v6713 = vsel %vm1115, %v6611, 0
        %6715 = vmatprep.subr.bf16.mxu0 0
        %6716 = vmatpush1.bf16.msra.mxu0 %v6713
        %6717 = vmatprep.subr.bf16.mxu0 0
        %6718 = vmatpush1.bf16.msra.mxu0 0
        %6719 = vmatprep.subr.bf16.mxu0 0
        %6720 = vmatpush1.bf16.msra.mxu0 0
        %6721 = vmatprep.subr.bf16.mxu0 0
        %6722 = vmatpush1.bf16.msra.mxu0 0
        %6723 = vmatprep.subr.bf16.mxu0 0
        %6724 = vmatpush1.bf16.msra.mxu0 0
        %6725 = vmatprep.subr.bf16.mxu0 0
        %6726 = vmatpush1.bf16.msra.mxu0 0
        %6727 = vmatprep.subr.bf16.mxu0 0
        %6728 = vmatpush1.bf16.msra.mxu0 0
        %6729 = vmatprep.subr.bf16.mxu0 0
        %6730 = vmatpush1.bf16.msra.mxu0 0
        %6731 = vmatprep.subr.bf16.mxu0 0
        %6732 = vmatpush1.bf16.msra.mxu0 0
        %6733 = vmatprep.subr.bf16.mxu0 0
        %6734 = vmatpush1.bf16.msra.mxu0 0
        %6735 = vmatprep.subr.bf16.mxu0 0
        %6736 = vmatpush1.bf16.msra.mxu0 0
        %6737 = vmatprep.subr.bf16.mxu0 0
        %6738 = vmatpush1.bf16.msra.mxu0 0
        %6739 = vmatprep.subr.bf16.mxu0 0
        %6740 = vmatpush1.bf16.msra.mxu0 0
        %6741 = vmatprep.subr.bf16.mxu0 0
        %6742 = vmatpush1.bf16.msra.mxu0 0
        %6743 = vmatprep.subr.bf16.mxu0 0
        %6744 = vmatpush1.bf16.msra.mxu0 0
        %6745 = vmatprep.subr.bf16.mxu0 0
        %6746 = vmatpush1.bf16.msra.mxu0 0
        %6747 = vmatprep.mubr.bf16.mxu0 0
        %6748 = vmatmul.mubr.bf16.gmra.mrb[0].mxu0 %v6710
        %v6749 = vpop.f32.mrb[0].mxu0
        %v6750 = vadd.f32 0.0, %v6749
        %v6751 = vpop.f32.mrb[0].mxu0
        %v6752 = vpop.f32.mrb[0].mxu0
        %v6753 = vpop.f32.mrb[0].mxu0
        %6754 = vdwg.mxu0
        %v6756 = vsel %vm1111, %v6603, 0
        %v6759 = vsel %vm1115, %v6612, 0
        %6761 = vmatprep.subr.bf16.mxu0 0
        %6762 = vmatpush1.bf16.msra.mxu0 %v6759
        %6763 = vmatprep.subr.bf16.mxu0 0
        %6764 = vmatpush1.bf16.msra.mxu0 0
        %6765 = vmatprep.subr.bf16.mxu0 0
        %6766 = vmatpush1.bf16.msra.mxu0 0
        %6767 = vmatprep.subr.bf16.mxu0 0
        %6768 = vmatpush1.bf16.msra.mxu0 0
        %6769 = vmatprep.subr.bf16.mxu0 0
        %6770 = vmatpush1.bf16.msra.mxu0 0
        %6771 = vmatprep.subr.bf16.mxu0 0
        %6772 = vmatpush1.bf16.msra.mxu0 0
        %6773 = vmatprep.subr.bf16.mxu0 0
        %6774 = vmatpush1.bf16.msra.mxu0 0
        %6775 = vmatprep.subr.bf16.mxu0 0
        %6776 = vmatpush1.bf16.msra.mxu0 0
        %6777 = vmatprep.subr.bf16.mxu0 0
        %6778 = vmatpush1.bf16.msra.mxu0 0
        %6779 = vmatprep.subr.bf16.mxu0 0
        %6780 = vmatpush1.bf16.msra.mxu0 0
        %6781 = vmatprep.subr.bf16.mxu0 0
        %6782 = vmatpush1.bf16.msra.mxu0 0
        %6783 = vmatprep.subr.bf16.mxu0 0
        %6784 = vmatpush1.bf16.msra.mxu0 0
        %6785 = vmatprep.subr.bf16.mxu0 0
        %6786 = vmatpush1.bf16.msra.mxu0 0
        %6787 = vmatprep.subr.bf16.mxu0 0
        %6788 = vmatpush1.bf16.msra.mxu0 0
        %6789 = vmatprep.subr.bf16.mxu0 0
        %6790 = vmatpush1.bf16.msra.mxu0 0
        %6791 = vmatprep.subr.bf16.mxu0 0
        %6792 = vmatpush1.bf16.msra.mxu0 0
        %6793 = vmatprep.mubr.bf16.mxu0 0
        %6794 = vmatmul.mubr.bf16.gmra.mrb[0].mxu0 %v6756
        %v6795 = vpop.f32.mrb[0].mxu0
        %v6796 = vadd.f32 0.0, %v6795
        %v6797 = vpop.f32.mrb[0].mxu0
        %v6798 = vpop.f32.mrb[0].mxu0
        %v6799 = vpop.f32.mrb[0].mxu0
        %6800 = vdwg.mxu0
        %v6802 = vsel %vm1111, %v6604, 0
        %v6805 = vsel %vm1115, %v6613, 0
        %6807 = vmatprep.subr.bf16.mxu0 0
        %6808 = vmatpush1.bf16.msra.mxu0 %v6805
        %6809 = vmatprep.subr.bf16.mxu0 0
        %6810 = vmatpush1.bf16.msra.mxu0 0
        %6811 = vmatprep.subr.bf16.mxu0 0
        %6812 = vmatpush1.bf16.msra.mxu0 0
        %6813 = vmatprep.subr.bf16.mxu0 0
        %6814 = vmatpush1.bf16.msra.mxu0 0
        %6815 = vmatprep.subr.bf16.mxu0 0
        %6816 = vmatpush1.bf16.msra.mxu0 0
        %6817 = vmatprep.subr.bf16.mxu0 0
        %6818 = vmatpush1.bf16.msra.mxu0 0
        %6819 = vmatprep.subr.bf16.mxu0 0
        %6820 = vmatpush1.bf16.msra.mxu0 0
        %6821 = vmatprep.subr.bf16.mxu0 0
        %6822 = vmatpush1.bf16.msra.mxu0 0
        %6823 = vmatprep.subr.bf16.mxu0 0
        %6824 = vmatpush1.bf16.msra.mxu0 0
        %6825 = vmatprep.subr.bf16.mxu0 0
        %6826 = vmatpush1.bf16.msra.mxu0 0
        %6827 = vmatprep.subr.bf16.mxu0 0
        %6828 = vmatpush1.bf16.msra.mxu0 0
        %6829 = vmatprep.subr.bf16.mxu0 0
        %6830 = vmatpush1.bf16.msra.mxu0 0
        %6831 = vmatprep.subr.bf16.mxu0 0
        %6832 = vmatpush1.bf16.msra.mxu0 0
        %6833 = vmatprep.subr.bf16.mxu0 0
        %6834 = vmatpush1.bf16.msra.mxu0 0
        %6835 = vmatprep.subr.bf16.mxu0 0
        %6836 = vmatpush1.bf16.msra.mxu0 0
        %6837 = vmatprep.subr.bf16.mxu0 0
        %6838 = vmatpush1.bf16.msra.mxu0 0
        %6839 = vmatprep.mubr.bf16.mxu0 0
        %6840 = vmatmul.mubr.bf16.gmra.mrb[0].mxu0 %v6802
        %v6841 = vpop.f32.mrb[0].mxu0
        %v6842 = vadd.f32 0.0, %v6841
        %v6843 = vpop.f32.mrb[0].mxu0
        %v6844 = vpop.f32.mrb[0].mxu0
        %v6845 = vpop.f32.mrb[0].mxu0
        %6846 = vdwg.mxu0
        %v6848 = vsel %vm1111, %v6605, 0
        %v6851 = vsel %vm1115, %v6614, 0
        %6853 = vmatprep.subr.bf16.mxu0 0
        %6854 = vmatpush1.bf16.msra.mxu0 %v6851
        %6855 = vmatprep.subr.bf16.mxu0 0
        %6856 = vmatpush1.bf16.msra.mxu0 0
        %6857 = vmatprep.subr.bf16.mxu0 0
        %6858 = vmatpush1.bf16.msra.mxu0 0
        %6859 = vmatprep.subr.bf16.mxu0 0
        %6860 = vmatpush1.bf16.msra.mxu0 0
        %6861 = vmatprep.subr.bf16.mxu0 0
        %6862 = vmatpush1.bf16.msra.mxu0 0
        %6863 = vmatprep.subr.bf16.mxu0 0
        %6864 = vmatpush1.bf16.msra.mxu0 0
        %6865 = vmatprep.subr.bf16.mxu0 0
        %6866 = vmatpush1.bf16.msra.mxu0 0
        %6867 = vmatprep.subr.bf16.mxu0 0
        %6868 = vmatpush1.bf16.msra.mxu0 0
        %6869 = vmatprep.subr.bf16.mxu0 0
        %6870 = vmatpush1.bf16.msra.mxu0 0
        %6871 = vmatprep.subr.bf16.mxu0 0
        %6872 = vmatpush1.bf16.msra.mxu0 0
        %6873 = vmatprep.subr.bf16.mxu0 0
        %6874 = vmatpush1.bf16.msra.mxu0 0
        %6875 = vmatprep.subr.bf16.mxu0 0
        %6876 = vmatpush1.bf16.msra.mxu0 0
        %6877 = vmatprep.subr.bf16.mxu0 0
        %6878 = vmatpush1.bf16.msra.mxu0 0
        %6879 = vmatprep.subr.bf16.mxu0 0
        %6880 = vmatpush1.bf16.msra.mxu0 0
        %6881 = vmatprep.subr.bf16.mxu0 0
        %6882 = vmatpush1.bf16.msra.mxu0 0
        %6883 = vmatprep.subr.bf16.mxu0 0
        %6884 = vmatpush1.bf16.msra.mxu0 0
        %6885 = vmatprep.mubr.bf16.mxu0 0
        %6886 = vmatmul.mubr.bf16.gmra.mrb[0].mxu0 %v6848
        %v6887 = vpop.f32.mrb[0].mxu0
        %v6888 = vadd.f32 0.0, %v6887
        %v6889 = vpop.f32.mrb[0].mxu0
        %v6890 = vpop.f32.mrb[0].mxu0
        %v6891 = vpop.f32.mrb[0].mxu0
        %6892 = vdwg.mxu0
        %v6894 = vsel %vm1111, %v6606, 0
        %v6897 = vsel %vm1115, %v6615, 0
        %6899 = vmatprep.subr.bf16.mxu0 0
        %6900 = vmatpush1.bf16.msra.mxu0 %v6897
        %6901 = vmatprep.subr.bf16.mxu0 0
        %6902 = vmatpush1.bf16.msra.mxu0 0
        %6903 = vmatprep.subr.bf16.mxu0 0
        %6904 = vmatpush1.bf16.msra.mxu0 0
        %6905 = vmatprep.subr.bf16.mxu0 0
        %6906 = vmatpush1.bf16.msra.mxu0 0
        %6907 = vmatprep.subr.bf16.mxu0 0
        %6908 = vmatpush1.bf16.msra.mxu0 0
        %6909 = vmatprep.subr.bf16.mxu0 0
        %6910 = vmatpush1.bf16.msra.mxu0 0
        %6911 = vmatprep.subr.bf16.mxu0 0
        %6912 = vmatpush1.bf16.msra.mxu0 0
        %6913 = vmatprep.subr.bf16.mxu0 0
        %6914 = vmatpush1.bf16.msra.mxu0 0
        %6915 = vmatprep.subr.bf16.mxu0 0
        %6916 = vmatpush1.bf16.msra.mxu0 0
        %6917 = vmatprep.subr.bf16.mxu0 0
        %6918 = vmatpush1.bf16.msra.mxu0 0
        %6919 = vmatprep.subr.bf16.mxu0 0
        %6920 = vmatpush1.bf16.msra.mxu0 0
        %6921 = vmatprep.subr.bf16.mxu0 0
        %6922 = vmatpush1.bf16.msra.mxu0 0
        %6923 = vmatprep.subr.bf16.mxu0 0
        %6924 = vmatpush1.bf16.msra.mxu0 0
        %6925 = vmatprep.subr.bf16.mxu0 0
        %6926 = vmatpush1.bf16.msra.mxu0 0
        %6927 = vmatprep.subr.bf16.mxu0 0
        %6928 = vmatpush1.bf16.msra.mxu0 0
        %6929 = vmatprep.subr.bf16.mxu0 0
        %6930 = vmatpush1.bf16.msra.mxu0 0
        %6931 = vmatprep.mubr.bf16.mxu0 0
        %6932 = vmatmul.mubr.bf16.gmra.mrb[0].mxu0 %v6894
        %v6933 = vpop.f32.mrb[0].mxu0
        %v6934 = vadd.f32 0.0, %v6933
        %v6935 = vpop.f32.mrb[0].mxu0
        %v6936 = vpop.f32.mrb[0].mxu0
        %v6937 = vpop.f32.mrb[0].mxu0
        %6938 = vdwg.mxu0
        %v6940 = vsel %vm1111, %v6607, 0
        %v6943 = vsel %vm1115, %v6616, 0
        %6945 = vmatprep.subr.bf16.mxu0 0
        %6946 = vmatpush1.bf16.msra.mxu0 %v6943
        %6947 = vmatprep.subr.bf16.mxu0 0
        %6948 = vmatpush1.bf16.msra.mxu0 0
        %6949 = vmatprep.subr.bf16.mxu0 0
        %6950 = vmatpush1.bf16.msra.mxu0 0
        %6951 = vmatprep.subr.bf16.mxu0 0
        %6952 = vmatpush1.bf16.msra.mxu0 0
        %6953 = vmatprep.subr.bf16.mxu0 0
        %6954 = vmatpush1.bf16.msra.mxu0 0
        %6955 = vmatprep.subr.bf16.mxu0 0
        %6956 = vmatpush1.bf16.msra.mxu0 0
        %6957 = vmatprep.subr.bf16.mxu0 0
        %6958 = vmatpush1.bf16.msra.mxu0 0
        %6959 = vmatprep.subr.bf16.mxu0 0
        %6960 = vmatpush1.bf16.msra.mxu0 0
        %6961 = vmatprep.subr.bf16.mxu0 0
        %6962 = vmatpush1.bf16.msra.mxu0 0
        %6963 = vmatprep.subr.bf16.mxu0 0
        %6964 = vmatpush1.bf16.msra.mxu0 0
        %6965 = vmatprep.subr.bf16.mxu0 0
        %6966 = vmatpush1.bf16.msra.mxu0 0
        %6967 = vmatprep.subr.bf16.mxu0 0
        %6968 = vmatpush1.bf16.msra.mxu0 0
        %6969 = vmatprep.subr.bf16.mxu0 0
        %6970 = vmatpush1.bf16.msra.mxu0 0
        %6971 = vmatprep.subr.bf16.mxu0 0
        %6972 = vmatpush1.bf16.msra.mxu0 0
        %6973 = vmatprep.subr.bf16.mxu0 0
        %6974 = vmatpush1.bf16.msra.mxu0 0
        %6975 = vmatprep.subr.bf16.mxu0 0
        %6976 = vmatpush1.bf16.msra.mxu0 0
        %6977 = vmatprep.mubr.bf16.mxu0 0
        %6978 = vmatmul.mubr.bf16.gmra.mrb[0].mxu0 %v6940
        %v6979 = vpop.f32.mrb[0].mxu0
        %v6980 = vadd.f32 0.0, %v6979
        %v6981 = vpop.f32.mrb[0].mxu0
        %v6982 = vpop.f32.mrb[0].mxu0
        %v6983 = vpop.f32.mrb[0].mxu0
        %6984 = vdwg.mxu0
        %v6985 = vsel %vm1438, %v6658, 0.0
        %v6986 = vsel %vm1438, %v6704, 0.0
        %v6987 = vadd.f32 %v6985, %v6986
        %v6988 = vsel %vm1438, %v6750, 0.0
        %v6989 = vadd.f32 %v6987, %v6988
        %v6990 = vsel %vm1438, %v6796, 0.0
        %v6991 = vadd.f32 %v6989, %v6990
        %v6992 = vsel %vm1438, %v6842, 0.0
        %v6993 = vadd.f32 %v6991, %v6992
        %v6994 = vsel %vm1438, %v6888, 0.0
        %v6995 = vadd.f32 %v6993, %v6994
        %v6996 = vsel %vm1438, %v6934, 0.0
        %v6997 = vadd.f32 %v6995, %v6996
        %v6998 = vsel %vm1438, %v6980, 0.0
        %v6999 = vadd.f32 %v6997, %v6998
        %s7000 = scalar_lea.vmem [#allocation19], 1
        %v7001 = vld [vmem:[%s7000] sm:$0x1]
        %v7003 = vlaneseq
        %v7004 = vshrl.u32 %v7003, 7
        %v7005 = vsub.s32 0, %v7004
        %v7006 = vrot.slane %v7001, %v7005
        %v7008 = vadd.f32 %v6999, %v7006
        %v7009 = vadd.f32 %v4225, %v7008
        %s7010 = scalar_lea.vmem [#allocation20], 1
        %v7011 = vld [vmem:[%s7010] sm:$0x1]
        %s7012 = scalar_lea.vmem [#allocation22], 1
        %v7013 = vld [vmem:[%s7012] sm:$0x1]
        %v7014 = vsel %vm1438, %v7009, 0.0
        %7015 = vadd.xlane.f32.xlu0 %v7014
        %v7016 = vpop.xlane.xlu0 %7015
        %v7017 = vmul.f32 %v7016, %v3955
        %v7018 = vsub.f32 %v7009, %v7017
        %v7019 = vmul.f32 %v7018, %v7018
        %v7020 = vsel %vm1438, %v7019, 0.0
        %7021 = vadd.xlane.f32.xlu0 %v7020
        %v7022 = vpop.xlane.xlu0 %7021
        %v7023 = vmul.f32 %v7022, %v3955
        %v7024 = vadd.f32 %v7023, 1e-05
        %v7025 = vrsqrt.pop %v7024
        %v7026 = vmul.f32 %v7018, %v7025
        %v7028 = vlaneseq
        %v7029 = vshrl.u32 %v7028, 7
        %v7030 = vsub.s32 0, %v7029
        %v7031 = vrot.slane %v7011, %v7030
        %v7033 = vmul.f32 %v7026, %v7031
        %v7035 = vlaneseq
        %v7036 = vshrl.u32 %v7035, 7
        %v7037 = vsub.s32 0, %v7036
        %v7038 = vrot.slane %v7013, %v7037
        %v7040 = vadd.f32 %v7033, %v7038
        %v7041 = vpack.c.bf16 %v7040, %v7040
        %s7042 = scalar_lea.vmem [#allocation26], 16
        %v7043 = vld [vmem:[%s7042] sm:$0xf]
        %v7044 = vld [vmem:[%s7042 + $0x4] sm:$0xf]
        %v7045 = vld [vmem:[%s7042 + $0x8] sm:$0xf]
        %v7046 = vld [vmem:[%s7042 + $0xc] sm:$0xf]
        %s7047 = scalar_lea.vmem [#allocation28], 1
        %v7048 = vld [vmem:[%s7047] sm:$0x1]
        %v7050 = vlaneseq
        %v7051 = vshrl.u32 %v7050, 7
        %v7052 = vsub.s32 0, %v7051
        %v7053 = vrot.slane %v7048, %v7052
        %v7059 = vunpack.c.l.b16 %v7043
        %v7060 = vunpack.c.l.b16 %v7044
        %v7061 = vunpack.c.l.b16 %v7045
        %v7062 = vunpack.c.l.b16 %v7046
        %v7063 = vpack.c.b16 %v7060, %v7059
        %v7064 = vpack.c.b16 %v7062, %v7061
        %v7068 = vsel %vm1438, %v7041, 0
        %7070 = vmatprep.subr.bf16.mxu0 0
        %7071 = vmatpush1.bf16.msra.mxu0 %v7063
        %7072 = vmatprep.subr.bf16.mxu0 0
        %7073 = vmatpush1.bf16.msra.mxu0 %v7064
        %7074 = vmatprep.subr.bf16.mxu0 0
        %7075 = vmatpush1.bf16.msra.mxu0 0
        %7076 = vmatprep.subr.bf16.mxu0 0
        %7077 = vmatpush1.bf16.msra.mxu0 0
        %7078 = vmatprep.subr.bf16.mxu0 0
        %7079 = vmatpush1.bf16.msra.mxu0 0
        %7080 = vmatprep.subr.bf16.mxu0 0
        %7081 = vmatpush1.bf16.msra.mxu0 0
        %7082 = vmatprep.subr.bf16.mxu0 0
        %7083 = vmatpush1.bf16.msra.mxu0 0
        %7084 = vmatprep.subr.bf16.mxu0 0
        %7085 = vmatpush1.bf16.msra.mxu0 0
        %7086 = vmatprep.subr.bf16.mxu0 0
        %7087 = vmatpush1.bf16.msra.mxu0 0
        %7088 = vmatprep.subr.bf16.mxu0 0
        %7089 = vmatpush1.bf16.msra.mxu0 0
        %7090 = vmatprep.subr.bf16.mxu0 0
        %7091 = vmatpush1.bf16.msra.mxu0 0
        %7092 = vmatprep.subr.bf16.mxu0 0
        %7093 = vmatpush1.bf16.msra.mxu0 0
        %7094 = vmatprep.subr.bf16.mxu0 0
        %7095 = vmatpush1.bf16.msra.mxu0 0
        %7096 = vmatprep.subr.bf16.mxu0 0
        %7097 = vmatpush1.bf16.msra.mxu0 0
        %7098 = vmatprep.subr.bf16.mxu0 0
        %7099 = vmatpush1.bf16.msra.mxu0 0
        %7100 = vmatprep.subr.bf16.mxu0 0
        %7101 = vmatpush1.bf16.msra.mxu0 0
        %7102 = vmatprep.mubr.bf16.mxu0 0
        %7103 = vmatmul.mubr.bf16.gmra.mrb[0].mxu0 %v7068
        %v7104 = vpop.f32.mrb[0].mxu0
        %v7105 = vadd.f32 %v7053, %v7104
        %v7106 = vpop.f32.mrb[0].mxu0
        %v7107 = vpop.f32.mrb[0].mxu0
        %v7108 = vpop.f32.mrb[0].mxu0
        %7109 = vdwg.mxu0
        %v7110 = vmax.f32 %v7105, 0.0
        %v7111 = vpack.c.bf16 %v7110, %v7110
        %s7112 = scalar_lea.vmem [#allocation29], 64
        %v7113 = vld [vmem:[%s7112] sm:$0xf]
        %v7114 = vld [vmem:[%s7112 + $0x4] sm:$0xf]
        %v7115 = vld [vmem:[%s7112 + $0x8] sm:$0xf]
        %v7116 = vld [vmem:[%s7112 + $0xc] sm:$0xf]
        %v7117 = vld [vmem:[%s7112 + $0x10] sm:$0xf]
        %v7118 = vld [vmem:[%s7112 + $0x14] sm:$0xf]
        %v7119 = vld [vmem:[%s7112 + $0x18] sm:$0xf]
        %v7120 = vld [vmem:[%s7112 + $0x1c] sm:$0xf]
        %v7121 = vld [vmem:[%s7112 + $0x20] sm:$0xf]
        %v7122 = vld [vmem:[%s7112 + $0x24] sm:$0xf]
        %v7123 = vld [vmem:[%s7112 + $0x28] sm:$0xf]
        %v7124 = vld [vmem:[%s7112 + $0x2c] sm:$0xf]
        %v7125 = vld [vmem:[%s7112 + $0x30] sm:$0xf]
        %v7126 = vld [vmem:[%s7112 + $0x34] sm:$0xf]
        %v7127 = vld [vmem:[%s7112 + $0x38] sm:$0xf]
        %v7128 = vld [vmem:[%s7112 + $0x3c] sm:$0xf]
        %s7129 = scalar_lea.vmem [#allocation31], 1
        %v7130 = vld [vmem:[%s7129] sm:$0x1]
        %v7132 = vlaneseq
        %v7133 = vshrl.u32 %v7132, 7
        %v7134 = vsub.s32 0, %v7133
        %v7135 = vrot.slane %v7130, %v7134
        %v7153 = vunpack.c.l.b16 %v7113
        %v7154 = vunpack.c.l.b16 %v7114
        %v7155 = vunpack.c.l.b16 %v7115
        %v7156 = vunpack.c.l.b16 %v7116
        %v7157 = vunpack.c.l.b16 %v7117
        %v7158 = vunpack.c.l.b16 %v7118
        %v7159 = vunpack.c.l.b16 %v7119
        %v7160 = vunpack.c.l.b16 %v7120
        %v7161 = vunpack.c.l.b16 %v7121
        %v7162 = vunpack.c.l.b16 %v7122
        %v7163 = vunpack.c.l.b16 %v7123
        %v7164 = vunpack.c.l.b16 %v7124
        %v7165 = vunpack.c.l.b16 %v7125
        %v7166 = vunpack.c.l.b16 %v7126
        %v7167 = vunpack.c.l.b16 %v7127
        %v7168 = vunpack.c.l.b16 %v7128
        %v7169 = vpack.c.b16 %v7154, %v7153
        %v7170 = vpack.c.b16 %v7156, %v7155
        %v7171 = vpack.c.b16 %v7158, %v7157
        %v7172 = vpack.c.b16 %v7160, %v7159
        %v7173 = vpack.c.b16 %v7162, %v7161
        %v7174 = vpack.c.b16 %v7164, %v7163
        %v7175 = vpack.c.b16 %v7166, %v7165
        %v7176 = vpack.c.b16 %v7168, %v7167
        %7185 = vmatprep.subr.bf16.mxu0 0
        %7186 = vmatpush1.bf16.msra.mxu0 %v7169
        %7187 = vmatprep.subr.bf16.mxu0 0
        %7188 = vmatpush1.bf16.msra.mxu0 %v7170
        %7189 = vmatprep.subr.bf16.mxu0 0
        %7190 = vmatpush1.bf16.msra.mxu0 %v7171
        %7191 = vmatprep.subr.bf16.mxu0 0
        %7192 = vmatpush1.bf16.msra.mxu0 %v7172
        %7193 = vmatprep.subr.bf16.mxu0 0
        %7194 = vmatpush1.bf16.msra.mxu0 %v7173
        %7195 = vmatprep.subr.bf16.mxu0 0
        %7196 = vmatpush1.bf16.msra.mxu0 %v7174
        %7197 = vmatprep.subr.bf16.mxu0 0
        %7198 = vmatpush1.bf16.msra.mxu0 %v7175
        %7199 = vmatprep.subr.bf16.mxu0 0
        %7200 = vmatpush1.bf16.msra.mxu0 %v7176
        %7201 = vmatprep.subr.bf16.mxu0 0
        %7202 = vmatpush1.bf16.msra.mxu0 0
        %7203 = vmatprep.subr.bf16.mxu0 0
        %7204 = vmatpush1.bf16.msra.mxu0 0
        %7205 = vmatprep.subr.bf16.mxu0 0
        %7206 = vmatpush1.bf16.msra.mxu0 0
        %7207 = vmatprep.subr.bf16.mxu0 0
        %7208 = vmatpush1.bf16.msra.mxu0 0
        %7209 = vmatprep.subr.bf16.mxu0 0
        %7210 = vmatpush1.bf16.msra.mxu0 0
        %7211 = vmatprep.subr.bf16.mxu0 0
        %7212 = vmatpush1.bf16.msra.mxu0 0
        %7213 = vmatprep.subr.bf16.mxu0 0
        %7214 = vmatpush1.bf16.msra.mxu0 0
        %7215 = vmatprep.subr.bf16.mxu0 0
        %7216 = vmatpush1.bf16.msra.mxu0 0
        %7217 = vmatprep.mubr.bf16.mxu0 0
        %7218 = vmatmul.mubr.bf16.gmra.mrb[0].mxu0 %v7111
        %v7219 = vpop.f32.mrb[0].mxu0
        %v7220 = vadd.f32 %v7135, %v7219
        %v7221 = vpop.f32.mrb[0].mxu0
        %v7222 = vpop.f32.mrb[0].mxu0
        %v7223 = vpop.f32.mrb[0].mxu0
        %7224 = vdwg.mxu0
        %v7225 = vadd.f32 %v7040, %v7220
        %s7226 = scalar_lea.vmem [#allocation23], 1
        %v7227 = vld [vmem:[%s7226] sm:$0x1]
        %s7228 = scalar_lea.vmem [#allocation25], 1
        %v7229 = vld [vmem:[%s7228] sm:$0x1]
        %v7230 = vsel %vm1438, %v7225, 0.0
        %7231 = vadd.xlane.f32.xlu0 %v7230
        %v7232 = vpop.xlane.xlu0 %7231
        %v7233 = vmul.f32 %v7232, %v3955
        %v7234 = vsub.f32 %v7225, %v7233
        %v7235 = vmul.f32 %v7234, %v7234
        %v7236 = vsel %vm1438, %v7235, 0.0
        %7237 = vadd.xlane.f32.xlu0 %v7236
        %v7238 = vpop.xlane.xlu0 %7237
        %v7239 = vmul.f32 %v7238, %v3955
        %v7240 = vadd.f32 %v7239, 1e-05
        %v7241 = vrsqrt.pop %v7240
        %v7242 = vmul.f32 %v7234, %v7241
        %v7244 = vlaneseq
        %v7245 = vshrl.u32 %v7244, 7
        %v7246 = vsub.s32 0, %v7245
        %v7247 = vrot.slane %v7227, %v7246
        %v7249 = vmul.f32 %v7242, %v7247
        %v7251 = vlaneseq
        %v7252 = vshrl.u32 %v7251, 7
        %v7253 = vsub.s32 0, %v7252
        %v7254 = vrot.slane %v7229, %v7253
        %v7256 = vadd.f32 %v7249, %v7254
        %v7257 = vmul.f32 %v7256, %v4193
        %v7258 = vadd.f32 %v7257, %v4225
        %s7259 = scalar_lea.vmem [#allocation32], 1
        %v7260 = vld [vmem:[%s7259] sm:$0x1]
        %s7261 = scalar_lea.vmem [#allocation34], 1
        %v7262 = vld [vmem:[%s7261] sm:$0x1]
        %v7263 = vsel %vm1438, %v7258, 0.0
        %7264 = vadd.xlane.f32.xlu0 %v7263
        %v7265 = vpop.xlane.xlu0 %7264
        %v7266 = vmul.f32 %v7265, %v3955
        %v7267 = vsub.f32 %v7258, %v7266
        %v7268 = vmul.f32 %v7267, %v7267
        %v7269 = vsel %vm1438, %v7268, 0.0
        %7270 = vadd.xlane.f32.xlu0 %v7269
        %v7271 = vpop.xlane.xlu0 %7270
        %v7272 = vmul.f32 %v7271, %v3955
        %v7273 = vadd.f32 %v7272, 1e-05
        %v7274 = vrsqrt.pop %v7273
        %v7275 = vmul.f32 %v7267, %v7274
        %v7277 = vlaneseq
        %v7278 = vshrl.u32 %v7277, 7
        %v7279 = vsub.s32 0, %v7278
        %v7280 = vrot.slane %v7260, %v7279
        %v7282 = vmul.f32 %v7275, %v7280
        %v7284 = vlaneseq
        %v7285 = vshrl.u32 %v7284, 7
        %v7286 = vsub.s32 0, %v7285
        %v7287 = vrot.slane %v7262, %v7286
        %v7289 = vadd.f32 %v7282, %v7287
        %v7290 = vpack.c.bf16 %v7289, %v7289
        %v7291 = vld [vmem:[#allocation35] sm:$0xf]
        %v7292 = vld [vmem:[#allocation35 + $0x4] sm:$0xf]
        %v7293 = vld [vmem:[#allocation35 + $0x8] sm:$0xf]
        %v7294 = vld [vmem:[#allocation35 + $0xc] sm:$0xf]
        %v7295 = vld [vmem:[#allocation37] sm:$0x1]
        %v7297 = vlaneseq
        %v7298 = vshrl.u32 %v7297, 7
        %v7299 = vsub.s32 0, %v7298
        %v7300 = vrot.slane %v7295, %v7299
        %v7306 = vunpack.c.l.b16 %v7291
        %v7307 = vunpack.c.l.b16 %v7292
        %v7308 = vunpack.c.l.b16 %v7293
        %v7309 = vunpack.c.l.b16 %v7294
        %v7310 = vpack.c.b16 %v7307, %v7306
        %v7311 = vpack.c.b16 %v7309, %v7308
        %v7315 = vsel %vm1438, %v7290, 0
        %7317 = vmatprep.subr.bf16.mxu0 0
        %7318 = vmatpush1.bf16.msra.mxu0 %v7310
        %7319 = vmatprep.subr.bf16.mxu0 0
        %7320 = vmatpush1.bf16.msra.mxu0 %v7311
        %7321 = vmatprep.subr.bf16.mxu0 0
        %7322 = vmatpush1.bf16.msra.mxu0 0
        %7323 = vmatprep.subr.bf16.mxu0 0
        %7324 = vmatpush1.bf16.msra.mxu0 0
        %7325 = vmatprep.subr.bf16.mxu0 0
        %7326 = vmatpush1.bf16.msra.mxu0 0
        %7327 = vmatprep.subr.bf16.mxu0 0
        %7328 = vmatpush1.bf16.msra.mxu0 0
        %7329 = vmatprep.subr.bf16.mxu0 0
        %7330 = vmatpush1.bf16.msra.mxu0 0
        %7331 = vmatprep.subr.bf16.mxu0 0
        %7332 = vmatpush1.bf16.msra.mxu0 0
        %7333 = vmatprep.subr.bf16.mxu0 0
        %7334 = vmatpush1.bf16.msra.mxu0 0
        %7335 = vmatprep.subr.bf16.mxu0 0
        %7336 = vmatpush1.bf16.msra.mxu0 0
        %7337 = vmatprep.subr.bf16.mxu0 0
        %7338 = vmatpush1.bf16.msra.mxu0 0
        %7339 = vmatprep.subr.bf16.mxu0 0
        %7340 = vmatpush1.bf16.msra.mxu0 0
        %7341 = vmatprep.subr.bf16.mxu0 0
        %7342 = vmatpush1.bf16.msra.mxu0 0
        %7343 = vmatprep.subr.bf16.mxu0 0
        %7344 = vmatpush1.bf16.msra.mxu0 0
        %7345 = vmatprep.subr.bf16.mxu0 0
        %7346 = vmatpush1.bf16.msra.mxu0 0
        %7347 = vmatprep.subr.bf16.mxu0 0
        %7348 = vmatpush1.bf16.msra.mxu0 0
        %7349 = vmatprep.mubr.bf16.mxu0 0
        %7350 = vmatmul.mubr.bf16.gmra.mrb[0].mxu0 %v7315
        %v7351 = vpop.f32.mrb[0].mxu0
        %v7352 = vadd.f32 %v7300, %v7351
        %v7353 = vpop.f32.mrb[0].mxu0
        %v7354 = vpop.f32.mrb[0].mxu0
        %v7355 = vpop.f32.mrb[0].mxu0
        %7356 = vdwg.mxu0
        %v7357 = vld [vmem:[%s945] sm:$0xf]
        %7359 = vset.pattern.permute.xlu0 0
        %7360 = vperm.xlu0 %7359, %v7357
        %v7361 = vpop.permute.xlu0 %7360
        %v7363 = vmul.f32 %v7352, %v7361
        %vm7364 = vcmask 27648
        %7365 = vst.msk [vmem:[%s1097] sm:$0xf] %vm7364, %v7363
        %s7366 = sand.u32 %s566, 1
        %s7367 = scalar_lea.sflag [#allocation4], %s7366
        %s7368 = sand.u32 %s566, 1
        %s7369 = smul.addr %s7368, 4
        %s7370 = scalar_lea.vmem [#allocation38], %s7369
        // Predicated region
        $region205: #{tpu_custom_call.1} parent=111 // pred_check
          %p7371 = pneg %p576
        $region206: #{tpu_custom_call.1} parent=111 // pred_check_branch
          %7373 = sbr.rel (%p7371) target = $region208
        $region207: #{tpu_custom_call.1} parent=111 // pred_region
          %s7375 = ssub.s32 64, 64
          %7376 = vsyncadd %s7367, %s7375
          %s7377 = smul.addr %s55, 64
          %s7378 = scalar_lea.hbm %s23, %s7377
          %s7380 = sshll.u32 %s7370, 4
          %s7381 = int_to_ptr.vmem [resolvable:$true] %s7380
          %7383 = dma.vmem_to_hbm [thread:$0]  %s7381, 64, %s7378, %s7367
        $region208: #{tpu_custom_call.1} parent=111 // pred_fallthru
          _
      $region112: #{tpu_custom_call.1} parent=5 // pred_fallthru
        _
      %p7384 = scmp.le.s32.totalorder 2, %s50
      // Predicated region
      $region209: #{tpu_custom_call.1} parent=5 // pred_check
        %p7385 = pneg %p7384
      $region210: #{tpu_custom_call.1} parent=5 // pred_check_branch
        %7387 = sbr.rel (%p7385) target = $region212
      $region211: #{tpu_custom_call.1} parent=5 // pred_region
        %s7388 = ssub.s32 %s50, 2
        // Predicated region
        $region213: #{tpu_custom_call.1} parent=211 // pred_check
          %p7389 = pneg %p582
        $region214: #{tpu_custom_call.1} parent=211 // pred_check_branch
          %7391 = sbr.rel (%p7389) target = $region216
        $region215: #{tpu_custom_call.1} parent=211 // pred_region
          %s7392 = sand.u32 %s567, 1
          %s7393 = scalar_lea.sflag [#allocation4], %s7392
          %s7394 = sand.u32 %s567, 1
          %s7395 = smul.addr %s7394, 4
          %s7396 = scalar_lea.vmem [#allocation38], %s7395
          %7397 = dma.done %s7393, 64
        $region216: #{tpu_custom_call.1} parent=211 // pred_fallthru
          _
      $region212: #{tpu_custom_call.1} parent=5 // pred_fallthru
        _
    $region6: #{tpu_custom_call.1} parent=1 // loop_footer
      %s54 = sadd.s32 1, %s50
    $region7: #{tpu_custom_call.1} parent=1 // loop_footer_branch
      %49 = sbr.rel target = $region3
    $region8: #{tpu_custom_call.1} parent=1 // loop_exit
      _
    %7398 = vsyncpa [#allocation3], 1
    %s7399 = scalar_lea.sflag [#allocation3], 1
    %7400 = vsyncpa %s7399, 1
    %7401 = vsyncpa [#allocation6], 1
    %s7402 = scalar_lea.sflag [#allocation6], 1
    %7403 = vsyncpa %s7402, 1
    %7404 = vsyncpa [#allocation9], 1
    %s7405 = scalar_lea.sflag [#allocation9], 1
    %7406 = vsyncpa %s7405, 1
    %7407 = vsyncpa [#allocation12], 1
    %7408 = vsyncpa [#allocation15], 1
    %7409 = vsyncpa [#allocation18], 1
    %7410 = vsyncpa [#allocation21], 1
    %7411 = vsyncpa [#allocation24], 1
    %7412 = vsyncpa [#allocation27], 1
    %7413 = vsyncpa [#allocation30], 1
    %7414 = vsyncpa [#allocation33], 1
    %7415 = vsyncpa [#allocation36], 1
    %7416 = vsyncpa [#allocation4], 1
    %s7417 = scalar_lea.sflag [#allocation4], 1
    %7418 = vsyncpa %s7417, 1

</llo_original>
